<compile_context>
chip_gen: v5e
topology: v5e:2x2
jax: 0.10.0
libtpu: 0.0.40
codegen_flags: <defaults>
</compile_context>

<pallas_src>
import jax
import jax.numpy as jnp
from jax import lax
from jax.experimental import pallas as pl
from jax.experimental.pallas import tpu as pltpu

EPS = 1e-5
LANE = 128


def _round_up(x, m):
    return (x + m - 1) // m * m


# --------------------------------------------------------------------------
# Pass 1: conv1 (3x3, pad 1, no bias) + skip 1x1 conv + partial BN1 stats
# --------------------------------------------------------------------------
def conv1_skip_kernel(xp_ref, w1_ref, w3_ref, b3_ref,
                      y1_ref, skip_ref, stats_ref):
    # xp_ref:   (1, Hp, Wp, Cip) bf16   (spatially padded, channel padded)
    # w1_ref:   (3, 3, Cip, Cop) bf16
    # w3_ref:   (Cip, Cop)       bf16
    # b3_ref:   (1, Cop)         f32
    # y1_ref:   (1, H, W, Cop)   f32    (pre-BN conv1 output)
    # skip_ref: (1, H, W, Cop)   f32
    # stats_ref:(1, 2, Cop)      f32    (row 0 = sum, row 1 = sum of squares)
    _, Hp, Wp, Cip = xp_ref.shape
    H, W = Hp - 2, Wp - 2
    Cop = y1_ref.shape[-1]
    HW = H * W

    # Center tap: reused by conv1 tap (1,1) and by the 1x1 skip conv.
    x_c = xp_ref[0, 1:1 + H, 1:1 + W, :].reshape(HW, Cip)

    # conv1 as 9 shifted MXU matmuls, f32 accumulation.
    # Bias b1 is dropped: it cancels exactly in the following BatchNorm.
    acc = jnp.dot(x_c, w1_ref[1, 1], preferred_element_type=jnp.float32)
    for kh in range(3):
        for kw in range(3):
            if kh == 1 and kw == 1:
                continue
            xs = xp_ref[0, kh:kh + H, kw:kw + W, :].reshape(HW, Cip)
            acc += jnp.dot(xs, w1_ref[kh, kw],
                           preferred_element_type=jnp.float32)

    y1_ref[0] = acc.reshape(H, W, Cop)

    # One-pass partial BN1 statistics for this block.
    stats_ref[0, 0:1, :] = jnp.sum(acc, axis=0, keepdims=True)
    stats_ref[0, 1:2, :] = jnp.sum(acc * acc, axis=0, keepdims=True)

    # Skip branch: 1x1 conv (+ bias) on the already-sliced center tap.
    skip = jnp.dot(x_c, w3_ref[...],
                   preferred_element_type=jnp.float32) + b3_ref[...]
    skip_ref[0] = skip.reshape(H, W, Cop)


# --------------------------------------------------------------------------
# Pass 2: BN1 (folded scale/shift) + ReLU + conv2 (no bias) + partial BN2 stats
# --------------------------------------------------------------------------
def bn_relu_conv2_kernel(y1_ref, sc1_ref, sh1_ref, w2_ref,
                         y2_ref, stats_ref, ypad_ref):
    # y1_ref:   (1, H, W, Cop) f32
    # sc1/sh1:  (1, Cop)       f32   (gamma/sqrt(var+eps), beta - mean*scale)
    # w2_ref:   (3, 3, Cop, Cop) bf16
    # y2_ref:   (1, H, W, Cop) f32   (pre-BN conv2 output)
    # stats_ref:(1, 2, Cop)    f32
    # ypad_ref: VMEM (Hp, Wp, Cop) bf16 scratch with a 1-pixel zero halo
    _, H, W, Cop = y1_ref.shape
    Hp, Wp = H + 2, W + 2
    HW = H * W

    # BN1 folded to a single multiply-add, then ReLU; cast once to bf16.
    y = y1_ref[0] * sc1_ref[0] + sh1_ref[0]
    y = jnp.maximum(y, 0.0).astype(jnp.bfloat16)

    # Zero only the halo border (not the whole scratch), then store interior.
    zrow = jnp.zeros((1, Wp, Cop), jnp.bfloat16)
    ypad_ref[0:1] = zrow
    ypad_ref[Hp - 1:Hp] = zrow
    zcol = jnp.zeros((H, 1, Cop), jnp.bfloat16)
    ypad_ref[1:1 + H, 0:1, :] = zcol
    ypad_ref[1:1 + H, Wp - 1:Wp, :] = zcol
    ypad_ref[1:1 + H, 1:1 + W, :] = y

    # conv2 as 9 shifted MXU matmuls, f32 accumulation (bias b2 dropped: BN2).
    acc = jnp.zeros((HW, Cop), jnp.float32)
    for kh in range(3):
        for kw in range(3):
            ys = ypad_ref[kh:kh + H, kw:kw + W, :].reshape(HW, Cop)
            acc += jnp.dot(ys, w2_ref[kh, kw],
                           preferred_element_type=jnp.float32)

    y2_ref[0] = acc.reshape(H, W, Cop)
    stats_ref[0, 0:1, :] = jnp.sum(acc, axis=0, keepdims=True)
    stats_ref[0, 1:2, :] = jnp.sum(acc * acc, axis=0, keepdims=True)


# --------------------------------------------------------------------------
# Pass 3: BN2 (folded) + residual add + ReLU
# --------------------------------------------------------------------------
def bn2_add_relu_kernel(y2_ref, sc2_ref, sh2_ref, skip_ref, out_ref):
    y = y2_ref[0] * sc2_ref[0] + sh2_ref[0]
    out_ref[0] = jnp.maximum(y + skip_ref[0], 0.0)


# --------------------------------------------------------------------------
# Wrapper
# --------------------------------------------------------------------------
@jax.jit
def basic_res_block(x_nchw, params):
    """x_nchw: (N, Cin, H, W) float32. Returns (N, Cout, H, W) float32."""
    (w1, b1, g1, be1, w2, b2, g2, be2, w3, b3) = params
    del b1, b2  # cancelled exactly by the BatchNorm mean subtraction
    N, Cin, H, W = x_nchw.shape
    Cout = w1.shape[-1]
    Hp, Wp = H + 2, W + 2
    Cip = _round_up(Cin, LANE)
    Cop = _round_up(Cout, LANE)
    NHW = N * H * W

    # Layout prep (would be hoisted / kept resident across layers in a net).
    x_nhwc = jnp.transpose(x_nchw, (0, 2, 3, 1))
    x_pad = jnp.pad(x_nhwc,
                    ((0, 0), (1, 1), (1, 1), (0, Cip - Cin))).astype(jnp.bfloat16)
    w1p = jnp.pad(w1, ((0, 0), (0, 0), (0, Cip - Cin), (0, Cop - Cout))).astype(jnp.bfloat16)
    w2p = jnp.pad(w2, ((0, 0), (0, 0), (0, Cop - Cout), (0, Cop - Cout))).astype(jnp.bfloat16)
    w3p = jnp.pad(w3, ((0, Cip - Cin), (0, Cop - Cout))).astype(jnp.bfloat16)
    b3p = jnp.pad(b3, ((0, 0), (0, Cop - Cout)))
    g1p = jnp.pad(g1, ((0, 0), (0, Cop - Cout)))
    be1p = jnp.pad(be1, ((0, 0), (0, Cop - Cout)))
    g2p = jnp.pad(g2, ((0, 0), (0, Cop - Cout)))
    be2p = jnp.pad(be2, ((0, 0), (0, Cop - Cout)))

    cparams = pltpu.CompilerParams(
        dimension_semantics=("parallel",),
        vmem_limit_bytes=32 * 1024 * 1024,
    )

    # ---- pass 1: conv1 + skip conv + per-block BN1 partial stats ----
    y1, skip, stats1 = pl.pallas_call(
        conv1_skip_kernel,
        grid=(N,),
        in_specs=[
            pl.BlockSpec((1, Hp, Wp, Cip), lambda n: (n, 0, 0, 0)),
            pl.BlockSpec((3, 3, Cip, Cop), lambda n: (0, 0, 0, 0)),
            pl.BlockSpec((Cip, Cop), lambda n: (0, 0)),
            pl.BlockSpec((1, Cop), lambda n: (0, 0)),
        ],
        out_specs=[
            pl.BlockSpec((1, H, W, Cop), lambda n: (n, 0, 0, 0)),
            pl.BlockSpec((1, H, W, Cop), lambda n: (n, 0, 0, 0)),
            pl.BlockSpec((1, 2, Cop), lambda n: (n, 0, 0)),
        ],
        out_shape=[
            jax.ShapeDtypeStruct((N, H, W, Cop), jnp.float32),
            jax.ShapeDtypeStruct((N, H, W, Cop), jnp.float32),
            jax.ShapeDtypeStruct((N, 2, Cop), jnp.float32),
        ],
        compiler_params=cparams,
    )(x_pad, w1p, w3p, b3p)

    def fold_bn(stats, gamma, beta):
        # stats: (N, 2, Cop) per-block [sum, sum_sq]; tiny reduction + folding.
        s = jnp.sum(stats[:, 0, :], axis=0)
        ss = jnp.sum(stats[:, 1, :], axis=0)
        mean = s / NHW
        var = ss / NHW - mean * mean
        scale = gamma[0] * lax.rsqrt(var + EPS)
        shift = beta[0] - mean * scale
        return scale[None, :], shift[None, :]

    sc1, sh1 = fold_bn(stats1, g1p, be1p)

    # ---- pass 2: BN1 + ReLU + conv2 + per-block BN2 partial stats ----
    y2, stats2 = pl.pallas_call(
        bn_relu_conv2_kernel,
        grid=(N,),
        in_specs=[
            pl.BlockSpec((1, H, W, Cop), lambda n: (n, 0, 0, 0)),
            pl.BlockSpec((1, Cop), lambda n: (0, 0)),
            pl.BlockSpec((1, Cop), lambda n: (0, 0)),
            pl.BlockSpec((3, 3, Cop, Cop), lambda n: (0, 0, 0, 0)),
        ],
        out_specs=[
            pl.BlockSpec((1, H, W, Cop), lambda n: (n, 0, 0, 0)),
            pl.BlockSpec((1, 2, Cop), lambda n: (n, 0, 0)),
        ],
        out_shape=[
            jax.ShapeDtypeStruct((N, H, W, Cop), jnp.float32),
            jax.ShapeDtypeStruct((N, 2, Cop), jnp.float32),
        ],
        scratch_shapes=[pltpu.VMEM((Hp, Wp, Cop), jnp.bfloat16)],
        compiler_params=cparams,
    )(y1, sc1, sh1, w2p)

    sc2, sh2 = fold_bn(stats2, g2p, be2p)

    # ---- pass 3: BN2 + residual add + ReLU ----
    out_nhwc = pl.pallas_call(
        bn2_add_relu_kernel,
        grid=(N,),
        in_specs=[
            pl.BlockSpec((1, H, W, Cop), lambda n: (n, 0, 0, 0)),
            pl.BlockSpec((1, Cop), lambda n: (0, 0)),
            pl.BlockSpec((1, Cop), lambda n: (0, 0)),
            pl.BlockSpec((1, H, W, Cop), lambda n: (n, 0, 0, 0)),
        ],
        out_specs=pl.BlockSpec((1, H, W, Cop), lambda n: (n, 0, 0, 0)),
        out_shape=jax.ShapeDtypeStruct((N, H, W, Cop), jnp.float32),
        compiler_params=cparams,
    )(y2, sc2, sh2, skip)

    out = out_nhwc[..., :Cout]
    return jnp.transpose(out, (0, 3, 1, 2))


# --------------------------------------------------------------------------
# Pure-JAX reference
# --------------------------------------------------------------------------
def reference_res_block(x_nchw, params, mxu_dtype=None):
    """mxu_dtype=jnp.bfloat16 mimics the kernel's MXU operand precision
    (with f32 accumulation); mxu_dtype=None is the exact f32 module math."""
    (w1, b1, g1, be1, w2, b2, g2, be2, w3, b3) = params
    cast = (lambda a: a.astype(mxu_dtype)) if mxu_dtype is not None else (lambda a: a)
    x = jnp.transpose(x_nchw, (0, 2, 3, 1))
    dn = ('NHWC', 'HWIO', 'NHWC')

    def bn(y, g, be):
        mean = jnp.mean(y, axis=(0, 1, 2), keepdims=True)
        var = jnp.mean((y - mean) ** 2, axis=(0, 1, 2), keepdims=True)
        return (y - mean) * lax.rsqrt(var + EPS) * g.reshape(1, 1, 1, -1) \
            + be.reshape(1, 1, 1, -1)

    y = lax.conv_general_dilated(cast(x), cast(w1), (1, 1), 'SAME',
                                 dimension_numbers=dn,
                                 preferred_element_type=jnp.float32)
    y = y + b1.reshape(1, 1, 1, -1)
    y = jnp.maximum(bn(y, g1, be1), 0.0)
    y = lax.conv_general_dilated(cast(y), cast(w2), (1, 1), 'SAME',
                                 dimension_numbers=dn,
                                 preferred_element_type=jnp.float32)
    y = y + b2.reshape(1, 1, 1, -1)
    y = bn(y, g2, be2)
    skip = jnp.einsum('nhwc,cd->nhwd', cast(x), cast(w3),
                      preferred_element_type=jnp.float32) + b3.reshape(1, 1, 1, -1)
    out = jnp.maximum(y + skip, 0.0)
    return jnp.transpose(out, (0, 3, 1, 2))


def init_params(key, cin, cout):
    ks = jax.random.split(key, 6)
    w1 = 0.1 * jax.random.normal(ks[0], (3, 3, cin, cout), jnp.float32)
    b1 = 0.05 * jax.random.normal(ks[1], (1, cout), jnp.float32)
    g1 = jnp.ones((1, cout), jnp.float32)
    be1 = jnp.zeros((1, cout), jnp.float32)
    w2 = 0.1 * jax.random.normal(ks[2], (3, 3, cout, cout), jnp.float32)
    b2 = 0.05 * jax.random.normal(ks[3], (1, cout), jnp.float32)
    g2 = jnp.ones((1, cout), jnp.float32)
    be2 = jnp.zeros((1, cout), jnp.float32)
    w3 = 0.1 * jax.random.normal(ks[4], (cin, cout), jnp.float32)
    b3 = 0.05 * jax.random.normal(ks[5], (1, cout), jnp.float32)
    return (w1, b1, g1, be1, w2, b2, g2, be2, w3, b3)


if __name__ == "__main__":
    key = jax.random.PRNGKey(0)
    k_x, k_p = jax.random.split(key)

    N, Cin, H, W = 2, 4, 16, 16
    Cout = 8
    x = jax.random.normal(k_x, (N, Cin, H, W), jnp.float32)
    params = init_params(k_p, Cin, Cout)

    out = jax.block_until_ready(basic_res_block(x, params))
    assert out.shape == (N, Cout, H, W)

    # Tight check vs a reference that uses the same bf16 MXU operand precision.
    ref_bf16 = jax.block_until_ready(
        reference_res_block(x, params, mxu_dtype=jnp.bfloat16))
    err_tight = float(jnp.max(jnp.abs(out - ref_bf16)))
    assert jnp.allclose(out, ref_bf16, rtol=1e-2, atol=1e-2), \
        f"mismatch vs bf16-matched reference (max abs err {err_tight})"

    # Looser sanity check vs the exact f32 module semantics (slack = bf16 MXU).
    ref_f32 = jax.block_until_ready(reference_res_block(x, params))
    err_loose = float(jnp.max(jnp.abs(out - ref_f32)))
    assert jnp.allclose(out, ref_f32, rtol=1e-1, atol=1e-1), \
        f"mismatch vs f32 reference (max abs err {err_loose})"

    print("KERNEL_OK")
</pallas_src>

<mosaic_0001>
module attributes {stable_mosaic.version = 11 : i64} {
  func.func @bn_relu_conv2_kernel(%arg0: i32, %arg1: memref<1x16x16x128xf32, #tpu.memory_space<vmem>>, %arg2: memref<1x128xf32, #tpu.memory_space<vmem>>, %arg3: memref<1x128xf32, #tpu.memory_space<vmem>>, %arg4: memref<3x3x128x128xbf16, #tpu.memory_space<vmem>>, %arg5: memref<1x16x16x128xf32, #tpu.memory_space<vmem>>, %arg6: memref<1x2x128xf32, #tpu.memory_space<vmem>>, %arg7: memref<18x18x128xbf16, #tpu.memory_space<vmem>>) attributes {dimension_semantics = [#tpu.dimension_semantics<parallel>], iteration_bounds = array<i64: 2>, scalar_prefetch = 0 : i64, scratch_operands = 1 : i64, tpu.core_type = #tpu.core_type<tc>, window_params = [{transform_indices = @transform_0, window_bounds = array<i64: 1, 16, 16, 128>}, {pipeline_mode = #tpu.pipeline_mode<synchronous>, transform_indices = @transform_1, window_bounds = array<i64: 1, 128>}, {pipeline_mode = #tpu.pipeline_mode<synchronous>, transform_indices = @transform_2, window_bounds = array<i64: 1, 128>}, {pipeline_mode = #tpu.pipeline_mode<synchronous>, transform_indices = @transform_3, window_bounds = array<i64: 3, 3, 128, 128>}, {transform_indices = @transform_4, window_bounds = array<i64: 1, 16, 16, 128>}, {transform_indices = @transform_5, window_bounds = array<i64: 1, 2, 128>}]} {
    %c0 = arith.constant 0 : index
    %c0_0 = arith.constant 0 : index
    %c0_1 = arith.constant 0 : index
    %c0_2 = arith.constant 0 : index
    %0 = vector.load %arg1[%c0, %c0_0, %c0_1, %c0_2] : memref<1x16x16x128xf32, #tpu.memory_space<vmem>>, vector<1x16x16x128xf32>
    %1 = vector.shape_cast %0 : vector<1x16x16x128xf32> to vector<16x16x128xf32>
    %c0_3 = arith.constant 0 : index
    %c0_4 = arith.constant 0 : index
    %2 = vector.load %arg2[%c0_3, %c0_4] : memref<1x128xf32, #tpu.memory_space<vmem>>, vector<1x128xf32>
    %3 = vector.shape_cast %2 : vector<1x128xf32> to vector<128xf32>
    %4 = vector.shape_cast %3 : vector<128xf32> to vector<1x1x128xf32>
    %5 = vector.broadcast %4 : vector<1x1x128xf32> to vector<16x16x128xf32>
    %6 = arith.mulf %1, %5 : vector<16x16x128xf32>
    %c0_5 = arith.constant 0 : index
    %c0_6 = arith.constant 0 : index
    %7 = vector.load %arg3[%c0_5, %c0_6] : memref<1x128xf32, #tpu.memory_space<vmem>>, vector<1x128xf32>
    %8 = vector.shape_cast %7 : vector<1x128xf32> to vector<128xf32>
    %9 = vector.shape_cast %8 : vector<128xf32> to vector<1x1x128xf32>
    %10 = vector.broadcast %9 : vector<1x1x128xf32> to vector<16x16x128xf32>
    %11 = arith.addf %6, %10 : vector<16x16x128xf32>
    %cst = arith.constant 0.000000e+00 : f32
    %12 = vector.broadcast %cst : f32 to vector<16x16x128xf32>
    %13 = arith.maximumf %11, %12 : vector<16x16x128xf32>
    %14 = arith.truncf %13 : vector<16x16x128xf32> to vector<16x16x128xbf16>
    %cst_7 = arith.constant 0.000000e+00 : bf16
    %15 = vector.broadcast %cst_7 : bf16 to vector<1x18x128xbf16>
    %c0_8 = arith.constant 0 : index
    %c0_9 = arith.constant 0 : index
    %c0_10 = arith.constant 0 : index
    %16 = vector.load %arg7[%c0_8, %c0_9, %c0_10] : memref<18x18x128xbf16, #tpu.memory_space<vmem>>, vector<1x18x128xbf16>
    tpu.vector_store %arg7[%c0_8, %c0_9, %c0_10], %15 {strides = array<i32>} : memref<18x18x128xbf16, #tpu.memory_space<vmem>>, vector<1x18x128xbf16>,
    %c17 = arith.constant 17 : index
    %c0_11 = arith.constant 0 : index
    %c0_12 = arith.constant 0 : index
    %17 = vector.load %arg7[%c17, %c0_11, %c0_12] : memref<18x18x128xbf16, #tpu.memory_space<vmem>>, vector<1x18x128xbf16>
    tpu.vector_store %arg7[%c17, %c0_11, %c0_12], %15 {strides = array<i32>} : memref<18x18x128xbf16, #tpu.memory_space<vmem>>, vector<1x18x128xbf16>,
    %cst_13 = arith.constant 0.000000e+00 : bf16
    %18 = vector.broadcast %cst_13 : bf16 to vector<16x1x128xbf16>
    %c1 = arith.constant 1 : index
    %c0_14 = arith.constant 0 : index
    %c0_15 = arith.constant 0 : index
    %19 = vector.load %arg7[%c1, %c0_14, %c0_15] : memref<18x18x128xbf16, #tpu.memory_space<vmem>>, vector<16x1x128xbf16>
    tpu.vector_store %arg7[%c1, %c0_14, %c0_15], %18 {strides = array<i32>} : memref<18x18x128xbf16, #tpu.memory_space<vmem>>, vector<16x1x128xbf16>,
    %c1_16 = arith.constant 1 : index
    %c17_17 = arith.constant 17 : index
    %c0_18 = arith.constant 0 : index
    %20 = vector.load %arg7[%c1_16, %c17_17, %c0_18] : memref<18x18x128xbf16, #tpu.memory_space<vmem>>, vector<16x1x128xbf16>
    tpu.vector_store %arg7[%c1_16, %c17_17, %c0_18], %18 {strides = array<i32>} : memref<18x18x128xbf16, #tpu.memory_space<vmem>>, vector<16x1x128xbf16>,
    %c1_19 = arith.constant 1 : index
    %c1_20 = arith.constant 1 : index
    %c0_21 = arith.constant 0 : index
    %21 = vector.load %arg7[%c1_19, %c1_20, %c0_21] : memref<18x18x128xbf16, #tpu.memory_space<vmem>>, vector<16x16x128xbf16>
    tpu.vector_store %arg7[%c1_19, %c1_20, %c0_21], %14 {strides = array<i32>} : memref<18x18x128xbf16, #tpu.memory_space<vmem>>, vector<16x16x128xbf16>,
    %cst_22 = arith.constant 0.000000e+00 : f32
    %22 = vector.broadcast %cst_22 : f32 to vector<256x128xf32>
    %c0_23 = arith.constant 0 : index
    %c0_24 = arith.constant 0 : index
    %c0_25 = arith.constant 0 : index
    %23 = vector.load %arg7[%c0_23, %c0_24, %c0_25] : memref<18x18x128xbf16, #tpu.memory_space<vmem>>, vector<16x16x128xbf16>
    %24 = vector.shape_cast %23 : vector<16x16x128xbf16> to vector<256x128xbf16>
    %c0_26 = arith.constant 0 : index
    %c0_27 = arith.constant 0 : index
    %c0_28 = arith.constant 0 : index
    %c0_29 = arith.constant 0 : index
    %25 = vector.load %arg4[%c0_26, %c0_27, %c0_28, %c0_29] : memref<3x3x128x128xbf16, #tpu.memory_space<vmem>>, vector<1x1x128x128xbf16>
    %26 = vector.shape_cast %25 : vector<1x1x128x128xbf16> to vector<128x128xbf16>
    %cst_30 = arith.constant dense<0.000000e+00> : vector<256x128xf32>
    %27 = tpu.matmul %24, %26, %cst_30 {dimension_numbers = #tpu.dot_dimension_numbers<[1], [0], [0], [1], [0, 0, 1, 1], [], []>} : vector<256x128xbf16>, vector<128x128xbf16>, vector<256x128xf32> -> vector<256x128xf32>
    %28 = arith.addf %22, %27 : vector<256x128xf32>
    %c0_31 = arith.constant 0 : index
    %c1_32 = arith.constant 1 : index
    %c0_33 = arith.constant 0 : index
    %29 = vector.load %arg7[%c0_31, %c1_32, %c0_33] : memref<18x18x128xbf16, #tpu.memory_space<vmem>>, vector<16x16x128xbf16>
    %30 = vector.shape_cast %29 : vector<16x16x128xbf16> to vector<256x128xbf16>
    %c0_34 = arith.constant 0 : index
    %c1_35 = arith.constant 1 : index
    %c0_36 = arith.constant 0 : index
    %c0_37 = arith.constant 0 : index
    %31 = vector.load %arg4[%c0_34, %c1_35, %c0_36, %c0_37] : memref<3x3x128x128xbf16, #tpu.memory_space<vmem>>, vector<1x1x128x128xbf16>
    %32 = vector.shape_cast %31 : vector<1x1x128x128xbf16> to vector<128x128xbf16>
    %cst_38 = arith.constant dense<0.000000e+00> : vector<256x128xf32>
    %33 = tpu.matmul %30, %32, %cst_38 {dimension_numbers = #tpu.dot_dimension_numbers<[1], [0], [0], [1], [0, 0, 1, 1], [], []>} : vector<256x128xbf16>, vector<128x128xbf16>, vector<256x128xf32> -> vector<256x128xf32>
    %34 = arith.addf %28, %33 : vector<256x128xf32>
    %c0_39 = arith.constant 0 : index
    %c2 = arith.constant 2 : index
    %c0_40 = arith.constant 0 : index
    %35 = vector.load %arg7[%c0_39, %c2, %c0_40] : memref<18x18x128xbf16, #tpu.memory_space<vmem>>, vector<16x16x128xbf16>
    %36 = vector.shape_cast %35 : vector<16x16x128xbf16> to vector<256x128xbf16>
    %c0_41 = arith.constant 0 : index
    %c2_42 = arith.constant 2 : index
    %c0_43 = arith.constant 0 : index
    %c0_44 = arith.constant 0 : index
    %37 = vector.load %arg4[%c0_41, %c2_42, %c0_43, %c0_44] : memref<3x3x128x128xbf16, #tpu.memory_space<vmem>>, vector<1x1x128x128xbf16>
    %38 = vector.shape_cast %37 : vector<1x1x128x128xbf16> to vector<128x128xbf16>
    %cst_45 = arith.constant dense<0.000000e+00> : vector<256x128xf32>
    %39 = tpu.matmul %36, %38, %cst_45 {dimension_numbers = #tpu.dot_dimension_numbers<[1], [0], [0], [1], [0, 0, 1, 1], [], []>} : vector<256x128xbf16>, vector<128x128xbf16>, vector<256x128xf32> -> vector<256x128xf32>
    %40 = arith.addf %34, %39 : vector<256x128xf32>
    %c1_46 = arith.constant 1 : index
    %c0_47 = arith.constant 0 : index
    %c0_48 = arith.constant 0 : index
    %41 = vector.load %arg7[%c1_46, %c0_47, %c0_48] : memref<18x18x128xbf16, #tpu.memory_space<vmem>>, vector<16x16x128xbf16>
    %42 = vector.shape_cast %41 : vector<16x16x128xbf16> to vector<256x128xbf16>
    %c1_49 = arith.constant 1 : index
    %c0_50 = arith.constant 0 : index
    %c0_51 = arith.constant 0 : index
    %c0_52 = arith.constant 0 : index
    %43 = vector.load %arg4[%c1_49, %c0_50, %c0_51, %c0_52] : memref<3x3x128x128xbf16, #tpu.memory_space<vmem>>, vector<1x1x128x128xbf16>
    %44 = vector.shape_cast %43 : vector<1x1x128x128xbf16> to vector<128x128xbf16>
    %cst_53 = arith.constant dense<0.000000e+00> : vector<256x128xf32>
    %45 = tpu.matmul %42, %44, %cst_53 {dimension_numbers = #tpu.dot_dimension_numbers<[1], [0], [0], [1], [0, 0, 1, 1], [], []>} : vector<256x128xbf16>, vector<128x128xbf16>, vector<256x128xf32> -> vector<256x128xf32>
    %46 = arith.addf %40, %45 : vector<256x128xf32>
    %c1_54 = arith.constant 1 : index
    %c1_55 = arith.constant 1 : index
    %c0_56 = arith.constant 0 : index
    %47 = vector.load %arg7[%c1_54, %c1_55, %c0_56] : memref<18x18x128xbf16, #tpu.memory_space<vmem>>, vector<16x16x128xbf16>
    %48 = vector.shape_cast %47 : vector<16x16x128xbf16> to vector<256x128xbf16>
    %c1_57 = arith.constant 1 : index
    %c1_58 = arith.constant 1 : index
    %c0_59 = arith.constant 0 : index
    %c0_60 = arith.constant 0 : index
    %49 = vector.load %arg4[%c1_57, %c1_58, %c0_59, %c0_60] : memref<3x3x128x128xbf16, #tpu.memory_space<vmem>>, vector<1x1x128x128xbf16>
    %50 = vector.shape_cast %49 : vector<1x1x128x128xbf16> to vector<128x128xbf16>
    %cst_61 = arith.constant dense<0.000000e+00> : vector<256x128xf32>
    %51 = tpu.matmul %48, %50, %cst_61 {dimension_numbers = #tpu.dot_dimension_numbers<[1], [0], [0], [1], [0, 0, 1, 1], [], []>} : vector<256x128xbf16>, vector<128x128xbf16>, vector<256x128xf32> -> vector<256x128xf32>
    %52 = arith.addf %46, %51 : vector<256x128xf32>
    %c1_62 = arith.constant 1 : index
    %c2_63 = arith.constant 2 : index
    %c0_64 = arith.constant 0 : index
    %53 = vector.load %arg7[%c1_62, %c2_63, %c0_64] : memref<18x18x128xbf16, #tpu.memory_space<vmem>>, vector<16x16x128xbf16>
    %54 = vector.shape_cast %53 : vector<16x16x128xbf16> to vector<256x128xbf16>
    %c1_65 = arith.constant 1 : index
    %c2_66 = arith.constant 2 : index
    %c0_67 = arith.constant 0 : index
    %c0_68 = arith.constant 0 : index
    %55 = vector.load %arg4[%c1_65, %c2_66, %c0_67, %c0_68] : memref<3x3x128x128xbf16, #tpu.memory_space<vmem>>, vector<1x1x128x128xbf16>
    %56 = vector.shape_cast %55 : vector<1x1x128x128xbf16> to vector<128x128xbf16>
    %cst_69 = arith.constant dense<0.000000e+00> : vector<256x128xf32>
    %57 = tpu.matmul %54, %56, %cst_69 {dimension_numbers = #tpu.dot_dimension_numbers<[1], [0], [0], [1], [0, 0, 1, 1], [], []>} : vector<256x128xbf16>, vector<128x128xbf16>, vector<256x128xf32> -> vector<256x128xf32>
    %58 = arith.addf %52, %57 : vector<256x128xf32>
    %c2_70 = arith.constant 2 : index
    %c0_71 = arith.constant 0 : index
    %c0_72 = arith.constant 0 : index
    %59 = vector.load %arg7[%c2_70, %c0_71, %c0_72] : memref<18x18x128xbf16, #tpu.memory_space<vmem>>, vector<16x16x128xbf16>
    %60 = vector.shape_cast %59 : vector<16x16x128xbf16> to vector<256x128xbf16>
    %c2_73 = arith.constant 2 : index
    %c0_74 = arith.constant 0 : index
    %c0_75 = arith.constant 0 : index
    %c0_76 = arith.constant 0 : index
    %61 = vector.load %arg4[%c2_73, %c0_74, %c0_75, %c0_76] : memref<3x3x128x128xbf16, #tpu.memory_space<vmem>>, vector<1x1x128x128xbf16>
    %62 = vector.shape_cast %61 : vector<1x1x128x128xbf16> to vector<128x128xbf16>
    %cst_77 = arith.constant dense<0.000000e+00> : vector<256x128xf32>
    %63 = tpu.matmul %60, %62, %cst_77 {dimension_numbers = #tpu.dot_dimension_numbers<[1], [0], [0], [1], [0, 0, 1, 1], [], []>} : vector<256x128xbf16>, vector<128x128xbf16>, vector<256x128xf32> -> vector<256x128xf32>
    %64 = arith.addf %58, %63 : vector<256x128xf32>
    %c2_78 = arith.constant 2 : index
    %c1_79 = arith.constant 1 : index
    %c0_80 = arith.constant 0 : index
    %65 = vector.load %arg7[%c2_78, %c1_79, %c0_80] : memref<18x18x128xbf16, #tpu.memory_space<vmem>>, vector<16x16x128xbf16>
    %66 = vector.shape_cast %65 : vector<16x16x128xbf16> to vector<256x128xbf16>
    %c2_81 = arith.constant 2 : index
    %c1_82 = arith.constant 1 : index
    %c0_83 = arith.constant 0 : index
    %c0_84 = arith.constant 0 : index
    %67 = vector.load %arg4[%c2_81, %c1_82, %c0_83, %c0_84] : memref<3x3x128x128xbf16, #tpu.memory_space<vmem>>, vector<1x1x128x128xbf16>
    %68 = vector.shape_cast %67 : vector<1x1x128x128xbf16> to vector<128x128xbf16>
    %cst_85 = arith.constant dense<0.000000e+00> : vector<256x128xf32>
    %69 = tpu.matmul %66, %68, %cst_85 {dimension_numbers = #tpu.dot_dimension_numbers<[1], [0], [0], [1], [0, 0, 1, 1], [], []>} : vector<256x128xbf16>, vector<128x128xbf16>, vector<256x128xf32> -> vector<256x128xf32>
    %70 = arith.addf %64, %69 : vector<256x128xf32>
    %c2_86 = arith.constant 2 : index
    %c2_87 = arith.constant 2 : index
    %c0_88 = arith.constant 0 : index
    %71 = vector.load %arg7[%c2_86, %c2_87, %c0_88] : memref<18x18x128xbf16, #tpu.memory_space<vmem>>, vector<16x16x128xbf16>
    %72 = vector.shape_cast %71 : vector<16x16x128xbf16> to vector<256x128xbf16>
    %c2_89 = arith.constant 2 : index
    %c2_90 = arith.constant 2 : index
    %c0_91 = arith.constant 0 : index
    %c0_92 = arith.constant 0 : index
    %73 = vector.load %arg4[%c2_89, %c2_90, %c0_91, %c0_92] : memref<3x3x128x128xbf16, #tpu.memory_space<vmem>>, vector<1x1x128x128xbf16>
    %74 = vector.shape_cast %73 : vector<1x1x128x128xbf16> to vector<128x128xbf16>
    %cst_93 = arith.constant dense<0.000000e+00> : vector<256x128xf32>
    %75 = tpu.matmul %72, %74, %cst_93 {dimension_numbers = #tpu.dot_dimension_numbers<[1], [0], [0], [1], [0, 0, 1, 1], [], []>} : vector<256x128xbf16>, vector<128x128xbf16>, vector<256x128xf32> -> vector<256x128xf32>
    %76 = arith.addf %70, %75 : vector<256x128xf32>
    %77 = vector.shape_cast %76 : vector<256x128xf32> to vector<16x16x128xf32>
    %c0_94 = arith.constant 0 : index
    %c0_95 = arith.constant 0 : index
    %c0_96 = arith.constant 0 : index
    %c0_97 = arith.constant 0 : index
    %78 = vector.load %arg5[%c0_94, %c0_95, %c0_96, %c0_97] : memref<1x16x16x128xf32, #tpu.memory_space<vmem>>, vector<1x16x16x128xf32>
    %79 = vector.shape_cast %78 : vector<1x16x16x128xf32> to vector<16x16x128xf32>
    %80 = vector.shape_cast %77 : vector<16x16x128xf32> to vector<1x16x16x128xf32>
    tpu.vector_store %arg5[%c0_94, %c0_95, %c0_96, %c0_97], %80 {strides = array<i32>} : memref<1x16x16x128xf32, #tpu.memory_space<vmem>>, vector<1x16x16x128xf32>,
    %cst_98 = arith.constant dense<0.000000e+00> : vector<128xf32>
    %81 = vector.multi_reduction <add>, %76, %cst_98 [0] : vector<256x128xf32> to vector<128xf32>
    %82 = vector.shape_cast %81 : vector<128xf32> to vector<1x128xf32>
    %c0_99 = arith.constant 0 : index
    %c0_100 = arith.constant 0 : index
    %c0_101 = arith.constant 0 : index
    %83 = vector.load %arg6[%c0_99, %c0_100, %c0_101] : memref<1x2x128xf32, #tpu.memory_space<vmem>>, vector<1x1x128xf32>
    %84 = vector.shape_cast %83 : vector<1x1x128xf32> to vector<1x128xf32>
    %85 = vector.shape_cast %82 : vector<1x128xf32> to vector<1x1x128xf32>
    tpu.vector_store %arg6[%c0_99, %c0_100, %c0_101], %85 {strides = array<i32>} : memref<1x2x128xf32, #tpu.memory_space<vmem>>, vector<1x1x128xf32>,
    %86 = arith.mulf %76, %76 : vector<256x128xf32>
    %cst_102 = arith.constant dense<0.000000e+00> : vector<128xf32>
    %87 = vector.multi_reduction <add>, %86, %cst_102 [0] : vector<256x128xf32> to vector<128xf32>
    %88 = vector.shape_cast %87 : vector<128xf32> to vector<1x128xf32>
    %c0_103 = arith.constant 0 : index
    %c1_104 = arith.constant 1 : index
    %c0_105 = arith.constant 0 : index
    %89 = vector.load %arg6[%c0_103, %c1_104, %c0_105] : memref<1x2x128xf32, #tpu.memory_space<vmem>>, vector<1x1x128xf32>
    %90 = vector.shape_cast %89 : vector<1x1x128xf32> to vector<1x128xf32>
    %91 = vector.shape_cast %88 : vector<1x128xf32> to vector<1x1x128xf32>
    tpu.vector_store %arg6[%c0_103, %c1_104, %c0_105], %91 {strides = array<i32>} : memref<1x2x128xf32, #tpu.memory_space<vmem>>, vector<1x1x128xf32>,
    return
  }
  func.func @transform_0(%arg0: i32) -> (i32, i32, i32, i32) {
    %c0_i32 = arith.constant 0 : i32
    %c0_i32_0 = arith.constant 0 : i32
    %c0_i32_1 = arith.constant 0 : i32
    %c0_i32_2 = arith.constant 0 : i32
    return %arg0, %c0_i32, %c0_i32_0, %c0_i32_1 : i32, i32, i32, i32
  }
  func.func @transform_1(%arg0: i32) -> (i32, i32) {
    %c0_i32 = arith.constant 0 : i32
    %c0_i32_0 = arith.constant 0 : i32
    %c0_i32_1 = arith.constant 0 : i32
    return %c0_i32, %c0_i32_0 : i32, i32
  }
  func.func @transform_2(%arg0: i32) -> (i32, i32) {
    %c0_i32 = arith.constant 0 : i32
    %c0_i32_0 = arith.constant 0 : i32
    %c0_i32_1 = arith.constant 0 : i32
    return %c0_i32, %c0_i32_0 : i32, i32
  }
  func.func @transform_3(%arg0: i32) -> (i32, i32, i32, i32) {
    %c0_i32 = arith.constant 0 : i32
    %c0_i32_0 = arith.constant 0 : i32
    %c0_i32_1 = arith.constant 0 : i32
    %c0_i32_2 = arith.constant 0 : i32
    %c0_i32_3 = arith.constant 0 : i32
    return %c0_i32, %c0_i32_0, %c0_i32_1, %c0_i32_2 : i32, i32, i32, i32
  }
  func.func @transform_4(%arg0: i32) -> (i32, i32, i32, i32) {
    %c0_i32 = arith.constant 0 : i32
    %c0_i32_0 = arith.constant 0 : i32
    %c0_i32_1 = arith.constant 0 : i32
    %c0_i32_2 = arith.constant 0 : i32
    return %arg0, %c0_i32, %c0_i32_0, %c0_i32_1 : i32, i32, i32, i32
  }
  func.func @transform_5(%arg0: i32) -> (i32, i32, i32) {
    %c0_i32 = arith.constant 0 : i32
    %c0_i32_0 = arith.constant 0 : i32
    %c0_i32_1 = arith.constant 0 : i32
    return %arg0, %c0_i32, %c0_i32_0 : i32, i32, i32
  }
}

module attributes {stable_mosaic.version = 11 : i64} {
  func.func @conv1_skip_kernel(%arg0: i32, %arg1: memref<1x18x18x128xbf16, #tpu.memory_space<vmem>>, %arg2: memref<3x3x128x128xbf16, #tpu.memory_space<vmem>>, %arg3: memref<128x128xbf16, #tpu.memory_space<vmem>>, %arg4: memref<1x128xf32, #tpu.memory_space<vmem>>, %arg5: memref<1x16x16x128xf32, #tpu.memory_space<vmem>>, %arg6: memref<1x16x16x128xf32, #tpu.memory_space<vmem>>, %arg7: memref<1x2x128xf32, #tpu.memory_space<vmem>>) attributes {dimension_semantics = [#tpu.dimension_semantics<parallel>], iteration_bounds = array<i64: 2>, scalar_prefetch = 0 : i64, scratch_operands = 0 : i64, tpu.core_type = #tpu.core_type<tc>, window_params = [{transform_indices = @transform_0, window_bounds = array<i64: 1, 18, 18, 128>}, {pipeline_mode = #tpu.pipeline_mode<synchronous>, transform_indices = @transform_1, window_bounds = array<i64: 3, 3, 128, 128>}, {pipeline_mode = #tpu.pipeline_mode<synchronous>, transform_indices = @transform_2, window_bounds = array<i64: 128, 128>}, {pipeline_mode = #tpu.pipeline_mode<synchronous>, transform_indices = @transform_3, window_bounds = array<i64: 1, 128>}, {transform_indices = @transform_4, window_bounds = array<i64: 1, 16, 16, 128>}, {transform_indices = @transform_5, window_bounds = array<i64: 1, 16, 16, 128>}, {transform_indices = @transform_6, window_bounds = array<i64: 1, 2, 128>}]} {
    %c0 = arith.constant 0 : index
    %c1 = arith.constant 1 : index
    %c1_0 = arith.constant 1 : index
    %c0_1 = arith.constant 0 : index
    %0 = vector.load %arg1[%c0, %c1, %c1_0, %c0_1] : memref<1x18x18x128xbf16, #tpu.memory_space<vmem>>, vector<1x16x16x128xbf16>
    %1 = vector.shape_cast %0 : vector<1x16x16x128xbf16> to vector<16x16x128xbf16>
    %2 = vector.shape_cast %1 : vector<16x16x128xbf16> to vector<256x128xbf16>
    %c1_2 = arith.constant 1 : index
    %c1_3 = arith.constant 1 : index
    %c0_4 = arith.constant 0 : index
    %c0_5 = arith.constant 0 : index
    %3 = vector.load %arg2[%c1_2, %c1_3, %c0_4, %c0_5] : memref<3x3x128x128xbf16, #tpu.memory_space<vmem>>, vector<1x1x128x128xbf16>
    %4 = vector.shape_cast %3 : vector<1x1x128x128xbf16> to vector<128x128xbf16>
    %cst = arith.constant dense<0.000000e+00> : vector<256x128xf32>
    %5 = tpu.matmul %2, %4, %cst {dimension_numbers = #tpu.dot_dimension_numbers<[1], [0], [0], [1], [0, 0, 1, 1], [], []>} : vector<256x128xbf16>, vector<128x128xbf16>, vector<256x128xf32> -> vector<256x128xf32>
    %c0_6 = arith.constant 0 : index
    %c0_7 = arith.constant 0 : index
    %c0_8 = arith.constant 0 : index
    %c0_9 = arith.constant 0 : index
    %6 = vector.load %arg1[%c0_6, %c0_7, %c0_8, %c0_9] : memref<1x18x18x128xbf16, #tpu.memory_space<vmem>>, vector<1x16x16x128xbf16>
    %7 = vector.shape_cast %6 : vector<1x16x16x128xbf16> to vector<16x16x128xbf16>
    %8 = vector.shape_cast %7 : vector<16x16x128xbf16> to vector<256x128xbf16>
    %c0_10 = arith.constant 0 : index
    %c0_11 = arith.constant 0 : index
    %c0_12 = arith.constant 0 : index
    %c0_13 = arith.constant 0 : index
    %9 = vector.load %arg2[%c0_10, %c0_11, %c0_12, %c0_13] : memref<3x3x128x128xbf16, #tpu.memory_space<vmem>>, vector<1x1x128x128xbf16>
    %10 = vector.shape_cast %9 : vector<1x1x128x128xbf16> to vector<128x128xbf16>
    %cst_14 = arith.constant dense<0.000000e+00> : vector<256x128xf32>
    %11 = tpu.matmul %8, %10, %cst_14 {dimension_numbers = #tpu.dot_dimension_numbers<[1], [0], [0], [1], [0, 0, 1, 1], [], []>} : vector<256x128xbf16>, vector<128x128xbf16>, vector<256x128xf32> -> vector<256x128xf32>
    %12 = arith.addf %5, %11 : vector<256x128xf32>
    %c0_15 = arith.constant 0 : index
    %c0_16 = arith.constant 0 : index
    %c1_17 = arith.constant 1 : index
    %c0_18 = arith.constant 0 : index
    %13 = vector.load %arg1[%c0_15, %c0_16, %c1_17, %c0_18] : memref<1x18x18x128xbf16, #tpu.memory_space<vmem>>, vector<1x16x16x128xbf16>
    %14 = vector.shape_cast %13 : vector<1x16x16x128xbf16> to vector<16x16x128xbf16>
    %15 = vector.shape_cast %14 : vector<16x16x128xbf16> to vector<256x128xbf16>
    %c0_19 = arith.constant 0 : index
    %c1_20 = arith.constant 1 : index
    %c0_21 = arith.constant 0 : index
    %c0_22 = arith.constant 0 : index
    %16 = vector.load %arg2[%c0_19, %c1_20, %c0_21, %c0_22] : memref<3x3x128x128xbf16, #tpu.memory_space<vmem>>, vector<1x1x128x128xbf16>
    %17 = vector.shape_cast %16 : vector<1x1x128x128xbf16> to vector<128x128xbf16>
    %cst_23 = arith.constant dense<0.000000e+00> : vector<256x128xf32>
    %18 = tpu.matmul %15, %17, %cst_23 {dimension_numbers = #tpu.dot_dimension_numbers<[1], [0], [0], [1], [0, 0, 1, 1], [], []>} : vector<256x128xbf16>, vector<128x128xbf16>, vector<256x128xf32> -> vector<256x128xf32>
    %19 = arith.addf %12, %18 : vector<256x128xf32>
    %c0_24 = arith.constant 0 : index
    %c0_25 = arith.constant 0 : index
    %c2 = arith.constant 2 : index
    %c0_26 = arith.constant 0 : index
    %20 = vector.load %arg1[%c0_24, %c0_25, %c2, %c0_26] : memref<1x18x18x128xbf16, #tpu.memory_space<vmem>>, vector<1x16x16x128xbf16>
    %21 = vector.shape_cast %20 : vector<1x16x16x128xbf16> to vector<16x16x128xbf16>
    %22 = vector.shape_cast %21 : vector<16x16x128xbf16> to vector<256x128xbf16>
    %c0_27 = arith.constant 0 : index
    %c2_28 = arith.constant 2 : index
    %c0_29 = arith.constant 0 : index
    %c0_30 = arith.constant 0 : index
    %23 = vector.load %arg2[%c0_27, %c2_28, %c0_29, %c0_30] : memref<3x3x128x128xbf16, #tpu.memory_space<vmem>>, vector<1x1x128x128xbf16>
    %24 = vector.shape_cast %23 : vector<1x1x128x128xbf16> to vector<128x128xbf16>
    %cst_31 = arith.constant dense<0.000000e+00> : vector<256x128xf32>
    %25 = tpu.matmul %22, %24, %cst_31 {dimension_numbers = #tpu.dot_dimension_numbers<[1], [0], [0], [1], [0, 0, 1, 1], [], []>} : vector<256x128xbf16>, vector<128x128xbf16>, vector<256x128xf32> -> vector<256x128xf32>
    %26 = arith.addf %19, %25 : vector<256x128xf32>
    %c0_32 = arith.constant 0 : index
    %c1_33 = arith.constant 1 : index
    %c0_34 = arith.constant 0 : index
    %c0_35 = arith.constant 0 : index
    %27 = vector.load %arg1[%c0_32, %c1_33, %c0_34, %c0_35] : memref<1x18x18x128xbf16, #tpu.memory_space<vmem>>, vector<1x16x16x128xbf16>
    %28 = vector.shape_cast %27 : vector<1x16x16x128xbf16> to vector<16x16x128xbf16>
    %29 = vector.shape_cast %28 : vector<16x16x128xbf16> to vector<256x128xbf16>
    %c1_36 = arith.constant 1 : index
    %c0_37 = arith.constant 0 : index
    %c0_38 = arith.constant 0 : index
    %c0_39 = arith.constant 0 : index
    %30 = vector.load %arg2[%c1_36, %c0_37, %c0_38, %c0_39] : memref<3x3x128x128xbf16, #tpu.memory_space<vmem>>, vector<1x1x128x128xbf16>
    %31 = vector.shape_cast %30 : vector<1x1x128x128xbf16> to vector<128x128xbf16>
    %cst_40 = arith.constant dense<0.000000e+00> : vector<256x128xf32>
    %32 = tpu.matmul %29, %31, %cst_40 {dimension_numbers = #tpu.dot_dimension_numbers<[1], [0], [0], [1], [0, 0, 1, 1], [], []>} : vector<256x128xbf16>, vector<128x128xbf16>, vector<256x128xf32> -> vector<256x128xf32>
    %33 = arith.addf %26, %32 : vector<256x128xf32>
    %c0_41 = arith.constant 0 : index
    %c1_42 = arith.constant 1 : index
    %c2_43 = arith.constant 2 : index
    %c0_44 = arith.constant 0 : index
    %34 = vector.load %arg1[%c0_41, %c1_42, %c2_43, %c0_44] : memref<1x18x18x128xbf16, #tpu.memory_space<vmem>>, vector<1x16x16x128xbf16>
    %35 = vector.shape_cast %34 : vector<1x16x16x128xbf16> to vector<16x16x128xbf16>
    %36 = vector.shape_cast %35 : vector<16x16x128xbf16> to vector<256x128xbf16>
    %c1_45 = arith.constant 1 : index
    %c2_46 = arith.constant 2 : index
    %c0_47 = arith.constant 0 : index
    %c0_48 = arith.constant 0 : index
    %37 = vector.load %arg2[%c1_45, %c2_46, %c0_47, %c0_48] : memref<3x3x128x128xbf16, #tpu.memory_space<vmem>>, vector<1x1x128x128xbf16>
    %38 = vector.shape_cast %37 : vector<1x1x128x128xbf16> to vector<128x128xbf16>
    %cst_49 = arith.constant dense<0.000000e+00> : vector<256x128xf32>
    %39 = tpu.matmul %36, %38, %cst_49 {dimension_numbers = #tpu.dot_dimension_numbers<[1], [0], [0], [1], [0, 0, 1, 1], [], []>} : vector<256x128xbf16>, vector<128x128xbf16>, vector<256x128xf32> -> vector<256x128xf32>
    %40 = arith.addf %33, %39 : vector<256x128xf32>
    %c0_50 = arith.constant 0 : index
    %c2_51 = arith.constant 2 : index
    %c0_52 = arith.constant 0 : index
    %c0_53 = arith.constant 0 : index
    %41 = vector.load %arg1[%c0_50, %c2_51, %c0_52, %c0_53] : memref<1x18x18x128xbf16, #tpu.memory_space<vmem>>, vector<1x16x16x128xbf16>
    %42 = vector.shape_cast %41 : vector<1x16x16x128xbf16> to vector<16x16x128xbf16>
    %43 = vector.shape_cast %42 : vector<16x16x128xbf16> to vector<256x128xbf16>
    %c2_54 = arith.constant 2 : index
    %c0_55 = arith.constant 0 : index
    %c0_56 = arith.constant 0 : index
    %c0_57 = arith.constant 0 : index
    %44 = vector.load %arg2[%c2_54, %c0_55, %c0_56, %c0_57] : memref<3x3x128x128xbf16, #tpu.memory_space<vmem>>, vector<1x1x128x128xbf16>
    %45 = vector.shape_cast %44 : vector<1x1x128x128xbf16> to vector<128x128xbf16>
    %cst_58 = arith.constant dense<0.000000e+00> : vector<256x128xf32>
    %46 = tpu.matmul %43, %45, %cst_58 {dimension_numbers = #tpu.dot_dimension_numbers<[1], [0], [0], [1], [0, 0, 1, 1], [], []>} : vector<256x128xbf16>, vector<128x128xbf16>, vector<256x128xf32> -> vector<256x128xf32>
    %47 = arith.addf %40, %46 : vector<256x128xf32>
    %c0_59 = arith.constant 0 : index
    %c2_60 = arith.constant 2 : index
    %c1_61 = arith.constant 1 : index
    %c0_62 = arith.constant 0 : index
    %48 = vector.load %arg1[%c0_59, %c2_60, %c1_61, %c0_62] : memref<1x18x18x128xbf16, #tpu.memory_space<vmem>>, vector<1x16x16x128xbf16>
    %49 = vector.shape_cast %48 : vector<1x16x16x128xbf16> to vector<16x16x128xbf16>
    %50 = vector.shape_cast %49 : vector<16x16x128xbf16> to vector<256x128xbf16>
    %c2_63 = arith.constant 2 : index
    %c1_64 = arith.constant 1 : index
    %c0_65 = arith.constant 0 : index
    %c0_66 = arith.constant 0 : index
    %51 = vector.load %arg2[%c2_63, %c1_64, %c0_65, %c0_66] : memref<3x3x128x128xbf16, #tpu.memory_space<vmem>>, vector<1x1x128x128xbf16>
    %52 = vector.shape_cast %51 : vector<1x1x128x128xbf16> to vector<128x128xbf16>
    %cst_67 = arith.constant dense<0.000000e+00> : vector<256x128xf32>
    %53 = tpu.matmul %50, %52, %cst_67 {dimension_numbers = #tpu.dot_dimension_numbers<[1], [0], [0], [1], [0, 0, 1, 1], [], []>} : vector<256x128xbf16>, vector<128x128xbf16>, vector<256x128xf32> -> vector<256x128xf32>
    %54 = arith.addf %47, %53 : vector<256x128xf32>
    %c0_68 = arith.constant 0 : index
    %c2_69 = arith.constant 2 : index
    %c2_70 = arith.constant 2 : index
    %c0_71 = arith.constant 0 : index
    %55 = vector.load %arg1[%c0_68, %c2_69, %c2_70, %c0_71] : memref<1x18x18x128xbf16, #tpu.memory_space<vmem>>, vector<1x16x16x128xbf16>
    %56 = vector.shape_cast %55 : vector<1x16x16x128xbf16> to vector<16x16x128xbf16>
    %57 = vector.shape_cast %56 : vector<16x16x128xbf16> to vector<256x128xbf16>
    %c2_72 = arith.constant 2 : index
    %c2_73 = arith.constant 2 : index
    %c0_74 = arith.constant 0 : index
    %c0_75 = arith.constant 0 : index
    %58 = vector.load %arg2[%c2_72, %c2_73, %c0_74, %c0_75] : memref<3x3x128x128xbf16, #tpu.memory_space<vmem>>, vector<1x1x128x128xbf16>
    %59 = vector.shape_cast %58 : vector<1x1x128x128xbf16> to vector<128x128xbf16>
    %cst_76 = arith.constant dense<0.000000e+00> : vector<256x128xf32>
    %60 = tpu.matmul %57, %59, %cst_76 {dimension_numbers = #tpu.dot_dimension_numbers<[1], [0], [0], [1], [0, 0, 1, 1], [], []>} : vector<256x128xbf16>, vector<128x128xbf16>, vector<256x128xf32> -> vector<256x128xf32>
    %61 = arith.addf %54, %60 : vector<256x128xf32>
    %62 = vector.shape_cast %61 : vector<256x128xf32> to vector<16x16x128xf32>
    %c0_77 = arith.constant 0 : index
    %c0_78 = arith.constant 0 : index
    %c0_79 = arith.constant 0 : index
    %c0_80 = arith.constant 0 : index
    %63 = vector.load %arg5[%c0_77, %c0_78, %c0_79, %c0_80] : memref<1x16x16x128xf32, #tpu.memory_space<vmem>>, vector<1x16x16x128xf32>
    %64 = vector.shape_cast %63 : vector<1x16x16x128xf32> to vector<16x16x128xf32>
    %65 = vector.shape_cast %62 : vector<16x16x128xf32> to vector<1x16x16x128xf32>
    tpu.vector_store %arg5[%c0_77, %c0_78, %c0_79, %c0_80], %65 {strides = array<i32>} : memref<1x16x16x128xf32, #tpu.memory_space<vmem>>, vector<1x16x16x128xf32>,
    %cst_81 = arith.constant dense<0.000000e+00> : vector<128xf32>
    %66 = vector.multi_reduction <add>, %61, %cst_81 [0] : vector<256x128xf32> to vector<128xf32>
    %67 = vector.shape_cast %66 : vector<128xf32> to vector<1x128xf32>
    %c0_82 = arith.constant 0 : index
    %c0_83 = arith.constant 0 : index
    %c0_84 = arith.constant 0 : index
    %68 = vector.load %arg7[%c0_82, %c0_83, %c0_84] : memref<1x2x128xf32, #tpu.memory_space<vmem>>, vector<1x1x128xf32>
    %69 = vector.shape_cast %68 : vector<1x1x128xf32> to vector<1x128xf32>
    %70 = vector.shape_cast %67 : vector<1x128xf32> to vector<1x1x128xf32>
    tpu.vector_store %arg7[%c0_82, %c0_83, %c0_84], %70 {strides = array<i32>} : memref<1x2x128xf32, #tpu.memory_space<vmem>>, vector<1x1x128xf32>,
    %71 = arith.mulf %61, %61 : vector<256x128xf32>
    %cst_85 = arith.constant dense<0.000000e+00> : vector<128xf32>
    %72 = vector.multi_reduction <add>, %71, %cst_85 [0] : vector<256x128xf32> to vector<128xf32>
    %73 = vector.shape_cast %72 : vector<128xf32> to vector<1x128xf32>
    %c0_86 = arith.constant 0 : index
    %c1_87 = arith.constant 1 : index
    %c0_88 = arith.constant 0 : index
    %74 = vector.load %arg7[%c0_86, %c1_87, %c0_88] : memref<1x2x128xf32, #tpu.memory_space<vmem>>, vector<1x1x128xf32>
    %75 = vector.shape_cast %74 : vector<1x1x128xf32> to vector<1x128xf32>
    %76 = vector.shape_cast %73 : vector<1x128xf32> to vector<1x1x128xf32>
    tpu.vector_store %arg7[%c0_86, %c1_87, %c0_88], %76 {strides = array<i32>} : memref<1x2x128xf32, #tpu.memory_space<vmem>>, vector<1x1x128xf32>,
    %c0_89 = arith.constant 0 : index
    %c0_90 = arith.constant 0 : index
    %77 = vector.load %arg3[%c0_89, %c0_90] : memref<128x128xbf16, #tpu.memory_space<vmem>>, vector<128x128xbf16>
    %cst_91 = arith.constant dense<0.000000e+00> : vector<256x128xf32>
    %78 = tpu.matmul %2, %77, %cst_91 {dimension_numbers = #tpu.dot_dimension_numbers<[1], [0], [0], [1], [0, 0, 1, 1], [], []>} : vector<256x128xbf16>, vector<128x128xbf16>, vector<256x128xf32> -> vector<256x128xf32>
    %c0_92 = arith.constant 0 : index
    %c0_93 = arith.constant 0 : index
    %79 = vector.load %arg4[%c0_92, %c0_93] : memref<1x128xf32, #tpu.memory_space<vmem>>, vector<1x128xf32>
    %80 = vector.broadcast %79 : vector<1x128xf32> to vector<256x128xf32>
    %81 = arith.addf %78, %80 : vector<256x128xf32>
    %82 = vector.shape_cast %81 : vector<256x128xf32> to vector<16x16x128xf32>
    %c0_94 = arith.constant 0 : index
    %c0_95 = arith.constant 0 : index
    %c0_96 = arith.constant 0 : index
    %c0_97 = arith.constant 0 : index
    %83 = vector.load %arg6[%c0_94, %c0_95, %c0_96, %c0_97] : memref<1x16x16x128xf32, #tpu.memory_space<vmem>>, vector<1x16x16x128xf32>
    %84 = vector.shape_cast %83 : vector<1x16x16x128xf32> to vector<16x16x128xf32>
    %85 = vector.shape_cast %82 : vector<16x16x128xf32> to vector<1x16x16x128xf32>
    tpu.vector_store %arg6[%c0_94, %c0_95, %c0_96, %c0_97], %85 {strides = array<i32>} : memref<1x16x16x128xf32, #tpu.memory_space<vmem>>, vector<1x16x16x128xf32>,
    return
  }
  func.func @transform_0(%arg0: i32) -> (i32, i32, i32, i32) {
    %c0_i32 = arith.constant 0 : i32
    %c0_i32_0 = arith.constant 0 : i32
    %c0_i32_1 = arith.constant 0 : i32
    %c0_i32_2 = arith.constant 0 : i32
    return %arg0, %c0_i32, %c0_i32_0, %c0_i32_1 : i32, i32, i32, i32
  }
  func.func @transform_1(%arg0: i32) -> (i32, i32, i32, i32) {
    %c0_i32 = arith.constant 0 : i32
    %c0_i32_0 = arith.constant 0 : i32
    %c0_i32_1 = arith.constant 0 : i32
    %c0_i32_2 = arith.constant 0 : i32
    %c0_i32_3 = arith.constant 0 : i32
    return %c0_i32, %c0_i32_0, %c0_i32_1, %c0_i32_2 : i32, i32, i32, i32
  }
  func.func @transform_2(%arg0: i32) -> (i32, i32) {
    %c0_i32 = arith.constant 0 : i32
    %c0_i32_0 = arith.constant 0 : i32
    %c0_i32_1 = arith.constant 0 : i32
    return %c0_i32, %c0_i32_0 : i32, i32
  }
  func.func @transform_3(%arg0: i32) -> (i32, i32) {
    %c0_i32 = arith.constant 0 : i32
    %c0_i32_0 = arith.constant 0 : i32
    %c0_i32_1 = arith.constant 0 : i32
    return %c0_i32, %c0_i32_0 : i32, i32
  }
  func.func @transform_4(%arg0: i32) -> (i32, i32, i32, i32) {
    %c0_i32 = arith.constant 0 : i32
    %c0_i32_0 = arith.constant 0 : i32
    %c0_i32_1 = arith.constant 0 : i32
    %c0_i32_2 = arith.constant 0 : i32
    return %arg0, %c0_i32, %c0_i32_0, %c0_i32_1 : i32, i32, i32, i32
  }
  func.func @transform_5(%arg0: i32) -> (i32, i32, i32, i32) {
    %c0_i32 = arith.constant 0 : i32
    %c0_i32_0 = arith.constant 0 : i32
    %c0_i32_1 = arith.constant 0 : i32
    %c0_i32_2 = arith.constant 0 : i32
    return %arg0, %c0_i32, %c0_i32_0, %c0_i32_1 : i32, i32, i32, i32
  }
  func.func @transform_6(%arg0: i32) -> (i32, i32, i32) {
    %c0_i32 = arith.constant 0 : i32
    %c0_i32_0 = arith.constant 0 : i32
    %c0_i32_1 = arith.constant 0 : i32
    return %arg0, %c0_i32, %c0_i32_0 : i32, i32, i32
  }
}

module attributes {stable_mosaic.version = 11 : i64} {
  func.func @bn2_add_relu_kernel(%arg0: i32, %arg1: memref<1x16x16x128xf32, #tpu.memory_space<vmem>>, %arg2: memref<1x128xf32, #tpu.memory_space<vmem>>, %arg3: memref<1x128xf32, #tpu.memory_space<vmem>>, %arg4: memref<1x16x16x128xf32, #tpu.memory_space<vmem>>, %arg5: memref<1x16x16x128xf32, #tpu.memory_space<vmem>>) attributes {dimension_semantics = [#tpu.dimension_semantics<parallel>], iteration_bounds = array<i64: 2>, scalar_prefetch = 0 : i64, scratch_operands = 0 : i64, tpu.core_type = #tpu.core_type<tc>, window_params = [{transform_indices = @transform_0, window_bounds = array<i64: 1, 16, 16, 128>}, {pipeline_mode = #tpu.pipeline_mode<synchronous>, transform_indices = @transform_1, window_bounds = array<i64: 1, 128>}, {pipeline_mode = #tpu.pipeline_mode<synchronous>, transform_indices = @transform_2, window_bounds = array<i64: 1, 128>}, {transform_indices = @transform_3, window_bounds = array<i64: 1, 16, 16, 128>}, {transform_indices = @transform_4, window_bounds = array<i64: 1, 16, 16, 128>}]} {
    %c0 = arith.constant 0 : index
    %c0_0 = arith.constant 0 : index
    %c0_1 = arith.constant 0 : index
    %c0_2 = arith.constant 0 : index
    %0 = vector.load %arg1[%c0, %c0_0, %c0_1, %c0_2] : memref<1x16x16x128xf32, #tpu.memory_space<vmem>>, vector<1x16x16x128xf32>
    %1 = vector.shape_cast %0 : vector<1x16x16x128xf32> to vector<16x16x128xf32>
    %c0_3 = arith.constant 0 : index
    %c0_4 = arith.constant 0 : index
    %2 = vector.load %arg2[%c0_3, %c0_4] : memref<1x128xf32, #tpu.memory_space<vmem>>, vector<1x128xf32>
    %3 = vector.shape_cast %2 : vector<1x128xf32> to vector<128xf32>
    %4 = vector.shape_cast %3 : vector<128xf32> to vector<1x1x128xf32>
    %5 = vector.broadcast %4 : vector<1x1x128xf32> to vector<16x16x128xf32>
    %6 = arith.mulf %1, %5 : vector<16x16x128xf32>
    %c0_5 = arith.constant 0 : index
    %c0_6 = arith.constant 0 : index
    %7 = vector.load %arg3[%c0_5, %c0_6] : memref<1x128xf32, #tpu.memory_space<vmem>>, vector<1x128xf32>
    %8 = vector.shape_cast %7 : vector<1x128xf32> to vector<128xf32>
    %9 = vector.shape_cast %8 : vector<128xf32> to vector<1x1x128xf32>
    %10 = vector.broadcast %9 : vector<1x1x128xf32> to vector<16x16x128xf32>
    %11 = arith.addf %6, %10 : vector<16x16x128xf32>
    %c0_7 = arith.constant 0 : index
    %c0_8 = arith.constant 0 : index
    %c0_9 = arith.constant 0 : index
    %c0_10 = arith.constant 0 : index
    %12 = vector.load %arg4[%c0_7, %c0_8, %c0_9, %c0_10] : memref<1x16x16x128xf32, #tpu.memory_space<vmem>>, vector<1x16x16x128xf32>
    %13 = vector.shape_cast %12 : vector<1x16x16x128xf32> to vector<16x16x128xf32>
    %14 = arith.addf %11, %13 : vector<16x16x128xf32>
    %cst = arith.constant 0.000000e+00 : f32
    %15 = vector.broadcast %cst : f32 to vector<16x16x128xf32>
    %16 = arith.maximumf %14, %15 : vector<16x16x128xf32>
    %c0_11 = arith.constant 0 : index
    %c0_12 = arith.constant 0 : index
    %c0_13 = arith.constant 0 : index
    %c0_14 = arith.constant 0 : index
    %17 = vector.load %arg5[%c0_11, %c0_12, %c0_13, %c0_14] : memref<1x16x16x128xf32, #tpu.memory_space<vmem>>, vector<1x16x16x128xf32>
    %18 = vector.shape_cast %17 : vector<1x16x16x128xf32> to vector<16x16x128xf32>
    %19 = vector.shape_cast %16 : vector<16x16x128xf32> to vector<1x16x16x128xf32>
    tpu.vector_store %arg5[%c0_11, %c0_12, %c0_13, %c0_14], %19 {strides = array<i32>} : memref<1x16x16x128xf32, #tpu.memory_space<vmem>>, vector<1x16x16x128xf32>,
    return
  }
  func.func @transform_0(%arg0: i32) -> (i32, i32, i32, i32) {
    %c0_i32 = arith.constant 0 : i32
    %c0_i32_0 = arith.constant 0 : i32
    %c0_i32_1 = arith.constant 0 : i32
    %c0_i32_2 = arith.constant 0 : i32
    return %arg0, %c0_i32, %c0_i32_0, %c0_i32_1 : i32, i32, i32, i32
  }
  func.func @transform_1(%arg0: i32) -> (i32, i32) {
    %c0_i32 = arith.constant 0 : i32
    %c0_i32_0 = arith.constant 0 : i32
    %c0_i32_1 = arith.constant 0 : i32
    return %c0_i32, %c0_i32_0 : i32, i32
  }
  func.func @transform_2(%arg0: i32) -> (i32, i32) {
    %c0_i32 = arith.constant 0 : i32
    %c0_i32_0 = arith.constant 0 : i32
    %c0_i32_1 = arith.constant 0 : i32
    return %c0_i32, %c0_i32_0 : i32, i32
  }
  func.func @transform_3(%arg0: i32) -> (i32, i32, i32, i32) {
    %c0_i32 = arith.constant 0 : i32
    %c0_i32_0 = arith.constant 0 : i32
    %c0_i32_1 = arith.constant 0 : i32
    %c0_i32_2 = arith.constant 0 : i32
    return %arg0, %c0_i32, %c0_i32_0, %c0_i32_1 : i32, i32, i32, i32
  }
  func.func @transform_4(%arg0: i32) -> (i32, i32, i32, i32) {
    %c0_i32 = arith.constant 0 : i32
    %c0_i32_0 = arith.constant 0 : i32
    %c0_i32_1 = arith.constant 0 : i32
    %c0_i32_2 = arith.constant 0 : i32
    return %arg0, %c0_i32, %c0_i32_0, %c0_i32_1 : i32, i32, i32, i32
  }
}

</mosaic_0001>

<llo_original>
// kernel: basic_res_block.5
$region0: #{basic_res_block.5}
  #allocation0 [shape = 'u32[]', space=smem, size = 0x4, offset = 0x4, fixed_abs, tag = 'smem constant byte address 0x4 - core index']
  #allocation1 [shape = 'u32[72,128]{1,0:T(1,128)}', space=vmem, size = 0x9000, scoped, tag = 'internal scratch']
  %s0 = inlined_call_operand.vmem [shape: f32[2,16,16,128], index: 0, kind: input, shape index: {}]
  %s1 = inlined_call_operand.vmem [shape: f32[1,128], index: 1, kind: input, shape index: {}]
  %s2 = inlined_call_operand.vmem [shape: f32[1,128], index: 2, kind: input, shape index: {}]
  %s3 = inlined_call_operand.vmem [shape: f32[2,16,16,128], index: 3, kind: input, shape index: {}]
  %s4 = inlined_call_operand.vmem [shape: f32[2,16,16,128], index: 4, kind: output, shape index: {}]
  %s5 = sld [smem:[#allocation0]]
  $region49: #{basic_res_block.5} parent=0
    _
  %s7 = ssub.s32 1, %s5
  %s8 = scalar_select 0, %s7, %s5
  loop: start=0, step=1, limit=4
  $region2: #{basic_res_block.5} parent=0 // loop_pre_header
    _
  $region3: #{basic_res_block.5} parent=0 // loop_header
    %s10 = sphi 0, %s14
    %p11 = scmp.ge.s32.totalorder %s10, 4
    %s20 = sphi 0, %s22
    %s23 = sphi 0, %s20
    %s24 = sphi 0, %s23
    %s40 = sphi 0, %s24
    %s44 = sphi 0, %s44
    %s46 = sphi 0, %s44
    %s47 = sphi 0, %s46
    %s61 = sphi 0, %s47
    %s65 = sphi 0, %s65
    %s67 = sphi 0, %s65
    %s68 = sphi 0, %s67
    %s82 = sphi 0, %s68
    %s88 = sphi 0, %s90
    %s91 = sphi 0, %s88
    %s92 = sphi 0, %s91
    %s108 = sphi 0, %s92
    %s114 = sphi 0, %s116
    %s117 = sphi 0, %s114
    %s118 = sphi 0, %s117
    %s134 = sphi 0, %s118
  $region4: #{basic_res_block.5} parent=0 // loop_header_branch
    %13 = sbr.rel (%p11) target = $region8
  $region5: #{basic_res_block.5} parent=0 // loop_body
    %s15 = ssub.s32 %s10, 1
    %s16 = ssub.s32 %s10, 2
    %s17 = sadd.s32 %s10, 1
    %s18 = ssub.s32 %s10, %s17
    %p19 = scmp.eq.s32.totalorder %s18, 0
    %s21 = sadd.s32 %s20, 1
    %s22 = scalar_select %p19, %s20, %s21
    %p25 = pneg %p19
    %p26 = scmp.eq.s32.totalorder %s10, 1
    %p27 = por %p25, %p26
    %p28 = scmp.ne.s32.totalorder %s20, %s23
    %p29 = scmp.eq.s32.totalorder %s10, 0
    %p30 = por %p28, %p29
    %p31 = scmp.ne.s32.totalorder %s20, %s23
    %p32 = scmp.eq.s32.totalorder %s15, 1
    %p33 = por %p31, %p32
    %p34 = scmp.ne.s32.totalorder %s23, %s24
    %p35 = scmp.eq.s32.totalorder %s15, 0
    %p36 = por %p34, %p35
    %p37 = scmp.ne.s32.totalorder %s23, %s24
    %p38 = scmp.eq.s32.totalorder %s16, 1
    %p39 = por %p37, %p38
    %p41 = scmp.ne.s32.totalorder %s24, %s40
    %p42 = scmp.eq.s32.totalorder %s16, 0
    %p43 = por %p41, %p42
    %s45 = sadd.s32 %s44, 1
    %p48 = scmp.eq.s32.totalorder %s10, 1
    %p49 = scmp.ne.s32.totalorder %s44, %s46
    %p50 = scmp.eq.s32.totalorder %s10, 0
    %p51 = por %p49, %p50
    %p52 = scmp.ne.s32.totalorder %s44, %s46
    %p53 = scmp.eq.s32.totalorder %s15, 1
    %p54 = por %p52, %p53
    %p55 = scmp.ne.s32.totalorder %s46, %s47
    %p56 = scmp.eq.s32.totalorder %s15, 0
    %p57 = por %p55, %p56
    %p58 = scmp.ne.s32.totalorder %s46, %s47
    %p59 = scmp.eq.s32.totalorder %s16, 1
    %p60 = por %p58, %p59
    %p62 = scmp.ne.s32.totalorder %s47, %s61
    %p63 = scmp.eq.s32.totalorder %s16, 0
    %p64 = por %p62, %p63
    %s66 = sadd.s32 %s65, 1
    %p69 = scmp.eq.s32.totalorder %s10, 1
    %p70 = scmp.ne.s32.totalorder %s65, %s67
    %p71 = scmp.eq.s32.totalorder %s10, 0
    %p72 = por %p70, %p71
    %p73 = scmp.ne.s32.totalorder %s65, %s67
    %p74 = scmp.eq.s32.totalorder %s15, 1
    %p75 = por %p73, %p74
    %p76 = scmp.ne.s32.totalorder %s67, %s68
    %p77 = scmp.eq.s32.totalorder %s15, 0
    %p78 = por %p76, %p77
    %p79 = scmp.ne.s32.totalorder %s67, %s68
    %p80 = scmp.eq.s32.totalorder %s16, 1
    %p81 = por %p79, %p80
    %p83 = scmp.ne.s32.totalorder %s68, %s82
    %p84 = scmp.eq.s32.totalorder %s16, 0
    %p85 = por %p83, %p84
    %s86 = ssub.s32 %s10, %s17
    %p87 = scmp.eq.s32.totalorder %s86, 0
    %s89 = sadd.s32 %s88, 1
    %s90 = scalar_select %p87, %s88, %s89
    %p93 = pneg %p87
    %p94 = scmp.eq.s32.totalorder %s10, 1
    %p95 = por %p93, %p94
    %p96 = scmp.ne.s32.totalorder %s88, %s91
    %p97 = scmp.eq.s32.totalorder %s10, 0
    %p98 = por %p96, %p97
    %p99 = scmp.ne.s32.totalorder %s88, %s91
    %p100 = scmp.eq.s32.totalorder %s15, 1
    %p101 = por %p99, %p100
    %p102 = scmp.ne.s32.totalorder %s91, %s92
    %p103 = scmp.eq.s32.totalorder %s15, 0
    %p104 = por %p102, %p103
    %p105 = scmp.ne.s32.totalorder %s91, %s92
    %p106 = scmp.eq.s32.totalorder %s16, 1
    %p107 = por %p105, %p106
    %p109 = scmp.ne.s32.totalorder %s92, %s108
    %p110 = scmp.eq.s32.totalorder %s16, 0
    %p111 = por %p109, %p110
    %s112 = ssub.s32 %s10, %s17
    %p113 = scmp.eq.s32.totalorder %s112, 0
    %s115 = sadd.s32 %s114, 1
    %s116 = scalar_select %p113, %s114, %s115
    %p119 = pneg %p113
    %p120 = scmp.eq.s32.totalorder %s10, 1
    %p121 = por %p119, %p120
    %p122 = scmp.ne.s32.totalorder %s114, %s117
    %p123 = scmp.eq.s32.totalorder %s10, 0
    %p124 = por %p122, %p123
    %p125 = scmp.ne.s32.totalorder %s114, %s117
    %p126 = scmp.eq.s32.totalorder %s15, 1
    %p127 = por %p125, %p126
    %p128 = scmp.ne.s32.totalorder %s117, %s118
    %p129 = scmp.eq.s32.totalorder %s15, 0
    %p130 = por %p128, %p129
    %p131 = scmp.ne.s32.totalorder %s117, %s118
    %p132 = scmp.eq.s32.totalorder %s16, 1
    %p133 = por %p131, %p132
    %p135 = scmp.ne.s32.totalorder %s118, %s134
    %p136 = scmp.eq.s32.totalorder %s16, 0
    %p137 = por %p135, %p136
    %p138 = scmp.le.s32.totalorder 1, %s10
    %p139 = scmp.lt.s32.totalorder %s10, 3
    %p140 = pnand %p138, %p139
    %p141 = pneg %p140
    // Predicated region
    $region9: #{basic_res_block.5} parent=5 // pred_check
      _
    $region10: #{basic_res_block.5} parent=5 // pred_check_branch
      %143 = sbr.rel (%p140) target = $region12
    $region11: #{basic_res_block.5} parent=5 // pred_region
      %s144 = ssub.s32 %s10, 1
      // Predicated region
      $region13: #{basic_res_block.5} parent=11 // pred_check
        %p145 = pneg %p57
      $region14: #{basic_res_block.5} parent=11 // pred_check_branch
        %147 = sbr.rel (%p145) target = $region16
      $region15: #{basic_res_block.5} parent=11 // pred_region
        _
      $region16: #{basic_res_block.5} parent=11 // pred_fallthru
        _
      // Predicated region
      $region17: #{basic_res_block.5} parent=11 // pred_check
        %p148 = pneg %p78
      $region18: #{basic_res_block.5} parent=11 // pred_check_branch
        %150 = sbr.rel (%p148) target = $region20
      $region19: #{basic_res_block.5} parent=11 // pred_region
        _
      $region20: #{basic_res_block.5} parent=11 // pred_fallthru
        _
    $region12: #{basic_res_block.5} parent=5 // pred_fallthru
      _
    %p151 = scmp.lt.s32.totalorder %s10, 2
    // Predicated region
    $region21: #{basic_res_block.5} parent=5 // pred_check
      %p152 = pneg %p151
    $region22: #{basic_res_block.5} parent=5 // pred_check_branch
      %154 = sbr.rel (%p152) target = $region24
    $region23: #{basic_res_block.5} parent=5 // pred_region
      // Predicated region
      $region25: #{basic_res_block.5} parent=23 // pred_check
        %p155 = pneg %p30
      $region26: #{basic_res_block.5} parent=23 // pred_check_branch
        %157 = sbr.rel (%p155) target = $region28
      $region27: #{basic_res_block.5} parent=23 // pred_region
        %p158 = scmp.lt.s32.totalorder %s10, 1
        %s159 = scalar_select %p158, %s10, 1
        %s160 = smul.addr %s159, 32
        %s161 = smul.addr %s160, 8
        %s162 = scalar_lea.vmem %s0, %s161
      $region28: #{basic_res_block.5} parent=23 // pred_fallthru
        _
      // Predicated region
      $region29: #{basic_res_block.5} parent=23 // pred_check
        %p163 = pneg %p98
      $region30: #{basic_res_block.5} parent=23 // pred_check_branch
        %165 = sbr.rel (%p163) target = $region32
      $region31: #{basic_res_block.5} parent=23 // pred_region
        %p166 = scmp.lt.s32.totalorder %s10, 1
        %s167 = scalar_select %p166, %s10, 1
        %s168 = smul.addr %s167, 32
        %s169 = smul.addr %s168, 8
        %s170 = scalar_lea.vmem %s3, %s169
      $region32: #{basic_res_block.5} parent=23 // pred_fallthru
        _
    $region24: #{basic_res_block.5} parent=5 // pred_fallthru
      _
    %p171 = scmp.le.s32.totalorder 1, %s10
    %p172 = scmp.lt.s32.totalorder %s10, 3
    %p173 = pnand %p171, %p172
    %p174 = pneg %p173
    // Predicated region
    $region33: #{basic_res_block.5} parent=5 // pred_check
      _
    $region34: #{basic_res_block.5} parent=5 // pred_check_branch
      %176 = sbr.rel (%p173) target = $region36
    $region35: #{basic_res_block.5} parent=5 // pred_region
      %s177 = ssub.s32 %s10, 1
      %p178 = scmp.lt.s32.totalorder %s15, 1
      %s179 = scalar_select %p178, %s15, 1
      %s180 = smul.addr %s179, 32
      %s181 = smul.addr %s180, 8
      %s182 = scalar_lea.vmem %s0, %s181
      %p183 = pneg %p36
      %p184 = pneg %p33
      %p185 = pneg %p57
      %p186 = pneg %p54
      %p187 = pneg %p78
      %p188 = pneg %p75
      %p189 = scmp.lt.s32.totalorder %s15, 1
      %s190 = scalar_select %p189, %s15, 1
      %s191 = smul.addr %s190, 32
      %s192 = smul.addr %s191, 8
      %s193 = scalar_lea.vmem %s3, %s192
      %p194 = pneg %p104
      %p195 = pneg %p101
      %p196 = pneg %p130
      %p197 = pneg %p127
      %p198 = scmp.lt.s32.totalorder %s15, 1
      %s199 = scalar_select %p198, %s15, 1
      %s200 = smul.addr %s199, 32
      %s201 = smul.addr %s200, 8
      %s202 = scalar_lea.vmem %s4, %s201
      %p203 = scmp.lt.s32.totalorder %s15, 1
      %s204 = scalar_select %p203, %s15, 1
      %s205 = smul.addr %s204, 32
      %s206 = smul.addr %s205, 8
      %s207 = scalar_lea.vmem %s0, %s206
      %p208 = scmp.lt.s32.totalorder %s15, 1
      %s209 = scalar_select %p208, %s15, 1
      %s210 = smul.addr %s209, 32
      %s211 = smul.addr %s210, 8
      %s212 = scalar_lea.vmem %s3, %s211
      %p213 = scmp.lt.s32.totalorder %s15, 1
      %s214 = scalar_select %p213, %s15, 1
      %s215 = smul.addr %s214, 32
      %s216 = smul.addr %s215, 8
      %s217 = scalar_lea.vmem %s4, %s216
      %v218 = vld [vmem:[%s207] sm:$0xff]
      %v219 = vld [vmem:[%s207 + $0x8] sm:$0xff]
      %v220 = vld [vmem:[%s207 + $0x10] sm:$0xff]
      %v221 = vld [vmem:[%s207 + $0x18] sm:$0xff]
      %v222 = vld [vmem:[%s207 + $0x20] sm:$0xff]
      %v223 = vld [vmem:[%s207 + $0x28] sm:$0xff]
      %v224 = vld [vmem:[%s207 + $0x30] sm:$0xff]
      %v225 = vld [vmem:[%s207 + $0x38] sm:$0xff]
      %v226 = vld [vmem:[%s207 + $0x40] sm:$0xff]
      %v227 = vld [vmem:[%s207 + $0x48] sm:$0xff]
      %v228 = vld [vmem:[%s207 + $0x50] sm:$0xff]
      %v229 = vld [vmem:[%s207 + $0x58] sm:$0xff]
      %v230 = vld [vmem:[%s207 + $0x60] sm:$0xff]
      %v231 = vld [vmem:[%s207 + $0x68] sm:$0xff]
      %v232 = vld [vmem:[%s207 + $0x70] sm:$0xff]
      %v233 = vld [vmem:[%s207 + $0x78] sm:$0xff]
      %v234 = vld [vmem:[%s207 + $0x80] sm:$0xff]
      %v235 = vld [vmem:[%s207 + $0x88] sm:$0xff]
      %v236 = vld [vmem:[%s207 + $0x90] sm:$0xff]
      %v237 = vld [vmem:[%s207 + $0x98] sm:$0xff]
      %v238 = vld [vmem:[%s207 + $0xa0] sm:$0xff]
      %v239 = vld [vmem:[%s207 + $0xa8] sm:$0xff]
      %v240 = vld [vmem:[%s207 + $0xb0] sm:$0xff]
      %v241 = vld [vmem:[%s207 + $0xb8] sm:$0xff]
      %v242 = vld [vmem:[%s207 + $0xc0] sm:$0xff]
      %v243 = vld [vmem:[%s207 + $0xc8] sm:$0xff]
      %v244 = vld [vmem:[%s207 + $0xd0] sm:$0xff]
      %v245 = vld [vmem:[%s207 + $0xd8] sm:$0xff]
      %v246 = vld [vmem:[%s207 + $0xe0] sm:$0xff]
      %v247 = vld [vmem:[%s207 + $0xe8] sm:$0xff]
      %v248 = vld [vmem:[%s207 + $0xf0] sm:$0xff]
      %v249 = vld [vmem:[%s207 + $0xf8] sm:$0xff]
      %v250 = vld [vmem:[%s1] sm:$0x1]
      %v252 = vperm.slane %v250, 0
      %v254 = vmul.f32 %v218, %v252
      %v255 = vmul.f32 %v219, %v252
      %v256 = vmul.f32 %v220, %v252
      %v257 = vmul.f32 %v221, %v252
      %v258 = vmul.f32 %v222, %v252
      %v259 = vmul.f32 %v223, %v252
      %v260 = vmul.f32 %v224, %v252
      %v261 = vmul.f32 %v225, %v252
      %v262 = vmul.f32 %v226, %v252
      %v263 = vmul.f32 %v227, %v252
      %v264 = vmul.f32 %v228, %v252
      %v265 = vmul.f32 %v229, %v252
      %v266 = vmul.f32 %v230, %v252
      %v267 = vmul.f32 %v231, %v252
      %v268 = vmul.f32 %v232, %v252
      %v269 = vmul.f32 %v233, %v252
      %v270 = vmul.f32 %v234, %v252
      %v271 = vmul.f32 %v235, %v252
      %v272 = vmul.f32 %v236, %v252
      %v273 = vmul.f32 %v237, %v252
      %v274 = vmul.f32 %v238, %v252
      %v275 = vmul.f32 %v239, %v252
      %v276 = vmul.f32 %v240, %v252
      %v277 = vmul.f32 %v241, %v252
      %v278 = vmul.f32 %v242, %v252
      %v279 = vmul.f32 %v243, %v252
      %v280 = vmul.f32 %v244, %v252
      %v281 = vmul.f32 %v245, %v252
      %v282 = vmul.f32 %v246, %v252
      %v283 = vmul.f32 %v247, %v252
      %v284 = vmul.f32 %v248, %v252
      %v285 = vmul.f32 %v249, %v252
      %v286 = vld [vmem:[%s2] sm:$0x1]
      %v288 = vperm.slane %v286, 0
      %v290 = vadd.f32 %v254, %v288
      %v291 = vadd.f32 %v255, %v288
      %v292 = vadd.f32 %v256, %v288
      %v293 = vadd.f32 %v257, %v288
      %v294 = vadd.f32 %v258, %v288
      %v295 = vadd.f32 %v259, %v288
      %v296 = vadd.f32 %v260, %v288
      %v297 = vadd.f32 %v261, %v288
      %v298 = vadd.f32 %v262, %v288
      %v299 = vadd.f32 %v263, %v288
      %v300 = vadd.f32 %v264, %v288
      %v301 = vadd.f32 %v265, %v288
      %v302 = vadd.f32 %v266, %v288
      %v303 = vadd.f32 %v267, %v288
      %v304 = vadd.f32 %v268, %v288
      %v305 = vadd.f32 %v269, %v288
      %v306 = vadd.f32 %v270, %v288
      %v307 = vadd.f32 %v271, %v288
      %v308 = vadd.f32 %v272, %v288
      %v309 = vadd.f32 %v273, %v288
      %v310 = vadd.f32 %v274, %v288
      %v311 = vadd.f32 %v275, %v288
      %v312 = vadd.f32 %v276, %v288
      %v313 = vadd.f32 %v277, %v288
      %v314 = vadd.f32 %v278, %v288
      %v315 = vadd.f32 %v279, %v288
      %v316 = vadd.f32 %v280, %v288
      %v317 = vadd.f32 %v281, %v288
      %v318 = vadd.f32 %v282, %v288
      %v319 = vadd.f32 %v283, %v288
      %v320 = vadd.f32 %v284, %v288
      %v321 = vadd.f32 %v285, %v288
      %v322 = vld [vmem:[%s212] sm:$0xff]
      %v323 = vld [vmem:[%s212 + $0x8] sm:$0xff]
      %v324 = vld [vmem:[%s212 + $0x10] sm:$0xff]
      %v325 = vld [vmem:[%s212 + $0x18] sm:$0xff]
      %v326 = vld [vmem:[%s212 + $0x20] sm:$0xff]
      %v327 = vld [vmem:[%s212 + $0x28] sm:$0xff]
      %v328 = vld [vmem:[%s212 + $0x30] sm:$0xff]
      %v329 = vld [vmem:[%s212 + $0x38] sm:$0xff]
      %v330 = vld [vmem:[%s212 + $0x40] sm:$0xff]
      %v331 = vld [vmem:[%s212 + $0x48] sm:$0xff]
      %v332 = vld [vmem:[%s212 + $0x50] sm:$0xff]
      %v333 = vld [vmem:[%s212 + $0x58] sm:$0xff]
      %v334 = vld [vmem:[%s212 + $0x60] sm:$0xff]
      %v335 = vld [vmem:[%s212 + $0x68] sm:$0xff]
      %v336 = vld [vmem:[%s212 + $0x70] sm:$0xff]
      %v337 = vld [vmem:[%s212 + $0x78] sm:$0xff]
      %v338 = vld [vmem:[%s212 + $0x80] sm:$0xff]
      %v339 = vld [vmem:[%s212 + $0x88] sm:$0xff]
      %v340 = vld [vmem:[%s212 + $0x90] sm:$0xff]
      %v341 = vld [vmem:[%s212 + $0x98] sm:$0xff]
      %v342 = vld [vmem:[%s212 + $0xa0] sm:$0xff]
      %v343 = vld [vmem:[%s212 + $0xa8] sm:$0xff]
      %v344 = vld [vmem:[%s212 + $0xb0] sm:$0xff]
      %v345 = vld [vmem:[%s212 + $0xb8] sm:$0xff]
      %v346 = vld [vmem:[%s212 + $0xc0] sm:$0xff]
      %v347 = vld [vmem:[%s212 + $0xc8] sm:$0xff]
      %v348 = vld [vmem:[%s212 + $0xd0] sm:$0xff]
      %v349 = vld [vmem:[%s212 + $0xd8] sm:$0xff]
      %v350 = vld [vmem:[%s212 + $0xe0] sm:$0xff]
      %v351 = vld [vmem:[%s212 + $0xe8] sm:$0xff]
      %v352 = vld [vmem:[%s212 + $0xf0] sm:$0xff]
      %v353 = vld [vmem:[%s212 + $0xf8] sm:$0xff]
      %v354 = vadd.f32 %v290, %v322
      %v355 = vadd.f32 %v291, %v323
      %v356 = vadd.f32 %v292, %v324
      %v357 = vadd.f32 %v293, %v325
      %v358 = vadd.f32 %v294, %v326
      %v359 = vadd.f32 %v295, %v327
      %v360 = vadd.f32 %v296, %v328
      %v361 = vadd.f32 %v297, %v329
      %v362 = vadd.f32 %v298, %v330
      %v363 = vadd.f32 %v299, %v331
      %v364 = vadd.f32 %v300, %v332
      %v365 = vadd.f32 %v301, %v333
      %v366 = vadd.f32 %v302, %v334
      %v367 = vadd.f32 %v303, %v335
      %v368 = vadd.f32 %v304, %v336
      %v369 = vadd.f32 %v305, %v337
      %v370 = vadd.f32 %v306, %v338
      %v371 = vadd.f32 %v307, %v339
      %v372 = vadd.f32 %v308, %v340
      %v373 = vadd.f32 %v309, %v341
      %v374 = vadd.f32 %v310, %v342
      %v375 = vadd.f32 %v311, %v343
      %v376 = vadd.f32 %v312, %v344
      %v377 = vadd.f32 %v313, %v345
      %v378 = vadd.f32 %v314, %v346
      %v379 = vadd.f32 %v315, %v347
      %v380 = vadd.f32 %v316, %v348
      %v381 = vadd.f32 %v317, %v349
      %v382 = vadd.f32 %v318, %v350
      %v383 = vadd.f32 %v319, %v351
      %v384 = vadd.f32 %v320, %v352
      %v385 = vadd.f32 %v321, %v353
      %v386 = vmax.f32 %v354, 0.0
      %v387 = vmax.f32 %v355, 0.0
      %v388 = vmax.f32 %v356, 0.0
      %v389 = vmax.f32 %v357, 0.0
      %v390 = vmax.f32 %v358, 0.0
      %v391 = vmax.f32 %v359, 0.0
      %v392 = vmax.f32 %v360, 0.0
      %v393 = vmax.f32 %v361, 0.0
      %v394 = vmax.f32 %v362, 0.0
      %v395 = vmax.f32 %v363, 0.0
      %v396 = vmax.f32 %v364, 0.0
      %v397 = vmax.f32 %v365, 0.0
      %v398 = vmax.f32 %v366, 0.0
      %v399 = vmax.f32 %v367, 0.0
      %v400 = vmax.f32 %v368, 0.0
      %v401 = vmax.f32 %v369, 0.0
      %v402 = vmax.f32 %v370, 0.0
      %v403 = vmax.f32 %v371, 0.0
      %v404 = vmax.f32 %v372, 0.0
      %v405 = vmax.f32 %v373, 0.0
      %v406 = vmax.f32 %v374, 0.0
      %v407 = vmax.f32 %v375, 0.0
      %v408 = vmax.f32 %v376, 0.0
      %v409 = vmax.f32 %v377, 0.0
      %v410 = vmax.f32 %v378, 0.0
      %v411 = vmax.f32 %v379, 0.0
      %v412 = vmax.f32 %v380, 0.0
      %v413 = vmax.f32 %v381, 0.0
      %v414 = vmax.f32 %v382, 0.0
      %v415 = vmax.f32 %v383, 0.0
      %v416 = vmax.f32 %v384, 0.0
      %v417 = vmax.f32 %v385, 0.0
      %418 = vst [vmem:[%s217] sm:$0xff] %v386
      %419 = vst [vmem:[%s217 + $0x8] sm:$0xff] %v387
      %420 = vst [vmem:[%s217 + $0x10] sm:$0xff] %v388
      %421 = vst [vmem:[%s217 + $0x18] sm:$0xff] %v389
      %422 = vst [vmem:[%s217 + $0x20] sm:$0xff] %v390
      %423 = vst [vmem:[%s217 + $0x28] sm:$0xff] %v391
      %424 = vst [vmem:[%s217 + $0x30] sm:$0xff] %v392
      %425 = vst [vmem:[%s217 + $0x38] sm:$0xff] %v393
      %426 = vst [vmem:[%s217 + $0x40] sm:$0xff] %v394
      %427 = vst [vmem:[%s217 + $0x48] sm:$0xff] %v395
      %428 = vst [vmem:[%s217 + $0x50] sm:$0xff] %v396
      %429 = vst [vmem:[%s217 + $0x58] sm:$0xff] %v397
      %430 = vst [vmem:[%s217 + $0x60] sm:$0xff] %v398
      %431 = vst [vmem:[%s217 + $0x68] sm:$0xff] %v399
      %432 = vst [vmem:[%s217 + $0x70] sm:$0xff] %v400
      %433 = vst [vmem:[%s217 + $0x78] sm:$0xff] %v401
      %434 = vst [vmem:[%s217 + $0x80] sm:$0xff] %v402
      %435 = vst [vmem:[%s217 + $0x88] sm:$0xff] %v403
      %436 = vst [vmem:[%s217 + $0x90] sm:$0xff] %v404
      %437 = vst [vmem:[%s217 + $0x98] sm:$0xff] %v405
      %438 = vst [vmem:[%s217 + $0xa0] sm:$0xff] %v406
      %439 = vst [vmem:[%s217 + $0xa8] sm:$0xff] %v407
      %440 = vst [vmem:[%s217 + $0xb0] sm:$0xff] %v408
      %441 = vst [vmem:[%s217 + $0xb8] sm:$0xff] %v409
      %442 = vst [vmem:[%s217 + $0xc0] sm:$0xff] %v410
      %443 = vst [vmem:[%s217 + $0xc8] sm:$0xff] %v411
      %444 = vst [vmem:[%s217 + $0xd0] sm:$0xff] %v412
      %445 = vst [vmem:[%s217 + $0xd8] sm:$0xff] %v413
      %446 = vst [vmem:[%s217 + $0xe0] sm:$0xff] %v414
      %447 = vst [vmem:[%s217 + $0xe8] sm:$0xff] %v415
      %448 = vst [vmem:[%s217 + $0xf0] sm:$0xff] %v416
      %449 = vst [vmem:[%s217 + $0xf8] sm:$0xff] %v417
      %p450 = scmp.lt.s32.totalorder %s15, 1
      %s451 = scalar_select %p450, %s15, 1
      %s452 = smul.addr %s451, 32
      %s453 = smul.addr %s452, 8
      %s454 = scalar_lea.vmem %s4, %s453
      // Predicated region
      $region37: #{basic_res_block.5} parent=35 // pred_check
        %p455 = pneg %p127
      $region38: #{basic_res_block.5} parent=35 // pred_check_branch
        %457 = sbr.rel (%p455) target = $region40
      $region39: #{basic_res_block.5} parent=35 // pred_region
        _
      $region40: #{basic_res_block.5} parent=35 // pred_fallthru
        _
    $region36: #{basic_res_block.5} parent=5 // pred_fallthru
      _
    %p458 = scmp.le.s32.totalorder 2, %s10
    // Predicated region
    $region41: #{basic_res_block.5} parent=5 // pred_check
      %p459 = pneg %p458
    $region42: #{basic_res_block.5} parent=5 // pred_check_branch
      %461 = sbr.rel (%p459) target = $region44
    $region43: #{basic_res_block.5} parent=5 // pred_region
      %s462 = ssub.s32 %s10, 2
      // Predicated region
      $region45: #{basic_res_block.5} parent=43 // pred_check
        %p463 = pneg %p133
      $region46: #{basic_res_block.5} parent=43 // pred_check_branch
        %465 = sbr.rel (%p463) target = $region48
      $region47: #{basic_res_block.5} parent=43 // pred_region
        %p466 = scmp.lt.s32.totalorder %s16, 1
        %s467 = scalar_select %p466, %s16, 1
        %s468 = smul.addr %s467, 32
        %s469 = smul.addr %s468, 8
        %s470 = scalar_lea.vmem %s4, %s469
      $region48: #{basic_res_block.5} parent=43 // pred_fallthru
        _
    $region44: #{basic_res_block.5} parent=5 // pred_fallthru
      _
  $region6: #{basic_res_block.5} parent=0 // loop_footer
    %s14 = sadd.s32 1, %s10
  $region7: #{basic_res_block.5} parent=0 // loop_footer_branch
    %9 = sbr.rel target = $region3
  $region8: #{basic_res_block.5} parent=0 // loop_exit
    _

// kernel: basic_res_block.4
$region0: #{basic_res_block.4}
  #allocation0 [shape = 'u32[]', space=smem, size = 0x4, offset = 0x4, fixed_abs, tag = 'smem constant byte address 0x4 - core index']
  #allocation1 [shape = 'u32[72,128]{1,0:T(1,128)}', space=vmem, size = 0x9000, scoped, tag = 'internal scratch']
  #allocation2 [shape = 'bf16[18,18,128]{2,1,0:T(8,128)(2,1)}', space=vmem, size = 0x1b000, scoped, tag = 'scratch operand']
  %s0 = inlined_call_operand.vmem [shape: f32[2,16,16,128], index: 0, kind: input, shape index: {}]
  %s1 = inlined_call_operand.vmem [shape: f32[1,128], index: 1, kind: input, shape index: {}]
  %s2 = inlined_call_operand.vmem [shape: f32[1,128], index: 2, kind: input, shape index: {}]
  %s3 = inlined_call_operand.vmem [shape: bf16[3,3,128,128], index: 3, kind: input, shape index: {}]
  %s4 = inlined_call_operand.vmem [shape: f32[2,16,16,128], index: 4, kind: output, shape index: {0}]
  %s5 = inlined_call_operand.vmem [shape: f32[2,2,128], index: 5, kind: output, shape index: {1}]
  %6 = xla_tuple %s4, %s5
  %s7 = sld [smem:[#allocation0]]
  $region57: #{basic_res_block.4} parent=0
    _
  %s9 = ssub.s32 1, %s7
  %s10 = scalar_select 0, %s9, %s7
  loop: start=0, step=1, limit=4
  $region2: #{basic_res_block.4} parent=0 // loop_pre_header
    _
  $region3: #{basic_res_block.4} parent=0 // loop_header
    %s12 = sphi 0, %s16
    %p13 = scmp.ge.s32.totalorder %s12, 4
    %s22 = sphi 0, %s24
    %s25 = sphi 0, %s22
    %s26 = sphi 0, %s25
    %s42 = sphi 0, %s26
    %s46 = sphi 0, %s46
    %s48 = sphi 0, %s46
    %s49 = sphi 0, %s48
    %s63 = sphi 0, %s49
    %s67 = sphi 0, %s67
    %s69 = sphi 0, %s67
    %s70 = sphi 0, %s69
    %s84 = sphi 0, %s70
    %s88 = sphi 0, %s88
    %s90 = sphi 0, %s88
    %s91 = sphi 0, %s90
    %s105 = sphi 0, %s91
    %s111 = sphi 0, %s113
    %s114 = sphi 0, %s111
    %s115 = sphi 0, %s114
    %s131 = sphi 0, %s115
    %s137 = sphi 0, %s139
    %s140 = sphi 0, %s137
    %s141 = sphi 0, %s140
    %s157 = sphi 0, %s141
  $region4: #{basic_res_block.4} parent=0 // loop_header_branch
    %15 = sbr.rel (%p13) target = $region8
  $region5: #{basic_res_block.4} parent=0 // loop_body
    %s17 = ssub.s32 %s12, 1
    %s18 = ssub.s32 %s12, 2
    %s19 = sadd.s32 %s12, 1
    %s20 = ssub.s32 %s12, %s19
    %p21 = scmp.eq.s32.totalorder %s20, 0
    %s23 = sadd.s32 %s22, 1
    %s24 = scalar_select %p21, %s22, %s23
    %p27 = pneg %p21
    %p28 = scmp.eq.s32.totalorder %s12, 1
    %p29 = por %p27, %p28
    %p30 = scmp.ne.s32.totalorder %s22, %s25
    %p31 = scmp.eq.s32.totalorder %s12, 0
    %p32 = por %p30, %p31
    %p33 = scmp.ne.s32.totalorder %s22, %s25
    %p34 = scmp.eq.s32.totalorder %s17, 1
    %p35 = por %p33, %p34
    %p36 = scmp.ne.s32.totalorder %s25, %s26
    %p37 = scmp.eq.s32.totalorder %s17, 0
    %p38 = por %p36, %p37
    %p39 = scmp.ne.s32.totalorder %s25, %s26
    %p40 = scmp.eq.s32.totalorder %s18, 1
    %p41 = por %p39, %p40
    %p43 = scmp.ne.s32.totalorder %s26, %s42
    %p44 = scmp.eq.s32.totalorder %s18, 0
    %p45 = por %p43, %p44
    %s47 = sadd.s32 %s46, 1
    %p50 = scmp.eq.s32.totalorder %s12, 1
    %p51 = scmp.ne.s32.totalorder %s46, %s48
    %p52 = scmp.eq.s32.totalorder %s12, 0
    %p53 = por %p51, %p52
    %p54 = scmp.ne.s32.totalorder %s46, %s48
    %p55 = scmp.eq.s32.totalorder %s17, 1
    %p56 = por %p54, %p55
    %p57 = scmp.ne.s32.totalorder %s48, %s49
    %p58 = scmp.eq.s32.totalorder %s17, 0
    %p59 = por %p57, %p58
    %p60 = scmp.ne.s32.totalorder %s48, %s49
    %p61 = scmp.eq.s32.totalorder %s18, 1
    %p62 = por %p60, %p61
    %p64 = scmp.ne.s32.totalorder %s49, %s63
    %p65 = scmp.eq.s32.totalorder %s18, 0
    %p66 = por %p64, %p65
    %s68 = sadd.s32 %s67, 1
    %p71 = scmp.eq.s32.totalorder %s12, 1
    %p72 = scmp.ne.s32.totalorder %s67, %s69
    %p73 = scmp.eq.s32.totalorder %s12, 0
    %p74 = por %p72, %p73
    %p75 = scmp.ne.s32.totalorder %s67, %s69
    %p76 = scmp.eq.s32.totalorder %s17, 1
    %p77 = por %p75, %p76
    %p78 = scmp.ne.s32.totalorder %s69, %s70
    %p79 = scmp.eq.s32.totalorder %s17, 0
    %p80 = por %p78, %p79
    %p81 = scmp.ne.s32.totalorder %s69, %s70
    %p82 = scmp.eq.s32.totalorder %s18, 1
    %p83 = por %p81, %p82
    %p85 = scmp.ne.s32.totalorder %s70, %s84
    %p86 = scmp.eq.s32.totalorder %s18, 0
    %p87 = por %p85, %p86
    %s89 = sadd.s32 %s88, 1
    %p92 = scmp.eq.s32.totalorder %s12, 1
    %p93 = scmp.ne.s32.totalorder %s88, %s90
    %p94 = scmp.eq.s32.totalorder %s12, 0
    %p95 = por %p93, %p94
    %p96 = scmp.ne.s32.totalorder %s88, %s90
    %p97 = scmp.eq.s32.totalorder %s17, 1
    %p98 = por %p96, %p97
    %p99 = scmp.ne.s32.totalorder %s90, %s91
    %p100 = scmp.eq.s32.totalorder %s17, 0
    %p101 = por %p99, %p100
    %p102 = scmp.ne.s32.totalorder %s90, %s91
    %p103 = scmp.eq.s32.totalorder %s18, 1
    %p104 = por %p102, %p103
    %p106 = scmp.ne.s32.totalorder %s91, %s105
    %p107 = scmp.eq.s32.totalorder %s18, 0
    %p108 = por %p106, %p107
    %s109 = ssub.s32 %s12, %s19
    %p110 = scmp.eq.s32.totalorder %s109, 0
    %s112 = sadd.s32 %s111, 1
    %s113 = scalar_select %p110, %s111, %s112
    %p116 = pneg %p110
    %p117 = scmp.eq.s32.totalorder %s12, 1
    %p118 = por %p116, %p117
    %p119 = scmp.ne.s32.totalorder %s111, %s114
    %p120 = scmp.eq.s32.totalorder %s12, 0
    %p121 = por %p119, %p120
    %p122 = scmp.ne.s32.totalorder %s111, %s114
    %p123 = scmp.eq.s32.totalorder %s17, 1
    %p124 = por %p122, %p123
    %p125 = scmp.ne.s32.totalorder %s114, %s115
    %p126 = scmp.eq.s32.totalorder %s17, 0
    %p127 = por %p125, %p126
    %p128 = scmp.ne.s32.totalorder %s114, %s115
    %p129 = scmp.eq.s32.totalorder %s18, 1
    %p130 = por %p128, %p129
    %p132 = scmp.ne.s32.totalorder %s115, %s131
    %p133 = scmp.eq.s32.totalorder %s18, 0
    %p134 = por %p132, %p133
    %s135 = ssub.s32 %s12, %s19
    %p136 = scmp.eq.s32.totalorder %s135, 0
    %s138 = sadd.s32 %s137, 1
    %s139 = scalar_select %p136, %s137, %s138
    %p142 = pneg %p136
    %p143 = scmp.eq.s32.totalorder %s12, 1
    %p144 = por %p142, %p143
    %p145 = scmp.ne.s32.totalorder %s137, %s140
    %p146 = scmp.eq.s32.totalorder %s12, 0
    %p147 = por %p145, %p146
    %p148 = scmp.ne.s32.totalorder %s137, %s140
    %p149 = scmp.eq.s32.totalorder %s17, 1
    %p150 = por %p148, %p149
    %p151 = scmp.ne.s32.totalorder %s140, %s141
    %p152 = scmp.eq.s32.totalorder %s17, 0
    %p153 = por %p151, %p152
    %p154 = scmp.ne.s32.totalorder %s140, %s141
    %p155 = scmp.eq.s32.totalorder %s18, 1
    %p156 = por %p154, %p155
    %p158 = scmp.ne.s32.totalorder %s141, %s157
    %p159 = scmp.eq.s32.totalorder %s18, 0
    %p160 = por %p158, %p159
    %p161 = scmp.le.s32.totalorder 1, %s12
    %p162 = scmp.lt.s32.totalorder %s12, 3
    %p163 = pnand %p161, %p162
    %p164 = pneg %p163
    // Predicated region
    $region9: #{basic_res_block.4} parent=5 // pred_check
      _
    $region10: #{basic_res_block.4} parent=5 // pred_check_branch
      %166 = sbr.rel (%p163) target = $region12
    $region11: #{basic_res_block.4} parent=5 // pred_region
      %s167 = ssub.s32 %s12, 1
      // Predicated region
      $region13: #{basic_res_block.4} parent=11 // pred_check
        %p168 = pneg %p59
      $region14: #{basic_res_block.4} parent=11 // pred_check_branch
        %170 = sbr.rel (%p168) target = $region16
      $region15: #{basic_res_block.4} parent=11 // pred_region
        _
      $region16: #{basic_res_block.4} parent=11 // pred_fallthru
        _
      // Predicated region
      $region17: #{basic_res_block.4} parent=11 // pred_check
        %p171 = pneg %p80
      $region18: #{basic_res_block.4} parent=11 // pred_check_branch
        %173 = sbr.rel (%p171) target = $region20
      $region19: #{basic_res_block.4} parent=11 // pred_region
        _
      $region20: #{basic_res_block.4} parent=11 // pred_fallthru
        _
      // Predicated region
      $region21: #{basic_res_block.4} parent=11 // pred_check
        %p174 = pneg %p101
      $region22: #{basic_res_block.4} parent=11 // pred_check_branch
        %176 = sbr.rel (%p174) target = $region24
      $region23: #{basic_res_block.4} parent=11 // pred_region
        _
      $region24: #{basic_res_block.4} parent=11 // pred_fallthru
        _
    $region12: #{basic_res_block.4} parent=5 // pred_fallthru
      _
    %p177 = scmp.lt.s32.totalorder %s12, 2
    // Predicated region
    $region25: #{basic_res_block.4} parent=5 // pred_check
      %p178 = pneg %p177
    $region26: #{basic_res_block.4} parent=5 // pred_check_branch
      %180 = sbr.rel (%p178) target = $region28
    $region27: #{basic_res_block.4} parent=5 // pred_region
      // Predicated region
      $region29: #{basic_res_block.4} parent=27 // pred_check
        %p181 = pneg %p32
      $region30: #{basic_res_block.4} parent=27 // pred_check_branch
        %183 = sbr.rel (%p181) target = $region32
      $region31: #{basic_res_block.4} parent=27 // pred_region
        %p184 = scmp.lt.s32.totalorder %s12, 1
        %s185 = scalar_select %p184, %s12, 1
        %s186 = smul.addr %s185, 32
        %s187 = smul.addr %s186, 8
        %s188 = scalar_lea.vmem %s0, %s187
      $region32: #{basic_res_block.4} parent=27 // pred_fallthru
        _
    $region28: #{basic_res_block.4} parent=5 // pred_fallthru
      _
    %p189 = scmp.le.s32.totalorder 1, %s12
    %p190 = scmp.lt.s32.totalorder %s12, 3
    %p191 = pnand %p189, %p190
    %p192 = pneg %p191
    // Predicated region
    $region33: #{basic_res_block.4} parent=5 // pred_check
      _
    $region34: #{basic_res_block.4} parent=5 // pred_check_branch
      %194 = sbr.rel (%p191) target = $region36
    $region35: #{basic_res_block.4} parent=5 // pred_region
      %s195 = ssub.s32 %s12, 1
      %p196 = scmp.lt.s32.totalorder %s17, 1
      %s197 = scalar_select %p196, %s17, 1
      %s198 = smul.addr %s197, 32
      %s199 = smul.addr %s198, 8
      %s200 = scalar_lea.vmem %s0, %s199
      %p201 = pneg %p38
      %p202 = pneg %p35
      %p203 = pneg %p59
      %p204 = pneg %p56
      %p205 = pneg %p80
      %p206 = pneg %p77
      %p207 = pneg %p101
      %p208 = pneg %p98
      %p209 = pneg %p127
      %p210 = pneg %p124
      %p211 = scmp.lt.s32.totalorder %s17, 1
      %s212 = scalar_select %p211, %s17, 1
      %s213 = smul.addr %s212, 32
      %s214 = smul.addr %s213, 8
      %s215 = scalar_lea.vmem %s4, %s214
      %p216 = pneg %p153
      %p217 = pneg %p150
      %p218 = scmp.lt.s32.totalorder %s17, 1
      %s219 = scalar_select %p218, %s17, 1
      %s220 = smul.addr %s219, 2
      %s221 = scalar_lea.vmem %s5, %s220
      %p222 = scmp.lt.s32.totalorder %s17, 1
      %s223 = scalar_select %p222, %s17, 1
      %s224 = smul.addr %s223, 32
      %s225 = smul.addr %s224, 8
      %s226 = scalar_lea.vmem %s0, %s225
      %p227 = scmp.lt.s32.totalorder %s17, 1
      %s228 = scalar_select %p227, %s17, 1
      %s229 = smul.addr %s228, 32
      %s230 = smul.addr %s229, 8
      %s231 = scalar_lea.vmem %s4, %s230
      %p232 = scmp.lt.s32.totalorder %s17, 1
      %s233 = scalar_select %p232, %s17, 1
      %s234 = smul.addr %s233, 2
      %s235 = scalar_lea.vmem %s5, %s234
      %v237 = vld [vmem:[%s226] sm:$0xff]
      %v238 = vld [vmem:[%s226 + $0x8] sm:$0xff]
      %v239 = vld [vmem:[%s226 + $0x10] sm:$0xff]
      %v240 = vld [vmem:[%s226 + $0x18] sm:$0xff]
      %v241 = vld [vmem:[%s226 + $0x20] sm:$0xff]
      %v242 = vld [vmem:[%s226 + $0x28] sm:$0xff]
      %v243 = vld [vmem:[%s226 + $0x30] sm:$0xff]
      %v244 = vld [vmem:[%s226 + $0x38] sm:$0xff]
      %v245 = vld [vmem:[%s226 + $0x40] sm:$0xff]
      %v246 = vld [vmem:[%s226 + $0x48] sm:$0xff]
      %v247 = vld [vmem:[%s226 + $0x50] sm:$0xff]
      %v248 = vld [vmem:[%s226 + $0x58] sm:$0xff]
      %v249 = vld [vmem:[%s226 + $0x60] sm:$0xff]
      %v250 = vld [vmem:[%s226 + $0x68] sm:$0xff]
      %v251 = vld [vmem:[%s226 + $0x70] sm:$0xff]
      %v252 = vld [vmem:[%s226 + $0x78] sm:$0xff]
      %v253 = vld [vmem:[%s226 + $0x80] sm:$0xff]
      %v254 = vld [vmem:[%s226 + $0x88] sm:$0xff]
      %v255 = vld [vmem:[%s226 + $0x90] sm:$0xff]
      %v256 = vld [vmem:[%s226 + $0x98] sm:$0xff]
      %v257 = vld [vmem:[%s226 + $0xa0] sm:$0xff]
      %v258 = vld [vmem:[%s226 + $0xa8] sm:$0xff]
      %v259 = vld [vmem:[%s226 + $0xb0] sm:$0xff]
      %v260 = vld [vmem:[%s226 + $0xb8] sm:$0xff]
      %v261 = vld [vmem:[%s226 + $0xc0] sm:$0xff]
      %v262 = vld [vmem:[%s226 + $0xc8] sm:$0xff]
      %v263 = vld [vmem:[%s226 + $0xd0] sm:$0xff]
      %v264 = vld [vmem:[%s226 + $0xd8] sm:$0xff]
      %v265 = vld [vmem:[%s226 + $0xe0] sm:$0xff]
      %v266 = vld [vmem:[%s226 + $0xe8] sm:$0xff]
      %v267 = vld [vmem:[%s226 + $0xf0] sm:$0xff]
      %v268 = vld [vmem:[%s226 + $0xf8] sm:$0xff]
      %v269 = vld [vmem:[%s1] sm:$0x1]
      %v271 = vperm.slane %v269, 0
      %v273 = vmul.f32 %v237, %v271
      %v274 = vmul.f32 %v238, %v271
      %v275 = vmul.f32 %v239, %v271
      %v276 = vmul.f32 %v240, %v271
      %v277 = vmul.f32 %v241, %v271
      %v278 = vmul.f32 %v242, %v271
      %v279 = vmul.f32 %v243, %v271
      %v280 = vmul.f32 %v244, %v271
      %v281 = vmul.f32 %v245, %v271
      %v282 = vmul.f32 %v246, %v271
      %v283 = vmul.f32 %v247, %v271
      %v284 = vmul.f32 %v248, %v271
      %v285 = vmul.f32 %v249, %v271
      %v286 = vmul.f32 %v250, %v271
      %v287 = vmul.f32 %v251, %v271
      %v288 = vmul.f32 %v252, %v271
      %v289 = vmul.f32 %v253, %v271
      %v290 = vmul.f32 %v254, %v271
      %v291 = vmul.f32 %v255, %v271
      %v292 = vmul.f32 %v256, %v271
      %v293 = vmul.f32 %v257, %v271
      %v294 = vmul.f32 %v258, %v271
      %v295 = vmul.f32 %v259, %v271
      %v296 = vmul.f32 %v260, %v271
      %v297 = vmul.f32 %v261, %v271
      %v298 = vmul.f32 %v262, %v271
      %v299 = vmul.f32 %v263, %v271
      %v300 = vmul.f32 %v264, %v271
      %v301 = vmul.f32 %v265, %v271
      %v302 = vmul.f32 %v266, %v271
      %v303 = vmul.f32 %v267, %v271
      %v304 = vmul.f32 %v268, %v271
      %v305 = vld [vmem:[%s2] sm:$0x1]
      %v307 = vperm.slane %v305, 0
      %v309 = vadd.f32 %v273, %v307
      %v310 = vadd.f32 %v274, %v307
      %v311 = vadd.f32 %v275, %v307
      %v312 = vadd.f32 %v276, %v307
      %v313 = vadd.f32 %v277, %v307
      %v314 = vadd.f32 %v278, %v307
      %v315 = vadd.f32 %v279, %v307
      %v316 = vadd.f32 %v280, %v307
      %v317 = vadd.f32 %v281, %v307
      %v318 = vadd.f32 %v282, %v307
      %v319 = vadd.f32 %v283, %v307
      %v320 = vadd.f32 %v284, %v307
      %v321 = vadd.f32 %v285, %v307
      %v322 = vadd.f32 %v286, %v307
      %v323 = vadd.f32 %v287, %v307
      %v324 = vadd.f32 %v288, %v307
      %v325 = vadd.f32 %v289, %v307
      %v326 = vadd.f32 %v290, %v307
      %v327 = vadd.f32 %v291, %v307
      %v328 = vadd.f32 %v292, %v307
      %v329 = vadd.f32 %v293, %v307
      %v330 = vadd.f32 %v294, %v307
      %v331 = vadd.f32 %v295, %v307
      %v332 = vadd.f32 %v296, %v307
      %v333 = vadd.f32 %v297, %v307
      %v334 = vadd.f32 %v298, %v307
      %v335 = vadd.f32 %v299, %v307
      %v336 = vadd.f32 %v300, %v307
      %v337 = vadd.f32 %v301, %v307
      %v338 = vadd.f32 %v302, %v307
      %v339 = vadd.f32 %v303, %v307
      %v340 = vadd.f32 %v304, %v307
      %v341 = vmax.f32 %v309, 0.0
      %v342 = vmax.f32 %v310, 0.0
      %v343 = vmax.f32 %v311, 0.0
      %v344 = vmax.f32 %v312, 0.0
      %v345 = vmax.f32 %v313, 0.0
      %v346 = vmax.f32 %v314, 0.0
      %v347 = vmax.f32 %v315, 0.0
      %v348 = vmax.f32 %v316, 0.0
      %v349 = vmax.f32 %v317, 0.0
      %v350 = vmax.f32 %v318, 0.0
      %v351 = vmax.f32 %v319, 0.0
      %v352 = vmax.f32 %v320, 0.0
      %v353 = vmax.f32 %v321, 0.0
      %v354 = vmax.f32 %v322, 0.0
      %v355 = vmax.f32 %v323, 0.0
      %v356 = vmax.f32 %v324, 0.0
      %v357 = vmax.f32 %v325, 0.0
      %v358 = vmax.f32 %v326, 0.0
      %v359 = vmax.f32 %v327, 0.0
      %v360 = vmax.f32 %v328, 0.0
      %v361 = vmax.f32 %v329, 0.0
      %v362 = vmax.f32 %v330, 0.0
      %v363 = vmax.f32 %v331, 0.0
      %v364 = vmax.f32 %v332, 0.0
      %v365 = vmax.f32 %v333, 0.0
      %v366 = vmax.f32 %v334, 0.0
      %v367 = vmax.f32 %v335, 0.0
      %v368 = vmax.f32 %v336, 0.0
      %v369 = vmax.f32 %v337, 0.0
      %v370 = vmax.f32 %v338, 0.0
      %v371 = vmax.f32 %v339, 0.0
      %v372 = vmax.f32 %v340, 0.0
      %v373 = vpack.c.bf16 %v341, %v341
      %v374 = vpack.c.bf16 %v342, %v342
      %v375 = vpack.c.bf16 %v343, %v343
      %v376 = vpack.c.bf16 %v344, %v344
      %v377 = vpack.c.bf16 %v345, %v345
      %v378 = vpack.c.bf16 %v346, %v346
      %v379 = vpack.c.bf16 %v347, %v347
      %v380 = vpack.c.bf16 %v348, %v348
      %v381 = vpack.c.bf16 %v349, %v349
      %v382 = vpack.c.bf16 %v350, %v350
      %v383 = vpack.c.bf16 %v351, %v351
      %v384 = vpack.c.bf16 %v352, %v352
      %v385 = vpack.c.bf16 %v353, %v353
      %v386 = vpack.c.bf16 %v354, %v354
      %v387 = vpack.c.bf16 %v355, %v355
      %v388 = vpack.c.bf16 %v356, %v356
      %v389 = vpack.c.bf16 %v357, %v357
      %v390 = vpack.c.bf16 %v358, %v358
      %v391 = vpack.c.bf16 %v359, %v359
      %v392 = vpack.c.bf16 %v360, %v360
      %v393 = vpack.c.bf16 %v361, %v361
      %v394 = vpack.c.bf16 %v362, %v362
      %v395 = vpack.c.bf16 %v363, %v363
      %v396 = vpack.c.bf16 %v364, %v364
      %v397 = vpack.c.bf16 %v365, %v365
      %v398 = vpack.c.bf16 %v366, %v366
      %v399 = vpack.c.bf16 %v367, %v367
      %v400 = vpack.c.bf16 %v368, %v368
      %v401 = vpack.c.bf16 %v369, %v369
      %v402 = vpack.c.bf16 %v370, %v370
      %v403 = vpack.c.bf16 %v371, %v371
      %v404 = vpack.c.bf16 %v372, %v372
      %405 = vst [vmem:[#allocation2] sm:$0xf] 0
      %406 = vst [vmem:[#allocation2 + $0x4] sm:$0xf] 0
      %407 = vst [vmem:[#allocation2 + $0x8] sm:$0x1] 0
      %s408 = scalar_lea.vmem [#allocation2], 204
      %409 = vst [vmem:[%s408] sm:$0xf] 0
      %410 = vst [vmem:[%s408 + $0x4] sm:$0xf] 0
      %411 = vst [vmem:[%s408 + $0x8] sm:$0x1] 0
      %s412 = scalar_lea.vmem [#allocation2], 12
      %vm413 = vcmask 1040384
      %vm414 = vsmask.f32 256
      %vm415 = vmand %vm413, %vm414
      %v416 = vld [vmem:[%s412] sm:$0x1]
      %v417 = vsel %vm415, 0, %v416
      %418 = vst [vmem:[%s412] sm:$0x1] %v417
      %v419 = vld [vmem:[%s412 + $0xc] sm:$0x1]
      %v420 = vsel %vm415, 0, %v419
      %421 = vst [vmem:[%s412 + $0xc] sm:$0x1] %v420
      %v422 = vld [vmem:[%s412 + $0x18] sm:$0x1]
      %v423 = vsel %vm415, 0, %v422
      %424 = vst [vmem:[%s412 + $0x18] sm:$0x1] %v423
      %v425 = vld [vmem:[%s412 + $0x24] sm:$0x1]
      %v426 = vsel %vm415, 0, %v425
      %427 = vst [vmem:[%s412 + $0x24] sm:$0x1] %v426
      %v428 = vld [vmem:[%s412 + $0x30] sm:$0x1]
      %v429 = vsel %vm415, 0, %v428
      %430 = vst [vmem:[%s412 + $0x30] sm:$0x1] %v429
      %v431 = vld [vmem:[%s412 + $0x3c] sm:$0x1]
      %v432 = vsel %vm415, 0, %v431
      %433 = vst [vmem:[%s412 + $0x3c] sm:$0x1] %v432
      %v434 = vld [vmem:[%s412 + $0x48] sm:$0x1]
      %v435 = vsel %vm415, 0, %v434
      %436 = vst [vmem:[%s412 + $0x48] sm:$0x1] %v435
      %v437 = vld [vmem:[%s412 + $0x54] sm:$0x1]
      %v438 = vsel %vm415, 0, %v437
      %439 = vst [vmem:[%s412 + $0x54] sm:$0x1] %v438
      %v440 = vld [vmem:[%s412 + $0x60] sm:$0x1]
      %v441 = vsel %vm415, 0, %v440
      %442 = vst [vmem:[%s412 + $0x60] sm:$0x1] %v441
      %v443 = vld [vmem:[%s412 + $0x6c] sm:$0x1]
      %v444 = vsel %vm415, 0, %v443
      %445 = vst [vmem:[%s412 + $0x6c] sm:$0x1] %v444
      %v446 = vld [vmem:[%s412 + $0x78] sm:$0x1]
      %v447 = vsel %vm415, 0, %v446
      %448 = vst [vmem:[%s412 + $0x78] sm:$0x1] %v447
      %v449 = vld [vmem:[%s412 + $0x84] sm:$0x1]
      %v450 = vsel %vm415, 0, %v449
      %451 = vst [vmem:[%s412 + $0x84] sm:$0x1] %v450
      %v452 = vld [vmem:[%s412 + $0x90] sm:$0x1]
      %v453 = vsel %vm415, 0, %v452
      %454 = vst [vmem:[%s412 + $0x90] sm:$0x1] %v453
      %v455 = vld [vmem:[%s412 + $0x9c] sm:$0x1]
      %v456 = vsel %vm415, 0, %v455
      %457 = vst [vmem:[%s412 + $0x9c] sm:$0x1] %v456
      %v458 = vld [vmem:[%s412 + $0xa8] sm:$0x1]
      %v459 = vsel %vm415, 0, %v458
      %460 = vst [vmem:[%s412 + $0xa8] sm:$0x1] %v459
      %v461 = vld [vmem:[%s412 + $0xb4] sm:$0x1]
      %v462 = vsel %vm415, 0, %v461
      %463 = vst [vmem:[%s412 + $0xb4] sm:$0x1] %v462
      %vm464 = vsmask.f32 7938
      %vm465 = vmand %vm413, %vm464
      %v466 = vld [vmem:[%s412 + $0x8] sm:$0x1]
      %v467 = vsel %vm465, 0, %v466
      %468 = vst [vmem:[%s412 + $0x8] sm:$0x1] %v467
      %v469 = vld [vmem:[%s412 + $0x14] sm:$0x1]
      %v470 = vsel %vm465, 0, %v469
      %471 = vst [vmem:[%s412 + $0x14] sm:$0x1] %v470
      %v472 = vld [vmem:[%s412 + $0x20] sm:$0x1]
      %v473 = vsel %vm465, 0, %v472
      %474 = vst [vmem:[%s412 + $0x20] sm:$0x1] %v473
      %v475 = vld [vmem:[%s412 + $0x2c] sm:$0x1]
      %v476 = vsel %vm465, 0, %v475
      %477 = vst [vmem:[%s412 + $0x2c] sm:$0x1] %v476
      %v478 = vld [vmem:[%s412 + $0x38] sm:$0x1]
      %v479 = vsel %vm465, 0, %v478
      %480 = vst [vmem:[%s412 + $0x38] sm:$0x1] %v479
      %v481 = vld [vmem:[%s412 + $0x44] sm:$0x1]
      %v482 = vsel %vm465, 0, %v481
      %483 = vst [vmem:[%s412 + $0x44] sm:$0x1] %v482
      %v484 = vld [vmem:[%s412 + $0x50] sm:$0x1]
      %v485 = vsel %vm465, 0, %v484
      %486 = vst [vmem:[%s412 + $0x50] sm:$0x1] %v485
      %v487 = vld [vmem:[%s412 + $0x5c] sm:$0x1]
      %v488 = vsel %vm465, 0, %v487
      %489 = vst [vmem:[%s412 + $0x5c] sm:$0x1] %v488
      %v490 = vld [vmem:[%s412 + $0x68] sm:$0x1]
      %v491 = vsel %vm465, 0, %v490
      %492 = vst [vmem:[%s412 + $0x68] sm:$0x1] %v491
      %v493 = vld [vmem:[%s412 + $0x74] sm:$0x1]
      %v494 = vsel %vm465, 0, %v493
      %495 = vst [vmem:[%s412 + $0x74] sm:$0x1] %v494
      %v496 = vld [vmem:[%s412 + $0x80] sm:$0x1]
      %v497 = vsel %vm465, 0, %v496
      %498 = vst [vmem:[%s412 + $0x80] sm:$0x1] %v497
      %v499 = vld [vmem:[%s412 + $0x8c] sm:$0x1]
      %v500 = vsel %vm465, 0, %v499
      %501 = vst [vmem:[%s412 + $0x8c] sm:$0x1] %v500
      %v502 = vld [vmem:[%s412 + $0x98] sm:$0x1]
      %v503 = vsel %vm465, 0, %v502
      %504 = vst [vmem:[%s412 + $0x98] sm:$0x1] %v503
      %v505 = vld [vmem:[%s412 + $0xa4] sm:$0x1]
      %v506 = vsel %vm465, 0, %v505
      %507 = vst [vmem:[%s412 + $0xa4] sm:$0x1] %v506
      %v508 = vld [vmem:[%s412 + $0xb0] sm:$0x1]
      %v509 = vsel %vm465, 0, %v508
      %510 = vst [vmem:[%s412 + $0xb0] sm:$0x1] %v509
      %v511 = vld [vmem:[%s412 + $0xbc] sm:$0x1]
      %v512 = vsel %vm465, 0, %v511
      %513 = vst [vmem:[%s412 + $0xbc] sm:$0x1] %v512
      %vm514 = vsmask.f32 4368
      %vm515 = vmor %vm414, %vm514
      %v517 = vshrl.u32 %v373, 16
      %v519 = vrot.slane %v517, 7
      %v520 = vshll.u32 %v373, 16
      %v522 = vor.u32 %v519, %v520
      %v523 = vrot.slane %v519, 4
      %v525 = vshrl.u32 %v374, 16
      %v527 = vrot.slane %v525, 7
      %v528 = vshll.u32 %v374, 16
      %v530 = vor.u32 %v527, %v528
      %v531 = vsel %vm515, %v523, %v530
      %v532 = vrot.slane %v527, 4
      %v534 = vshrl.u32 %v375, 16
      %v536 = vrot.slane %v534, 7
      %v537 = vshll.u32 %v375, 16
      %v539 = vor.u32 %v536, %v537
      %v540 = vrot.slane %v536, 4
      %v542 = vshrl.u32 %v376, 16
      %v544 = vrot.slane %v542, 7
      %v545 = vshll.u32 %v376, 16
      %v547 = vor.u32 %v544, %v545
      %v548 = vsel %vm515, %v540, %v547
      %v549 = vrot.slane %v544, 4
      %v551 = vshrl.u32 %v377, 16
      %v553 = vrot.slane %v551, 7
      %v554 = vshll.u32 %v377, 16
      %v556 = vor.u32 %v553, %v554
      %v557 = vrot.slane %v553, 4
      %v559 = vshrl.u32 %v378, 16
      %v561 = vrot.slane %v559, 7
      %v562 = vshll.u32 %v378, 16
      %v564 = vor.u32 %v561, %v562
      %v565 = vsel %vm515, %v557, %v564
      %v566 = vrot.slane %v561, 4
      %v568 = vshrl.u32 %v379, 16
      %v570 = vrot.slane %v568, 7
      %v571 = vshll.u32 %v379, 16
      %v573 = vor.u32 %v570, %v571
      %v574 = vrot.slane %v570, 4
      %v576 = vshrl.u32 %v380, 16
      %v578 = vrot.slane %v576, 7
      %v579 = vshll.u32 %v380, 16
      %v581 = vor.u32 %v578, %v579
      %v582 = vsel %vm515, %v574, %v581
      %v583 = vrot.slane %v578, 4
      %v585 = vshrl.u32 %v381, 16
      %v587 = vrot.slane %v585, 7
      %v588 = vshll.u32 %v381, 16
      %v590 = vor.u32 %v587, %v588
      %v591 = vrot.slane %v587, 4
      %v593 = vshrl.u32 %v382, 16
      %v595 = vrot.slane %v593, 7
      %v596 = vshll.u32 %v382, 16
      %v598 = vor.u32 %v595, %v596
      %v599 = vsel %vm515, %v591, %v598
      %v600 = vrot.slane %v595, 4
      %v602 = vshrl.u32 %v383, 16
      %v604 = vrot.slane %v602, 7
      %v605 = vshll.u32 %v383, 16
      %v607 = vor.u32 %v604, %v605
      %v608 = vrot.slane %v604, 4
      %v610 = vshrl.u32 %v384, 16
      %v612 = vrot.slane %v610, 7
      %v613 = vshll.u32 %v384, 16
      %v615 = vor.u32 %v612, %v613
      %v616 = vsel %vm515, %v608, %v615
      %v617 = vrot.slane %v612, 4
      %v619 = vshrl.u32 %v385, 16
      %v621 = vrot.slane %v619, 7
      %v622 = vshll.u32 %v385, 16
      %v624 = vor.u32 %v621, %v622
      %v625 = vrot.slane %v621, 4
      %v627 = vshrl.u32 %v386, 16
      %v629 = vrot.slane %v627, 7
      %v630 = vshll.u32 %v386, 16
      %v632 = vor.u32 %v629, %v630
      %v633 = vsel %vm515, %v625, %v632
      %v634 = vrot.slane %v629, 4
      %v636 = vshrl.u32 %v387, 16
      %v638 = vrot.slane %v636, 7
      %v639 = vshll.u32 %v387, 16
      %v641 = vor.u32 %v638, %v639
      %v642 = vrot.slane %v638, 4
      %v644 = vshrl.u32 %v388, 16
      %v646 = vrot.slane %v644, 7
      %v647 = vshll.u32 %v388, 16
      %v649 = vor.u32 %v646, %v647
      %v650 = vsel %vm515, %v642, %v649
      %v651 = vrot.slane %v646, 4
      %v653 = vshrl.u32 %v389, 16
      %v655 = vrot.slane %v653, 7
      %v656 = vshll.u32 %v389, 16
      %v658 = vor.u32 %v655, %v656
      %v659 = vrot.slane %v655, 4
      %v661 = vshrl.u32 %v390, 16
      %v663 = vrot.slane %v661, 7
      %v664 = vshll.u32 %v390, 16
      %v666 = vor.u32 %v663, %v664
      %v667 = vsel %vm515, %v659, %v666
      %v668 = vrot.slane %v663, 4
      %v670 = vshrl.u32 %v391, 16
      %v672 = vrot.slane %v670, 7
      %v673 = vshll.u32 %v391, 16
      %v675 = vor.u32 %v672, %v673
      %v676 = vrot.slane %v672, 4
      %v678 = vshrl.u32 %v392, 16
      %v680 = vrot.slane %v678, 7
      %v681 = vshll.u32 %v392, 16
      %v683 = vor.u32 %v680, %v681
      %v684 = vsel %vm515, %v676, %v683
      %v685 = vrot.slane %v680, 4
      %v687 = vshrl.u32 %v393, 16
      %v689 = vrot.slane %v687, 7
      %v690 = vshll.u32 %v393, 16
      %v692 = vor.u32 %v689, %v690
      %v693 = vrot.slane %v689, 4
      %v695 = vshrl.u32 %v394, 16
      %v697 = vrot.slane %v695, 7
      %v698 = vshll.u32 %v394, 16
      %v700 = vor.u32 %v697, %v698
      %v701 = vsel %vm515, %v693, %v700
      %v702 = vrot.slane %v697, 4
      %v704 = vshrl.u32 %v395, 16
      %v706 = vrot.slane %v704, 7
      %v707 = vshll.u32 %v395, 16
      %v709 = vor.u32 %v706, %v707
      %v710 = vrot.slane %v706, 4
      %v712 = vshrl.u32 %v396, 16
      %v714 = vrot.slane %v712, 7
      %v715 = vshll.u32 %v396, 16
      %v717 = vor.u32 %v714, %v715
      %v718 = vsel %vm515, %v710, %v717
      %v719 = vrot.slane %v714, 4
      %v721 = vshrl.u32 %v397, 16
      %v723 = vrot.slane %v721, 7
      %v724 = vshll.u32 %v397, 16
      %v726 = vor.u32 %v723, %v724
      %v727 = vrot.slane %v723, 4
      %v729 = vshrl.u32 %v398, 16
      %v731 = vrot.slane %v729, 7
      %v732 = vshll.u32 %v398, 16
      %v734 = vor.u32 %v731, %v732
      %v735 = vsel %vm515, %v727, %v734
      %v736 = vrot.slane %v731, 4
      %v738 = vshrl.u32 %v399, 16
      %v740 = vrot.slane %v738, 7
      %v741 = vshll.u32 %v399, 16
      %v743 = vor.u32 %v740, %v741
      %v744 = vrot.slane %v740, 4
      %v746 = vshrl.u32 %v400, 16
      %v748 = vrot.slane %v746, 7
      %v749 = vshll.u32 %v400, 16
      %v751 = vor.u32 %v748, %v749
      %v752 = vsel %vm515, %v744, %v751
      %v753 = vrot.slane %v748, 4
      %v755 = vshrl.u32 %v401, 16
      %v757 = vrot.slane %v755, 7
      %v758 = vshll.u32 %v401, 16
      %v760 = vor.u32 %v757, %v758
      %v761 = vrot.slane %v757, 4
      %v763 = vshrl.u32 %v402, 16
      %v765 = vrot.slane %v763, 7
      %v766 = vshll.u32 %v402, 16
      %v768 = vor.u32 %v765, %v766
      %v769 = vsel %vm515, %v761, %v768
      %v770 = vrot.slane %v765, 4
      %v772 = vshrl.u32 %v403, 16
      %v774 = vrot.slane %v772, 7
      %v775 = vshll.u32 %v403, 16
      %v777 = vor.u32 %v774, %v775
      %v778 = vrot.slane %v774, 4
      %v780 = vshrl.u32 %v404, 16
      %v782 = vrot.slane %v780, 7
      %v783 = vshll.u32 %v404, 16
      %v785 = vor.u32 %v782, %v783
      %v786 = vsel %vm515, %v778, %v785
      %v787 = vrot.slane %v782, 4
      %vm836 = vcmask 1043456
      %vm837 = vmand %vm836, %vm464
      %v838 = vld [vmem:[%s412] sm:$0xf]
      %v839 = vsel %vm837, %v522, %v838
      %840 = vst [vmem:[%s412] sm:$0xf] %v839
      %841 = vst [vmem:[%s412 + $0x4] sm:$0xf] %v531
      %v842 = vld [vmem:[%s412 + $0x8] sm:$0x1]
      %v843 = vsel %vm415, %v532, %v842
      %844 = vst [vmem:[%s412 + $0x8] sm:$0x1] %v843
      %v845 = vld [vmem:[%s412 + $0xc] sm:$0xf]
      %v846 = vsel %vm837, %v539, %v845
      %847 = vst [vmem:[%s412 + $0xc] sm:$0xf] %v846
      %848 = vst [vmem:[%s412 + $0x10] sm:$0xf] %v548
      %v849 = vld [vmem:[%s412 + $0x14] sm:$0x1]
      %v850 = vsel %vm415, %v549, %v849
      %851 = vst [vmem:[%s412 + $0x14] sm:$0x1] %v850
      %v852 = vld [vmem:[%s412 + $0x18] sm:$0xf]
      %v853 = vsel %vm837, %v556, %v852
      %854 = vst [vmem:[%s412 + $0x18] sm:$0xf] %v853
      %855 = vst [vmem:[%s412 + $0x1c] sm:$0xf] %v565
      %v856 = vld [vmem:[%s412 + $0x20] sm:$0x1]
      %v857 = vsel %vm415, %v566, %v856
      %858 = vst [vmem:[%s412 + $0x20] sm:$0x1] %v857
      %v859 = vld [vmem:[%s412 + $0x24] sm:$0xf]
      %v860 = vsel %vm837, %v573, %v859
      %861 = vst [vmem:[%s412 + $0x24] sm:$0xf] %v860
      %862 = vst [vmem:[%s412 + $0x28] sm:$0xf] %v582
      %v863 = vld [vmem:[%s412 + $0x2c] sm:$0x1]
      %v864 = vsel %vm415, %v583, %v863
      %865 = vst [vmem:[%s412 + $0x2c] sm:$0x1] %v864
      %v866 = vld [vmem:[%s412 + $0x30] sm:$0xf]
      %v867 = vsel %vm837, %v590, %v866
      %868 = vst [vmem:[%s412 + $0x30] sm:$0xf] %v867
      %869 = vst [vmem:[%s412 + $0x34] sm:$0xf] %v599
      %v870 = vld [vmem:[%s412 + $0x38] sm:$0x1]
      %v871 = vsel %vm415, %v600, %v870
      %872 = vst [vmem:[%s412 + $0x38] sm:$0x1] %v871
      %v873 = vld [vmem:[%s412 + $0x3c] sm:$0xf]
      %v874 = vsel %vm837, %v607, %v873
      %875 = vst [vmem:[%s412 + $0x3c] sm:$0xf] %v874
      %876 = vst [vmem:[%s412 + $0x40] sm:$0xf] %v616
      %v877 = vld [vmem:[%s412 + $0x44] sm:$0x1]
      %v878 = vsel %vm415, %v617, %v877
      %879 = vst [vmem:[%s412 + $0x44] sm:$0x1] %v878
      %v880 = vld [vmem:[%s412 + $0x48] sm:$0xf]
      %v881 = vsel %vm837, %v624, %v880
      %882 = vst [vmem:[%s412 + $0x48] sm:$0xf] %v881
      %883 = vst [vmem:[%s412 + $0x4c] sm:$0xf] %v633
      %v884 = vld [vmem:[%s412 + $0x50] sm:$0x1]
      %v885 = vsel %vm415, %v634, %v884
      %886 = vst [vmem:[%s412 + $0x50] sm:$0x1] %v885
      %v887 = vld [vmem:[%s412 + $0x54] sm:$0xf]
      %v888 = vsel %vm837, %v641, %v887
      %889 = vst [vmem:[%s412 + $0x54] sm:$0xf] %v888
      %890 = vst [vmem:[%s412 + $0x58] sm:$0xf] %v650
      %v891 = vld [vmem:[%s412 + $0x5c] sm:$0x1]
      %v892 = vsel %vm415, %v651, %v891
      %893 = vst [vmem:[%s412 + $0x5c] sm:$0x1] %v892
      %v894 = vld [vmem:[%s412 + $0x60] sm:$0xf]
      %v895 = vsel %vm837, %v658, %v894
      %896 = vst [vmem:[%s412 + $0x60] sm:$0xf] %v895
      %897 = vst [vmem:[%s412 + $0x64] sm:$0xf] %v667
      %v898 = vld [vmem:[%s412 + $0x68] sm:$0x1]
      %v899 = vsel %vm415, %v668, %v898
      %900 = vst [vmem:[%s412 + $0x68] sm:$0x1] %v899
      %v901 = vld [vmem:[%s412 + $0x6c] sm:$0xf]
      %v902 = vsel %vm837, %v675, %v901
      %903 = vst [vmem:[%s412 + $0x6c] sm:$0xf] %v902
      %904 = vst [vmem:[%s412 + $0x70] sm:$0xf] %v684
      %v905 = vld [vmem:[%s412 + $0x74] sm:$0x1]
      %v906 = vsel %vm415, %v685, %v905
      %907 = vst [vmem:[%s412 + $0x74] sm:$0x1] %v906
      %v908 = vld [vmem:[%s412 + $0x78] sm:$0xf]
      %v909 = vsel %vm837, %v692, %v908
      %910 = vst [vmem:[%s412 + $0x78] sm:$0xf] %v909
      %911 = vst [vmem:[%s412 + $0x7c] sm:$0xf] %v701
      %v912 = vld [vmem:[%s412 + $0x80] sm:$0x1]
      %v913 = vsel %vm415, %v702, %v912
      %914 = vst [vmem:[%s412 + $0x80] sm:$0x1] %v913
      %v915 = vld [vmem:[%s412 + $0x84] sm:$0xf]
      %v916 = vsel %vm837, %v709, %v915
      %917 = vst [vmem:[%s412 + $0x84] sm:$0xf] %v916
      %918 = vst [vmem:[%s412 + $0x88] sm:$0xf] %v718
      %v919 = vld [vmem:[%s412 + $0x8c] sm:$0x1]
      %v920 = vsel %vm415, %v719, %v919
      %921 = vst [vmem:[%s412 + $0x8c] sm:$0x1] %v920
      %v922 = vld [vmem:[%s412 + $0x90] sm:$0xf]
      %v923 = vsel %vm837, %v726, %v922
      %924 = vst [vmem:[%s412 + $0x90] sm:$0xf] %v923
      %925 = vst [vmem:[%s412 + $0x94] sm:$0xf] %v735
      %v926 = vld [vmem:[%s412 + $0x98] sm:$0x1]
      %v927 = vsel %vm415, %v736, %v926
      %928 = vst [vmem:[%s412 + $0x98] sm:$0x1] %v927
      %v929 = vld [vmem:[%s412 + $0x9c] sm:$0xf]
      %v930 = vsel %vm837, %v743, %v929
      %931 = vst [vmem:[%s412 + $0x9c] sm:$0xf] %v930
      %932 = vst [vmem:[%s412 + $0xa0] sm:$0xf] %v752
      %v933 = vld [vmem:[%s412 + $0xa4] sm:$0x1]
      %v934 = vsel %vm415, %v753, %v933
      %935 = vst [vmem:[%s412 + $0xa4] sm:$0x1] %v934
      %v936 = vld [vmem:[%s412 + $0xa8] sm:$0xf]
      %v937 = vsel %vm837, %v760, %v936
      %938 = vst [vmem:[%s412 + $0xa8] sm:$0xf] %v937
      %939 = vst [vmem:[%s412 + $0xac] sm:$0xf] %v769
      %v940 = vld [vmem:[%s412 + $0xb0] sm:$0x1]
      %v941 = vsel %vm415, %v770, %v940
      %942 = vst [vmem:[%s412 + $0xb0] sm:$0x1] %v941
      %v943 = vld [vmem:[%s412 + $0xb4] sm:$0xf]
      %v944 = vsel %vm837, %v777, %v943
      %945 = vst [vmem:[%s412 + $0xb4] sm:$0xf] %v944
      %946 = vst [vmem:[%s412 + $0xb8] sm:$0xf] %v786
      %v947 = vld [vmem:[%s412 + $0xbc] sm:$0x1]
      %v948 = vsel %vm415, %v787, %v947
      %949 = vst [vmem:[%s412 + $0xbc] sm:$0x1] %v948
      %v950 = vld [vmem:[#allocation2] sm:$0xf]
      %v951 = vld [vmem:[#allocation2 + $0x4] sm:$0xf]
      %v952 = vld [vmem:[#allocation2 + $0xc] sm:$0xf]
      %v953 = vld [vmem:[#allocation2 + $0x10] sm:$0xf]
      %v954 = vld [vmem:[#allocation2 + $0x18] sm:$0xf]
      %v955 = vld [vmem:[#allocation2 + $0x1c] sm:$0xf]
      %v956 = vld [vmem:[#allocation2 + $0x24] sm:$0xf]
      %v957 = vld [vmem:[#allocation2 + $0x28] sm:$0xf]
      %v958 = vld [vmem:[#allocation2 + $0x30] sm:$0xf]
      %v959 = vld [vmem:[#allocation2 + $0x34] sm:$0xf]
      %v960 = vld [vmem:[#allocation2 + $0x3c] sm:$0xf]
      %v961 = vld [vmem:[#allocation2 + $0x40] sm:$0xf]
      %v962 = vld [vmem:[#allocation2 + $0x48] sm:$0xf]
      %v963 = vld [vmem:[#allocation2 + $0x4c] sm:$0xf]
      %v964 = vld [vmem:[#allocation2 + $0x54] sm:$0xf]
      %v965 = vld [vmem:[#allocation2 + $0x58] sm:$0xf]
      %v966 = vld [vmem:[#allocation2 + $0x60] sm:$0xf]
      %v967 = vld [vmem:[#allocation2 + $0x64] sm:$0xf]
      %v968 = vld [vmem:[#allocation2 + $0x6c] sm:$0xf]
      %v969 = vld [vmem:[#allocation2 + $0x70] sm:$0xf]
      %v970 = vld [vmem:[#allocation2 + $0x78] sm:$0xf]
      %v971 = vld [vmem:[#allocation2 + $0x7c] sm:$0xf]
      %v972 = vld [vmem:[#allocation2 + $0x84] sm:$0xf]
      %v973 = vld [vmem:[#allocation2 + $0x88] sm:$0xf]
      %v974 = vld [vmem:[#allocation2 + $0x90] sm:$0xf]
      %v975 = vld [vmem:[#allocation2 + $0x94] sm:$0xf]
      %v976 = vld [vmem:[#allocation2 + $0x9c] sm:$0xf]
      %v977 = vld [vmem:[#allocation2 + $0xa0] sm:$0xf]
      %v978 = vld [vmem:[#allocation2 + $0xa8] sm:$0xf]
      %v979 = vld [vmem:[#allocation2 + $0xac] sm:$0xf]
      %v980 = vld [vmem:[#allocation2 + $0xb4] sm:$0xf]
      %v981 = vld [vmem:[#allocation2 + $0xb8] sm:$0xf]
      %v982 = vld [vmem:[%s3] sm:$0xf]
      %v983 = vld [vmem:[%s3 + $0x4] sm:$0xf]
      %v984 = vld [vmem:[%s3 + $0x8] sm:$0xf]
      %v985 = vld [vmem:[%s3 + $0xc] sm:$0xf]
      %v986 = vld [vmem:[%s3 + $0x10] sm:$0xf]
      %v987 = vld [vmem:[%s3 + $0x14] sm:$0xf]
      %v988 = vld [vmem:[%s3 + $0x18] sm:$0xf]
      %v989 = vld [vmem:[%s3 + $0x1c] sm:$0xf]
      %v990 = vld [vmem:[%s3 + $0x20] sm:$0xf]
      %v991 = vld [vmem:[%s3 + $0x24] sm:$0xf]
      %v992 = vld [vmem:[%s3 + $0x28] sm:$0xf]
      %v993 = vld [vmem:[%s3 + $0x2c] sm:$0xf]
      %v994 = vld [vmem:[%s3 + $0x30] sm:$0xf]
      %v995 = vld [vmem:[%s3 + $0x34] sm:$0xf]
      %v996 = vld [vmem:[%s3 + $0x38] sm:$0xf]
      %v997 = vld [vmem:[%s3 + $0x3c] sm:$0xf]
      %v998 = vld [vmem:[#allocation2 + $0x8] sm:$0x1]
      %v999 = vld [vmem:[#allocation2 + $0x14] sm:$0x1]
      %v1000 = vld [vmem:[#allocation2 + $0x20] sm:$0x1]
      %v1001 = vld [vmem:[#allocation2 + $0x2c] sm:$0x1]
      %v1002 = vld [vmem:[#allocation2 + $0x38] sm:$0x1]
      %v1003 = vld [vmem:[#allocation2 + $0x44] sm:$0x1]
      %v1004 = vld [vmem:[#allocation2 + $0x50] sm:$0x1]
      %v1005 = vld [vmem:[#allocation2 + $0x5c] sm:$0x1]
      %v1006 = vld [vmem:[#allocation2 + $0x68] sm:$0x1]
      %v1007 = vld [vmem:[#allocation2 + $0x74] sm:$0x1]
      %v1008 = vld [vmem:[#allocation2 + $0x80] sm:$0x1]
      %v1009 = vld [vmem:[#allocation2 + $0x8c] sm:$0x1]
      %v1010 = vld [vmem:[#allocation2 + $0x98] sm:$0x1]
      %v1011 = vld [vmem:[#allocation2 + $0xa4] sm:$0x1]
      %v1012 = vld [vmem:[#allocation2 + $0xb0] sm:$0x1]
      %v1013 = vld [vmem:[#allocation2 + $0xbc] sm:$0x1]
      %vm1014 = vsmask.f32 3328
      %vm1015 = vsmask.f32 7440
      %vm1016 = vmor %vm1014, %vm1015
      %v1018 = vshrl.u32 %v950, 16
      %v1020 = vrot.slane %v1018, 4
      %v1021 = vshll.u32 %v950, 16
      %v1023 = vrot.slane %v1021, 5
      %v1024 = vor.u32 %v1020, %v1023
      %v1025 = vrot.slane %v1024, 4
      %v1027 = vshll.u32 %v951, 16
      %v1029 = vrot.slane %v1027, 5
      %v1030 = vsel %vm1016, %v1025, %v1029
      %v1031 = vshrl.u32 %v951, 16
      %v1033 = vrot.slane %v1031, 4
      %v1034 = vor.u32 %v1033, %v1029
      %v1035 = vrot.slane %v1034, 4
      %v1037 = vshll.u32 %v998, 16
      %v1039 = vrot.slane %v1037, 5
      %v1040 = vsel %vm1016, %v1035, %v1039
      %v1042 = vshrl.u32 %v952, 16
      %v1044 = vrot.slane %v1042, 4
      %v1045 = vshll.u32 %v952, 16
      %v1047 = vrot.slane %v1045, 5
      %v1048 = vor.u32 %v1044, %v1047
      %v1049 = vrot.slane %v1048, 4
      %v1051 = vshll.u32 %v953, 16
      %v1053 = vrot.slane %v1051, 5
      %v1054 = vsel %vm1016, %v1049, %v1053
      %v1055 = vshrl.u32 %v953, 16
      %v1057 = vrot.slane %v1055, 4
      %v1058 = vor.u32 %v1057, %v1053
      %v1059 = vrot.slane %v1058, 4
      %v1061 = vshll.u32 %v999, 16
      %v1063 = vrot.slane %v1061, 5
      %v1064 = vsel %vm1016, %v1059, %v1063
      %v1066 = vshrl.u32 %v954, 16
      %v1068 = vrot.slane %v1066, 4
      %v1069 = vshll.u32 %v954, 16
      %v1071 = vrot.slane %v1069, 5
      %v1072 = vor.u32 %v1068, %v1071
      %v1073 = vrot.slane %v1072, 4
      %v1075 = vshll.u32 %v955, 16
      %v1077 = vrot.slane %v1075, 5
      %v1078 = vsel %vm1016, %v1073, %v1077
      %v1079 = vshrl.u32 %v955, 16
      %v1081 = vrot.slane %v1079, 4
      %v1082 = vor.u32 %v1081, %v1077
      %v1083 = vrot.slane %v1082, 4
      %v1085 = vshll.u32 %v1000, 16
      %v1087 = vrot.slane %v1085, 5
      %v1088 = vsel %vm1016, %v1083, %v1087
      %v1090 = vshrl.u32 %v956, 16
      %v1092 = vrot.slane %v1090, 4
      %v1093 = vshll.u32 %v956, 16
      %v1095 = vrot.slane %v1093, 5
      %v1096 = vor.u32 %v1092, %v1095
      %v1097 = vrot.slane %v1096, 4
      %v1099 = vshll.u32 %v957, 16
      %v1101 = vrot.slane %v1099, 5
      %v1102 = vsel %vm1016, %v1097, %v1101
      %v1103 = vshrl.u32 %v957, 16
      %v1105 = vrot.slane %v1103, 4
      %v1106 = vor.u32 %v1105, %v1101
      %v1107 = vrot.slane %v1106, 4
      %v1109 = vshll.u32 %v1001, 16
      %v1111 = vrot.slane %v1109, 5
      %v1112 = vsel %vm1016, %v1107, %v1111
      %v1114 = vshrl.u32 %v958, 16
      %v1116 = vrot.slane %v1114, 4
      %v1117 = vshll.u32 %v958, 16
      %v1119 = vrot.slane %v1117, 5
      %v1120 = vor.u32 %v1116, %v1119
      %v1121 = vrot.slane %v1120, 4
      %v1123 = vshll.u32 %v959, 16
      %v1125 = vrot.slane %v1123, 5
      %v1126 = vsel %vm1016, %v1121, %v1125
      %v1127 = vshrl.u32 %v959, 16
      %v1129 = vrot.slane %v1127, 4
      %v1130 = vor.u32 %v1129, %v1125
      %v1131 = vrot.slane %v1130, 4
      %v1133 = vshll.u32 %v1002, 16
      %v1135 = vrot.slane %v1133, 5
      %v1136 = vsel %vm1016, %v1131, %v1135
      %v1138 = vshrl.u32 %v960, 16
      %v1140 = vrot.slane %v1138, 4
      %v1141 = vshll.u32 %v960, 16
      %v1143 = vrot.slane %v1141, 5
      %v1144 = vor.u32 %v1140, %v1143
      %v1145 = vrot.slane %v1144, 4
      %v1147 = vshll.u32 %v961, 16
      %v1149 = vrot.slane %v1147, 5
      %v1150 = vsel %vm1016, %v1145, %v1149
      %v1151 = vshrl.u32 %v961, 16
      %v1153 = vrot.slane %v1151, 4
      %v1154 = vor.u32 %v1153, %v1149
      %v1155 = vrot.slane %v1154, 4
      %v1157 = vshll.u32 %v1003, 16
      %v1159 = vrot.slane %v1157, 5
      %v1160 = vsel %vm1016, %v1155, %v1159
      %v1162 = vshrl.u32 %v962, 16
      %v1164 = vrot.slane %v1162, 4
      %v1165 = vshll.u32 %v962, 16
      %v1167 = vrot.slane %v1165, 5
      %v1168 = vor.u32 %v1164, %v1167
      %v1169 = vrot.slane %v1168, 4
      %v1171 = vshll.u32 %v963, 16
      %v1173 = vrot.slane %v1171, 5
      %v1174 = vsel %vm1016, %v1169, %v1173
      %v1175 = vshrl.u32 %v963, 16
      %v1177 = vrot.slane %v1175, 4
      %v1178 = vor.u32 %v1177, %v1173
      %v1179 = vrot.slane %v1178, 4
      %v1181 = vshll.u32 %v1004, 16
      %v1183 = vrot.slane %v1181, 5
      %v1184 = vsel %vm1016, %v1179, %v1183
      %v1186 = vshrl.u32 %v964, 16
      %v1188 = vrot.slane %v1186, 4
      %v1189 = vshll.u32 %v964, 16
      %v1191 = vrot.slane %v1189, 5
      %v1192 = vor.u32 %v1188, %v1191
      %v1193 = vrot.slane %v1192, 4
      %v1195 = vshll.u32 %v965, 16
      %v1197 = vrot.slane %v1195, 5
      %v1198 = vsel %vm1016, %v1193, %v1197
      %v1199 = vshrl.u32 %v965, 16
      %v1201 = vrot.slane %v1199, 4
      %v1202 = vor.u32 %v1201, %v1197
      %v1203 = vrot.slane %v1202, 4
      %v1205 = vshll.u32 %v1005, 16
      %v1207 = vrot.slane %v1205, 5
      %v1208 = vsel %vm1016, %v1203, %v1207
      %v1210 = vshrl.u32 %v966, 16
      %v1212 = vrot.slane %v1210, 4
      %v1213 = vshll.u32 %v966, 16
      %v1215 = vrot.slane %v1213, 5
      %v1216 = vor.u32 %v1212, %v1215
      %v1217 = vrot.slane %v1216, 4
      %v1219 = vshll.u32 %v967, 16
      %v1221 = vrot.slane %v1219, 5
      %v1222 = vsel %vm1016, %v1217, %v1221
      %v1223 = vshrl.u32 %v967, 16
      %v1225 = vrot.slane %v1223, 4
      %v1226 = vor.u32 %v1225, %v1221
      %v1227 = vrot.slane %v1226, 4
      %v1229 = vshll.u32 %v1006, 16
      %v1231 = vrot.slane %v1229, 5
      %v1232 = vsel %vm1016, %v1227, %v1231
      %v1234 = vshrl.u32 %v968, 16
      %v1236 = vrot.slane %v1234, 4
      %v1237 = vshll.u32 %v968, 16
      %v1239 = vrot.slane %v1237, 5
      %v1240 = vor.u32 %v1236, %v1239
      %v1241 = vrot.slane %v1240, 4
      %v1243 = vshll.u32 %v969, 16
      %v1245 = vrot.slane %v1243, 5
      %v1246 = vsel %vm1016, %v1241, %v1245
      %v1247 = vshrl.u32 %v969, 16
      %v1249 = vrot.slane %v1247, 4
      %v1250 = vor.u32 %v1249, %v1245
      %v1251 = vrot.slane %v1250, 4
      %v1253 = vshll.u32 %v1007, 16
      %v1255 = vrot.slane %v1253, 5
      %v1256 = vsel %vm1016, %v1251, %v1255
      %v1258 = vshrl.u32 %v970, 16
      %v1260 = vrot.slane %v1258, 4
      %v1261 = vshll.u32 %v970, 16
      %v1263 = vrot.slane %v1261, 5
      %v1264 = vor.u32 %v1260, %v1263
      %v1265 = vrot.slane %v1264, 4
      %v1267 = vshll.u32 %v971, 16
      %v1269 = vrot.slane %v1267, 5
      %v1270 = vsel %vm1016, %v1265, %v1269
      %v1271 = vshrl.u32 %v971, 16
      %v1273 = vrot.slane %v1271, 4
      %v1274 = vor.u32 %v1273, %v1269
      %v1275 = vrot.slane %v1274, 4
      %v1277 = vshll.u32 %v1008, 16
      %v1279 = vrot.slane %v1277, 5
      %v1280 = vsel %vm1016, %v1275, %v1279
      %v1282 = vshrl.u32 %v972, 16
      %v1284 = vrot.slane %v1282, 4
      %v1285 = vshll.u32 %v972, 16
      %v1287 = vrot.slane %v1285, 5
      %v1288 = vor.u32 %v1284, %v1287
      %v1289 = vrot.slane %v1288, 4
      %v1291 = vshll.u32 %v973, 16
      %v1293 = vrot.slane %v1291, 5
      %v1294 = vsel %vm1016, %v1289, %v1293
      %v1295 = vshrl.u32 %v973, 16
      %v1297 = vrot.slane %v1295, 4
      %v1298 = vor.u32 %v1297, %v1293
      %v1299 = vrot.slane %v1298, 4
      %v1301 = vshll.u32 %v1009, 16
      %v1303 = vrot.slane %v1301, 5
      %v1304 = vsel %vm1016, %v1299, %v1303
      %v1306 = vshrl.u32 %v974, 16
      %v1308 = vrot.slane %v1306, 4
      %v1309 = vshll.u32 %v974, 16
      %v1311 = vrot.slane %v1309, 5
      %v1312 = vor.u32 %v1308, %v1311
      %v1313 = vrot.slane %v1312, 4
      %v1315 = vshll.u32 %v975, 16
      %v1317 = vrot.slane %v1315, 5
      %v1318 = vsel %vm1016, %v1313, %v1317
      %v1319 = vshrl.u32 %v975, 16
      %v1321 = vrot.slane %v1319, 4
      %v1322 = vor.u32 %v1321, %v1317
      %v1323 = vrot.slane %v1322, 4
      %v1325 = vshll.u32 %v1010, 16
      %v1327 = vrot.slane %v1325, 5
      %v1328 = vsel %vm1016, %v1323, %v1327
      %v1330 = vshrl.u32 %v976, 16
      %v1332 = vrot.slane %v1330, 4
      %v1333 = vshll.u32 %v976, 16
      %v1335 = vrot.slane %v1333, 5
      %v1336 = vor.u32 %v1332, %v1335
      %v1337 = vrot.slane %v1336, 4
      %v1339 = vshll.u32 %v977, 16
      %v1341 = vrot.slane %v1339, 5
      %v1342 = vsel %vm1016, %v1337, %v1341
      %v1343 = vshrl.u32 %v977, 16
      %v1345 = vrot.slane %v1343, 4
      %v1346 = vor.u32 %v1345, %v1341
      %v1347 = vrot.slane %v1346, 4
      %v1349 = vshll.u32 %v1011, 16
      %v1351 = vrot.slane %v1349, 5
      %v1352 = vsel %vm1016, %v1347, %v1351
      %v1354 = vshrl.u32 %v978, 16
      %v1356 = vrot.slane %v1354, 4
      %v1357 = vshll.u32 %v978, 16
      %v1359 = vrot.slane %v1357, 5
      %v1360 = vor.u32 %v1356, %v1359
      %v1361 = vrot.slane %v1360, 4
      %v1363 = vshll.u32 %v979, 16
      %v1365 = vrot.slane %v1363, 5
      %v1366 = vsel %vm1016, %v1361, %v1365
      %v1367 = vshrl.u32 %v979, 16
      %v1369 = vrot.slane %v1367, 4
      %v1370 = vor.u32 %v1369, %v1365
      %v1371 = vrot.slane %v1370, 4
      %v1373 = vshll.u32 %v1012, 16
      %v1375 = vrot.slane %v1373, 5
      %v1376 = vsel %vm1016, %v1371, %v1375
      %v1378 = vshrl.u32 %v980, 16
      %v1380 = vrot.slane %v1378, 4
      %v1381 = vshll.u32 %v980, 16
      %v1383 = vrot.slane %v1381, 5
      %v1384 = vor.u32 %v1380, %v1383
      %v1385 = vrot.slane %v1384, 4
      %v1387 = vshll.u32 %v981, 16
      %v1389 = vrot.slane %v1387, 5
      %v1390 = vsel %vm1016, %v1385, %v1389
      %v1391 = vshrl.u32 %v981, 16
      %v1393 = vrot.slane %v1391, 4
      %v1394 = vor.u32 %v1393, %v1389
      %v1395 = vrot.slane %v1394, 4
      %v1397 = vshll.u32 %v1013, 16
      %v1399 = vrot.slane %v1397, 5
      %v1400 = vsel %vm1016, %v1395, %v1399
      %s1401 = scalar_lea.vmem %s3, 64
      %v1402 = vld [vmem:[%s1401] sm:$0xf]
      %v1403 = vld [vmem:[%s1401 + $0x4] sm:$0xf]
      %v1404 = vld [vmem:[%s1401 + $0x8] sm:$0xf]
      %v1405 = vld [vmem:[%s1401 + $0xc] sm:$0xf]
      %v1406 = vld [vmem:[%s1401 + $0x10] sm:$0xf]
      %v1407 = vld [vmem:[%s1401 + $0x14] sm:$0xf]
      %v1408 = vld [vmem:[%s1401 + $0x18] sm:$0xf]
      %v1409 = vld [vmem:[%s1401 + $0x1c] sm:$0xf]
      %v1410 = vld [vmem:[%s1401 + $0x20] sm:$0xf]
      %v1411 = vld [vmem:[%s1401 + $0x24] sm:$0xf]
      %v1412 = vld [vmem:[%s1401 + $0x28] sm:$0xf]
      %v1413 = vld [vmem:[%s1401 + $0x2c] sm:$0xf]
      %v1414 = vld [vmem:[%s1401 + $0x30] sm:$0xf]
      %v1415 = vld [vmem:[%s1401 + $0x34] sm:$0xf]
      %v1416 = vld [vmem:[%s1401 + $0x38] sm:$0xf]
      %v1417 = vld [vmem:[%s1401 + $0x3c] sm:$0xf]
      %v1418 = vunpack.c.l.b16 %v1030
      %v1419 = vunpack.c.l.b16 %v1040
      %v1420 = vunpack.c.l.b16 %v1054
      %v1421 = vunpack.c.l.b16 %v1064
      %v1422 = vunpack.c.l.b16 %v1078
      %v1423 = vunpack.c.l.b16 %v1088
      %v1424 = vunpack.c.l.b16 %v1102
      %v1425 = vunpack.c.l.b16 %v1112
      %v1426 = vunpack.c.l.b16 %v1126
      %v1427 = vunpack.c.l.b16 %v1136
      %v1428 = vunpack.c.l.b16 %v1150
      %v1429 = vunpack.c.l.b16 %v1160
      %v1430 = vunpack.c.l.b16 %v1174
      %v1431 = vunpack.c.l.b16 %v1184
      %v1432 = vunpack.c.l.b16 %v1198
      %v1433 = vunpack.c.l.b16 %v1208
      %v1434 = vunpack.c.l.b16 %v1222
      %v1435 = vunpack.c.l.b16 %v1232
      %v1436 = vunpack.c.l.b16 %v1246
      %v1437 = vunpack.c.l.b16 %v1256
      %v1438 = vunpack.c.l.b16 %v1270
      %v1439 = vunpack.c.l.b16 %v1280
      %v1440 = vunpack.c.l.b16 %v1294
      %v1441 = vunpack.c.l.b16 %v1304
      %v1442 = vunpack.c.l.b16 %v1318
      %v1443 = vunpack.c.l.b16 %v1328
      %v1444 = vunpack.c.l.b16 %v1342
      %v1445 = vunpack.c.l.b16 %v1352
      %v1446 = vunpack.c.l.b16 %v1366
      %v1447 = vunpack.c.l.b16 %v1376
      %v1448 = vunpack.c.l.b16 %v1390
      %v1449 = vunpack.c.l.b16 %v1400
      %v1450 = vpack.c.b16 %v1419, %v1418
      %v1451 = vpack.c.b16 %v1421, %v1420
      %v1452 = vpack.c.b16 %v1423, %v1422
      %v1453 = vpack.c.b16 %v1425, %v1424
      %v1454 = vpack.c.b16 %v1427, %v1426
      %v1455 = vpack.c.b16 %v1429, %v1428
      %v1456 = vpack.c.b16 %v1431, %v1430
      %v1457 = vpack.c.b16 %v1433, %v1432
      %v1458 = vpack.c.b16 %v1435, %v1434
      %v1459 = vpack.c.b16 %v1437, %v1436
      %v1460 = vpack.c.b16 %v1439, %v1438
      %v1461 = vpack.c.b16 %v1441, %v1440
      %v1462 = vpack.c.b16 %v1443, %v1442
      %v1463 = vpack.c.b16 %v1445, %v1444
      %v1464 = vpack.c.b16 %v1447, %v1446
      %v1465 = vpack.c.b16 %v1449, %v1448
      %v1498 = vunpack.c.l.b16 %v1402
      %v1499 = vunpack.c.l.b16 %v1403
      %v1500 = vunpack.c.l.b16 %v1404
      %v1501 = vunpack.c.l.b16 %v1405
      %v1502 = vunpack.c.l.b16 %v1406
      %v1503 = vunpack.c.l.b16 %v1407
      %v1504 = vunpack.c.l.b16 %v1408
      %v1505 = vunpack.c.l.b16 %v1409
      %v1506 = vunpack.c.l.b16 %v1410
      %v1507 = vunpack.c.l.b16 %v1411
      %v1508 = vunpack.c.l.b16 %v1412
      %v1509 = vunpack.c.l.b16 %v1413
      %v1510 = vunpack.c.l.b16 %v1414
      %v1511 = vunpack.c.l.b16 %v1415
      %v1512 = vunpack.c.l.b16 %v1416
      %v1513 = vunpack.c.l.b16 %v1417
      %v1514 = vpack.c.b16 %v1499, %v1498
      %v1515 = vpack.c.b16 %v1501, %v1500
      %v1516 = vpack.c.b16 %v1503, %v1502
      %v1517 = vpack.c.b16 %v1505, %v1504
      %v1518 = vpack.c.b16 %v1507, %v1506
      %v1519 = vpack.c.b16 %v1509, %v1508
      %v1520 = vpack.c.b16 %v1511, %v1510
      %v1521 = vpack.c.b16 %v1513, %v1512
      %1530 = vmatpush.bf16.msra.mxu0 %v1521
      %1531 = vmatpush.bf16.msra.mxu0 %v1520
      %1532 = vmatpush.bf16.msra.mxu0 %v1519
      %1533 = vmatpush.bf16.msra.mxu0 %v1518
      %1534 = vmatpush.bf16.msra.mxu0 %v1517
      %1535 = vmatpush.bf16.msra.mxu0 %v1516
      %1536 = vmatpush.bf16.msra.mxu0 %v1515
      %1537 = vmatpush.bf16.msra.mxu0 %v1514
      %1538 = vmatmul.bf16.gmra.mxu0 %v1450
      %v1539 = vpop.f32.mrf.mxu0
      %v1540 = vadd.f32 0.0, %v1539
      %v1541 = vpop.f32.mrf.mxu0
      %v1542 = vadd.f32 0.0, %v1541
      %1543 = vmatmul.bf16.gmra.mxu0 %v1451
      %v1544 = vpop.f32.mrf.mxu0
      %v1545 = vadd.f32 0.0, %v1544
      %v1546 = vpop.f32.mrf.mxu0
      %v1547 = vadd.f32 0.0, %v1546
      %1548 = vmatmul.bf16.gmra.mxu0 %v1452
      %v1549 = vpop.f32.mrf.mxu0
      %v1550 = vadd.f32 0.0, %v1549
      %v1551 = vpop.f32.mrf.mxu0
      %v1552 = vadd.f32 0.0, %v1551
      %1553 = vmatmul.bf16.gmra.mxu0 %v1453
      %v1554 = vpop.f32.mrf.mxu0
      %v1555 = vadd.f32 0.0, %v1554
      %v1556 = vpop.f32.mrf.mxu0
      %v1557 = vadd.f32 0.0, %v1556
      %1558 = vmatmul.bf16.gmra.mxu0 %v1454
      %v1559 = vpop.f32.mrf.mxu0
      %v1560 = vadd.f32 0.0, %v1559
      %v1561 = vpop.f32.mrf.mxu0
      %v1562 = vadd.f32 0.0, %v1561
      %1563 = vmatmul.bf16.gmra.mxu0 %v1455
      %v1564 = vpop.f32.mrf.mxu0
      %v1565 = vadd.f32 0.0, %v1564
      %v1566 = vpop.f32.mrf.mxu0
      %v1567 = vadd.f32 0.0, %v1566
      %1568 = vmatmul.bf16.gmra.mxu0 %v1456
      %v1569 = vpop.f32.mrf.mxu0
      %v1570 = vadd.f32 0.0, %v1569
      %v1571 = vpop.f32.mrf.mxu0
      %v1572 = vadd.f32 0.0, %v1571
      %1573 = vmatmul.bf16.gmra.mxu0 %v1457
      %v1574 = vpop.f32.mrf.mxu0
      %v1575 = vadd.f32 0.0, %v1574
      %v1576 = vpop.f32.mrf.mxu0
      %v1577 = vadd.f32 0.0, %v1576
      %1578 = vmatmul.bf16.gmra.mxu0 %v1458
      %v1579 = vpop.f32.mrf.mxu0
      %v1580 = vadd.f32 0.0, %v1579
      %v1581 = vpop.f32.mrf.mxu0
      %v1582 = vadd.f32 0.0, %v1581
      %1583 = vmatmul.bf16.gmra.mxu0 %v1459
      %v1584 = vpop.f32.mrf.mxu0
      %v1585 = vadd.f32 0.0, %v1584
      %v1586 = vpop.f32.mrf.mxu0
      %v1587 = vadd.f32 0.0, %v1586
      %1588 = vmatmul.bf16.gmra.mxu0 %v1460
      %v1589 = vpop.f32.mrf.mxu0
      %v1590 = vadd.f32 0.0, %v1589
      %v1591 = vpop.f32.mrf.mxu0
      %v1592 = vadd.f32 0.0, %v1591
      %1593 = vmatmul.bf16.gmra.mxu0 %v1461
      %v1594 = vpop.f32.mrf.mxu0
      %v1595 = vadd.f32 0.0, %v1594
      %v1596 = vpop.f32.mrf.mxu0
      %v1597 = vadd.f32 0.0, %v1596
      %1598 = vmatmul.bf16.gmra.mxu0 %v1462
      %v1599 = vpop.f32.mrf.mxu0
      %v1600 = vadd.f32 0.0, %v1599
      %v1601 = vpop.f32.mrf.mxu0
      %v1602 = vadd.f32 0.0, %v1601
      %1603 = vmatmul.bf16.gmra.mxu0 %v1463
      %v1604 = vpop.f32.mrf.mxu0
      %v1605 = vadd.f32 0.0, %v1604
      %v1606 = vpop.f32.mrf.mxu0
      %v1607 = vadd.f32 0.0, %v1606
      %1608 = vmatmul.bf16.gmra.mxu0 %v1464
      %v1609 = vpop.f32.mrf.mxu0
      %v1610 = vadd.f32 0.0, %v1609
      %v1611 = vpop.f32.mrf.mxu0
      %v1612 = vadd.f32 0.0, %v1611
      %1613 = vmatmul.bf16.gmra.mxu0 %v1465
      %v1614 = vpop.f32.mrf.mxu0
      %v1615 = vadd.f32 0.0, %v1614
      %v1616 = vpop.f32.mrf.mxu0
      %v1617 = vadd.f32 0.0, %v1616
      %1618 = vdwg.mxu0
      %v1651 = vunpack.c.l.b16 %v950
      %v1652 = vunpack.c.l.b16 %v951
      %v1653 = vunpack.c.l.b16 %v952
      %v1654 = vunpack.c.l.b16 %v953
      %v1655 = vunpack.c.l.b16 %v954
      %v1656 = vunpack.c.l.b16 %v955
      %v1657 = vunpack.c.l.b16 %v956
      %v1658 = vunpack.c.l.b16 %v957
      %v1659 = vunpack.c.l.b16 %v958
      %v1660 = vunpack.c.l.b16 %v959
      %v1661 = vunpack.c.l.b16 %v960
      %v1662 = vunpack.c.l.b16 %v961
      %v1663 = vunpack.c.l.b16 %v962
      %v1664 = vunpack.c.l.b16 %v963
      %v1665 = vunpack.c.l.b16 %v964
      %v1666 = vunpack.c.l.b16 %v965
      %v1667 = vunpack.c.l.b16 %v966
      %v1668 = vunpack.c.l.b16 %v967
      %v1669 = vunpack.c.l.b16 %v968
      %v1670 = vunpack.c.l.b16 %v969
      %v1671 = vunpack.c.l.b16 %v970
      %v1672 = vunpack.c.l.b16 %v971
      %v1673 = vunpack.c.l.b16 %v972
      %v1674 = vunpack.c.l.b16 %v973
      %v1675 = vunpack.c.l.b16 %v974
      %v1676 = vunpack.c.l.b16 %v975
      %v1677 = vunpack.c.l.b16 %v976
      %v1678 = vunpack.c.l.b16 %v977
      %v1679 = vunpack.c.l.b16 %v978
      %v1680 = vunpack.c.l.b16 %v979
      %v1681 = vunpack.c.l.b16 %v980
      %v1682 = vunpack.c.l.b16 %v981
      %v1683 = vpack.c.b16 %v1652, %v1651
      %v1684 = vpack.c.b16 %v1654, %v1653
      %v1685 = vpack.c.b16 %v1656, %v1655
      %v1686 = vpack.c.b16 %v1658, %v1657
      %v1687 = vpack.c.b16 %v1660, %v1659
      %v1688 = vpack.c.b16 %v1662, %v1661
      %v1689 = vpack.c.b16 %v1664, %v1663
      %v1690 = vpack.c.b16 %v1666, %v1665
      %v1691 = vpack.c.b16 %v1668, %v1667
      %v1692 = vpack.c.b16 %v1670, %v1669
      %v1693 = vpack.c.b16 %v1672, %v1671
      %v1694 = vpack.c.b16 %v1674, %v1673
      %v1695 = vpack.c.b16 %v1676, %v1675
      %v1696 = vpack.c.b16 %v1678, %v1677
      %v1697 = vpack.c.b16 %v1680, %v1679
      %v1698 = vpack.c.b16 %v1682, %v1681
      %v1731 = vunpack.c.l.b16 %v982
      %v1732 = vunpack.c.l.b16 %v983
      %v1733 = vunpack.c.l.b16 %v984
      %v1734 = vunpack.c.l.b16 %v985
      %v1735 = vunpack.c.l.b16 %v986
      %v1736 = vunpack.c.l.b16 %v987
      %v1737 = vunpack.c.l.b16 %v988
      %v1738 = vunpack.c.l.b16 %v989
      %v1739 = vunpack.c.l.b16 %v990
      %v1740 = vunpack.c.l.b16 %v991
      %v1741 = vunpack.c.l.b16 %v992
      %v1742 = vunpack.c.l.b16 %v993
      %v1743 = vunpack.c.l.b16 %v994
      %v1744 = vunpack.c.l.b16 %v995
      %v1745 = vunpack.c.l.b16 %v996
      %v1746 = vunpack.c.l.b16 %v997
      %v1747 = vpack.c.b16 %v1732, %v1731
      %v1748 = vpack.c.b16 %v1734, %v1733
      %v1749 = vpack.c.b16 %v1736, %v1735
      %v1750 = vpack.c.b16 %v1738, %v1737
      %v1751 = vpack.c.b16 %v1740, %v1739
      %v1752 = vpack.c.b16 %v1742, %v1741
      %v1753 = vpack.c.b16 %v1744, %v1743
      %v1754 = vpack.c.b16 %v1746, %v1745
      %1763 = vmatpush.bf16.msra.mxu0 %v1754
      %1764 = vmatpush.bf16.msra.mxu0 %v1753
      %1765 = vmatpush.bf16.msra.mxu0 %v1752
      %1766 = vmatpush.bf16.msra.mxu0 %v1751
      %1767 = vmatpush.bf16.msra.mxu0 %v1750
      %1768 = vmatpush.bf16.msra.mxu0 %v1749
      %1769 = vmatpush.bf16.msra.mxu0 %v1748
      %1770 = vmatpush.bf16.msra.mxu0 %v1747
      %1771 = vmatmul.bf16.gmra.mxu0 %v1683
      %v1772 = vpop.f32.mrf.mxu0
      %v1773 = vadd.f32 %v1540, %v1772
      %v1774 = vpop.f32.mrf.mxu0
      %v1775 = vadd.f32 %v1542, %v1774
      %1776 = vmatmul.bf16.gmra.mxu0 %v1684
      %v1777 = vpop.f32.mrf.mxu0
      %v1778 = vadd.f32 %v1545, %v1777
      %v1779 = vpop.f32.mrf.mxu0
      %v1780 = vadd.f32 %v1547, %v1779
      %1781 = vmatmul.bf16.gmra.mxu0 %v1685
      %v1782 = vpop.f32.mrf.mxu0
      %v1783 = vadd.f32 %v1550, %v1782
      %v1784 = vpop.f32.mrf.mxu0
      %v1785 = vadd.f32 %v1552, %v1784
      %1786 = vmatmul.bf16.gmra.mxu0 %v1686
      %v1787 = vpop.f32.mrf.mxu0
      %v1788 = vadd.f32 %v1555, %v1787
      %v1789 = vpop.f32.mrf.mxu0
      %v1790 = vadd.f32 %v1557, %v1789
      %1791 = vmatmul.bf16.gmra.mxu0 %v1687
      %v1792 = vpop.f32.mrf.mxu0
      %v1793 = vadd.f32 %v1560, %v1792
      %v1794 = vpop.f32.mrf.mxu0
      %v1795 = vadd.f32 %v1562, %v1794
      %1796 = vmatmul.bf16.gmra.mxu0 %v1688
      %v1797 = vpop.f32.mrf.mxu0
      %v1798 = vadd.f32 %v1565, %v1797
      %v1799 = vpop.f32.mrf.mxu0
      %v1800 = vadd.f32 %v1567, %v1799
      %1801 = vmatmul.bf16.gmra.mxu0 %v1689
      %v1802 = vpop.f32.mrf.mxu0
      %v1803 = vadd.f32 %v1570, %v1802
      %v1804 = vpop.f32.mrf.mxu0
      %v1805 = vadd.f32 %v1572, %v1804
      %1806 = vmatmul.bf16.gmra.mxu0 %v1690
      %v1807 = vpop.f32.mrf.mxu0
      %v1808 = vadd.f32 %v1575, %v1807
      %v1809 = vpop.f32.mrf.mxu0
      %v1810 = vadd.f32 %v1577, %v1809
      %1811 = vmatmul.bf16.gmra.mxu0 %v1691
      %v1812 = vpop.f32.mrf.mxu0
      %v1813 = vadd.f32 %v1580, %v1812
      %v1814 = vpop.f32.mrf.mxu0
      %v1815 = vadd.f32 %v1582, %v1814
      %1816 = vmatmul.bf16.gmra.mxu0 %v1692
      %v1817 = vpop.f32.mrf.mxu0
      %v1818 = vadd.f32 %v1585, %v1817
      %v1819 = vpop.f32.mrf.mxu0
      %v1820 = vadd.f32 %v1587, %v1819
      %1821 = vmatmul.bf16.gmra.mxu0 %v1693
      %v1822 = vpop.f32.mrf.mxu0
      %v1823 = vadd.f32 %v1590, %v1822
      %v1824 = vpop.f32.mrf.mxu0
      %v1825 = vadd.f32 %v1592, %v1824
      %1826 = vmatmul.bf16.gmra.mxu0 %v1694
      %v1827 = vpop.f32.mrf.mxu0
      %v1828 = vadd.f32 %v1595, %v1827
      %v1829 = vpop.f32.mrf.mxu0
      %v1830 = vadd.f32 %v1597, %v1829
      %1831 = vmatmul.bf16.gmra.mxu0 %v1695
      %v1832 = vpop.f32.mrf.mxu0
      %v1833 = vadd.f32 %v1600, %v1832
      %v1834 = vpop.f32.mrf.mxu0
      %v1835 = vadd.f32 %v1602, %v1834
      %1836 = vmatmul.bf16.gmra.mxu0 %v1696
      %v1837 = vpop.f32.mrf.mxu0
      %v1838 = vadd.f32 %v1605, %v1837
      %v1839 = vpop.f32.mrf.mxu0
      %v1840 = vadd.f32 %v1607, %v1839
      %1841 = vmatmul.bf16.gmra.mxu0 %v1697
      %v1842 = vpop.f32.mrf.mxu0
      %v1843 = vadd.f32 %v1610, %v1842
      %v1844 = vpop.f32.mrf.mxu0
      %v1845 = vadd.f32 %v1612, %v1844
      %1846 = vmatmul.bf16.gmra.mxu0 %v1698
      %v1847 = vpop.f32.mrf.mxu0
      %v1848 = vadd.f32 %v1615, %v1847
      %v1849 = vpop.f32.mrf.mxu0
      %v1850 = vadd.f32 %v1617, %v1849
      %1851 = vdwg.mxu0
      %v1852 = vld [vmem:[#allocation2] sm:$0xe]
      %v1853 = vld [vmem:[#allocation2 + $0xc] sm:$0xe]
      %v1854 = vld [vmem:[#allocation2 + $0x18] sm:$0xe]
      %v1855 = vld [vmem:[#allocation2 + $0x24] sm:$0xe]
      %v1856 = vld [vmem:[#allocation2 + $0x30] sm:$0xe]
      %v1857 = vld [vmem:[#allocation2 + $0x3c] sm:$0xe]
      %v1858 = vld [vmem:[#allocation2 + $0x48] sm:$0xe]
      %v1859 = vld [vmem:[#allocation2 + $0x54] sm:$0xe]
      %v1860 = vld [vmem:[#allocation2 + $0x60] sm:$0xe]
      %v1861 = vld [vmem:[#allocation2 + $0x6c] sm:$0xe]
      %v1862 = vld [vmem:[#allocation2 + $0x78] sm:$0xe]
      %v1863 = vld [vmem:[#allocation2 + $0x84] sm:$0xe]
      %v1864 = vld [vmem:[#allocation2 + $0x90] sm:$0xe]
      %v1865 = vld [vmem:[#allocation2 + $0x9c] sm:$0xe]
      %v1866 = vld [vmem:[#allocation2 + $0xa8] sm:$0xe]
      %v1867 = vld [vmem:[#allocation2 + $0xb4] sm:$0xe]
      %vm1900 = vcmask 1042432
      %vm1901 = vcmask 1046532
      %vm1902 = vmor %vm1900, %vm1901
      %v1903 = vrot.slane %v1852, 5
      %v1904 = vrot.slane %v1903, 4
      %v1905 = vrot.slane %v951, 5
      %v1906 = vsel %vm1902, %v1904, %v1905
      %v1907 = vrot.slane %v1905, 4
      %v1908 = vrot.slane %v998, 5
      %v1909 = vsel %vm1902, %v1907, %v1908
      %v1910 = vrot.slane %v1853, 5
      %v1911 = vrot.slane %v1910, 4
      %v1912 = vrot.slane %v953, 5
      %v1913 = vsel %vm1902, %v1911, %v1912
      %v1914 = vrot.slane %v1912, 4
      %v1915 = vrot.slane %v999, 5
      %v1916 = vsel %vm1902, %v1914, %v1915
      %v1917 = vrot.slane %v1854, 5
      %v1918 = vrot.slane %v1917, 4
      %v1919 = vrot.slane %v955, 5
      %v1920 = vsel %vm1902, %v1918, %v1919
      %v1921 = vrot.slane %v1919, 4
      %v1922 = vrot.slane %v1000, 5
      %v1923 = vsel %vm1902, %v1921, %v1922
      %v1924 = vrot.slane %v1855, 5
      %v1925 = vrot.slane %v1924, 4
      %v1926 = vrot.slane %v957, 5
      %v1927 = vsel %vm1902, %v1925, %v1926
      %v1928 = vrot.slane %v1926, 4
      %v1929 = vrot.slane %v1001, 5
      %v1930 = vsel %vm1902, %v1928, %v1929
      %v1931 = vrot.slane %v1856, 5
      %v1932 = vrot.slane %v1931, 4
      %v1933 = vrot.slane %v959, 5
      %v1934 = vsel %vm1902, %v1932, %v1933
      %v1935 = vrot.slane %v1933, 4
      %v1936 = vrot.slane %v1002, 5
      %v1937 = vsel %vm1902, %v1935, %v1936
      %v1938 = vrot.slane %v1857, 5
      %v1939 = vrot.slane %v1938, 4
      %v1940 = vrot.slane %v961, 5
      %v1941 = vsel %vm1902, %v1939, %v1940
      %v1942 = vrot.slane %v1940, 4
      %v1943 = vrot.slane %v1003, 5
      %v1944 = vsel %vm1902, %v1942, %v1943
      %v1945 = vrot.slane %v1858, 5
      %v1946 = vrot.slane %v1945, 4
      %v1947 = vrot.slane %v963, 5
      %v1948 = vsel %vm1902, %v1946, %v1947
      %v1949 = vrot.slane %v1947, 4
      %v1950 = vrot.slane %v1004, 5
      %v1951 = vsel %vm1902, %v1949, %v1950
      %v1952 = vrot.slane %v1859, 5
      %v1953 = vrot.slane %v1952, 4
      %v1954 = vrot.slane %v965, 5
      %v1955 = vsel %vm1902, %v1953, %v1954
      %v1956 = vrot.slane %v1954, 4
      %v1957 = vrot.slane %v1005, 5
      %v1958 = vsel %vm1902, %v1956, %v1957
      %v1959 = vrot.slane %v1860, 5
      %v1960 = vrot.slane %v1959, 4
      %v1961 = vrot.slane %v967, 5
      %v1962 = vsel %vm1902, %v1960, %v1961
      %v1963 = vrot.slane %v1961, 4
      %v1964 = vrot.slane %v1006, 5
      %v1965 = vsel %vm1902, %v1963, %v1964
      %v1966 = vrot.slane %v1861, 5
      %v1967 = vrot.slane %v1966, 4
      %v1968 = vrot.slane %v969, 5
      %v1969 = vsel %vm1902, %v1967, %v1968
      %v1970 = vrot.slane %v1968, 4
      %v1971 = vrot.slane %v1007, 5
      %v1972 = vsel %vm1902, %v1970, %v1971
      %v1973 = vrot.slane %v1862, 5
      %v1974 = vrot.slane %v1973, 4
      %v1975 = vrot.slane %v971, 5
      %v1976 = vsel %vm1902, %v1974, %v1975
      %v1977 = vrot.slane %v1975, 4
      %v1978 = vrot.slane %v1008, 5
      %v1979 = vsel %vm1902, %v1977, %v1978
      %v1980 = vrot.slane %v1863, 5
      %v1981 = vrot.slane %v1980, 4
      %v1982 = vrot.slane %v973, 5
      %v1983 = vsel %vm1902, %v1981, %v1982
      %v1984 = vrot.slane %v1982, 4
      %v1985 = vrot.slane %v1009, 5
      %v1986 = vsel %vm1902, %v1984, %v1985
      %v1987 = vrot.slane %v1864, 5
      %v1988 = vrot.slane %v1987, 4
      %v1989 = vrot.slane %v975, 5
      %v1990 = vsel %vm1902, %v1988, %v1989
      %v1991 = vrot.slane %v1989, 4
      %v1992 = vrot.slane %v1010, 5
      %v1993 = vsel %vm1902, %v1991, %v1992
      %v1994 = vrot.slane %v1865, 5
      %v1995 = vrot.slane %v1994, 4
      %v1996 = vrot.slane %v977, 5
      %v1997 = vsel %vm1902, %v1995, %v1996
      %v1998 = vrot.slane %v1996, 4
      %v1999 = vrot.slane %v1011, 5
      %v2000 = vsel %vm1902, %v1998, %v1999
      %v2001 = vrot.slane %v1866, 5
      %v2002 = vrot.slane %v2001, 4
      %v2003 = vrot.slane %v979, 5
      %v2004 = vsel %vm1902, %v2002, %v2003
      %v2005 = vrot.slane %v2003, 4
      %v2006 = vrot.slane %v1012, 5
      %v2007 = vsel %vm1902, %v2005, %v2006
      %v2008 = vrot.slane %v1867, 5
      %v2009 = vrot.slane %v2008, 4
      %v2010 = vrot.slane %v981, 5
      %v2011 = vsel %vm1902, %v2009, %v2010
      %v2012 = vrot.slane %v2010, 4
      %v2013 = vrot.slane %v1013, 5
      %v2014 = vsel %vm1902, %v2012, %v2013
      %s2015 = scalar_lea.vmem %s3, 128
      %v2016 = vld [vmem:[%s2015] sm:$0xf]
      %v2017 = vld [vmem:[%s2015 + $0x4] sm:$0xf]
      %v2018 = vld [vmem:[%s2015 + $0x8] sm:$0xf]
      %v2019 = vld [vmem:[%s2015 + $0xc] sm:$0xf]
      %v2020 = vld [vmem:[%s2015 + $0x10] sm:$0xf]
      %v2021 = vld [vmem:[%s2015 + $0x14] sm:$0xf]
      %v2022 = vld [vmem:[%s2015 + $0x18] sm:$0xf]
      %v2023 = vld [vmem:[%s2015 + $0x1c] sm:$0xf]
      %v2024 = vld [vmem:[%s2015 + $0x20] sm:$0xf]
      %v2025 = vld [vmem:[%s2015 + $0x24] sm:$0xf]
      %v2026 = vld [vmem:[%s2015 + $0x28] sm:$0xf]
      %v2027 = vld [vmem:[%s2015 + $0x2c] sm:$0xf]
      %v2028 = vld [vmem:[%s2015 + $0x30] sm:$0xf]
      %v2029 = vld [vmem:[%s2015 + $0x34] sm:$0xf]
      %v2030 = vld [vmem:[%s2015 + $0x38] sm:$0xf]
      %v2031 = vld [vmem:[%s2015 + $0x3c] sm:$0xf]
      %v2032 = vunpack.c.l.b16 %v1906
      %v2033 = vunpack.c.l.b16 %v1909
      %v2034 = vunpack.c.l.b16 %v1913
      %v2035 = vunpack.c.l.b16 %v1916
      %v2036 = vunpack.c.l.b16 %v1920
      %v2037 = vunpack.c.l.b16 %v1923
      %v2038 = vunpack.c.l.b16 %v1927
      %v2039 = vunpack.c.l.b16 %v1930
      %v2040 = vunpack.c.l.b16 %v1934
      %v2041 = vunpack.c.l.b16 %v1937
      %v2042 = vunpack.c.l.b16 %v1941
      %v2043 = vunpack.c.l.b16 %v1944
      %v2044 = vunpack.c.l.b16 %v1948
      %v2045 = vunpack.c.l.b16 %v1951
      %v2046 = vunpack.c.l.b16 %v1955
      %v2047 = vunpack.c.l.b16 %v1958
      %v2048 = vunpack.c.l.b16 %v1962
      %v2049 = vunpack.c.l.b16 %v1965
      %v2050 = vunpack.c.l.b16 %v1969
      %v2051 = vunpack.c.l.b16 %v1972
      %v2052 = vunpack.c.l.b16 %v1976
      %v2053 = vunpack.c.l.b16 %v1979
      %v2054 = vunpack.c.l.b16 %v1983
      %v2055 = vunpack.c.l.b16 %v1986
      %v2056 = vunpack.c.l.b16 %v1990
      %v2057 = vunpack.c.l.b16 %v1993
      %v2058 = vunpack.c.l.b16 %v1997
      %v2059 = vunpack.c.l.b16 %v2000
      %v2060 = vunpack.c.l.b16 %v2004
      %v2061 = vunpack.c.l.b16 %v2007
      %v2062 = vunpack.c.l.b16 %v2011
      %v2063 = vunpack.c.l.b16 %v2014
      %v2064 = vpack.c.b16 %v2033, %v2032
      %v2065 = vpack.c.b16 %v2035, %v2034
      %v2066 = vpack.c.b16 %v2037, %v2036
      %v2067 = vpack.c.b16 %v2039, %v2038
      %v2068 = vpack.c.b16 %v2041, %v2040
      %v2069 = vpack.c.b16 %v2043, %v2042
      %v2070 = vpack.c.b16 %v2045, %v2044
      %v2071 = vpack.c.b16 %v2047, %v2046
      %v2072 = vpack.c.b16 %v2049, %v2048
      %v2073 = vpack.c.b16 %v2051, %v2050
      %v2074 = vpack.c.b16 %v2053, %v2052
      %v2075 = vpack.c.b16 %v2055, %v2054
      %v2076 = vpack.c.b16 %v2057, %v2056
      %v2077 = vpack.c.b16 %v2059, %v2058
      %v2078 = vpack.c.b16 %v2061, %v2060
      %v2079 = vpack.c.b16 %v2063, %v2062
      %v2112 = vunpack.c.l.b16 %v2016
      %v2113 = vunpack.c.l.b16 %v2017
      %v2114 = vunpack.c.l.b16 %v2018
      %v2115 = vunpack.c.l.b16 %v2019
      %v2116 = vunpack.c.l.b16 %v2020
      %v2117 = vunpack.c.l.b16 %v2021
      %v2118 = vunpack.c.l.b16 %v2022
      %v2119 = vunpack.c.l.b16 %v2023
      %v2120 = vunpack.c.l.b16 %v2024
      %v2121 = vunpack.c.l.b16 %v2025
      %v2122 = vunpack.c.l.b16 %v2026
      %v2123 = vunpack.c.l.b16 %v2027
      %v2124 = vunpack.c.l.b16 %v2028
      %v2125 = vunpack.c.l.b16 %v2029
      %v2126 = vunpack.c.l.b16 %v2030
      %v2127 = vunpack.c.l.b16 %v2031
      %v2128 = vpack.c.b16 %v2113, %v2112
      %v2129 = vpack.c.b16 %v2115, %v2114
      %v2130 = vpack.c.b16 %v2117, %v2116
      %v2131 = vpack.c.b16 %v2119, %v2118
      %v2132 = vpack.c.b16 %v2121, %v2120
      %v2133 = vpack.c.b16 %v2123, %v2122
      %v2134 = vpack.c.b16 %v2125, %v2124
      %v2135 = vpack.c.b16 %v2127, %v2126
      %2144 = vmatpush.bf16.msra.mxu0 %v2135
      %2145 = vmatpush.bf16.msra.mxu0 %v2134
      %2146 = vmatpush.bf16.msra.mxu0 %v2133
      %2147 = vmatpush.bf16.msra.mxu0 %v2132
      %2148 = vmatpush.bf16.msra.mxu0 %v2131
      %2149 = vmatpush.bf16.msra.mxu0 %v2130
      %2150 = vmatpush.bf16.msra.mxu0 %v2129
      %2151 = vmatpush.bf16.msra.mxu0 %v2128
      %2152 = vmatmul.bf16.gmra.mxu0 %v2064
      %v2153 = vpop.f32.mrf.mxu0
      %v2154 = vadd.f32 0.0, %v2153
      %v2155 = vpop.f32.mrf.mxu0
      %v2156 = vadd.f32 0.0, %v2155
      %2157 = vmatmul.bf16.gmra.mxu0 %v2065
      %v2158 = vpop.f32.mrf.mxu0
      %v2159 = vadd.f32 0.0, %v2158
      %v2160 = vpop.f32.mrf.mxu0
      %v2161 = vadd.f32 0.0, %v2160
      %2162 = vmatmul.bf16.gmra.mxu0 %v2066
      %v2163 = vpop.f32.mrf.mxu0
      %v2164 = vadd.f32 0.0, %v2163
      %v2165 = vpop.f32.mrf.mxu0
      %v2166 = vadd.f32 0.0, %v2165
      %2167 = vmatmul.bf16.gmra.mxu0 %v2067
      %v2168 = vpop.f32.mrf.mxu0
      %v2169 = vadd.f32 0.0, %v2168
      %v2170 = vpop.f32.mrf.mxu0
      %v2171 = vadd.f32 0.0, %v2170
      %2172 = vmatmul.bf16.gmra.mxu0 %v2068
      %v2173 = vpop.f32.mrf.mxu0
      %v2174 = vadd.f32 0.0, %v2173
      %v2175 = vpop.f32.mrf.mxu0
      %v2176 = vadd.f32 0.0, %v2175
      %2177 = vmatmul.bf16.gmra.mxu0 %v2069
      %v2178 = vpop.f32.mrf.mxu0
      %v2179 = vadd.f32 0.0, %v2178
      %v2180 = vpop.f32.mrf.mxu0
      %v2181 = vadd.f32 0.0, %v2180
      %2182 = vmatmul.bf16.gmra.mxu0 %v2070
      %v2183 = vpop.f32.mrf.mxu0
      %v2184 = vadd.f32 0.0, %v2183
      %v2185 = vpop.f32.mrf.mxu0
      %v2186 = vadd.f32 0.0, %v2185
      %2187 = vmatmul.bf16.gmra.mxu0 %v2071
      %v2188 = vpop.f32.mrf.mxu0
      %v2189 = vadd.f32 0.0, %v2188
      %v2190 = vpop.f32.mrf.mxu0
      %v2191 = vadd.f32 0.0, %v2190
      %2192 = vmatmul.bf16.gmra.mxu0 %v2072
      %v2193 = vpop.f32.mrf.mxu0
      %v2194 = vadd.f32 0.0, %v2193
      %v2195 = vpop.f32.mrf.mxu0
      %v2196 = vadd.f32 0.0, %v2195
      %2197 = vmatmul.bf16.gmra.mxu0 %v2073
      %v2198 = vpop.f32.mrf.mxu0
      %v2199 = vadd.f32 0.0, %v2198
      %v2200 = vpop.f32.mrf.mxu0
      %v2201 = vadd.f32 0.0, %v2200
      %2202 = vmatmul.bf16.gmra.mxu0 %v2074
      %v2203 = vpop.f32.mrf.mxu0
      %v2204 = vadd.f32 0.0, %v2203
      %v2205 = vpop.f32.mrf.mxu0
      %v2206 = vadd.f32 0.0, %v2205
      %2207 = vmatmul.bf16.gmra.mxu0 %v2075
      %v2208 = vpop.f32.mrf.mxu0
      %v2209 = vadd.f32 0.0, %v2208
      %v2210 = vpop.f32.mrf.mxu0
      %v2211 = vadd.f32 0.0, %v2210
      %2212 = vmatmul.bf16.gmra.mxu0 %v2076
      %v2213 = vpop.f32.mrf.mxu0
      %v2214 = vadd.f32 0.0, %v2213
      %v2215 = vpop.f32.mrf.mxu0
      %v2216 = vadd.f32 0.0, %v2215
      %2217 = vmatmul.bf16.gmra.mxu0 %v2077
      %v2218 = vpop.f32.mrf.mxu0
      %v2219 = vadd.f32 0.0, %v2218
      %v2220 = vpop.f32.mrf.mxu0
      %v2221 = vadd.f32 0.0, %v2220
      %2222 = vmatmul.bf16.gmra.mxu0 %v2078
      %v2223 = vpop.f32.mrf.mxu0
      %v2224 = vadd.f32 0.0, %v2223
      %v2225 = vpop.f32.mrf.mxu0
      %v2226 = vadd.f32 0.0, %v2225
      %2227 = vmatmul.bf16.gmra.mxu0 %v2079
      %v2228 = vpop.f32.mrf.mxu0
      %v2229 = vadd.f32 0.0, %v2228
      %v2230 = vpop.f32.mrf.mxu0
      %v2231 = vadd.f32 0.0, %v2230
      %2232 = vdwg.mxu0
      %v2233 = vadd.f32 %v1773, %v2154
      %v2234 = vadd.f32 %v1775, %v2156
      %v2235 = vadd.f32 %v1778, %v2159
      %v2236 = vadd.f32 %v1780, %v2161
      %v2237 = vadd.f32 %v1783, %v2164
      %v2238 = vadd.f32 %v1785, %v2166
      %v2239 = vadd.f32 %v1788, %v2169
      %v2240 = vadd.f32 %v1790, %v2171
      %v2241 = vadd.f32 %v1793, %v2174
      %v2242 = vadd.f32 %v1795, %v2176
      %v2243 = vadd.f32 %v1798, %v2179
      %v2244 = vadd.f32 %v1800, %v2181
      %v2245 = vadd.f32 %v1803, %v2184
      %v2246 = vadd.f32 %v1805, %v2186
      %v2247 = vadd.f32 %v1808, %v2189
      %v2248 = vadd.f32 %v1810, %v2191
      %v2249 = vadd.f32 %v1813, %v2194
      %v2250 = vadd.f32 %v1815, %v2196
      %v2251 = vadd.f32 %v1818, %v2199
      %v2252 = vadd.f32 %v1820, %v2201
      %v2253 = vadd.f32 %v1823, %v2204
      %v2254 = vadd.f32 %v1825, %v2206
      %v2255 = vadd.f32 %v1828, %v2209
      %v2256 = vadd.f32 %v1830, %v2211
      %v2257 = vadd.f32 %v1833, %v2214
      %v2258 = vadd.f32 %v1835, %v2216
      %v2259 = vadd.f32 %v1838, %v2219
      %v2260 = vadd.f32 %v1840, %v2221
      %v2261 = vadd.f32 %v1843, %v2224
      %v2262 = vadd.f32 %v1845, %v2226
      %v2263 = vadd.f32 %v1848, %v2229
      %v2264 = vadd.f32 %v1850, %v2231
      %v2265 = vld [vmem:[%s412] sm:$0xf]
      %v2266 = vld [vmem:[%s412 + $0x4] sm:$0xf]
      %v2267 = vld [vmem:[%s412 + $0xc] sm:$0xf]
      %v2268 = vld [vmem:[%s412 + $0x10] sm:$0xf]
      %v2269 = vld [vmem:[%s412 + $0x18] sm:$0xf]
      %v2270 = vld [vmem:[%s412 + $0x1c] sm:$0xf]
      %v2271 = vld [vmem:[%s412 + $0x24] sm:$0xf]
      %v2272 = vld [vmem:[%s412 + $0x28] sm:$0xf]
      %v2273 = vld [vmem:[%s412 + $0x30] sm:$0xf]
      %v2274 = vld [vmem:[%s412 + $0x34] sm:$0xf]
      %v2275 = vld [vmem:[%s412 + $0x3c] sm:$0xf]
      %v2276 = vld [vmem:[%s412 + $0x40] sm:$0xf]
      %v2277 = vld [vmem:[%s412 + $0x48] sm:$0xf]
      %v2278 = vld [vmem:[%s412 + $0x4c] sm:$0xf]
      %v2279 = vld [vmem:[%s412 + $0x54] sm:$0xf]
      %v2280 = vld [vmem:[%s412 + $0x58] sm:$0xf]
      %v2281 = vld [vmem:[%s412 + $0x60] sm:$0xf]
      %v2282 = vld [vmem:[%s412 + $0x64] sm:$0xf]
      %v2283 = vld [vmem:[%s412 + $0x6c] sm:$0xf]
      %v2284 = vld [vmem:[%s412 + $0x70] sm:$0xf]
      %v2285 = vld [vmem:[%s412 + $0x78] sm:$0xf]
      %v2286 = vld [vmem:[%s412 + $0x7c] sm:$0xf]
      %v2287 = vld [vmem:[%s412 + $0x84] sm:$0xf]
      %v2288 = vld [vmem:[%s412 + $0x88] sm:$0xf]
      %v2289 = vld [vmem:[%s412 + $0x90] sm:$0xf]
      %v2290 = vld [vmem:[%s412 + $0x94] sm:$0xf]
      %v2291 = vld [vmem:[%s412 + $0x9c] sm:$0xf]
      %v2292 = vld [vmem:[%s412 + $0xa0] sm:$0xf]
      %v2293 = vld [vmem:[%s412 + $0xa8] sm:$0xf]
      %v2294 = vld [vmem:[%s412 + $0xac] sm:$0xf]
      %v2295 = vld [vmem:[%s412 + $0xb4] sm:$0xf]
      %v2296 = vld [vmem:[%s412 + $0xb8] sm:$0xf]
      %s2297 = scalar_lea.vmem %s3, 192
      %v2298 = vld [vmem:[%s2297] sm:$0xf]
      %v2299 = vld [vmem:[%s2297 + $0x4] sm:$0xf]
      %v2300 = vld [vmem:[%s2297 + $0x8] sm:$0xf]
      %v2301 = vld [vmem:[%s2297 + $0xc] sm:$0xf]
      %v2302 = vld [vmem:[%s2297 + $0x10] sm:$0xf]
      %v2303 = vld [vmem:[%s2297 + $0x14] sm:$0xf]
      %v2304 = vld [vmem:[%s2297 + $0x18] sm:$0xf]
      %v2305 = vld [vmem:[%s2297 + $0x1c] sm:$0xf]
      %v2306 = vld [vmem:[%s2297 + $0x20] sm:$0xf]
      %v2307 = vld [vmem:[%s2297 + $0x24] sm:$0xf]
      %v2308 = vld [vmem:[%s2297 + $0x28] sm:$0xf]
      %v2309 = vld [vmem:[%s2297 + $0x2c] sm:$0xf]
      %v2310 = vld [vmem:[%s2297 + $0x30] sm:$0xf]
      %v2311 = vld [vmem:[%s2297 + $0x34] sm:$0xf]
      %v2312 = vld [vmem:[%s2297 + $0x38] sm:$0xf]
      %v2313 = vld [vmem:[%s2297 + $0x3c] sm:$0xf]
      %v2346 = vunpack.c.l.b16 %v2265
      %v2347 = vunpack.c.l.b16 %v2266
      %v2348 = vunpack.c.l.b16 %v2267
      %v2349 = vunpack.c.l.b16 %v2268
      %v2350 = vunpack.c.l.b16 %v2269
      %v2351 = vunpack.c.l.b16 %v2270
      %v2352 = vunpack.c.l.b16 %v2271
      %v2353 = vunpack.c.l.b16 %v2272
      %v2354 = vunpack.c.l.b16 %v2273
      %v2355 = vunpack.c.l.b16 %v2274
      %v2356 = vunpack.c.l.b16 %v2275
      %v2357 = vunpack.c.l.b16 %v2276
      %v2358 = vunpack.c.l.b16 %v2277
      %v2359 = vunpack.c.l.b16 %v2278
      %v2360 = vunpack.c.l.b16 %v2279
      %v2361 = vunpack.c.l.b16 %v2280
      %v2362 = vunpack.c.l.b16 %v2281
      %v2363 = vunpack.c.l.b16 %v2282
      %v2364 = vunpack.c.l.b16 %v2283
      %v2365 = vunpack.c.l.b16 %v2284
      %v2366 = vunpack.c.l.b16 %v2285
      %v2367 = vunpack.c.l.b16 %v2286
      %v2368 = vunpack.c.l.b16 %v2287
      %v2369 = vunpack.c.l.b16 %v2288
      %v2370 = vunpack.c.l.b16 %v2289
      %v2371 = vunpack.c.l.b16 %v2290
      %v2372 = vunpack.c.l.b16 %v2291
      %v2373 = vunpack.c.l.b16 %v2292
      %v2374 = vunpack.c.l.b16 %v2293
      %v2375 = vunpack.c.l.b16 %v2294
      %v2376 = vunpack.c.l.b16 %v2295
      %v2377 = vunpack.c.l.b16 %v2296
      %v2378 = vpack.c.b16 %v2347, %v2346
      %v2379 = vpack.c.b16 %v2349, %v2348
      %v2380 = vpack.c.b16 %v2351, %v2350
      %v2381 = vpack.c.b16 %v2353, %v2352
      %v2382 = vpack.c.b16 %v2355, %v2354
      %v2383 = vpack.c.b16 %v2357, %v2356
      %v2384 = vpack.c.b16 %v2359, %v2358
      %v2385 = vpack.c.b16 %v2361, %v2360
      %v2386 = vpack.c.b16 %v2363, %v2362
      %v2387 = vpack.c.b16 %v2365, %v2364
      %v2388 = vpack.c.b16 %v2367, %v2366
      %v2389 = vpack.c.b16 %v2369, %v2368
      %v2390 = vpack.c.b16 %v2371, %v2370
      %v2391 = vpack.c.b16 %v2373, %v2372
      %v2392 = vpack.c.b16 %v2375, %v2374
      %v2393 = vpack.c.b16 %v2377, %v2376
      %v2426 = vunpack.c.l.b16 %v2298
      %v2427 = vunpack.c.l.b16 %v2299
      %v2428 = vunpack.c.l.b16 %v2300
      %v2429 = vunpack.c.l.b16 %v2301
      %v2430 = vunpack.c.l.b16 %v2302
      %v2431 = vunpack.c.l.b16 %v2303
      %v2432 = vunpack.c.l.b16 %v2304
      %v2433 = vunpack.c.l.b16 %v2305
      %v2434 = vunpack.c.l.b16 %v2306
      %v2435 = vunpack.c.l.b16 %v2307
      %v2436 = vunpack.c.l.b16 %v2308
      %v2437 = vunpack.c.l.b16 %v2309
      %v2438 = vunpack.c.l.b16 %v2310
      %v2439 = vunpack.c.l.b16 %v2311
      %v2440 = vunpack.c.l.b16 %v2312
      %v2441 = vunpack.c.l.b16 %v2313
      %v2442 = vpack.c.b16 %v2427, %v2426
      %v2443 = vpack.c.b16 %v2429, %v2428
      %v2444 = vpack.c.b16 %v2431, %v2430
      %v2445 = vpack.c.b16 %v2433, %v2432
      %v2446 = vpack.c.b16 %v2435, %v2434
      %v2447 = vpack.c.b16 %v2437, %v2436
      %v2448 = vpack.c.b16 %v2439, %v2438
      %v2449 = vpack.c.b16 %v2441, %v2440
      %2458 = vmatpush.bf16.msra.mxu0 %v2449
      %2459 = vmatpush.bf16.msra.mxu0 %v2448
      %2460 = vmatpush.bf16.msra.mxu0 %v2447
      %2461 = vmatpush.bf16.msra.mxu0 %v2446
      %2462 = vmatpush.bf16.msra.mxu0 %v2445
      %2463 = vmatpush.bf16.msra.mxu0 %v2444
      %2464 = vmatpush.bf16.msra.mxu0 %v2443
      %2465 = vmatpush.bf16.msra.mxu0 %v2442
      %2466 = vmatmul.bf16.gmra.mxu0 %v2378
      %v2467 = vpop.f32.mrf.mxu0
      %v2468 = vadd.f32 0.0, %v2467
      %v2469 = vpop.f32.mrf.mxu0
      %v2470 = vadd.f32 0.0, %v2469
      %2471 = vmatmul.bf16.gmra.mxu0 %v2379
      %v2472 = vpop.f32.mrf.mxu0
      %v2473 = vadd.f32 0.0, %v2472
      %v2474 = vpop.f32.mrf.mxu0
      %v2475 = vadd.f32 0.0, %v2474
      %2476 = vmatmul.bf16.gmra.mxu0 %v2380
      %v2477 = vpop.f32.mrf.mxu0
      %v2478 = vadd.f32 0.0, %v2477
      %v2479 = vpop.f32.mrf.mxu0
      %v2480 = vadd.f32 0.0, %v2479
      %2481 = vmatmul.bf16.gmra.mxu0 %v2381
      %v2482 = vpop.f32.mrf.mxu0
      %v2483 = vadd.f32 0.0, %v2482
      %v2484 = vpop.f32.mrf.mxu0
      %v2485 = vadd.f32 0.0, %v2484
      %2486 = vmatmul.bf16.gmra.mxu0 %v2382
      %v2487 = vpop.f32.mrf.mxu0
      %v2488 = vadd.f32 0.0, %v2487
      %v2489 = vpop.f32.mrf.mxu0
      %v2490 = vadd.f32 0.0, %v2489
      %2491 = vmatmul.bf16.gmra.mxu0 %v2383
      %v2492 = vpop.f32.mrf.mxu0
      %v2493 = vadd.f32 0.0, %v2492
      %v2494 = vpop.f32.mrf.mxu0
      %v2495 = vadd.f32 0.0, %v2494
      %2496 = vmatmul.bf16.gmra.mxu0 %v2384
      %v2497 = vpop.f32.mrf.mxu0
      %v2498 = vadd.f32 0.0, %v2497
      %v2499 = vpop.f32.mrf.mxu0
      %v2500 = vadd.f32 0.0, %v2499
      %2501 = vmatmul.bf16.gmra.mxu0 %v2385
      %v2502 = vpop.f32.mrf.mxu0
      %v2503 = vadd.f32 0.0, %v2502
      %v2504 = vpop.f32.mrf.mxu0
      %v2505 = vadd.f32 0.0, %v2504
      %2506 = vmatmul.bf16.gmra.mxu0 %v2386
      %v2507 = vpop.f32.mrf.mxu0
      %v2508 = vadd.f32 0.0, %v2507
      %v2509 = vpop.f32.mrf.mxu0
      %v2510 = vadd.f32 0.0, %v2509
      %2511 = vmatmul.bf16.gmra.mxu0 %v2387
      %v2512 = vpop.f32.mrf.mxu0
      %v2513 = vadd.f32 0.0, %v2512
      %v2514 = vpop.f32.mrf.mxu0
      %v2515 = vadd.f32 0.0, %v2514
      %2516 = vmatmul.bf16.gmra.mxu0 %v2388
      %v2517 = vpop.f32.mrf.mxu0
      %v2518 = vadd.f32 0.0, %v2517
      %v2519 = vpop.f32.mrf.mxu0
      %v2520 = vadd.f32 0.0, %v2519
      %2521 = vmatmul.bf16.gmra.mxu0 %v2389
      %v2522 = vpop.f32.mrf.mxu0
      %v2523 = vadd.f32 0.0, %v2522
      %v2524 = vpop.f32.mrf.mxu0
      %v2525 = vadd.f32 0.0, %v2524
      %2526 = vmatmul.bf16.gmra.mxu0 %v2390
      %v2527 = vpop.f32.mrf.mxu0
      %v2528 = vadd.f32 0.0, %v2527
      %v2529 = vpop.f32.mrf.mxu0
      %v2530 = vadd.f32 0.0, %v2529
      %2531 = vmatmul.bf16.gmra.mxu0 %v2391
      %v2532 = vpop.f32.mrf.mxu0
      %v2533 = vadd.f32 0.0, %v2532
      %v2534 = vpop.f32.mrf.mxu0
      %v2535 = vadd.f32 0.0, %v2534
      %2536 = vmatmul.bf16.gmra.mxu0 %v2392
      %v2537 = vpop.f32.mrf.mxu0
      %v2538 = vadd.f32 0.0, %v2537
      %v2539 = vpop.f32.mrf.mxu0
      %v2540 = vadd.f32 0.0, %v2539
      %2541 = vmatmul.bf16.gmra.mxu0 %v2393
      %v2542 = vpop.f32.mrf.mxu0
      %v2543 = vadd.f32 0.0, %v2542
      %v2544 = vpop.f32.mrf.mxu0
      %v2545 = vadd.f32 0.0, %v2544
      %2546 = vdwg.mxu0
      %v2547 = vadd.f32 %v2233, %v2468
      %v2548 = vadd.f32 %v2234, %v2470
      %v2549 = vadd.f32 %v2235, %v2473
      %v2550 = vadd.f32 %v2236, %v2475
      %v2551 = vadd.f32 %v2237, %v2478
      %v2552 = vadd.f32 %v2238, %v2480
      %v2553 = vadd.f32 %v2239, %v2483
      %v2554 = vadd.f32 %v2240, %v2485
      %v2555 = vadd.f32 %v2241, %v2488
      %v2556 = vadd.f32 %v2242, %v2490
      %v2557 = vadd.f32 %v2243, %v2493
      %v2558 = vadd.f32 %v2244, %v2495
      %v2559 = vadd.f32 %v2245, %v2498
      %v2560 = vadd.f32 %v2246, %v2500
      %v2561 = vadd.f32 %v2247, %v2503
      %v2562 = vadd.f32 %v2248, %v2505
      %v2563 = vadd.f32 %v2249, %v2508
      %v2564 = vadd.f32 %v2250, %v2510
      %v2565 = vadd.f32 %v2251, %v2513
      %v2566 = vadd.f32 %v2252, %v2515
      %v2567 = vadd.f32 %v2253, %v2518
      %v2568 = vadd.f32 %v2254, %v2520
      %v2569 = vadd.f32 %v2255, %v2523
      %v2570 = vadd.f32 %v2256, %v2525
      %v2571 = vadd.f32 %v2257, %v2528
      %v2572 = vadd.f32 %v2258, %v2530
      %v2573 = vadd.f32 %v2259, %v2533
      %v2574 = vadd.f32 %v2260, %v2535
      %v2575 = vadd.f32 %v2261, %v2538
      %v2576 = vadd.f32 %v2262, %v2540
      %v2577 = vadd.f32 %v2263, %v2543
      %v2578 = vadd.f32 %v2264, %v2545
      %v2579 = vld [vmem:[%s412] sm:$0xf]
      %v2580 = vld [vmem:[%s412 + $0x4] sm:$0xf]
      %v2581 = vld [vmem:[%s412 + $0x8] sm:$0x1]
      %v2582 = vld [vmem:[%s412 + $0xc] sm:$0xf]
      %v2583 = vld [vmem:[%s412 + $0x10] sm:$0xf]
      %v2584 = vld [vmem:[%s412 + $0x14] sm:$0x1]
      %v2585 = vld [vmem:[%s412 + $0x18] sm:$0xf]
      %v2586 = vld [vmem:[%s412 + $0x1c] sm:$0xf]
      %v2587 = vld [vmem:[%s412 + $0x20] sm:$0x1]
      %v2588 = vld [vmem:[%s412 + $0x24] sm:$0xf]
      %v2589 = vld [vmem:[%s412 + $0x28] sm:$0xf]
      %v2590 = vld [vmem:[%s412 + $0x2c] sm:$0x1]
      %v2591 = vld [vmem:[%s412 + $0x30] sm:$0xf]
      %v2592 = vld [vmem:[%s412 + $0x34] sm:$0xf]
      %v2593 = vld [vmem:[%s412 + $0x38] sm:$0x1]
      %v2594 = vld [vmem:[%s412 + $0x3c] sm:$0xf]
      %v2595 = vld [vmem:[%s412 + $0x40] sm:$0xf]
      %v2596 = vld [vmem:[%s412 + $0x44] sm:$0x1]
      %v2597 = vld [vmem:[%s412 + $0x48] sm:$0xf]
      %v2598 = vld [vmem:[%s412 + $0x4c] sm:$0xf]
      %v2599 = vld [vmem:[%s412 + $0x50] sm:$0x1]
      %v2600 = vld [vmem:[%s412 + $0x54] sm:$0xf]
      %v2601 = vld [vmem:[%s412 + $0x58] sm:$0xf]
      %v2602 = vld [vmem:[%s412 + $0x5c] sm:$0x1]
      %v2603 = vld [vmem:[%s412 + $0x60] sm:$0xf]
      %v2604 = vld [vmem:[%s412 + $0x64] sm:$0xf]
      %v2605 = vld [vmem:[%s412 + $0x68] sm:$0x1]
      %v2606 = vld [vmem:[%s412 + $0x6c] sm:$0xf]
      %v2607 = vld [vmem:[%s412 + $0x70] sm:$0xf]
      %v2608 = vld [vmem:[%s412 + $0x74] sm:$0x1]
      %v2609 = vld [vmem:[%s412 + $0x78] sm:$0xf]
      %v2610 = vld [vmem:[%s412 + $0x7c] sm:$0xf]
      %v2611 = vld [vmem:[%s412 + $0x80] sm:$0x1]
      %v2612 = vld [vmem:[%s412 + $0x84] sm:$0xf]
      %v2613 = vld [vmem:[%s412 + $0x88] sm:$0xf]
      %v2614 = vld [vmem:[%s412 + $0x8c] sm:$0x1]
      %v2615 = vld [vmem:[%s412 + $0x90] sm:$0xf]
      %v2616 = vld [vmem:[%s412 + $0x94] sm:$0xf]
      %v2617 = vld [vmem:[%s412 + $0x98] sm:$0x1]
      %v2618 = vld [vmem:[%s412 + $0x9c] sm:$0xf]
      %v2619 = vld [vmem:[%s412 + $0xa0] sm:$0xf]
      %v2620 = vld [vmem:[%s412 + $0xa4] sm:$0x1]
      %v2621 = vld [vmem:[%s412 + $0xa8] sm:$0xf]
      %v2622 = vld [vmem:[%s412 + $0xac] sm:$0xf]
      %v2623 = vld [vmem:[%s412 + $0xb0] sm:$0x1]
      %v2624 = vld [vmem:[%s412 + $0xb4] sm:$0xf]
      %v2625 = vld [vmem:[%s412 + $0xb8] sm:$0xf]
      %v2626 = vld [vmem:[%s412 + $0xbc] sm:$0x1]
      %v2628 = vshrl.u32 %v2579, 16
      %v2630 = vrot.slane %v2628, 4
      %v2631 = vshll.u32 %v2579, 16
      %v2633 = vrot.slane %v2631, 5
      %v2634 = vor.u32 %v2630, %v2633
      %v2635 = vrot.slane %v2634, 4
      %v2637 = vshll.u32 %v2580, 16
      %v2639 = vrot.slane %v2637, 5
      %v2640 = vsel %vm1016, %v2635, %v2639
      %v2641 = vshrl.u32 %v2580, 16
      %v2643 = vrot.slane %v2641, 4
      %v2644 = vor.u32 %v2643, %v2639
      %v2645 = vrot.slane %v2644, 4
      %v2647 = vshll.u32 %v2581, 16
      %v2649 = vrot.slane %v2647, 5
      %v2650 = vsel %vm1016, %v2645, %v2649
      %v2652 = vshrl.u32 %v2582, 16
      %v2654 = vrot.slane %v2652, 4
      %v2655 = vshll.u32 %v2582, 16
      %v2657 = vrot.slane %v2655, 5
      %v2658 = vor.u32 %v2654, %v2657
      %v2659 = vrot.slane %v2658, 4
      %v2661 = vshll.u32 %v2583, 16
      %v2663 = vrot.slane %v2661, 5
      %v2664 = vsel %vm1016, %v2659, %v2663
      %v2665 = vshrl.u32 %v2583, 16
      %v2667 = vrot.slane %v2665, 4
      %v2668 = vor.u32 %v2667, %v2663
      %v2669 = vrot.slane %v2668, 4
      %v2671 = vshll.u32 %v2584, 16
      %v2673 = vrot.slane %v2671, 5
      %v2674 = vsel %vm1016, %v2669, %v2673
      %v2676 = vshrl.u32 %v2585, 16
      %v2678 = vrot.slane %v2676, 4
      %v2679 = vshll.u32 %v2585, 16
      %v2681 = vrot.slane %v2679, 5
      %v2682 = vor.u32 %v2678, %v2681
      %v2683 = vrot.slane %v2682, 4
      %v2685 = vshll.u32 %v2586, 16
      %v2687 = vrot.slane %v2685, 5
      %v2688 = vsel %vm1016, %v2683, %v2687
      %v2689 = vshrl.u32 %v2586, 16
      %v2691 = vrot.slane %v2689, 4
      %v2692 = vor.u32 %v2691, %v2687
      %v2693 = vrot.slane %v2692, 4
      %v2695 = vshll.u32 %v2587, 16
      %v2697 = vrot.slane %v2695, 5
      %v2698 = vsel %vm1016, %v2693, %v2697
      %v2700 = vshrl.u32 %v2588, 16
      %v2702 = vrot.slane %v2700, 4
      %v2703 = vshll.u32 %v2588, 16
      %v2705 = vrot.slane %v2703, 5
      %v2706 = vor.u32 %v2702, %v2705
      %v2707 = vrot.slane %v2706, 4
      %v2709 = vshll.u32 %v2589, 16
      %v2711 = vrot.slane %v2709, 5
      %v2712 = vsel %vm1016, %v2707, %v2711
      %v2713 = vshrl.u32 %v2589, 16
      %v2715 = vrot.slane %v2713, 4
      %v2716 = vor.u32 %v2715, %v2711
      %v2717 = vrot.slane %v2716, 4
      %v2719 = vshll.u32 %v2590, 16
      %v2721 = vrot.slane %v2719, 5
      %v2722 = vsel %vm1016, %v2717, %v2721
      %v2724 = vshrl.u32 %v2591, 16
      %v2726 = vrot.slane %v2724, 4
      %v2727 = vshll.u32 %v2591, 16
      %v2729 = vrot.slane %v2727, 5
      %v2730 = vor.u32 %v2726, %v2729
      %v2731 = vrot.slane %v2730, 4
      %v2733 = vshll.u32 %v2592, 16
      %v2735 = vrot.slane %v2733, 5
      %v2736 = vsel %vm1016, %v2731, %v2735
      %v2737 = vshrl.u32 %v2592, 16
      %v2739 = vrot.slane %v2737, 4
      %v2740 = vor.u32 %v2739, %v2735
      %v2741 = vrot.slane %v2740, 4
      %v2743 = vshll.u32 %v2593, 16
      %v2745 = vrot.slane %v2743, 5
      %v2746 = vsel %vm1016, %v2741, %v2745
      %v2748 = vshrl.u32 %v2594, 16
      %v2750 = vrot.slane %v2748, 4
      %v2751 = vshll.u32 %v2594, 16
      %v2753 = vrot.slane %v2751, 5
      %v2754 = vor.u32 %v2750, %v2753
      %v2755 = vrot.slane %v2754, 4
      %v2757 = vshll.u32 %v2595, 16
      %v2759 = vrot.slane %v2757, 5
      %v2760 = vsel %vm1016, %v2755, %v2759
      %v2761 = vshrl.u32 %v2595, 16
      %v2763 = vrot.slane %v2761, 4
      %v2764 = vor.u32 %v2763, %v2759
      %v2765 = vrot.slane %v2764, 4
      %v2767 = vshll.u32 %v2596, 16
      %v2769 = vrot.slane %v2767, 5
      %v2770 = vsel %vm1016, %v2765, %v2769
      %v2772 = vshrl.u32 %v2597, 16
      %v2774 = vrot.slane %v2772, 4
      %v2775 = vshll.u32 %v2597, 16
      %v2777 = vrot.slane %v2775, 5
      %v2778 = vor.u32 %v2774, %v2777
      %v2779 = vrot.slane %v2778, 4
      %v2781 = vshll.u32 %v2598, 16
      %v2783 = vrot.slane %v2781, 5
      %v2784 = vsel %vm1016, %v2779, %v2783
      %v2785 = vshrl.u32 %v2598, 16
      %v2787 = vrot.slane %v2785, 4
      %v2788 = vor.u32 %v2787, %v2783
      %v2789 = vrot.slane %v2788, 4
      %v2791 = vshll.u32 %v2599, 16
      %v2793 = vrot.slane %v2791, 5
      %v2794 = vsel %vm1016, %v2789, %v2793
      %v2796 = vshrl.u32 %v2600, 16
      %v2798 = vrot.slane %v2796, 4
      %v2799 = vshll.u32 %v2600, 16
      %v2801 = vrot.slane %v2799, 5
      %v2802 = vor.u32 %v2798, %v2801
      %v2803 = vrot.slane %v2802, 4
      %v2805 = vshll.u32 %v2601, 16
      %v2807 = vrot.slane %v2805, 5
      %v2808 = vsel %vm1016, %v2803, %v2807
      %v2809 = vshrl.u32 %v2601, 16
      %v2811 = vrot.slane %v2809, 4
      %v2812 = vor.u32 %v2811, %v2807
      %v2813 = vrot.slane %v2812, 4
      %v2815 = vshll.u32 %v2602, 16
      %v2817 = vrot.slane %v2815, 5
      %v2818 = vsel %vm1016, %v2813, %v2817
      %v2820 = vshrl.u32 %v2603, 16
      %v2822 = vrot.slane %v2820, 4
      %v2823 = vshll.u32 %v2603, 16
      %v2825 = vrot.slane %v2823, 5
      %v2826 = vor.u32 %v2822, %v2825
      %v2827 = vrot.slane %v2826, 4
      %v2829 = vshll.u32 %v2604, 16
      %v2831 = vrot.slane %v2829, 5
      %v2832 = vsel %vm1016, %v2827, %v2831
      %v2833 = vshrl.u32 %v2604, 16
      %v2835 = vrot.slane %v2833, 4
      %v2836 = vor.u32 %v2835, %v2831
      %v2837 = vrot.slane %v2836, 4
      %v2839 = vshll.u32 %v2605, 16
      %v2841 = vrot.slane %v2839, 5
      %v2842 = vsel %vm1016, %v2837, %v2841
      %v2844 = vshrl.u32 %v2606, 16
      %v2846 = vrot.slane %v2844, 4
      %v2847 = vshll.u32 %v2606, 16
      %v2849 = vrot.slane %v2847, 5
      %v2850 = vor.u32 %v2846, %v2849
      %v2851 = vrot.slane %v2850, 4
      %v2853 = vshll.u32 %v2607, 16
      %v2855 = vrot.slane %v2853, 5
      %v2856 = vsel %vm1016, %v2851, %v2855
      %v2857 = vshrl.u32 %v2607, 16
      %v2859 = vrot.slane %v2857, 4
      %v2860 = vor.u32 %v2859, %v2855
      %v2861 = vrot.slane %v2860, 4
      %v2863 = vshll.u32 %v2608, 16
      %v2865 = vrot.slane %v2863, 5
      %v2866 = vsel %vm1016, %v2861, %v2865
      %v2868 = vshrl.u32 %v2609, 16
      %v2870 = vrot.slane %v2868, 4
      %v2871 = vshll.u32 %v2609, 16
      %v2873 = vrot.slane %v2871, 5
      %v2874 = vor.u32 %v2870, %v2873
      %v2875 = vrot.slane %v2874, 4
      %v2877 = vshll.u32 %v2610, 16
      %v2879 = vrot.slane %v2877, 5
      %v2880 = vsel %vm1016, %v2875, %v2879
      %v2881 = vshrl.u32 %v2610, 16
      %v2883 = vrot.slane %v2881, 4
      %v2884 = vor.u32 %v2883, %v2879
      %v2885 = vrot.slane %v2884, 4
      %v2887 = vshll.u32 %v2611, 16
      %v2889 = vrot.slane %v2887, 5
      %v2890 = vsel %vm1016, %v2885, %v2889
      %v2892 = vshrl.u32 %v2612, 16
      %v2894 = vrot.slane %v2892, 4
      %v2895 = vshll.u32 %v2612, 16
      %v2897 = vrot.slane %v2895, 5
      %v2898 = vor.u32 %v2894, %v2897
      %v2899 = vrot.slane %v2898, 4
      %v2901 = vshll.u32 %v2613, 16
      %v2903 = vrot.slane %v2901, 5
      %v2904 = vsel %vm1016, %v2899, %v2903
      %v2905 = vshrl.u32 %v2613, 16
      %v2907 = vrot.slane %v2905, 4
      %v2908 = vor.u32 %v2907, %v2903
      %v2909 = vrot.slane %v2908, 4
      %v2911 = vshll.u32 %v2614, 16
      %v2913 = vrot.slane %v2911, 5
      %v2914 = vsel %vm1016, %v2909, %v2913
      %v2916 = vshrl.u32 %v2615, 16
      %v2918 = vrot.slane %v2916, 4
      %v2919 = vshll.u32 %v2615, 16
      %v2921 = vrot.slane %v2919, 5
      %v2922 = vor.u32 %v2918, %v2921
      %v2923 = vrot.slane %v2922, 4
      %v2925 = vshll.u32 %v2616, 16
      %v2927 = vrot.slane %v2925, 5
      %v2928 = vsel %vm1016, %v2923, %v2927
      %v2929 = vshrl.u32 %v2616, 16
      %v2931 = vrot.slane %v2929, 4
      %v2932 = vor.u32 %v2931, %v2927
      %v2933 = vrot.slane %v2932, 4
      %v2935 = vshll.u32 %v2617, 16
      %v2937 = vrot.slane %v2935, 5
      %v2938 = vsel %vm1016, %v2933, %v2937
      %v2940 = vshrl.u32 %v2618, 16
      %v2942 = vrot.slane %v2940, 4
      %v2943 = vshll.u32 %v2618, 16
      %v2945 = vrot.slane %v2943, 5
      %v2946 = vor.u32 %v2942, %v2945
      %v2947 = vrot.slane %v2946, 4
      %v2949 = vshll.u32 %v2619, 16
      %v2951 = vrot.slane %v2949, 5
      %v2952 = vsel %vm1016, %v2947, %v2951
      %v2953 = vshrl.u32 %v2619, 16
      %v2955 = vrot.slane %v2953, 4
      %v2956 = vor.u32 %v2955, %v2951
      %v2957 = vrot.slane %v2956, 4
      %v2959 = vshll.u32 %v2620, 16
      %v2961 = vrot.slane %v2959, 5
      %v2962 = vsel %vm1016, %v2957, %v2961
      %v2964 = vshrl.u32 %v2621, 16
      %v2966 = vrot.slane %v2964, 4
      %v2967 = vshll.u32 %v2621, 16
      %v2969 = vrot.slane %v2967, 5
      %v2970 = vor.u32 %v2966, %v2969
      %v2971 = vrot.slane %v2970, 4
      %v2973 = vshll.u32 %v2622, 16
      %v2975 = vrot.slane %v2973, 5
      %v2976 = vsel %vm1016, %v2971, %v2975
      %v2977 = vshrl.u32 %v2622, 16
      %v2979 = vrot.slane %v2977, 4
      %v2980 = vor.u32 %v2979, %v2975
      %v2981 = vrot.slane %v2980, 4
      %v2983 = vshll.u32 %v2623, 16
      %v2985 = vrot.slane %v2983, 5
      %v2986 = vsel %vm1016, %v2981, %v2985
      %v2988 = vshrl.u32 %v2624, 16
      %v2990 = vrot.slane %v2988, 4
      %v2991 = vshll.u32 %v2624, 16
      %v2993 = vrot.slane %v2991, 5
      %v2994 = vor.u32 %v2990, %v2993
      %v2995 = vrot.slane %v2994, 4
      %v2997 = vshll.u32 %v2625, 16
      %v2999 = vrot.slane %v2997, 5
      %v3000 = vsel %vm1016, %v2995, %v2999
      %v3001 = vshrl.u32 %v2625, 16
      %v3003 = vrot.slane %v3001, 4
      %v3004 = vor.u32 %v3003, %v2999
      %v3005 = vrot.slane %v3004, 4
      %v3007 = vshll.u32 %v2626, 16
      %v3009 = vrot.slane %v3007, 5
      %v3010 = vsel %vm1016, %v3005, %v3009
      %s3011 = scalar_lea.vmem %s3, 256
      %v3012 = vld [vmem:[%s3011] sm:$0xf]
      %v3013 = vld [vmem:[%s3011 + $0x4] sm:$0xf]
      %v3014 = vld [vmem:[%s3011 + $0x8] sm:$0xf]
      %v3015 = vld [vmem:[%s3011 + $0xc] sm:$0xf]
      %v3016 = vld [vmem:[%s3011 + $0x10] sm:$0xf]
      %v3017 = vld [vmem:[%s3011 + $0x14] sm:$0xf]
      %v3018 = vld [vmem:[%s3011 + $0x18] sm:$0xf]
      %v3019 = vld [vmem:[%s3011 + $0x1c] sm:$0xf]
      %v3020 = vld [vmem:[%s3011 + $0x20] sm:$0xf]
      %v3021 = vld [vmem:[%s3011 + $0x24] sm:$0xf]
      %v3022 = vld [vmem:[%s3011 + $0x28] sm:$0xf]
      %v3023 = vld [vmem:[%s3011 + $0x2c] sm:$0xf]
      %v3024 = vld [vmem:[%s3011 + $0x30] sm:$0xf]
      %v3025 = vld [vmem:[%s3011 + $0x34] sm:$0xf]
      %v3026 = vld [vmem:[%s3011 + $0x38] sm:$0xf]
      %v3027 = vld [vmem:[%s3011 + $0x3c] sm:$0xf]
      %v3028 = vunpack.c.l.b16 %v2640
      %v3029 = vunpack.c.l.b16 %v2650
      %v3030 = vunpack.c.l.b16 %v2664
      %v3031 = vunpack.c.l.b16 %v2674
      %v3032 = vunpack.c.l.b16 %v2688
      %v3033 = vunpack.c.l.b16 %v2698
      %v3034 = vunpack.c.l.b16 %v2712
      %v3035 = vunpack.c.l.b16 %v2722
      %v3036 = vunpack.c.l.b16 %v2736
      %v3037 = vunpack.c.l.b16 %v2746
      %v3038 = vunpack.c.l.b16 %v2760
      %v3039 = vunpack.c.l.b16 %v2770
      %v3040 = vunpack.c.l.b16 %v2784
      %v3041 = vunpack.c.l.b16 %v2794
      %v3042 = vunpack.c.l.b16 %v2808
      %v3043 = vunpack.c.l.b16 %v2818
      %v3044 = vunpack.c.l.b16 %v2832
      %v3045 = vunpack.c.l.b16 %v2842
      %v3046 = vunpack.c.l.b16 %v2856
      %v3047 = vunpack.c.l.b16 %v2866
      %v3048 = vunpack.c.l.b16 %v2880
      %v3049 = vunpack.c.l.b16 %v2890
      %v3050 = vunpack.c.l.b16 %v2904
      %v3051 = vunpack.c.l.b16 %v2914
      %v3052 = vunpack.c.l.b16 %v2928
      %v3053 = vunpack.c.l.b16 %v2938
      %v3054 = vunpack.c.l.b16 %v2952
      %v3055 = vunpack.c.l.b16 %v2962
      %v3056 = vunpack.c.l.b16 %v2976
      %v3057 = vunpack.c.l.b16 %v2986
      %v3058 = vunpack.c.l.b16 %v3000
      %v3059 = vunpack.c.l.b16 %v3010
      %v3060 = vpack.c.b16 %v3029, %v3028
      %v3061 = vpack.c.b16 %v3031, %v3030
      %v3062 = vpack.c.b16 %v3033, %v3032
      %v3063 = vpack.c.b16 %v3035, %v3034
      %v3064 = vpack.c.b16 %v3037, %v3036
      %v3065 = vpack.c.b16 %v3039, %v3038
      %v3066 = vpack.c.b16 %v3041, %v3040
      %v3067 = vpack.c.b16 %v3043, %v3042
      %v3068 = vpack.c.b16 %v3045, %v3044
      %v3069 = vpack.c.b16 %v3047, %v3046
      %v3070 = vpack.c.b16 %v3049, %v3048
      %v3071 = vpack.c.b16 %v3051, %v3050
      %v3072 = vpack.c.b16 %v3053, %v3052
      %v3073 = vpack.c.b16 %v3055, %v3054
      %v3074 = vpack.c.b16 %v3057, %v3056
      %v3075 = vpack.c.b16 %v3059, %v3058
      %v3108 = vunpack.c.l.b16 %v3012
      %v3109 = vunpack.c.l.b16 %v3013
      %v3110 = vunpack.c.l.b16 %v3014
      %v3111 = vunpack.c.l.b16 %v3015
      %v3112 = vunpack.c.l.b16 %v3016
      %v3113 = vunpack.c.l.b16 %v3017
      %v3114 = vunpack.c.l.b16 %v3018
      %v3115 = vunpack.c.l.b16 %v3019
      %v3116 = vunpack.c.l.b16 %v3020
      %v3117 = vunpack.c.l.b16 %v3021
      %v3118 = vunpack.c.l.b16 %v3022
      %v3119 = vunpack.c.l.b16 %v3023
      %v3120 = vunpack.c.l.b16 %v3024
      %v3121 = vunpack.c.l.b16 %v3025
      %v3122 = vunpack.c.l.b16 %v3026
      %v3123 = vunpack.c.l.b16 %v3027
      %v3124 = vpack.c.b16 %v3109, %v3108
      %v3125 = vpack.c.b16 %v3111, %v3110
      %v3126 = vpack.c.b16 %v3113, %v3112
      %v3127 = vpack.c.b16 %v3115, %v3114
      %v3128 = vpack.c.b16 %v3117, %v3116
      %v3129 = vpack.c.b16 %v3119, %v3118
      %v3130 = vpack.c.b16 %v3121, %v3120
      %v3131 = vpack.c.b16 %v3123, %v3122
      %3140 = vmatpush.bf16.msra.mxu0 %v3131
      %3141 = vmatpush.bf16.msra.mxu0 %v3130
      %3142 = vmatpush.bf16.msra.mxu0 %v3129
      %3143 = vmatpush.bf16.msra.mxu0 %v3128
      %3144 = vmatpush.bf16.msra.mxu0 %v3127
      %3145 = vmatpush.bf16.msra.mxu0 %v3126
      %3146 = vmatpush.bf16.msra.mxu0 %v3125
      %3147 = vmatpush.bf16.msra.mxu0 %v3124
      %3148 = vmatmul.bf16.gmra.mxu0 %v3060
      %v3149 = vpop.f32.mrf.mxu0
      %v3150 = vadd.f32 0.0, %v3149
      %v3151 = vpop.f32.mrf.mxu0
      %v3152 = vadd.f32 0.0, %v3151
      %3153 = vmatmul.bf16.gmra.mxu0 %v3061
      %v3154 = vpop.f32.mrf.mxu0
      %v3155 = vadd.f32 0.0, %v3154
      %v3156 = vpop.f32.mrf.mxu0
      %v3157 = vadd.f32 0.0, %v3156
      %3158 = vmatmul.bf16.gmra.mxu0 %v3062
      %v3159 = vpop.f32.mrf.mxu0
      %v3160 = vadd.f32 0.0, %v3159
      %v3161 = vpop.f32.mrf.mxu0
      %v3162 = vadd.f32 0.0, %v3161
      %3163 = vmatmul.bf16.gmra.mxu0 %v3063
      %v3164 = vpop.f32.mrf.mxu0
      %v3165 = vadd.f32 0.0, %v3164
      %v3166 = vpop.f32.mrf.mxu0
      %v3167 = vadd.f32 0.0, %v3166
      %3168 = vmatmul.bf16.gmra.mxu0 %v3064
      %v3169 = vpop.f32.mrf.mxu0
      %v3170 = vadd.f32 0.0, %v3169
      %v3171 = vpop.f32.mrf.mxu0
      %v3172 = vadd.f32 0.0, %v3171
      %3173 = vmatmul.bf16.gmra.mxu0 %v3065
      %v3174 = vpop.f32.mrf.mxu0
      %v3175 = vadd.f32 0.0, %v3174
      %v3176 = vpop.f32.mrf.mxu0
      %v3177 = vadd.f32 0.0, %v3176
      %3178 = vmatmul.bf16.gmra.mxu0 %v3066
      %v3179 = vpop.f32.mrf.mxu0
      %v3180 = vadd.f32 0.0, %v3179
      %v3181 = vpop.f32.mrf.mxu0
      %v3182 = vadd.f32 0.0, %v3181
      %3183 = vmatmul.bf16.gmra.mxu0 %v3067
      %v3184 = vpop.f32.mrf.mxu0
      %v3185 = vadd.f32 0.0, %v3184
      %v3186 = vpop.f32.mrf.mxu0
      %v3187 = vadd.f32 0.0, %v3186
      %3188 = vmatmul.bf16.gmra.mxu0 %v3068
      %v3189 = vpop.f32.mrf.mxu0
      %v3190 = vadd.f32 0.0, %v3189
      %v3191 = vpop.f32.mrf.mxu0
      %v3192 = vadd.f32 0.0, %v3191
      %3193 = vmatmul.bf16.gmra.mxu0 %v3069
      %v3194 = vpop.f32.mrf.mxu0
      %v3195 = vadd.f32 0.0, %v3194
      %v3196 = vpop.f32.mrf.mxu0
      %v3197 = vadd.f32 0.0, %v3196
      %3198 = vmatmul.bf16.gmra.mxu0 %v3070
      %v3199 = vpop.f32.mrf.mxu0
      %v3200 = vadd.f32 0.0, %v3199
      %v3201 = vpop.f32.mrf.mxu0
      %v3202 = vadd.f32 0.0, %v3201
      %3203 = vmatmul.bf16.gmra.mxu0 %v3071
      %v3204 = vpop.f32.mrf.mxu0
      %v3205 = vadd.f32 0.0, %v3204
      %v3206 = vpop.f32.mrf.mxu0
      %v3207 = vadd.f32 0.0, %v3206
      %3208 = vmatmul.bf16.gmra.mxu0 %v3072
      %v3209 = vpop.f32.mrf.mxu0
      %v3210 = vadd.f32 0.0, %v3209
      %v3211 = vpop.f32.mrf.mxu0
      %v3212 = vadd.f32 0.0, %v3211
      %3213 = vmatmul.bf16.gmra.mxu0 %v3073
      %v3214 = vpop.f32.mrf.mxu0
      %v3215 = vadd.f32 0.0, %v3214
      %v3216 = vpop.f32.mrf.mxu0
      %v3217 = vadd.f32 0.0, %v3216
      %3218 = vmatmul.bf16.gmra.mxu0 %v3074
      %v3219 = vpop.f32.mrf.mxu0
      %v3220 = vadd.f32 0.0, %v3219
      %v3221 = vpop.f32.mrf.mxu0
      %v3222 = vadd.f32 0.0, %v3221
      %3223 = vmatmul.bf16.gmra.mxu0 %v3075
      %v3224 = vpop.f32.mrf.mxu0
      %v3225 = vadd.f32 0.0, %v3224
      %v3226 = vpop.f32.mrf.mxu0
      %v3227 = vadd.f32 0.0, %v3226
      %3228 = vdwg.mxu0
      %v3229 = vadd.f32 %v2547, %v3150
      %v3230 = vadd.f32 %v2548, %v3152
      %v3231 = vadd.f32 %v2549, %v3155
      %v3232 = vadd.f32 %v2550, %v3157
      %v3233 = vadd.f32 %v2551, %v3160
      %v3234 = vadd.f32 %v2552, %v3162
      %v3235 = vadd.f32 %v2553, %v3165
      %v3236 = vadd.f32 %v2554, %v3167
      %v3237 = vadd.f32 %v2555, %v3170
      %v3238 = vadd.f32 %v2556, %v3172
      %v3239 = vadd.f32 %v2557, %v3175
      %v3240 = vadd.f32 %v2558, %v3177
      %v3241 = vadd.f32 %v2559, %v3180
      %v3242 = vadd.f32 %v2560, %v3182
      %v3243 = vadd.f32 %v2561, %v3185
      %v3244 = vadd.f32 %v2562, %v3187
      %v3245 = vadd.f32 %v2563, %v3190
      %v3246 = vadd.f32 %v2564, %v3192
      %v3247 = vadd.f32 %v2565, %v3195
      %v3248 = vadd.f32 %v2566, %v3197
      %v3249 = vadd.f32 %v2567, %v3200
      %v3250 = vadd.f32 %v2568, %v3202
      %v3251 = vadd.f32 %v2569, %v3205
      %v3252 = vadd.f32 %v2570, %v3207
      %v3253 = vadd.f32 %v2571, %v3210
      %v3254 = vadd.f32 %v2572, %v3212
      %v3255 = vadd.f32 %v2573, %v3215
      %v3256 = vadd.f32 %v2574, %v3217
      %v3257 = vadd.f32 %v2575, %v3220
      %v3258 = vadd.f32 %v2576, %v3222
      %v3259 = vadd.f32 %v2577, %v3225
      %v3260 = vadd.f32 %v2578, %v3227
      %v3261 = vld [vmem:[%s412] sm:$0xe]
      %v3262 = vld [vmem:[%s412 + $0xc] sm:$0xe]
      %v3263 = vld [vmem:[%s412 + $0x18] sm:$0xe]
      %v3264 = vld [vmem:[%s412 + $0x24] sm:$0xe]
      %v3265 = vld [vmem:[%s412 + $0x30] sm:$0xe]
      %v3266 = vld [vmem:[%s412 + $0x3c] sm:$0xe]
      %v3267 = vld [vmem:[%s412 + $0x48] sm:$0xe]
      %v3268 = vld [vmem:[%s412 + $0x54] sm:$0xe]
      %v3269 = vld [vmem:[%s412 + $0x60] sm:$0xe]
      %v3270 = vld [vmem:[%s412 + $0x6c] sm:$0xe]
      %v3271 = vld [vmem:[%s412 + $0x78] sm:$0xe]
      %v3272 = vld [vmem:[%s412 + $0x84] sm:$0xe]
      %v3273 = vld [vmem:[%s412 + $0x90] sm:$0xe]
      %v3274 = vld [vmem:[%s412 + $0x9c] sm:$0xe]
      %v3275 = vld [vmem:[%s412 + $0xa8] sm:$0xe]
      %v3276 = vld [vmem:[%s412 + $0xb4] sm:$0xe]
      %v3325 = vrot.slane %v3261, 5
      %v3326 = vrot.slane %v3325, 4
      %v3327 = vrot.slane %v2580, 5
      %v3328 = vsel %vm1902, %v3326, %v3327
      %v3329 = vrot.slane %v3327, 4
      %v3330 = vrot.slane %v2581, 5
      %v3331 = vsel %vm1902, %v3329, %v3330
      %v3332 = vrot.slane %v3262, 5
      %v3333 = vrot.slane %v3332, 4
      %v3334 = vrot.slane %v2583, 5
      %v3335 = vsel %vm1902, %v3333, %v3334
      %v3336 = vrot.slane %v3334, 4
      %v3337 = vrot.slane %v2584, 5
      %v3338 = vsel %vm1902, %v3336, %v3337
      %v3339 = vrot.slane %v3263, 5
      %v3340 = vrot.slane %v3339, 4
      %v3341 = vrot.slane %v2586, 5
      %v3342 = vsel %vm1902, %v3340, %v3341
      %v3343 = vrot.slane %v3341, 4
      %v3344 = vrot.slane %v2587, 5
      %v3345 = vsel %vm1902, %v3343, %v3344
      %v3346 = vrot.slane %v3264, 5
      %v3347 = vrot.slane %v3346, 4
      %v3348 = vrot.slane %v2589, 5
      %v3349 = vsel %vm1902, %v3347, %v3348
      %v3350 = vrot.slane %v3348, 4
      %v3351 = vrot.slane %v2590, 5
      %v3352 = vsel %vm1902, %v3350, %v3351
      %v3353 = vrot.slane %v3265, 5
      %v3354 = vrot.slane %v3353, 4
      %v3355 = vrot.slane %v2592, 5
      %v3356 = vsel %vm1902, %v3354, %v3355
      %v3357 = vrot.slane %v3355, 4
      %v3358 = vrot.slane %v2593, 5
      %v3359 = vsel %vm1902, %v3357, %v3358
      %v3360 = vrot.slane %v3266, 5
      %v3361 = vrot.slane %v3360, 4
      %v3362 = vrot.slane %v2595, 5
      %v3363 = vsel %vm1902, %v3361, %v3362
      %v3364 = vrot.slane %v3362, 4
      %v3365 = vrot.slane %v2596, 5
      %v3366 = vsel %vm1902, %v3364, %v3365
      %v3367 = vrot.slane %v3267, 5
      %v3368 = vrot.slane %v3367, 4
      %v3369 = vrot.slane %v2598, 5
      %v3370 = vsel %vm1902, %v3368, %v3369
      %v3371 = vrot.slane %v3369, 4
      %v3372 = vrot.slane %v2599, 5
      %v3373 = vsel %vm1902, %v3371, %v3372
      %v3374 = vrot.slane %v3268, 5
      %v3375 = vrot.slane %v3374, 4
      %v3376 = vrot.slane %v2601, 5
      %v3377 = vsel %vm1902, %v3375, %v3376
      %v3378 = vrot.slane %v3376, 4
      %v3379 = vrot.slane %v2602, 5
      %v3380 = vsel %vm1902, %v3378, %v3379
      %v3381 = vrot.slane %v3269, 5
      %v3382 = vrot.slane %v3381, 4
      %v3383 = vrot.slane %v2604, 5
      %v3384 = vsel %vm1902, %v3382, %v3383
      %v3385 = vrot.slane %v3383, 4
      %v3386 = vrot.slane %v2605, 5
      %v3387 = vsel %vm1902, %v3385, %v3386
      %v3388 = vrot.slane %v3270, 5
      %v3389 = vrot.slane %v3388, 4
      %v3390 = vrot.slane %v2607, 5
      %v3391 = vsel %vm1902, %v3389, %v3390
      %v3392 = vrot.slane %v3390, 4
      %v3393 = vrot.slane %v2608, 5
      %v3394 = vsel %vm1902, %v3392, %v3393
      %v3395 = vrot.slane %v3271, 5
      %v3396 = vrot.slane %v3395, 4
      %v3397 = vrot.slane %v2610, 5
      %v3398 = vsel %vm1902, %v3396, %v3397
      %v3399 = vrot.slane %v3397, 4
      %v3400 = vrot.slane %v2611, 5
      %v3401 = vsel %vm1902, %v3399, %v3400
      %v3402 = vrot.slane %v3272, 5
      %v3403 = vrot.slane %v3402, 4
      %v3404 = vrot.slane %v2613, 5
      %v3405 = vsel %vm1902, %v3403, %v3404
      %v3406 = vrot.slane %v3404, 4
      %v3407 = vrot.slane %v2614, 5
      %v3408 = vsel %vm1902, %v3406, %v3407
      %v3409 = vrot.slane %v3273, 5
      %v3410 = vrot.slane %v3409, 4
      %v3411 = vrot.slane %v2616, 5
      %v3412 = vsel %vm1902, %v3410, %v3411
      %v3413 = vrot.slane %v3411, 4
      %v3414 = vrot.slane %v2617, 5
      %v3415 = vsel %vm1902, %v3413, %v3414
      %v3416 = vrot.slane %v3274, 5
      %v3417 = vrot.slane %v3416, 4
      %v3418 = vrot.slane %v2619, 5
      %v3419 = vsel %vm1902, %v3417, %v3418
      %v3420 = vrot.slane %v3418, 4
      %v3421 = vrot.slane %v2620, 5
      %v3422 = vsel %vm1902, %v3420, %v3421
      %v3423 = vrot.slane %v3275, 5
      %v3424 = vrot.slane %v3423, 4
      %v3425 = vrot.slane %v2622, 5
      %v3426 = vsel %vm1902, %v3424, %v3425
      %v3427 = vrot.slane %v3425, 4
      %v3428 = vrot.slane %v2623, 5
      %v3429 = vsel %vm1902, %v3427, %v3428
      %v3430 = vrot.slane %v3276, 5
      %v3431 = vrot.slane %v3430, 4
      %v3432 = vrot.slane %v2625, 5
      %v3433 = vsel %vm1902, %v3431, %v3432
      %v3434 = vrot.slane %v3432, 4
      %v3435 = vrot.slane %v2626, 5
      %v3436 = vsel %vm1902, %v3434, %v3435
      %s3437 = scalar_lea.vmem %s3, 320
      %v3438 = vld [vmem:[%s3437] sm:$0xf]
      %v3439 = vld [vmem:[%s3437 + $0x4] sm:$0xf]
      %v3440 = vld [vmem:[%s3437 + $0x8] sm:$0xf]
      %v3441 = vld [vmem:[%s3437 + $0xc] sm:$0xf]
      %v3442 = vld [vmem:[%s3437 + $0x10] sm:$0xf]
      %v3443 = vld [vmem:[%s3437 + $0x14] sm:$0xf]
      %v3444 = vld [vmem:[%s3437 + $0x18] sm:$0xf]
      %v3445 = vld [vmem:[%s3437 + $0x1c] sm:$0xf]
      %v3446 = vld [vmem:[%s3437 + $0x20] sm:$0xf]
      %v3447 = vld [vmem:[%s3437 + $0x24] sm:$0xf]
      %v3448 = vld [vmem:[%s3437 + $0x28] sm:$0xf]
      %v3449 = vld [vmem:[%s3437 + $0x2c] sm:$0xf]
      %v3450 = vld [vmem:[%s3437 + $0x30] sm:$0xf]
      %v3451 = vld [vmem:[%s3437 + $0x34] sm:$0xf]
      %v3452 = vld [vmem:[%s3437 + $0x38] sm:$0xf]
      %v3453 = vld [vmem:[%s3437 + $0x3c] sm:$0xf]
      %v3454 = vunpack.c.l.b16 %v3328
      %v3455 = vunpack.c.l.b16 %v3331
      %v3456 = vunpack.c.l.b16 %v3335
      %v3457 = vunpack.c.l.b16 %v3338
      %v3458 = vunpack.c.l.b16 %v3342
      %v3459 = vunpack.c.l.b16 %v3345
      %v3460 = vunpack.c.l.b16 %v3349
      %v3461 = vunpack.c.l.b16 %v3352
      %v3462 = vunpack.c.l.b16 %v3356
      %v3463 = vunpack.c.l.b16 %v3359
      %v3464 = vunpack.c.l.b16 %v3363
      %v3465 = vunpack.c.l.b16 %v3366
      %v3466 = vunpack.c.l.b16 %v3370
      %v3467 = vunpack.c.l.b16 %v3373
      %v3468 = vunpack.c.l.b16 %v3377
      %v3469 = vunpack.c.l.b16 %v3380
      %v3470 = vunpack.c.l.b16 %v3384
      %v3471 = vunpack.c.l.b16 %v3387
      %v3472 = vunpack.c.l.b16 %v3391
      %v3473 = vunpack.c.l.b16 %v3394
      %v3474 = vunpack.c.l.b16 %v3398
      %v3475 = vunpack.c.l.b16 %v3401
      %v3476 = vunpack.c.l.b16 %v3405
      %v3477 = vunpack.c.l.b16 %v3408
      %v3478 = vunpack.c.l.b16 %v3412
      %v3479 = vunpack.c.l.b16 %v3415
      %v3480 = vunpack.c.l.b16 %v3419
      %v3481 = vunpack.c.l.b16 %v3422
      %v3482 = vunpack.c.l.b16 %v3426
      %v3483 = vunpack.c.l.b16 %v3429
      %v3484 = vunpack.c.l.b16 %v3433
      %v3485 = vunpack.c.l.b16 %v3436
      %v3486 = vpack.c.b16 %v3455, %v3454
      %v3487 = vpack.c.b16 %v3457, %v3456
      %v3488 = vpack.c.b16 %v3459, %v3458
      %v3489 = vpack.c.b16 %v3461, %v3460
      %v3490 = vpack.c.b16 %v3463, %v3462
      %v3491 = vpack.c.b16 %v3465, %v3464
      %v3492 = vpack.c.b16 %v3467, %v3466
      %v3493 = vpack.c.b16 %v3469, %v3468
      %v3494 = vpack.c.b16 %v3471, %v3470
      %v3495 = vpack.c.b16 %v3473, %v3472
      %v3496 = vpack.c.b16 %v3475, %v3474
      %v3497 = vpack.c.b16 %v3477, %v3476
      %v3498 = vpack.c.b16 %v3479, %v3478
      %v3499 = vpack.c.b16 %v3481, %v3480
      %v3500 = vpack.c.b16 %v3483, %v3482
      %v3501 = vpack.c.b16 %v3485, %v3484
      %v3534 = vunpack.c.l.b16 %v3438
      %v3535 = vunpack.c.l.b16 %v3439
      %v3536 = vunpack.c.l.b16 %v3440
      %v3537 = vunpack.c.l.b16 %v3441
      %v3538 = vunpack.c.l.b16 %v3442
      %v3539 = vunpack.c.l.b16 %v3443
      %v3540 = vunpack.c.l.b16 %v3444
      %v3541 = vunpack.c.l.b16 %v3445
      %v3542 = vunpack.c.l.b16 %v3446
      %v3543 = vunpack.c.l.b16 %v3447
      %v3544 = vunpack.c.l.b16 %v3448
      %v3545 = vunpack.c.l.b16 %v3449
      %v3546 = vunpack.c.l.b16 %v3450
      %v3547 = vunpack.c.l.b16 %v3451
      %v3548 = vunpack.c.l.b16 %v3452
      %v3549 = vunpack.c.l.b16 %v3453
      %v3550 = vpack.c.b16 %v3535, %v3534
      %v3551 = vpack.c.b16 %v3537, %v3536
      %v3552 = vpack.c.b16 %v3539, %v3538
      %v3553 = vpack.c.b16 %v3541, %v3540
      %v3554 = vpack.c.b16 %v3543, %v3542
      %v3555 = vpack.c.b16 %v3545, %v3544
      %v3556 = vpack.c.b16 %v3547, %v3546
      %v3557 = vpack.c.b16 %v3549, %v3548
      %3566 = vmatpush.bf16.msra.mxu0 %v3557
      %3567 = vmatpush.bf16.msra.mxu0 %v3556
      %3568 = vmatpush.bf16.msra.mxu0 %v3555
      %3569 = vmatpush.bf16.msra.mxu0 %v3554
      %3570 = vmatpush.bf16.msra.mxu0 %v3553
      %3571 = vmatpush.bf16.msra.mxu0 %v3552
      %3572 = vmatpush.bf16.msra.mxu0 %v3551
      %3573 = vmatpush.bf16.msra.mxu0 %v3550
      %3574 = vmatmul.bf16.gmra.mxu0 %v3486
      %v3575 = vpop.f32.mrf.mxu0
      %v3576 = vadd.f32 0.0, %v3575
      %v3577 = vpop.f32.mrf.mxu0
      %v3578 = vadd.f32 0.0, %v3577
      %3579 = vmatmul.bf16.gmra.mxu0 %v3487
      %v3580 = vpop.f32.mrf.mxu0
      %v3581 = vadd.f32 0.0, %v3580
      %v3582 = vpop.f32.mrf.mxu0
      %v3583 = vadd.f32 0.0, %v3582
      %3584 = vmatmul.bf16.gmra.mxu0 %v3488
      %v3585 = vpop.f32.mrf.mxu0
      %v3586 = vadd.f32 0.0, %v3585
      %v3587 = vpop.f32.mrf.mxu0
      %v3588 = vadd.f32 0.0, %v3587
      %3589 = vmatmul.bf16.gmra.mxu0 %v3489
      %v3590 = vpop.f32.mrf.mxu0
      %v3591 = vadd.f32 0.0, %v3590
      %v3592 = vpop.f32.mrf.mxu0
      %v3593 = vadd.f32 0.0, %v3592
      %3594 = vmatmul.bf16.gmra.mxu0 %v3490
      %v3595 = vpop.f32.mrf.mxu0
      %v3596 = vadd.f32 0.0, %v3595
      %v3597 = vpop.f32.mrf.mxu0
      %v3598 = vadd.f32 0.0, %v3597
      %3599 = vmatmul.bf16.gmra.mxu0 %v3491
      %v3600 = vpop.f32.mrf.mxu0
      %v3601 = vadd.f32 0.0, %v3600
      %v3602 = vpop.f32.mrf.mxu0
      %v3603 = vadd.f32 0.0, %v3602
      %3604 = vmatmul.bf16.gmra.mxu0 %v3492
      %v3605 = vpop.f32.mrf.mxu0
      %v3606 = vadd.f32 0.0, %v3605
      %v3607 = vpop.f32.mrf.mxu0
      %v3608 = vadd.f32 0.0, %v3607
      %3609 = vmatmul.bf16.gmra.mxu0 %v3493
      %v3610 = vpop.f32.mrf.mxu0
      %v3611 = vadd.f32 0.0, %v3610
      %v3612 = vpop.f32.mrf.mxu0
      %v3613 = vadd.f32 0.0, %v3612
      %3614 = vmatmul.bf16.gmra.mxu0 %v3494
      %v3615 = vpop.f32.mrf.mxu0
      %v3616 = vadd.f32 0.0, %v3615
      %v3617 = vpop.f32.mrf.mxu0
      %v3618 = vadd.f32 0.0, %v3617
      %3619 = vmatmul.bf16.gmra.mxu0 %v3495
      %v3620 = vpop.f32.mrf.mxu0
      %v3621 = vadd.f32 0.0, %v3620
      %v3622 = vpop.f32.mrf.mxu0
      %v3623 = vadd.f32 0.0, %v3622
      %3624 = vmatmul.bf16.gmra.mxu0 %v3496
      %v3625 = vpop.f32.mrf.mxu0
      %v3626 = vadd.f32 0.0, %v3625
      %v3627 = vpop.f32.mrf.mxu0
      %v3628 = vadd.f32 0.0, %v3627
      %3629 = vmatmul.bf16.gmra.mxu0 %v3497
      %v3630 = vpop.f32.mrf.mxu0
      %v3631 = vadd.f32 0.0, %v3630
      %v3632 = vpop.f32.mrf.mxu0
      %v3633 = vadd.f32 0.0, %v3632
      %3634 = vmatmul.bf16.gmra.mxu0 %v3498
      %v3635 = vpop.f32.mrf.mxu0
      %v3636 = vadd.f32 0.0, %v3635
      %v3637 = vpop.f32.mrf.mxu0
      %v3638 = vadd.f32 0.0, %v3637
      %3639 = vmatmul.bf16.gmra.mxu0 %v3499
      %v3640 = vpop.f32.mrf.mxu0
      %v3641 = vadd.f32 0.0, %v3640
      %v3642 = vpop.f32.mrf.mxu0
      %v3643 = vadd.f32 0.0, %v3642
      %3644 = vmatmul.bf16.gmra.mxu0 %v3500
      %v3645 = vpop.f32.mrf.mxu0
      %v3646 = vadd.f32 0.0, %v3645
      %v3647 = vpop.f32.mrf.mxu0
      %v3648 = vadd.f32 0.0, %v3647
      %3649 = vmatmul.bf16.gmra.mxu0 %v3501
      %v3650 = vpop.f32.mrf.mxu0
      %v3651 = vadd.f32 0.0, %v3650
      %v3652 = vpop.f32.mrf.mxu0
      %v3653 = vadd.f32 0.0, %v3652
      %3654 = vdwg.mxu0
      %v3655 = vadd.f32 %v3229, %v3576
      %v3656 = vadd.f32 %v3230, %v3578
      %v3657 = vadd.f32 %v3231, %v3581
      %v3658 = vadd.f32 %v3232, %v3583
      %v3659 = vadd.f32 %v3233, %v3586
      %v3660 = vadd.f32 %v3234, %v3588
      %v3661 = vadd.f32 %v3235, %v3591
      %v3662 = vadd.f32 %v3236, %v3593
      %v3663 = vadd.f32 %v3237, %v3596
      %v3664 = vadd.f32 %v3238, %v3598
      %v3665 = vadd.f32 %v3239, %v3601
      %v3666 = vadd.f32 %v3240, %v3603
      %v3667 = vadd.f32 %v3241, %v3606
      %v3668 = vadd.f32 %v3242, %v3608
      %v3669 = vadd.f32 %v3243, %v3611
      %v3670 = vadd.f32 %v3244, %v3613
      %v3671 = vadd.f32 %v3245, %v3616
      %v3672 = vadd.f32 %v3246, %v3618
      %v3673 = vadd.f32 %v3247, %v3621
      %v3674 = vadd.f32 %v3248, %v3623
      %v3675 = vadd.f32 %v3249, %v3626
      %v3676 = vadd.f32 %v3250, %v3628
      %v3677 = vadd.f32 %v3251, %v3631
      %v3678 = vadd.f32 %v3252, %v3633
      %v3679 = vadd.f32 %v3253, %v3636
      %v3680 = vadd.f32 %v3254, %v3638
      %v3681 = vadd.f32 %v3255, %v3641
      %v3682 = vadd.f32 %v3256, %v3643
      %v3683 = vadd.f32 %v3257, %v3646
      %v3684 = vadd.f32 %v3258, %v3648
      %v3685 = vadd.f32 %v3259, %v3651
      %v3686 = vadd.f32 %v3260, %v3653
      %s3687 = scalar_lea.vmem [#allocation2], 24
      %v3688 = vld [vmem:[%s3687] sm:$0xf]
      %v3689 = vld [vmem:[%s3687 + $0x4] sm:$0xf]
      %v3690 = vld [vmem:[%s3687 + $0xc] sm:$0xf]
      %v3691 = vld [vmem:[%s3687 + $0x10] sm:$0xf]
      %v3692 = vld [vmem:[%s3687 + $0x18] sm:$0xf]
      %v3693 = vld [vmem:[%s3687 + $0x1c] sm:$0xf]
      %v3694 = vld [vmem:[%s3687 + $0x24] sm:$0xf]
      %v3695 = vld [vmem:[%s3687 + $0x28] sm:$0xf]
      %v3696 = vld [vmem:[%s3687 + $0x30] sm:$0xf]
      %v3697 = vld [vmem:[%s3687 + $0x34] sm:$0xf]
      %v3698 = vld [vmem:[%s3687 + $0x3c] sm:$0xf]
      %v3699 = vld [vmem:[%s3687 + $0x40] sm:$0xf]
      %v3700 = vld [vmem:[%s3687 + $0x48] sm:$0xf]
      %v3701 = vld [vmem:[%s3687 + $0x4c] sm:$0xf]
      %v3702 = vld [vmem:[%s3687 + $0x54] sm:$0xf]
      %v3703 = vld [vmem:[%s3687 + $0x58] sm:$0xf]
      %v3704 = vld [vmem:[%s3687 + $0x60] sm:$0xf]
      %v3705 = vld [vmem:[%s3687 + $0x64] sm:$0xf]
      %v3706 = vld [vmem:[%s3687 + $0x6c] sm:$0xf]
      %v3707 = vld [vmem:[%s3687 + $0x70] sm:$0xf]
      %v3708 = vld [vmem:[%s3687 + $0x78] sm:$0xf]
      %v3709 = vld [vmem:[%s3687 + $0x7c] sm:$0xf]
      %v3710 = vld [vmem:[%s3687 + $0x84] sm:$0xf]
      %v3711 = vld [vmem:[%s3687 + $0x88] sm:$0xf]
      %v3712 = vld [vmem:[%s3687 + $0x90] sm:$0xf]
      %v3713 = vld [vmem:[%s3687 + $0x94] sm:$0xf]
      %v3714 = vld [vmem:[%s3687 + $0x9c] sm:$0xf]
      %v3715 = vld [vmem:[%s3687 + $0xa0] sm:$0xf]
      %v3716 = vld [vmem:[%s3687 + $0xa8] sm:$0xf]
      %v3717 = vld [vmem:[%s3687 + $0xac] sm:$0xf]
      %v3718 = vld [vmem:[%s3687 + $0xb4] sm:$0xf]
      %v3719 = vld [vmem:[%s3687 + $0xb8] sm:$0xf]
      %s3720 = scalar_lea.vmem %s3, 384
      %v3721 = vld [vmem:[%s3720] sm:$0xf]
      %v3722 = vld [vmem:[%s3720 + $0x4] sm:$0xf]
      %v3723 = vld [vmem:[%s3720 + $0x8] sm:$0xf]
      %v3724 = vld [vmem:[%s3720 + $0xc] sm:$0xf]
      %v3725 = vld [vmem:[%s3720 + $0x10] sm:$0xf]
      %v3726 = vld [vmem:[%s3720 + $0x14] sm:$0xf]
      %v3727 = vld [vmem:[%s3720 + $0x18] sm:$0xf]
      %v3728 = vld [vmem:[%s3720 + $0x1c] sm:$0xf]
      %v3729 = vld [vmem:[%s3720 + $0x20] sm:$0xf]
      %v3730 = vld [vmem:[%s3720 + $0x24] sm:$0xf]
      %v3731 = vld [vmem:[%s3720 + $0x28] sm:$0xf]
      %v3732 = vld [vmem:[%s3720 + $0x2c] sm:$0xf]
      %v3733 = vld [vmem:[%s3720 + $0x30] sm:$0xf]
      %v3734 = vld [vmem:[%s3720 + $0x34] sm:$0xf]
      %v3735 = vld [vmem:[%s3720 + $0x38] sm:$0xf]
      %v3736 = vld [vmem:[%s3720 + $0x3c] sm:$0xf]
      %v3769 = vunpack.c.l.b16 %v3688
      %v3770 = vunpack.c.l.b16 %v3689
      %v3771 = vunpack.c.l.b16 %v3690
      %v3772 = vunpack.c.l.b16 %v3691
      %v3773 = vunpack.c.l.b16 %v3692
      %v3774 = vunpack.c.l.b16 %v3693
      %v3775 = vunpack.c.l.b16 %v3694
      %v3776 = vunpack.c.l.b16 %v3695
      %v3777 = vunpack.c.l.b16 %v3696
      %v3778 = vunpack.c.l.b16 %v3697
      %v3779 = vunpack.c.l.b16 %v3698
      %v3780 = vunpack.c.l.b16 %v3699
      %v3781 = vunpack.c.l.b16 %v3700
      %v3782 = vunpack.c.l.b16 %v3701
      %v3783 = vunpack.c.l.b16 %v3702
      %v3784 = vunpack.c.l.b16 %v3703
      %v3785 = vunpack.c.l.b16 %v3704
      %v3786 = vunpack.c.l.b16 %v3705
      %v3787 = vunpack.c.l.b16 %v3706
      %v3788 = vunpack.c.l.b16 %v3707
      %v3789 = vunpack.c.l.b16 %v3708
      %v3790 = vunpack.c.l.b16 %v3709
      %v3791 = vunpack.c.l.b16 %v3710
      %v3792 = vunpack.c.l.b16 %v3711
      %v3793 = vunpack.c.l.b16 %v3712
      %v3794 = vunpack.c.l.b16 %v3713
      %v3795 = vunpack.c.l.b16 %v3714
      %v3796 = vunpack.c.l.b16 %v3715
      %v3797 = vunpack.c.l.b16 %v3716
      %v3798 = vunpack.c.l.b16 %v3717
      %v3799 = vunpack.c.l.b16 %v3718
      %v3800 = vunpack.c.l.b16 %v3719
      %v3801 = vpack.c.b16 %v3770, %v3769
      %v3802 = vpack.c.b16 %v3772, %v3771
      %v3803 = vpack.c.b16 %v3774, %v3773
      %v3804 = vpack.c.b16 %v3776, %v3775
      %v3805 = vpack.c.b16 %v3778, %v3777
      %v3806 = vpack.c.b16 %v3780, %v3779
      %v3807 = vpack.c.b16 %v3782, %v3781
      %v3808 = vpack.c.b16 %v3784, %v3783
      %v3809 = vpack.c.b16 %v3786, %v3785
      %v3810 = vpack.c.b16 %v3788, %v3787
      %v3811 = vpack.c.b16 %v3790, %v3789
      %v3812 = vpack.c.b16 %v3792, %v3791
      %v3813 = vpack.c.b16 %v3794, %v3793
      %v3814 = vpack.c.b16 %v3796, %v3795
      %v3815 = vpack.c.b16 %v3798, %v3797
      %v3816 = vpack.c.b16 %v3800, %v3799
      %v3849 = vunpack.c.l.b16 %v3721
      %v3850 = vunpack.c.l.b16 %v3722
      %v3851 = vunpack.c.l.b16 %v3723
      %v3852 = vunpack.c.l.b16 %v3724
      %v3853 = vunpack.c.l.b16 %v3725
      %v3854 = vunpack.c.l.b16 %v3726
      %v3855 = vunpack.c.l.b16 %v3727
      %v3856 = vunpack.c.l.b16 %v3728
      %v3857 = vunpack.c.l.b16 %v3729
      %v3858 = vunpack.c.l.b16 %v3730
      %v3859 = vunpack.c.l.b16 %v3731
      %v3860 = vunpack.c.l.b16 %v3732
      %v3861 = vunpack.c.l.b16 %v3733
      %v3862 = vunpack.c.l.b16 %v3734
      %v3863 = vunpack.c.l.b16 %v3735
      %v3864 = vunpack.c.l.b16 %v3736
      %v3865 = vpack.c.b16 %v3850, %v3849
      %v3866 = vpack.c.b16 %v3852, %v3851
      %v3867 = vpack.c.b16 %v3854, %v3853
      %v3868 = vpack.c.b16 %v3856, %v3855
      %v3869 = vpack.c.b16 %v3858, %v3857
      %v3870 = vpack.c.b16 %v3860, %v3859
      %v3871 = vpack.c.b16 %v3862, %v3861
      %v3872 = vpack.c.b16 %v3864, %v3863
      %3881 = vmatpush.bf16.msra.mxu0 %v3872
      %3882 = vmatpush.bf16.msra.mxu0 %v3871
      %3883 = vmatpush.bf16.msra.mxu0 %v3870
      %3884 = vmatpush.bf16.msra.mxu0 %v3869
      %3885 = vmatpush.bf16.msra.mxu0 %v3868
      %3886 = vmatpush.bf16.msra.mxu0 %v3867
      %3887 = vmatpush.bf16.msra.mxu0 %v3866
      %3888 = vmatpush.bf16.msra.mxu0 %v3865
      %3889 = vmatmul.bf16.gmra.mxu0 %v3801
      %v3890 = vpop.f32.mrf.mxu0
      %v3891 = vadd.f32 0.0, %v3890
      %v3892 = vpop.f32.mrf.mxu0
      %v3893 = vadd.f32 0.0, %v3892
      %3894 = vmatmul.bf16.gmra.mxu0 %v3802
      %v3895 = vpop.f32.mrf.mxu0
      %v3896 = vadd.f32 0.0, %v3895
      %v3897 = vpop.f32.mrf.mxu0
      %v3898 = vadd.f32 0.0, %v3897
      %3899 = vmatmul.bf16.gmra.mxu0 %v3803
      %v3900 = vpop.f32.mrf.mxu0
      %v3901 = vadd.f32 0.0, %v3900
      %v3902 = vpop.f32.mrf.mxu0
      %v3903 = vadd.f32 0.0, %v3902
      %3904 = vmatmul.bf16.gmra.mxu0 %v3804
      %v3905 = vpop.f32.mrf.mxu0
      %v3906 = vadd.f32 0.0, %v3905
      %v3907 = vpop.f32.mrf.mxu0
      %v3908 = vadd.f32 0.0, %v3907
      %3909 = vmatmul.bf16.gmra.mxu0 %v3805
      %v3910 = vpop.f32.mrf.mxu0
      %v3911 = vadd.f32 0.0, %v3910
      %v3912 = vpop.f32.mrf.mxu0
      %v3913 = vadd.f32 0.0, %v3912
      %3914 = vmatmul.bf16.gmra.mxu0 %v3806
      %v3915 = vpop.f32.mrf.mxu0
      %v3916 = vadd.f32 0.0, %v3915
      %v3917 = vpop.f32.mrf.mxu0
      %v3918 = vadd.f32 0.0, %v3917
      %3919 = vmatmul.bf16.gmra.mxu0 %v3807
      %v3920 = vpop.f32.mrf.mxu0
      %v3921 = vadd.f32 0.0, %v3920
      %v3922 = vpop.f32.mrf.mxu0
      %v3923 = vadd.f32 0.0, %v3922
      %3924 = vmatmul.bf16.gmra.mxu0 %v3808
      %v3925 = vpop.f32.mrf.mxu0
      %v3926 = vadd.f32 0.0, %v3925
      %v3927 = vpop.f32.mrf.mxu0
      %v3928 = vadd.f32 0.0, %v3927
      %3929 = vmatmul.bf16.gmra.mxu0 %v3809
      %v3930 = vpop.f32.mrf.mxu0
      %v3931 = vadd.f32 0.0, %v3930
      %v3932 = vpop.f32.mrf.mxu0
      %v3933 = vadd.f32 0.0, %v3932
      %3934 = vmatmul.bf16.gmra.mxu0 %v3810
      %v3935 = vpop.f32.mrf.mxu0
      %v3936 = vadd.f32 0.0, %v3935
      %v3937 = vpop.f32.mrf.mxu0
      %v3938 = vadd.f32 0.0, %v3937
      %3939 = vmatmul.bf16.gmra.mxu0 %v3811
      %v3940 = vpop.f32.mrf.mxu0
      %v3941 = vadd.f32 0.0, %v3940
      %v3942 = vpop.f32.mrf.mxu0
      %v3943 = vadd.f32 0.0, %v3942
      %3944 = vmatmul.bf16.gmra.mxu0 %v3812
      %v3945 = vpop.f32.mrf.mxu0
      %v3946 = vadd.f32 0.0, %v3945
      %v3947 = vpop.f32.mrf.mxu0
      %v3948 = vadd.f32 0.0, %v3947
      %3949 = vmatmul.bf16.gmra.mxu0 %v3813
      %v3950 = vpop.f32.mrf.mxu0
      %v3951 = vadd.f32 0.0, %v3950
      %v3952 = vpop.f32.mrf.mxu0
      %v3953 = vadd.f32 0.0, %v3952
      %3954 = vmatmul.bf16.gmra.mxu0 %v3814
      %v3955 = vpop.f32.mrf.mxu0
      %v3956 = vadd.f32 0.0, %v3955
      %v3957 = vpop.f32.mrf.mxu0
      %v3958 = vadd.f32 0.0, %v3957
      %3959 = vmatmul.bf16.gmra.mxu0 %v3815
      %v3960 = vpop.f32.mrf.mxu0
      %v3961 = vadd.f32 0.0, %v3960
      %v3962 = vpop.f32.mrf.mxu0
      %v3963 = vadd.f32 0.0, %v3962
      %3964 = vmatmul.bf16.gmra.mxu0 %v3816
      %v3965 = vpop.f32.mrf.mxu0
      %v3966 = vadd.f32 0.0, %v3965
      %v3967 = vpop.f32.mrf.mxu0
      %v3968 = vadd.f32 0.0, %v3967
      %3969 = vdwg.mxu0
      %v3970 = vadd.f32 %v3655, %v3891
      %v3971 = vadd.f32 %v3656, %v3893
      %v3972 = vadd.f32 %v3657, %v3896
      %v3973 = vadd.f32 %v3658, %v3898
      %v3974 = vadd.f32 %v3659, %v3901
      %v3975 = vadd.f32 %v3660, %v3903
      %v3976 = vadd.f32 %v3661, %v3906
      %v3977 = vadd.f32 %v3662, %v3908
      %v3978 = vadd.f32 %v3663, %v3911
      %v3979 = vadd.f32 %v3664, %v3913
      %v3980 = vadd.f32 %v3665, %v3916
      %v3981 = vadd.f32 %v3666, %v3918
      %v3982 = vadd.f32 %v3667, %v3921
      %v3983 = vadd.f32 %v3668, %v3923
      %v3984 = vadd.f32 %v3669, %v3926
      %v3985 = vadd.f32 %v3670, %v3928
      %v3986 = vadd.f32 %v3671, %v3931
      %v3987 = vadd.f32 %v3672, %v3933
      %v3988 = vadd.f32 %v3673, %v3936
      %v3989 = vadd.f32 %v3674, %v3938
      %v3990 = vadd.f32 %v3675, %v3941
      %v3991 = vadd.f32 %v3676, %v3943
      %v3992 = vadd.f32 %v3677, %v3946
      %v3993 = vadd.f32 %v3678, %v3948
      %v3994 = vadd.f32 %v3679, %v3951
      %v3995 = vadd.f32 %v3680, %v3953
      %v3996 = vadd.f32 %v3681, %v3956
      %v3997 = vadd.f32 %v3682, %v3958
      %v3998 = vadd.f32 %v3683, %v3961
      %v3999 = vadd.f32 %v3684, %v3963
      %v4000 = vadd.f32 %v3685, %v3966
      %v4001 = vadd.f32 %v3686, %v3968
      %v4002 = vld [vmem:[%s3687] sm:$0xf]
      %v4003 = vld [vmem:[%s3687 + $0x4] sm:$0xf]
      %v4004 = vld [vmem:[%s3687 + $0x8] sm:$0x1]
      %v4005 = vld [vmem:[%s3687 + $0xc] sm:$0xf]
      %v4006 = vld [vmem:[%s3687 + $0x10] sm:$0xf]
      %v4007 = vld [vmem:[%s3687 + $0x14] sm:$0x1]
      %v4008 = vld [vmem:[%s3687 + $0x18] sm:$0xf]
      %v4009 = vld [vmem:[%s3687 + $0x1c] sm:$0xf]
      %v4010 = vld [vmem:[%s3687 + $0x20] sm:$0x1]
      %v4011 = vld [vmem:[%s3687 + $0x24] sm:$0xf]
      %v4012 = vld [vmem:[%s3687 + $0x28] sm:$0xf]
      %v4013 = vld [vmem:[%s3687 + $0x2c] sm:$0x1]
      %v4014 = vld [vmem:[%s3687 + $0x30] sm:$0xf]
      %v4015 = vld [vmem:[%s3687 + $0x34] sm:$0xf]
      %v4016 = vld [vmem:[%s3687 + $0x38] sm:$0x1]
      %v4017 = vld [vmem:[%s3687 + $0x3c] sm:$0xf]
      %v4018 = vld [vmem:[%s3687 + $0x40] sm:$0xf]
      %v4019 = vld [vmem:[%s3687 + $0x44] sm:$0x1]
      %v4020 = vld [vmem:[%s3687 + $0x48] sm:$0xf]
      %v4021 = vld [vmem:[%s3687 + $0x4c] sm:$0xf]
      %v4022 = vld [vmem:[%s3687 + $0x50] sm:$0x1]
      %v4023 = vld [vmem:[%s3687 + $0x54] sm:$0xf]
      %v4024 = vld [vmem:[%s3687 + $0x58] sm:$0xf]
      %v4025 = vld [vmem:[%s3687 + $0x5c] sm:$0x1]
      %v4026 = vld [vmem:[%s3687 + $0x60] sm:$0xf]
      %v4027 = vld [vmem:[%s3687 + $0x64] sm:$0xf]
      %v4028 = vld [vmem:[%s3687 + $0x68] sm:$0x1]
      %v4029 = vld [vmem:[%s3687 + $0x6c] sm:$0xf]
      %v4030 = vld [vmem:[%s3687 + $0x70] sm:$0xf]
      %v4031 = vld [vmem:[%s3687 + $0x74] sm:$0x1]
      %v4032 = vld [vmem:[%s3687 + $0x78] sm:$0xf]
      %v4033 = vld [vmem:[%s3687 + $0x7c] sm:$0xf]
      %v4034 = vld [vmem:[%s3687 + $0x80] sm:$0x1]
      %v4035 = vld [vmem:[%s3687 + $0x84] sm:$0xf]
      %v4036 = vld [vmem:[%s3687 + $0x88] sm:$0xf]
      %v4037 = vld [vmem:[%s3687 + $0x8c] sm:$0x1]
      %v4038 = vld [vmem:[%s3687 + $0x90] sm:$0xf]
      %v4039 = vld [vmem:[%s3687 + $0x94] sm:$0xf]
      %v4040 = vld [vmem:[%s3687 + $0x98] sm:$0x1]
      %v4041 = vld [vmem:[%s3687 + $0x9c] sm:$0xf]
      %v4042 = vld [vmem:[%s3687 + $0xa0] sm:$0xf]
      %v4043 = vld [vmem:[%s3687 + $0xa4] sm:$0x1]
      %v4044 = vld [vmem:[%s3687 + $0xa8] sm:$0xf]
      %v4045 = vld [vmem:[%s3687 + $0xac] sm:$0xf]
      %v4046 = vld [vmem:[%s3687 + $0xb0] sm:$0x1]
      %v4047 = vld [vmem:[%s3687 + $0xb4] sm:$0xf]
      %v4048 = vld [vmem:[%s3687 + $0xb8] sm:$0xf]
      %v4049 = vld [vmem:[%s3687 + $0xbc] sm:$0x1]
      %v4051 = vshrl.u32 %v4002, 16
      %v4053 = vrot.slane %v4051, 4
      %v4054 = vshll.u32 %v4002, 16
      %v4056 = vrot.slane %v4054, 5
      %v4057 = vor.u32 %v4053, %v4056
      %v4058 = vrot.slane %v4057, 4
      %v4060 = vshll.u32 %v4003, 16
      %v4062 = vrot.slane %v4060, 5
      %v4063 = vsel %vm1016, %v4058, %v4062
      %v4064 = vshrl.u32 %v4003, 16
      %v4066 = vrot.slane %v4064, 4
      %v4067 = vor.u32 %v4066, %v4062
      %v4068 = vrot.slane %v4067, 4
      %v4070 = vshll.u32 %v4004, 16
      %v4072 = vrot.slane %v4070, 5
      %v4073 = vsel %vm1016, %v4068, %v4072
      %v4075 = vshrl.u32 %v4005, 16
      %v4077 = vrot.slane %v4075, 4
      %v4078 = vshll.u32 %v4005, 16
      %v4080 = vrot.slane %v4078, 5
      %v4081 = vor.u32 %v4077, %v4080
      %v4082 = vrot.slane %v4081, 4
      %v4084 = vshll.u32 %v4006, 16
      %v4086 = vrot.slane %v4084, 5
      %v4087 = vsel %vm1016, %v4082, %v4086
      %v4088 = vshrl.u32 %v4006, 16
      %v4090 = vrot.slane %v4088, 4
      %v4091 = vor.u32 %v4090, %v4086
      %v4092 = vrot.slane %v4091, 4
      %v4094 = vshll.u32 %v4007, 16
      %v4096 = vrot.slane %v4094, 5
      %v4097 = vsel %vm1016, %v4092, %v4096
      %v4099 = vshrl.u32 %v4008, 16
      %v4101 = vrot.slane %v4099, 4
      %v4102 = vshll.u32 %v4008, 16
      %v4104 = vrot.slane %v4102, 5
      %v4105 = vor.u32 %v4101, %v4104
      %v4106 = vrot.slane %v4105, 4
      %v4108 = vshll.u32 %v4009, 16
      %v4110 = vrot.slane %v4108, 5
      %v4111 = vsel %vm1016, %v4106, %v4110
      %v4112 = vshrl.u32 %v4009, 16
      %v4114 = vrot.slane %v4112, 4
      %v4115 = vor.u32 %v4114, %v4110
      %v4116 = vrot.slane %v4115, 4
      %v4118 = vshll.u32 %v4010, 16
      %v4120 = vrot.slane %v4118, 5
      %v4121 = vsel %vm1016, %v4116, %v4120
      %v4123 = vshrl.u32 %v4011, 16
      %v4125 = vrot.slane %v4123, 4
      %v4126 = vshll.u32 %v4011, 16
      %v4128 = vrot.slane %v4126, 5
      %v4129 = vor.u32 %v4125, %v4128
      %v4130 = vrot.slane %v4129, 4
      %v4132 = vshll.u32 %v4012, 16
      %v4134 = vrot.slane %v4132, 5
      %v4135 = vsel %vm1016, %v4130, %v4134
      %v4136 = vshrl.u32 %v4012, 16
      %v4138 = vrot.slane %v4136, 4
      %v4139 = vor.u32 %v4138, %v4134
      %v4140 = vrot.slane %v4139, 4
      %v4142 = vshll.u32 %v4013, 16
      %v4144 = vrot.slane %v4142, 5
      %v4145 = vsel %vm1016, %v4140, %v4144
      %v4147 = vshrl.u32 %v4014, 16
      %v4149 = vrot.slane %v4147, 4
      %v4150 = vshll.u32 %v4014, 16
      %v4152 = vrot.slane %v4150, 5
      %v4153 = vor.u32 %v4149, %v4152
      %v4154 = vrot.slane %v4153, 4
      %v4156 = vshll.u32 %v4015, 16
      %v4158 = vrot.slane %v4156, 5
      %v4159 = vsel %vm1016, %v4154, %v4158
      %v4160 = vshrl.u32 %v4015, 16
      %v4162 = vrot.slane %v4160, 4
      %v4163 = vor.u32 %v4162, %v4158
      %v4164 = vrot.slane %v4163, 4
      %v4166 = vshll.u32 %v4016, 16
      %v4168 = vrot.slane %v4166, 5
      %v4169 = vsel %vm1016, %v4164, %v4168
      %v4171 = vshrl.u32 %v4017, 16
      %v4173 = vrot.slane %v4171, 4
      %v4174 = vshll.u32 %v4017, 16
      %v4176 = vrot.slane %v4174, 5
      %v4177 = vor.u32 %v4173, %v4176
      %v4178 = vrot.slane %v4177, 4
      %v4180 = vshll.u32 %v4018, 16
      %v4182 = vrot.slane %v4180, 5
      %v4183 = vsel %vm1016, %v4178, %v4182
      %v4184 = vshrl.u32 %v4018, 16
      %v4186 = vrot.slane %v4184, 4
      %v4187 = vor.u32 %v4186, %v4182
      %v4188 = vrot.slane %v4187, 4
      %v4190 = vshll.u32 %v4019, 16
      %v4192 = vrot.slane %v4190, 5
      %v4193 = vsel %vm1016, %v4188, %v4192
      %v4195 = vshrl.u32 %v4020, 16
      %v4197 = vrot.slane %v4195, 4
      %v4198 = vshll.u32 %v4020, 16
      %v4200 = vrot.slane %v4198, 5
      %v4201 = vor.u32 %v4197, %v4200
      %v4202 = vrot.slane %v4201, 4
      %v4204 = vshll.u32 %v4021, 16
      %v4206 = vrot.slane %v4204, 5
      %v4207 = vsel %vm1016, %v4202, %v4206
      %v4208 = vshrl.u32 %v4021, 16
      %v4210 = vrot.slane %v4208, 4
      %v4211 = vor.u32 %v4210, %v4206
      %v4212 = vrot.slane %v4211, 4
      %v4214 = vshll.u32 %v4022, 16
      %v4216 = vrot.slane %v4214, 5
      %v4217 = vsel %vm1016, %v4212, %v4216
      %v4219 = vshrl.u32 %v4023, 16
      %v4221 = vrot.slane %v4219, 4
      %v4222 = vshll.u32 %v4023, 16
      %v4224 = vrot.slane %v4222, 5
      %v4225 = vor.u32 %v4221, %v4224
      %v4226 = vrot.slane %v4225, 4
      %v4228 = vshll.u32 %v4024, 16
      %v4230 = vrot.slane %v4228, 5
      %v4231 = vsel %vm1016, %v4226, %v4230
      %v4232 = vshrl.u32 %v4024, 16
      %v4234 = vrot.slane %v4232, 4
      %v4235 = vor.u32 %v4234, %v4230
      %v4236 = vrot.slane %v4235, 4
      %v4238 = vshll.u32 %v4025, 16
      %v4240 = vrot.slane %v4238, 5
      %v4241 = vsel %vm1016, %v4236, %v4240
      %v4243 = vshrl.u32 %v4026, 16
      %v4245 = vrot.slane %v4243, 4
      %v4246 = vshll.u32 %v4026, 16
      %v4248 = vrot.slane %v4246, 5
      %v4249 = vor.u32 %v4245, %v4248
      %v4250 = vrot.slane %v4249, 4
      %v4252 = vshll.u32 %v4027, 16
      %v4254 = vrot.slane %v4252, 5
      %v4255 = vsel %vm1016, %v4250, %v4254
      %v4256 = vshrl.u32 %v4027, 16
      %v4258 = vrot.slane %v4256, 4
      %v4259 = vor.u32 %v4258, %v4254
      %v4260 = vrot.slane %v4259, 4
      %v4262 = vshll.u32 %v4028, 16
      %v4264 = vrot.slane %v4262, 5
      %v4265 = vsel %vm1016, %v4260, %v4264
      %v4267 = vshrl.u32 %v4029, 16
      %v4269 = vrot.slane %v4267, 4
      %v4270 = vshll.u32 %v4029, 16
      %v4272 = vrot.slane %v4270, 5
      %v4273 = vor.u32 %v4269, %v4272
      %v4274 = vrot.slane %v4273, 4
      %v4276 = vshll.u32 %v4030, 16
      %v4278 = vrot.slane %v4276, 5
      %v4279 = vsel %vm1016, %v4274, %v4278
      %v4280 = vshrl.u32 %v4030, 16
      %v4282 = vrot.slane %v4280, 4
      %v4283 = vor.u32 %v4282, %v4278
      %v4284 = vrot.slane %v4283, 4
      %v4286 = vshll.u32 %v4031, 16
      %v4288 = vrot.slane %v4286, 5
      %v4289 = vsel %vm1016, %v4284, %v4288
      %v4291 = vshrl.u32 %v4032, 16
      %v4293 = vrot.slane %v4291, 4
      %v4294 = vshll.u32 %v4032, 16
      %v4296 = vrot.slane %v4294, 5
      %v4297 = vor.u32 %v4293, %v4296
      %v4298 = vrot.slane %v4297, 4
      %v4300 = vshll.u32 %v4033, 16
      %v4302 = vrot.slane %v4300, 5
      %v4303 = vsel %vm1016, %v4298, %v4302
      %v4304 = vshrl.u32 %v4033, 16
      %v4306 = vrot.slane %v4304, 4
      %v4307 = vor.u32 %v4306, %v4302
      %v4308 = vrot.slane %v4307, 4
      %v4310 = vshll.u32 %v4034, 16
      %v4312 = vrot.slane %v4310, 5
      %v4313 = vsel %vm1016, %v4308, %v4312
      %v4315 = vshrl.u32 %v4035, 16
      %v4317 = vrot.slane %v4315, 4
      %v4318 = vshll.u32 %v4035, 16
      %v4320 = vrot.slane %v4318, 5
      %v4321 = vor.u32 %v4317, %v4320
      %v4322 = vrot.slane %v4321, 4
      %v4324 = vshll.u32 %v4036, 16
      %v4326 = vrot.slane %v4324, 5
      %v4327 = vsel %vm1016, %v4322, %v4326
      %v4328 = vshrl.u32 %v4036, 16
      %v4330 = vrot.slane %v4328, 4
      %v4331 = vor.u32 %v4330, %v4326
      %v4332 = vrot.slane %v4331, 4
      %v4334 = vshll.u32 %v4037, 16
      %v4336 = vrot.slane %v4334, 5
      %v4337 = vsel %vm1016, %v4332, %v4336
      %v4339 = vshrl.u32 %v4038, 16
      %v4341 = vrot.slane %v4339, 4
      %v4342 = vshll.u32 %v4038, 16
      %v4344 = vrot.slane %v4342, 5
      %v4345 = vor.u32 %v4341, %v4344
      %v4346 = vrot.slane %v4345, 4
      %v4348 = vshll.u32 %v4039, 16
      %v4350 = vrot.slane %v4348, 5
      %v4351 = vsel %vm1016, %v4346, %v4350
      %v4352 = vshrl.u32 %v4039, 16
      %v4354 = vrot.slane %v4352, 4
      %v4355 = vor.u32 %v4354, %v4350
      %v4356 = vrot.slane %v4355, 4
      %v4358 = vshll.u32 %v4040, 16
      %v4360 = vrot.slane %v4358, 5
      %v4361 = vsel %vm1016, %v4356, %v4360
      %v4363 = vshrl.u32 %v4041, 16
      %v4365 = vrot.slane %v4363, 4
      %v4366 = vshll.u32 %v4041, 16
      %v4368 = vrot.slane %v4366, 5
      %v4369 = vor.u32 %v4365, %v4368
      %v4370 = vrot.slane %v4369, 4
      %v4372 = vshll.u32 %v4042, 16
      %v4374 = vrot.slane %v4372, 5
      %v4375 = vsel %vm1016, %v4370, %v4374
      %v4376 = vshrl.u32 %v4042, 16
      %v4378 = vrot.slane %v4376, 4
      %v4379 = vor.u32 %v4378, %v4374
      %v4380 = vrot.slane %v4379, 4
      %v4382 = vshll.u32 %v4043, 16
      %v4384 = vrot.slane %v4382, 5
      %v4385 = vsel %vm1016, %v4380, %v4384
      %v4387 = vshrl.u32 %v4044, 16
      %v4389 = vrot.slane %v4387, 4
      %v4390 = vshll.u32 %v4044, 16
      %v4392 = vrot.slane %v4390, 5
      %v4393 = vor.u32 %v4389, %v4392
      %v4394 = vrot.slane %v4393, 4
      %v4396 = vshll.u32 %v4045, 16
      %v4398 = vrot.slane %v4396, 5
      %v4399 = vsel %vm1016, %v4394, %v4398
      %v4400 = vshrl.u32 %v4045, 16
      %v4402 = vrot.slane %v4400, 4
      %v4403 = vor.u32 %v4402, %v4398
      %v4404 = vrot.slane %v4403, 4
      %v4406 = vshll.u32 %v4046, 16
      %v4408 = vrot.slane %v4406, 5
      %v4409 = vsel %vm1016, %v4404, %v4408
      %v4411 = vshrl.u32 %v4047, 16
      %v4413 = vrot.slane %v4411, 4
      %v4414 = vshll.u32 %v4047, 16
      %v4416 = vrot.slane %v4414, 5
      %v4417 = vor.u32 %v4413, %v4416
      %v4418 = vrot.slane %v4417, 4
      %v4420 = vshll.u32 %v4048, 16
      %v4422 = vrot.slane %v4420, 5
      %v4423 = vsel %vm1016, %v4418, %v4422
      %v4424 = vshrl.u32 %v4048, 16
      %v4426 = vrot.slane %v4424, 4
      %v4427 = vor.u32 %v4426, %v4422
      %v4428 = vrot.slane %v4427, 4
      %v4430 = vshll.u32 %v4049, 16
      %v4432 = vrot.slane %v4430, 5
      %v4433 = vsel %vm1016, %v4428, %v4432
      %s4434 = scalar_lea.vmem %s3, 448
      %v4435 = vld [vmem:[%s4434] sm:$0xf]
      %v4436 = vld [vmem:[%s4434 + $0x4] sm:$0xf]
      %v4437 = vld [vmem:[%s4434 + $0x8] sm:$0xf]
      %v4438 = vld [vmem:[%s4434 + $0xc] sm:$0xf]
      %v4439 = vld [vmem:[%s4434 + $0x10] sm:$0xf]
      %v4440 = vld [vmem:[%s4434 + $0x14] sm:$0xf]
      %v4441 = vld [vmem:[%s4434 + $0x18] sm:$0xf]
      %v4442 = vld [vmem:[%s4434 + $0x1c] sm:$0xf]
      %v4443 = vld [vmem:[%s4434 + $0x20] sm:$0xf]
      %v4444 = vld [vmem:[%s4434 + $0x24] sm:$0xf]
      %v4445 = vld [vmem:[%s4434 + $0x28] sm:$0xf]
      %v4446 = vld [vmem:[%s4434 + $0x2c] sm:$0xf]
      %v4447 = vld [vmem:[%s4434 + $0x30] sm:$0xf]
      %v4448 = vld [vmem:[%s4434 + $0x34] sm:$0xf]
      %v4449 = vld [vmem:[%s4434 + $0x38] sm:$0xf]
      %v4450 = vld [vmem:[%s4434 + $0x3c] sm:$0xf]
      %v4451 = vunpack.c.l.b16 %v4063
      %v4452 = vunpack.c.l.b16 %v4073
      %v4453 = vunpack.c.l.b16 %v4087
      %v4454 = vunpack.c.l.b16 %v4097
      %v4455 = vunpack.c.l.b16 %v4111
      %v4456 = vunpack.c.l.b16 %v4121
      %v4457 = vunpack.c.l.b16 %v4135
      %v4458 = vunpack.c.l.b16 %v4145
      %v4459 = vunpack.c.l.b16 %v4159
      %v4460 = vunpack.c.l.b16 %v4169
      %v4461 = vunpack.c.l.b16 %v4183
      %v4462 = vunpack.c.l.b16 %v4193
      %v4463 = vunpack.c.l.b16 %v4207
      %v4464 = vunpack.c.l.b16 %v4217
      %v4465 = vunpack.c.l.b16 %v4231
      %v4466 = vunpack.c.l.b16 %v4241
      %v4467 = vunpack.c.l.b16 %v4255
      %v4468 = vunpack.c.l.b16 %v4265
      %v4469 = vunpack.c.l.b16 %v4279
      %v4470 = vunpack.c.l.b16 %v4289
      %v4471 = vunpack.c.l.b16 %v4303
      %v4472 = vunpack.c.l.b16 %v4313
      %v4473 = vunpack.c.l.b16 %v4327
      %v4474 = vunpack.c.l.b16 %v4337
      %v4475 = vunpack.c.l.b16 %v4351
      %v4476 = vunpack.c.l.b16 %v4361
      %v4477 = vunpack.c.l.b16 %v4375
      %v4478 = vunpack.c.l.b16 %v4385
      %v4479 = vunpack.c.l.b16 %v4399
      %v4480 = vunpack.c.l.b16 %v4409
      %v4481 = vunpack.c.l.b16 %v4423
      %v4482 = vunpack.c.l.b16 %v4433
      %v4483 = vpack.c.b16 %v4452, %v4451
      %v4484 = vpack.c.b16 %v4454, %v4453
      %v4485 = vpack.c.b16 %v4456, %v4455
      %v4486 = vpack.c.b16 %v4458, %v4457
      %v4487 = vpack.c.b16 %v4460, %v4459
      %v4488 = vpack.c.b16 %v4462, %v4461
      %v4489 = vpack.c.b16 %v4464, %v4463
      %v4490 = vpack.c.b16 %v4466, %v4465
      %v4491 = vpack.c.b16 %v4468, %v4467
      %v4492 = vpack.c.b16 %v4470, %v4469
      %v4493 = vpack.c.b16 %v4472, %v4471
      %v4494 = vpack.c.b16 %v4474, %v4473
      %v4495 = vpack.c.b16 %v4476, %v4475
      %v4496 = vpack.c.b16 %v4478, %v4477
      %v4497 = vpack.c.b16 %v4480, %v4479
      %v4498 = vpack.c.b16 %v4482, %v4481
      %v4531 = vunpack.c.l.b16 %v4435
      %v4532 = vunpack.c.l.b16 %v4436
      %v4533 = vunpack.c.l.b16 %v4437
      %v4534 = vunpack.c.l.b16 %v4438
      %v4535 = vunpack.c.l.b16 %v4439
      %v4536 = vunpack.c.l.b16 %v4440
      %v4537 = vunpack.c.l.b16 %v4441
      %v4538 = vunpack.c.l.b16 %v4442
      %v4539 = vunpack.c.l.b16 %v4443
      %v4540 = vunpack.c.l.b16 %v4444
      %v4541 = vunpack.c.l.b16 %v4445
      %v4542 = vunpack.c.l.b16 %v4446
      %v4543 = vunpack.c.l.b16 %v4447
      %v4544 = vunpack.c.l.b16 %v4448
      %v4545 = vunpack.c.l.b16 %v4449
      %v4546 = vunpack.c.l.b16 %v4450
      %v4547 = vpack.c.b16 %v4532, %v4531
      %v4548 = vpack.c.b16 %v4534, %v4533
      %v4549 = vpack.c.b16 %v4536, %v4535
      %v4550 = vpack.c.b16 %v4538, %v4537
      %v4551 = vpack.c.b16 %v4540, %v4539
      %v4552 = vpack.c.b16 %v4542, %v4541
      %v4553 = vpack.c.b16 %v4544, %v4543
      %v4554 = vpack.c.b16 %v4546, %v4545
      %4563 = vmatpush.bf16.msra.mxu0 %v4554
      %4564 = vmatpush.bf16.msra.mxu0 %v4553
      %4565 = vmatpush.bf16.msra.mxu0 %v4552
      %4566 = vmatpush.bf16.msra.mxu0 %v4551
      %4567 = vmatpush.bf16.msra.mxu0 %v4550
      %4568 = vmatpush.bf16.msra.mxu0 %v4549
      %4569 = vmatpush.bf16.msra.mxu0 %v4548
      %4570 = vmatpush.bf16.msra.mxu0 %v4547
      %4571 = vmatmul.bf16.gmra.mxu0 %v4483
      %v4572 = vpop.f32.mrf.mxu0
      %v4573 = vadd.f32 0.0, %v4572
      %v4574 = vpop.f32.mrf.mxu0
      %v4575 = vadd.f32 0.0, %v4574
      %4576 = vmatmul.bf16.gmra.mxu0 %v4484
      %v4577 = vpop.f32.mrf.mxu0
      %v4578 = vadd.f32 0.0, %v4577
      %v4579 = vpop.f32.mrf.mxu0
      %v4580 = vadd.f32 0.0, %v4579
      %4581 = vmatmul.bf16.gmra.mxu0 %v4485
      %v4582 = vpop.f32.mrf.mxu0
      %v4583 = vadd.f32 0.0, %v4582
      %v4584 = vpop.f32.mrf.mxu0
      %v4585 = vadd.f32 0.0, %v4584
      %4586 = vmatmul.bf16.gmra.mxu0 %v4486
      %v4587 = vpop.f32.mrf.mxu0
      %v4588 = vadd.f32 0.0, %v4587
      %v4589 = vpop.f32.mrf.mxu0
      %v4590 = vadd.f32 0.0, %v4589
      %4591 = vmatmul.bf16.gmra.mxu0 %v4487
      %v4592 = vpop.f32.mrf.mxu0
      %v4593 = vadd.f32 0.0, %v4592
      %v4594 = vpop.f32.mrf.mxu0
      %v4595 = vadd.f32 0.0, %v4594
      %4596 = vmatmul.bf16.gmra.mxu0 %v4488
      %v4597 = vpop.f32.mrf.mxu0
      %v4598 = vadd.f32 0.0, %v4597
      %v4599 = vpop.f32.mrf.mxu0
      %v4600 = vadd.f32 0.0, %v4599
      %4601 = vmatmul.bf16.gmra.mxu0 %v4489
      %v4602 = vpop.f32.mrf.mxu0
      %v4603 = vadd.f32 0.0, %v4602
      %v4604 = vpop.f32.mrf.mxu0
      %v4605 = vadd.f32 0.0, %v4604
      %4606 = vmatmul.bf16.gmra.mxu0 %v4490
      %v4607 = vpop.f32.mrf.mxu0
      %v4608 = vadd.f32 0.0, %v4607
      %v4609 = vpop.f32.mrf.mxu0
      %v4610 = vadd.f32 0.0, %v4609
      %4611 = vmatmul.bf16.gmra.mxu0 %v4491
      %v4612 = vpop.f32.mrf.mxu0
      %v4613 = vadd.f32 0.0, %v4612
      %v4614 = vpop.f32.mrf.mxu0
      %v4615 = vadd.f32 0.0, %v4614
      %4616 = vmatmul.bf16.gmra.mxu0 %v4492
      %v4617 = vpop.f32.mrf.mxu0
      %v4618 = vadd.f32 0.0, %v4617
      %v4619 = vpop.f32.mrf.mxu0
      %v4620 = vadd.f32 0.0, %v4619
      %4621 = vmatmul.bf16.gmra.mxu0 %v4493
      %v4622 = vpop.f32.mrf.mxu0
      %v4623 = vadd.f32 0.0, %v4622
      %v4624 = vpop.f32.mrf.mxu0
      %v4625 = vadd.f32 0.0, %v4624
      %4626 = vmatmul.bf16.gmra.mxu0 %v4494
      %v4627 = vpop.f32.mrf.mxu0
      %v4628 = vadd.f32 0.0, %v4627
      %v4629 = vpop.f32.mrf.mxu0
      %v4630 = vadd.f32 0.0, %v4629
      %4631 = vmatmul.bf16.gmra.mxu0 %v4495
      %v4632 = vpop.f32.mrf.mxu0
      %v4633 = vadd.f32 0.0, %v4632
      %v4634 = vpop.f32.mrf.mxu0
      %v4635 = vadd.f32 0.0, %v4634
      %4636 = vmatmul.bf16.gmra.mxu0 %v4496
      %v4637 = vpop.f32.mrf.mxu0
      %v4638 = vadd.f32 0.0, %v4637
      %v4639 = vpop.f32.mrf.mxu0
      %v4640 = vadd.f32 0.0, %v4639
      %4641 = vmatmul.bf16.gmra.mxu0 %v4497
      %v4642 = vpop.f32.mrf.mxu0
      %v4643 = vadd.f32 0.0, %v4642
      %v4644 = vpop.f32.mrf.mxu0
      %v4645 = vadd.f32 0.0, %v4644
      %4646 = vmatmul.bf16.gmra.mxu0 %v4498
      %v4647 = vpop.f32.mrf.mxu0
      %v4648 = vadd.f32 0.0, %v4647
      %v4649 = vpop.f32.mrf.mxu0
      %v4650 = vadd.f32 0.0, %v4649
      %4651 = vdwg.mxu0
      %v4652 = vadd.f32 %v3970, %v4573
      %v4653 = vadd.f32 %v3971, %v4575
      %v4654 = vadd.f32 %v3972, %v4578
      %v4655 = vadd.f32 %v3973, %v4580
      %v4656 = vadd.f32 %v3974, %v4583
      %v4657 = vadd.f32 %v3975, %v4585
      %v4658 = vadd.f32 %v3976, %v4588
      %v4659 = vadd.f32 %v3977, %v4590
      %v4660 = vadd.f32 %v3978, %v4593
      %v4661 = vadd.f32 %v3979, %v4595
      %v4662 = vadd.f32 %v3980, %v4598
      %v4663 = vadd.f32 %v3981, %v4600
      %v4664 = vadd.f32 %v3982, %v4603
      %v4665 = vadd.f32 %v3983, %v4605
      %v4666 = vadd.f32 %v3984, %v4608
      %v4667 = vadd.f32 %v3985, %v4610
      %v4668 = vadd.f32 %v3986, %v4613
      %v4669 = vadd.f32 %v3987, %v4615
      %v4670 = vadd.f32 %v3988, %v4618
      %v4671 = vadd.f32 %v3989, %v4620
      %v4672 = vadd.f32 %v3990, %v4623
      %v4673 = vadd.f32 %v3991, %v4625
      %v4674 = vadd.f32 %v3992, %v4628
      %v4675 = vadd.f32 %v3993, %v4630
      %v4676 = vadd.f32 %v3994, %v4633
      %v4677 = vadd.f32 %v3995, %v4635
      %v4678 = vadd.f32 %v3996, %v4638
      %v4679 = vadd.f32 %v3997, %v4640
      %v4680 = vadd.f32 %v3998, %v4643
      %v4681 = vadd.f32 %v3999, %v4645
      %v4682 = vadd.f32 %v4000, %v4648
      %v4683 = vadd.f32 %v4001, %v4650
      %v4684 = vld [vmem:[%s3687] sm:$0xe]
      %v4685 = vld [vmem:[%s3687 + $0xc] sm:$0xe]
      %v4686 = vld [vmem:[%s3687 + $0x18] sm:$0xe]
      %v4687 = vld [vmem:[%s3687 + $0x24] sm:$0xe]
      %v4688 = vld [vmem:[%s3687 + $0x30] sm:$0xe]
      %v4689 = vld [vmem:[%s3687 + $0x3c] sm:$0xe]
      %v4690 = vld [vmem:[%s3687 + $0x48] sm:$0xe]
      %v4691 = vld [vmem:[%s3687 + $0x54] sm:$0xe]
      %v4692 = vld [vmem:[%s3687 + $0x60] sm:$0xe]
      %v4693 = vld [vmem:[%s3687 + $0x6c] sm:$0xe]
      %v4694 = vld [vmem:[%s3687 + $0x78] sm:$0xe]
      %v4695 = vld [vmem:[%s3687 + $0x84] sm:$0xe]
      %v4696 = vld [vmem:[%s3687 + $0x90] sm:$0xe]
      %v4697 = vld [vmem:[%s3687 + $0x9c] sm:$0xe]
      %v4698 = vld [vmem:[%s3687 + $0xa8] sm:$0xe]
      %v4699 = vld [vmem:[%s3687 + $0xb4] sm:$0xe]
      %v4748 = vrot.slane %v4684, 5
      %v4749 = vrot.slane %v4748, 4
      %v4750 = vrot.slane %v4003, 5
      %v4751 = vsel %vm1902, %v4749, %v4750
      %v4752 = vrot.slane %v4750, 4
      %v4753 = vrot.slane %v4004, 5
      %v4754 = vsel %vm1902, %v4752, %v4753
      %v4755 = vrot.slane %v4685, 5
      %v4756 = vrot.slane %v4755, 4
      %v4757 = vrot.slane %v4006, 5
      %v4758 = vsel %vm1902, %v4756, %v4757
      %v4759 = vrot.slane %v4757, 4
      %v4760 = vrot.slane %v4007, 5
      %v4761 = vsel %vm1902, %v4759, %v4760
      %v4762 = vrot.slane %v4686, 5
      %v4763 = vrot.slane %v4762, 4
      %v4764 = vrot.slane %v4009, 5
      %v4765 = vsel %vm1902, %v4763, %v4764
      %v4766 = vrot.slane %v4764, 4
      %v4767 = vrot.slane %v4010, 5
      %v4768 = vsel %vm1902, %v4766, %v4767
      %v4769 = vrot.slane %v4687, 5
      %v4770 = vrot.slane %v4769, 4
      %v4771 = vrot.slane %v4012, 5
      %v4772 = vsel %vm1902, %v4770, %v4771
      %v4773 = vrot.slane %v4771, 4
      %v4774 = vrot.slane %v4013, 5
      %v4775 = vsel %vm1902, %v4773, %v4774
      %v4776 = vrot.slane %v4688, 5
      %v4777 = vrot.slane %v4776, 4
      %v4778 = vrot.slane %v4015, 5
      %v4779 = vsel %vm1902, %v4777, %v4778
      %v4780 = vrot.slane %v4778, 4
      %v4781 = vrot.slane %v4016, 5
      %v4782 = vsel %vm1902, %v4780, %v4781
      %v4783 = vrot.slane %v4689, 5
      %v4784 = vrot.slane %v4783, 4
      %v4785 = vrot.slane %v4018, 5
      %v4786 = vsel %vm1902, %v4784, %v4785
      %v4787 = vrot.slane %v4785, 4
      %v4788 = vrot.slane %v4019, 5
      %v4789 = vsel %vm1902, %v4787, %v4788
      %v4790 = vrot.slane %v4690, 5
      %v4791 = vrot.slane %v4790, 4
      %v4792 = vrot.slane %v4021, 5
      %v4793 = vsel %vm1902, %v4791, %v4792
      %v4794 = vrot.slane %v4792, 4
      %v4795 = vrot.slane %v4022, 5
      %v4796 = vsel %vm1902, %v4794, %v4795
      %v4797 = vrot.slane %v4691, 5
      %v4798 = vrot.slane %v4797, 4
      %v4799 = vrot.slane %v4024, 5
      %v4800 = vsel %vm1902, %v4798, %v4799
      %v4801 = vrot.slane %v4799, 4
      %v4802 = vrot.slane %v4025, 5
      %v4803 = vsel %vm1902, %v4801, %v4802
      %v4804 = vrot.slane %v4692, 5
      %v4805 = vrot.slane %v4804, 4
      %v4806 = vrot.slane %v4027, 5
      %v4807 = vsel %vm1902, %v4805, %v4806
      %v4808 = vrot.slane %v4806, 4
      %v4809 = vrot.slane %v4028, 5
      %v4810 = vsel %vm1902, %v4808, %v4809
      %v4811 = vrot.slane %v4693, 5
      %v4812 = vrot.slane %v4811, 4
      %v4813 = vrot.slane %v4030, 5
      %v4814 = vsel %vm1902, %v4812, %v4813
      %v4815 = vrot.slane %v4813, 4
      %v4816 = vrot.slane %v4031, 5
      %v4817 = vsel %vm1902, %v4815, %v4816
      %v4818 = vrot.slane %v4694, 5
      %v4819 = vrot.slane %v4818, 4
      %v4820 = vrot.slane %v4033, 5
      %v4821 = vsel %vm1902, %v4819, %v4820
      %v4822 = vrot.slane %v4820, 4
      %v4823 = vrot.slane %v4034, 5
      %v4824 = vsel %vm1902, %v4822, %v4823
      %v4825 = vrot.slane %v4695, 5
      %v4826 = vrot.slane %v4825, 4
      %v4827 = vrot.slane %v4036, 5
      %v4828 = vsel %vm1902, %v4826, %v4827
      %v4829 = vrot.slane %v4827, 4
      %v4830 = vrot.slane %v4037, 5
      %v4831 = vsel %vm1902, %v4829, %v4830
      %v4832 = vrot.slane %v4696, 5
      %v4833 = vrot.slane %v4832, 4
      %v4834 = vrot.slane %v4039, 5
      %v4835 = vsel %vm1902, %v4833, %v4834
      %v4836 = vrot.slane %v4834, 4
      %v4837 = vrot.slane %v4040, 5
      %v4838 = vsel %vm1902, %v4836, %v4837
      %v4839 = vrot.slane %v4697, 5
      %v4840 = vrot.slane %v4839, 4
      %v4841 = vrot.slane %v4042, 5
      %v4842 = vsel %vm1902, %v4840, %v4841
      %v4843 = vrot.slane %v4841, 4
      %v4844 = vrot.slane %v4043, 5
      %v4845 = vsel %vm1902, %v4843, %v4844
      %v4846 = vrot.slane %v4698, 5
      %v4847 = vrot.slane %v4846, 4
      %v4848 = vrot.slane %v4045, 5
      %v4849 = vsel %vm1902, %v4847, %v4848
      %v4850 = vrot.slane %v4848, 4
      %v4851 = vrot.slane %v4046, 5
      %v4852 = vsel %vm1902, %v4850, %v4851
      %v4853 = vrot.slane %v4699, 5
      %v4854 = vrot.slane %v4853, 4
      %v4855 = vrot.slane %v4048, 5
      %v4856 = vsel %vm1902, %v4854, %v4855
      %v4857 = vrot.slane %v4855, 4
      %v4858 = vrot.slane %v4049, 5
      %v4859 = vsel %vm1902, %v4857, %v4858
      %s4860 = scalar_lea.vmem %s3, 512
      %v4861 = vld [vmem:[%s4860] sm:$0xf]
      %v4862 = vld [vmem:[%s4860 + $0x4] sm:$0xf]
      %v4863 = vld [vmem:[%s4860 + $0x8] sm:$0xf]
      %v4864 = vld [vmem:[%s4860 + $0xc] sm:$0xf]
      %v4865 = vld [vmem:[%s4860 + $0x10] sm:$0xf]
      %v4866 = vld [vmem:[%s4860 + $0x14] sm:$0xf]
      %v4867 = vld [vmem:[%s4860 + $0x18] sm:$0xf]
      %v4868 = vld [vmem:[%s4860 + $0x1c] sm:$0xf]
      %v4869 = vld [vmem:[%s4860 + $0x20] sm:$0xf]
      %v4870 = vld [vmem:[%s4860 + $0x24] sm:$0xf]
      %v4871 = vld [vmem:[%s4860 + $0x28] sm:$0xf]
      %v4872 = vld [vmem:[%s4860 + $0x2c] sm:$0xf]
      %v4873 = vld [vmem:[%s4860 + $0x30] sm:$0xf]
      %v4874 = vld [vmem:[%s4860 + $0x34] sm:$0xf]
      %v4875 = vld [vmem:[%s4860 + $0x38] sm:$0xf]
      %v4876 = vld [vmem:[%s4860 + $0x3c] sm:$0xf]
      %v4877 = vunpack.c.l.b16 %v4751
      %v4878 = vunpack.c.l.b16 %v4754
      %v4879 = vunpack.c.l.b16 %v4758
      %v4880 = vunpack.c.l.b16 %v4761
      %v4881 = vunpack.c.l.b16 %v4765
      %v4882 = vunpack.c.l.b16 %v4768
      %v4883 = vunpack.c.l.b16 %v4772
      %v4884 = vunpack.c.l.b16 %v4775
      %v4885 = vunpack.c.l.b16 %v4779
      %v4886 = vunpack.c.l.b16 %v4782
      %v4887 = vunpack.c.l.b16 %v4786
      %v4888 = vunpack.c.l.b16 %v4789
      %v4889 = vunpack.c.l.b16 %v4793
      %v4890 = vunpack.c.l.b16 %v4796
      %v4891 = vunpack.c.l.b16 %v4800
      %v4892 = vunpack.c.l.b16 %v4803
      %v4893 = vunpack.c.l.b16 %v4807
      %v4894 = vunpack.c.l.b16 %v4810
      %v4895 = vunpack.c.l.b16 %v4814
      %v4896 = vunpack.c.l.b16 %v4817
      %v4897 = vunpack.c.l.b16 %v4821
      %v4898 = vunpack.c.l.b16 %v4824
      %v4899 = vunpack.c.l.b16 %v4828
      %v4900 = vunpack.c.l.b16 %v4831
      %v4901 = vunpack.c.l.b16 %v4835
      %v4902 = vunpack.c.l.b16 %v4838
      %v4903 = vunpack.c.l.b16 %v4842
      %v4904 = vunpack.c.l.b16 %v4845
      %v4905 = vunpack.c.l.b16 %v4849
      %v4906 = vunpack.c.l.b16 %v4852
      %v4907 = vunpack.c.l.b16 %v4856
      %v4908 = vunpack.c.l.b16 %v4859
      %v4909 = vpack.c.b16 %v4878, %v4877
      %v4910 = vpack.c.b16 %v4880, %v4879
      %v4911 = vpack.c.b16 %v4882, %v4881
      %v4912 = vpack.c.b16 %v4884, %v4883
      %v4913 = vpack.c.b16 %v4886, %v4885
      %v4914 = vpack.c.b16 %v4888, %v4887
      %v4915 = vpack.c.b16 %v4890, %v4889
      %v4916 = vpack.c.b16 %v4892, %v4891
      %v4917 = vpack.c.b16 %v4894, %v4893
      %v4918 = vpack.c.b16 %v4896, %v4895
      %v4919 = vpack.c.b16 %v4898, %v4897
      %v4920 = vpack.c.b16 %v4900, %v4899
      %v4921 = vpack.c.b16 %v4902, %v4901
      %v4922 = vpack.c.b16 %v4904, %v4903
      %v4923 = vpack.c.b16 %v4906, %v4905
      %v4924 = vpack.c.b16 %v4908, %v4907
      %v4957 = vunpack.c.l.b16 %v4861
      %v4958 = vunpack.c.l.b16 %v4862
      %v4959 = vunpack.c.l.b16 %v4863
      %v4960 = vunpack.c.l.b16 %v4864
      %v4961 = vunpack.c.l.b16 %v4865
      %v4962 = vunpack.c.l.b16 %v4866
      %v4963 = vunpack.c.l.b16 %v4867
      %v4964 = vunpack.c.l.b16 %v4868
      %v4965 = vunpack.c.l.b16 %v4869
      %v4966 = vunpack.c.l.b16 %v4870
      %v4967 = vunpack.c.l.b16 %v4871
      %v4968 = vunpack.c.l.b16 %v4872
      %v4969 = vunpack.c.l.b16 %v4873
      %v4970 = vunpack.c.l.b16 %v4874
      %v4971 = vunpack.c.l.b16 %v4875
      %v4972 = vunpack.c.l.b16 %v4876
      %v4973 = vpack.c.b16 %v4958, %v4957
      %v4974 = vpack.c.b16 %v4960, %v4959
      %v4975 = vpack.c.b16 %v4962, %v4961
      %v4976 = vpack.c.b16 %v4964, %v4963
      %v4977 = vpack.c.b16 %v4966, %v4965
      %v4978 = vpack.c.b16 %v4968, %v4967
      %v4979 = vpack.c.b16 %v4970, %v4969
      %v4980 = vpack.c.b16 %v4972, %v4971
      %4989 = vmatpush.bf16.msra.mxu0 %v4980
      %4990 = vmatpush.bf16.msra.mxu0 %v4979
      %4991 = vmatpush.bf16.msra.mxu0 %v4978
      %4992 = vmatpush.bf16.msra.mxu0 %v4977
      %4993 = vmatpush.bf16.msra.mxu0 %v4976
      %4994 = vmatpush.bf16.msra.mxu0 %v4975
      %4995 = vmatpush.bf16.msra.mxu0 %v4974
      %4996 = vmatpush.bf16.msra.mxu0 %v4973
      %4997 = vmatmul.bf16.gmra.mxu0 %v4909
      %v4998 = vpop.f32.mrf.mxu0
      %v4999 = vadd.f32 0.0, %v4998
      %v5000 = vpop.f32.mrf.mxu0
      %v5001 = vadd.f32 0.0, %v5000
      %5002 = vmatmul.bf16.gmra.mxu0 %v4910
      %v5003 = vpop.f32.mrf.mxu0
      %v5004 = vadd.f32 0.0, %v5003
      %v5005 = vpop.f32.mrf.mxu0
      %v5006 = vadd.f32 0.0, %v5005
      %5007 = vmatmul.bf16.gmra.mxu0 %v4911
      %v5008 = vpop.f32.mrf.mxu0
      %v5009 = vadd.f32 0.0, %v5008
      %v5010 = vpop.f32.mrf.mxu0
      %v5011 = vadd.f32 0.0, %v5010
      %5012 = vmatmul.bf16.gmra.mxu0 %v4912
      %v5013 = vpop.f32.mrf.mxu0
      %v5014 = vadd.f32 0.0, %v5013
      %v5015 = vpop.f32.mrf.mxu0
      %v5016 = vadd.f32 0.0, %v5015
      %5017 = vmatmul.bf16.gmra.mxu0 %v4913
      %v5018 = vpop.f32.mrf.mxu0
      %v5019 = vadd.f32 0.0, %v5018
      %v5020 = vpop.f32.mrf.mxu0
      %v5021 = vadd.f32 0.0, %v5020
      %5022 = vmatmul.bf16.gmra.mxu0 %v4914
      %v5023 = vpop.f32.mrf.mxu0
      %v5024 = vadd.f32 0.0, %v5023
      %v5025 = vpop.f32.mrf.mxu0
      %v5026 = vadd.f32 0.0, %v5025
      %5027 = vmatmul.bf16.gmra.mxu0 %v4915
      %v5028 = vpop.f32.mrf.mxu0
      %v5029 = vadd.f32 0.0, %v5028
      %v5030 = vpop.f32.mrf.mxu0
      %v5031 = vadd.f32 0.0, %v5030
      %5032 = vmatmul.bf16.gmra.mxu0 %v4916
      %v5033 = vpop.f32.mrf.mxu0
      %v5034 = vadd.f32 0.0, %v5033
      %v5035 = vpop.f32.mrf.mxu0
      %v5036 = vadd.f32 0.0, %v5035
      %5037 = vmatmul.bf16.gmra.mxu0 %v4917
      %v5038 = vpop.f32.mrf.mxu0
      %v5039 = vadd.f32 0.0, %v5038
      %v5040 = vpop.f32.mrf.mxu0
      %v5041 = vadd.f32 0.0, %v5040
      %5042 = vmatmul.bf16.gmra.mxu0 %v4918
      %v5043 = vpop.f32.mrf.mxu0
      %v5044 = vadd.f32 0.0, %v5043
      %v5045 = vpop.f32.mrf.mxu0
      %v5046 = vadd.f32 0.0, %v5045
      %5047 = vmatmul.bf16.gmra.mxu0 %v4919
      %v5048 = vpop.f32.mrf.mxu0
      %v5049 = vadd.f32 0.0, %v5048
      %v5050 = vpop.f32.mrf.mxu0
      %v5051 = vadd.f32 0.0, %v5050
      %5052 = vmatmul.bf16.gmra.mxu0 %v4920
      %v5053 = vpop.f32.mrf.mxu0
      %v5054 = vadd.f32 0.0, %v5053
      %v5055 = vpop.f32.mrf.mxu0
      %v5056 = vadd.f32 0.0, %v5055
      %5057 = vmatmul.bf16.gmra.mxu0 %v4921
      %v5058 = vpop.f32.mrf.mxu0
      %v5059 = vadd.f32 0.0, %v5058
      %v5060 = vpop.f32.mrf.mxu0
      %v5061 = vadd.f32 0.0, %v5060
      %5062 = vmatmul.bf16.gmra.mxu0 %v4922
      %v5063 = vpop.f32.mrf.mxu0
      %v5064 = vadd.f32 0.0, %v5063
      %v5065 = vpop.f32.mrf.mxu0
      %v5066 = vadd.f32 0.0, %v5065
      %5067 = vmatmul.bf16.gmra.mxu0 %v4923
      %v5068 = vpop.f32.mrf.mxu0
      %v5069 = vadd.f32 0.0, %v5068
      %v5070 = vpop.f32.mrf.mxu0
      %v5071 = vadd.f32 0.0, %v5070
      %5072 = vmatmul.bf16.gmra.mxu0 %v4924
      %v5073 = vpop.f32.mrf.mxu0
      %v5074 = vadd.f32 0.0, %v5073
      %v5075 = vpop.f32.mrf.mxu0
      %v5076 = vadd.f32 0.0, %v5075
      %5077 = vdwg.mxu0
      %v5078 = vadd.f32 %v4652, %v4999
      %v5079 = vadd.f32 %v4653, %v5001
      %v5080 = vadd.f32 %v4654, %v5004
      %v5081 = vadd.f32 %v4655, %v5006
      %v5082 = vadd.f32 %v4656, %v5009
      %v5083 = vadd.f32 %v4657, %v5011
      %v5084 = vadd.f32 %v4658, %v5014
      %v5085 = vadd.f32 %v4659, %v5016
      %v5086 = vadd.f32 %v4660, %v5019
      %v5087 = vadd.f32 %v4661, %v5021
      %v5088 = vadd.f32 %v4662, %v5024
      %v5089 = vadd.f32 %v4663, %v5026
      %v5090 = vadd.f32 %v4664, %v5029
      %v5091 = vadd.f32 %v4665, %v5031
      %v5092 = vadd.f32 %v4666, %v5034
      %v5093 = vadd.f32 %v4667, %v5036
      %v5094 = vadd.f32 %v4668, %v5039
      %v5095 = vadd.f32 %v4669, %v5041
      %v5096 = vadd.f32 %v4670, %v5044
      %v5097 = vadd.f32 %v4671, %v5046
      %v5098 = vadd.f32 %v4672, %v5049
      %v5099 = vadd.f32 %v4673, %v5051
      %v5100 = vadd.f32 %v4674, %v5054
      %v5101 = vadd.f32 %v4675, %v5056
      %v5102 = vadd.f32 %v4676, %v5059
      %v5103 = vadd.f32 %v4677, %v5061
      %v5104 = vadd.f32 %v4678, %v5064
      %v5105 = vadd.f32 %v4679, %v5066
      %v5106 = vadd.f32 %v4680, %v5069
      %v5107 = vadd.f32 %v4681, %v5071
      %v5108 = vadd.f32 %v4682, %v5074
      %v5109 = vadd.f32 %v4683, %v5076
      %5110 = vst [vmem:[%s231] sm:$0xff] %v5078
      %5111 = vst [vmem:[%s231 + $0x8] sm:$0xff] %v5079
      %5112 = vst [vmem:[%s231 + $0x10] sm:$0xff] %v5080
      %5113 = vst [vmem:[%s231 + $0x18] sm:$0xff] %v5081
      %5114 = vst [vmem:[%s231 + $0x20] sm:$0xff] %v5082
      %5115 = vst [vmem:[%s231 + $0x28] sm:$0xff] %v5083
      %5116 = vst [vmem:[%s231 + $0x30] sm:$0xff] %v5084
      %5117 = vst [vmem:[%s231 + $0x38] sm:$0xff] %v5085
      %5118 = vst [vmem:[%s231 + $0x40] sm:$0xff] %v5086
      %5119 = vst [vmem:[%s231 + $0x48] sm:$0xff] %v5087
      %5120 = vst [vmem:[%s231 + $0x50] sm:$0xff] %v5088
      %5121 = vst [vmem:[%s231 + $0x58] sm:$0xff] %v5089
      %5122 = vst [vmem:[%s231 + $0x60] sm:$0xff] %v5090
      %5123 = vst [vmem:[%s231 + $0x68] sm:$0xff] %v5091
      %5124 = vst [vmem:[%s231 + $0x70] sm:$0xff] %v5092
      %5125 = vst [vmem:[%s231 + $0x78] sm:$0xff] %v5093
      %5126 = vst [vmem:[%s231 + $0x80] sm:$0xff] %v5094
      %5127 = vst [vmem:[%s231 + $0x88] sm:$0xff] %v5095
      %5128 = vst [vmem:[%s231 + $0x90] sm:$0xff] %v5096
      %5129 = vst [vmem:[%s231 + $0x98] sm:$0xff] %v5097
      %5130 = vst [vmem:[%s231 + $0xa0] sm:$0xff] %v5098
      %5131 = vst [vmem:[%s231 + $0xa8] sm:$0xff] %v5099
      %5132 = vst [vmem:[%s231 + $0xb0] sm:$0xff] %v5100
      %5133 = vst [vmem:[%s231 + $0xb8] sm:$0xff] %v5101
      %5134 = vst [vmem:[%s231 + $0xc0] sm:$0xff] %v5102
      %5135 = vst [vmem:[%s231 + $0xc8] sm:$0xff] %v5103
      %5136 = vst [vmem:[%s231 + $0xd0] sm:$0xff] %v5104
      %5137 = vst [vmem:[%s231 + $0xd8] sm:$0xff] %v5105
      %5138 = vst [vmem:[%s231 + $0xe0] sm:$0xff] %v5106
      %5139 = vst [vmem:[%s231 + $0xe8] sm:$0xff] %v5107
      %5140 = vst [vmem:[%s231 + $0xf0] sm:$0xff] %v5108
      %5141 = vst [vmem:[%s231 + $0xf8] sm:$0xff] %v5109
      %v5142 = vadd.f32 %v5078, %v5079
      %v5143 = vadd.f32 %v5142, %v5080
      %v5144 = vadd.f32 %v5143, %v5081
      %v5145 = vadd.f32 %v5144, %v5082
      %v5146 = vadd.f32 %v5145, %v5083
      %v5147 = vadd.f32 %v5146, %v5084
      %v5148 = vadd.f32 %v5147, %v5085
      %v5149 = vadd.f32 %v5148, %v5086
      %v5150 = vadd.f32 %v5149, %v5087
      %v5151 = vadd.f32 %v5150, %v5088
      %v5152 = vadd.f32 %v5151, %v5089
      %v5153 = vadd.f32 %v5152, %v5090
      %v5154 = vadd.f32 %v5153, %v5091
      %v5155 = vadd.f32 %v5154, %v5092
      %v5156 = vadd.f32 %v5155, %v5093
      %v5157 = vadd.f32 %v5156, %v5094
      %v5158 = vadd.f32 %v5157, %v5095
      %v5159 = vadd.f32 %v5158, %v5096
      %v5160 = vadd.f32 %v5159, %v5097
      %v5161 = vadd.f32 %v5160, %v5098
      %v5162 = vadd.f32 %v5161, %v5099
      %v5163 = vadd.f32 %v5162, %v5100
      %v5164 = vadd.f32 %v5163, %v5101
      %v5165 = vadd.f32 %v5164, %v5102
      %v5166 = vadd.f32 %v5165, %v5103
      %v5167 = vadd.f32 %v5166, %v5104
      %v5168 = vadd.f32 %v5167, %v5105
      %v5169 = vadd.f32 %v5168, %v5106
      %v5170 = vadd.f32 %v5169, %v5107
      %v5171 = vadd.f32 %v5170, %v5108
      %v5172 = vadd.f32 %v5171, %v5109
      %v5173 = vrot.slane %v5172, 4
      %v5174 = vadd.f32 %v5172, %v5173
      %v5175 = vrot.slane %v5174, 2
      %v5176 = vadd.f32 %v5174, %v5175
      %v5177 = vrot.slane %v5176, 1
      %v5178 = vadd.f32 %v5176, %v5177
      %5179 = vst [vmem:[%s235] sm:$0x1] %v5178
      %v5180 = vmul.f32 %v5078, %v5078
      %v5181 = vmul.f32 %v5079, %v5079
      %v5182 = vmul.f32 %v5080, %v5080
      %v5183 = vmul.f32 %v5081, %v5081
      %v5184 = vmul.f32 %v5082, %v5082
      %v5185 = vmul.f32 %v5083, %v5083
      %v5186 = vmul.f32 %v5084, %v5084
      %v5187 = vmul.f32 %v5085, %v5085
      %v5188 = vmul.f32 %v5086, %v5086
      %v5189 = vmul.f32 %v5087, %v5087
      %v5190 = vmul.f32 %v5088, %v5088
      %v5191 = vmul.f32 %v5089, %v5089
      %v5192 = vmul.f32 %v5090, %v5090
      %v5193 = vmul.f32 %v5091, %v5091
      %v5194 = vmul.f32 %v5092, %v5092
      %v5195 = vmul.f32 %v5093, %v5093
      %v5196 = vmul.f32 %v5094, %v5094
      %v5197 = vmul.f32 %v5095, %v5095
      %v5198 = vmul.f32 %v5096, %v5096
      %v5199 = vmul.f32 %v5097, %v5097
      %v5200 = vmul.f32 %v5098, %v5098
      %v5201 = vmul.f32 %v5099, %v5099
      %v5202 = vmul.f32 %v5100, %v5100
      %v5203 = vmul.f32 %v5101, %v5101
      %v5204 = vmul.f32 %v5102, %v5102
      %v5205 = vmul.f32 %v5103, %v5103
      %v5206 = vmul.f32 %v5104, %v5104
      %v5207 = vmul.f32 %v5105, %v5105
      %v5208 = vmul.f32 %v5106, %v5106
      %v5209 = vmul.f32 %v5107, %v5107
      %v5210 = vmul.f32 %v5108, %v5108
      %v5211 = vmul.f32 %v5109, %v5109
      %v5212 = vadd.f32 %v5180, %v5181
      %v5213 = vadd.f32 %v5212, %v5182
      %v5214 = vadd.f32 %v5213, %v5183
      %v5215 = vadd.f32 %v5214, %v5184
      %v5216 = vadd.f32 %v5215, %v5185
      %v5217 = vadd.f32 %v5216, %v5186
      %v5218 = vadd.f32 %v5217, %v5187
      %v5219 = vadd.f32 %v5218, %v5188
      %v5220 = vadd.f32 %v5219, %v5189
      %v5221 = vadd.f32 %v5220, %v5190
      %v5222 = vadd.f32 %v5221, %v5191
      %v5223 = vadd.f32 %v5222, %v5192
      %v5224 = vadd.f32 %v5223, %v5193
      %v5225 = vadd.f32 %v5224, %v5194
      %v5226 = vadd.f32 %v5225, %v5195
      %v5227 = vadd.f32 %v5226, %v5196
      %v5228 = vadd.f32 %v5227, %v5197
      %v5229 = vadd.f32 %v5228, %v5198
      %v5230 = vadd.f32 %v5229, %v5199
      %v5231 = vadd.f32 %v5230, %v5200
      %v5232 = vadd.f32 %v5231, %v5201
      %v5233 = vadd.f32 %v5232, %v5202
      %v5234 = vadd.f32 %v5233, %v5203
      %v5235 = vadd.f32 %v5234, %v5204
      %v5236 = vadd.f32 %v5235, %v5205
      %v5237 = vadd.f32 %v5236, %v5206
      %v5238 = vadd.f32 %v5237, %v5207
      %v5239 = vadd.f32 %v5238, %v5208
      %v5240 = vadd.f32 %v5239, %v5209
      %v5241 = vadd.f32 %v5240, %v5210
      %v5242 = vadd.f32 %v5241, %v5211
      %v5243 = vrot.slane %v5242, 4
      %v5244 = vadd.f32 %v5242, %v5243
      %v5245 = vrot.slane %v5244, 2
      %v5246 = vadd.f32 %v5244, %v5245
      %v5247 = vrot.slane %v5246, 1
      %v5248 = vadd.f32 %v5246, %v5247
      %5249 = vst [vmem:[%s235 + $0x1] sm:$0x1] %v5248
      %p5250 = scmp.lt.s32.totalorder %s17, 1
      %s5251 = scalar_select %p5250, %s17, 1
      %s5252 = smul.addr %s5251, 32
      %s5253 = smul.addr %s5252, 8
      %s5254 = scalar_lea.vmem %s4, %s5253
      %p5255 = scmp.lt.s32.totalorder %s17, 1
      %s5256 = scalar_select %p5255, %s17, 1
      %s5257 = smul.addr %s5256, 2
      %s5258 = scalar_lea.vmem %s5, %s5257
      // Predicated region
      $region37: #{basic_res_block.4} parent=35 // pred_check
        %p5259 = pneg %p124
      $region38: #{basic_res_block.4} parent=35 // pred_check_branch
        %5261 = sbr.rel (%p5259) target = $region40
      $region39: #{basic_res_block.4} parent=35 // pred_region
        _
      $region40: #{basic_res_block.4} parent=35 // pred_fallthru
        _
      // Predicated region
      $region41: #{basic_res_block.4} parent=35 // pred_check
        %p5262 = pneg %p150
      $region42: #{basic_res_block.4} parent=35 // pred_check_branch
        %5264 = sbr.rel (%p5262) target = $region44
      $region43: #{basic_res_block.4} parent=35 // pred_region
        _
      $region44: #{basic_res_block.4} parent=35 // pred_fallthru
        _
    $region36: #{basic_res_block.4} parent=5 // pred_fallthru
      _
    %p5265 = scmp.le.s32.totalorder 2, %s12
    // Predicated region
    $region45: #{basic_res_block.4} parent=5 // pred_check
      %p5266 = pneg %p5265
    $region46: #{basic_res_block.4} parent=5 // pred_check_branch
      %5268 = sbr.rel (%p5266) target = $region48
    $region47: #{basic_res_block.4} parent=5 // pred_region
      %s5269 = ssub.s32 %s12, 2
      // Predicated region
      $region49: #{basic_res_block.4} parent=47 // pred_check
        %p5270 = pneg %p130
      $region50: #{basic_res_block.4} parent=47 // pred_check_branch
        %5272 = sbr.rel (%p5270) target = $region52
      $region51: #{basic_res_block.4} parent=47 // pred_region
        %p5273 = scmp.lt.s32.totalorder %s18, 1
        %s5274 = scalar_select %p5273, %s18, 1
        %s5275 = smul.addr %s5274, 32
        %s5276 = smul.addr %s5275, 8
        %s5277 = scalar_lea.vmem %s4, %s5276
      $region52: #{basic_res_block.4} parent=47 // pred_fallthru
        _
      // Predicated region
      $region53: #{basic_res_block.4} parent=47 // pred_check
        %p5278 = pneg %p156
      $region54: #{basic_res_block.4} parent=47 // pred_check_branch
        %5280 = sbr.rel (%p5278) target = $region56
      $region55: #{basic_res_block.4} parent=47 // pred_region
        %p5281 = scmp.lt.s32.totalorder %s18, 1
        %s5282 = scalar_select %p5281, %s18, 1
        %s5283 = smul.addr %s5282, 2
        %s5284 = scalar_lea.vmem %s5, %s5283
      $region56: #{basic_res_block.4} parent=47 // pred_fallthru
        _
    $region48: #{basic_res_block.4} parent=5 // pred_fallthru
      _
  $region6: #{basic_res_block.4} parent=0 // loop_footer
    %s16 = sadd.s32 1, %s12
  $region7: #{basic_res_block.4} parent=0 // loop_footer_branch
    %11 = sbr.rel target = $region3
  $region8: #{basic_res_block.4} parent=0 // loop_exit
    _

// kernel: basic_res_block.3
$region0: #{basic_res_block.3}
  #allocation0 [shape = 'u32[]', space=smem, size = 0x4, offset = 0x4, fixed_abs, tag = 'smem constant byte address 0x4 - core index']
  #allocation1 [shape = 'u32[72,128]{1,0:T(1,128)}', space=vmem, size = 0x9000, scoped, tag = 'internal scratch']
  %s0 = inlined_call_operand.vmem [shape: bf16[2,18,18,128], index: 0, kind: input, shape index: {}]
  %s1 = inlined_call_operand.vmem [shape: bf16[3,3,128,128], index: 1, kind: input, shape index: {}]
  %s2 = inlined_call_operand.vmem [shape: bf16[128,128], index: 2, kind: input, shape index: {}]
  %s3 = inlined_call_operand.vmem [shape: f32[1,128], index: 3, kind: input, shape index: {}]
  %s4 = inlined_call_operand.vmem [shape: f32[2,16,16,128], index: 4, kind: output, shape index: {0}]
  %s5 = inlined_call_operand.vmem [shape: f32[2,16,16,128], index: 5, kind: output, shape index: {1}]
  %s6 = inlined_call_operand.vmem [shape: f32[2,2,128], index: 6, kind: output, shape index: {2}]
  %7 = xla_tuple %s4, %s5, %s6
  %s8 = sld [smem:[#allocation0]]
  $region65: #{basic_res_block.3} parent=0
    _
  %s10 = ssub.s32 1, %s8
  %s11 = scalar_select 0, %s10, %s8
  loop: start=0, step=1, limit=4
  $region2: #{basic_res_block.3} parent=0 // loop_pre_header
    _
  $region3: #{basic_res_block.3} parent=0 // loop_header
    %s13 = sphi 0, %s17
    %p14 = scmp.ge.s32.totalorder %s13, 4
    %s23 = sphi 0, %s25
    %s26 = sphi 0, %s23
    %s27 = sphi 0, %s26
    %s43 = sphi 0, %s27
    %s47 = sphi 0, %s47
    %s49 = sphi 0, %s47
    %s50 = sphi 0, %s49
    %s64 = sphi 0, %s50
    %s68 = sphi 0, %s68
    %s70 = sphi 0, %s68
    %s71 = sphi 0, %s70
    %s85 = sphi 0, %s71
    %s89 = sphi 0, %s89
    %s91 = sphi 0, %s89
    %s92 = sphi 0, %s91
    %s106 = sphi 0, %s92
    %s112 = sphi 0, %s114
    %s115 = sphi 0, %s112
    %s116 = sphi 0, %s115
    %s132 = sphi 0, %s116
    %s138 = sphi 0, %s140
    %s141 = sphi 0, %s138
    %s142 = sphi 0, %s141
    %s158 = sphi 0, %s142
    %s164 = sphi 0, %s166
    %s167 = sphi 0, %s164
    %s168 = sphi 0, %s167
    %s184 = sphi 0, %s168
  $region4: #{basic_res_block.3} parent=0 // loop_header_branch
    %16 = sbr.rel (%p14) target = $region8
  $region5: #{basic_res_block.3} parent=0 // loop_body
    %s18 = ssub.s32 %s13, 1
    %s19 = ssub.s32 %s13, 2
    %s20 = sadd.s32 %s13, 1
    %s21 = ssub.s32 %s13, %s20
    %p22 = scmp.eq.s32.totalorder %s21, 0
    %s24 = sadd.s32 %s23, 1
    %s25 = scalar_select %p22, %s23, %s24
    %p28 = pneg %p22
    %p29 = scmp.eq.s32.totalorder %s13, 1
    %p30 = por %p28, %p29
    %p31 = scmp.ne.s32.totalorder %s23, %s26
    %p32 = scmp.eq.s32.totalorder %s13, 0
    %p33 = por %p31, %p32
    %p34 = scmp.ne.s32.totalorder %s23, %s26
    %p35 = scmp.eq.s32.totalorder %s18, 1
    %p36 = por %p34, %p35
    %p37 = scmp.ne.s32.totalorder %s26, %s27
    %p38 = scmp.eq.s32.totalorder %s18, 0
    %p39 = por %p37, %p38
    %p40 = scmp.ne.s32.totalorder %s26, %s27
    %p41 = scmp.eq.s32.totalorder %s19, 1
    %p42 = por %p40, %p41
    %p44 = scmp.ne.s32.totalorder %s27, %s43
    %p45 = scmp.eq.s32.totalorder %s19, 0
    %p46 = por %p44, %p45
    %s48 = sadd.s32 %s47, 1
    %p51 = scmp.eq.s32.totalorder %s13, 1
    %p52 = scmp.ne.s32.totalorder %s47, %s49
    %p53 = scmp.eq.s32.totalorder %s13, 0
    %p54 = por %p52, %p53
    %p55 = scmp.ne.s32.totalorder %s47, %s49
    %p56 = scmp.eq.s32.totalorder %s18, 1
    %p57 = por %p55, %p56
    %p58 = scmp.ne.s32.totalorder %s49, %s50
    %p59 = scmp.eq.s32.totalorder %s18, 0
    %p60 = por %p58, %p59
    %p61 = scmp.ne.s32.totalorder %s49, %s50
    %p62 = scmp.eq.s32.totalorder %s19, 1
    %p63 = por %p61, %p62
    %p65 = scmp.ne.s32.totalorder %s50, %s64
    %p66 = scmp.eq.s32.totalorder %s19, 0
    %p67 = por %p65, %p66
    %s69 = sadd.s32 %s68, 1
    %p72 = scmp.eq.s32.totalorder %s13, 1
    %p73 = scmp.ne.s32.totalorder %s68, %s70
    %p74 = scmp.eq.s32.totalorder %s13, 0
    %p75 = por %p73, %p74
    %p76 = scmp.ne.s32.totalorder %s68, %s70
    %p77 = scmp.eq.s32.totalorder %s18, 1
    %p78 = por %p76, %p77
    %p79 = scmp.ne.s32.totalorder %s70, %s71
    %p80 = scmp.eq.s32.totalorder %s18, 0
    %p81 = por %p79, %p80
    %p82 = scmp.ne.s32.totalorder %s70, %s71
    %p83 = scmp.eq.s32.totalorder %s19, 1
    %p84 = por %p82, %p83
    %p86 = scmp.ne.s32.totalorder %s71, %s85
    %p87 = scmp.eq.s32.totalorder %s19, 0
    %p88 = por %p86, %p87
    %s90 = sadd.s32 %s89, 1
    %p93 = scmp.eq.s32.totalorder %s13, 1
    %p94 = scmp.ne.s32.totalorder %s89, %s91
    %p95 = scmp.eq.s32.totalorder %s13, 0
    %p96 = por %p94, %p95
    %p97 = scmp.ne.s32.totalorder %s89, %s91
    %p98 = scmp.eq.s32.totalorder %s18, 1
    %p99 = por %p97, %p98
    %p100 = scmp.ne.s32.totalorder %s91, %s92
    %p101 = scmp.eq.s32.totalorder %s18, 0
    %p102 = por %p100, %p101
    %p103 = scmp.ne.s32.totalorder %s91, %s92
    %p104 = scmp.eq.s32.totalorder %s19, 1
    %p105 = por %p103, %p104
    %p107 = scmp.ne.s32.totalorder %s92, %s106
    %p108 = scmp.eq.s32.totalorder %s19, 0
    %p109 = por %p107, %p108
    %s110 = ssub.s32 %s13, %s20
    %p111 = scmp.eq.s32.totalorder %s110, 0
    %s113 = sadd.s32 %s112, 1
    %s114 = scalar_select %p111, %s112, %s113
    %p117 = pneg %p111
    %p118 = scmp.eq.s32.totalorder %s13, 1
    %p119 = por %p117, %p118
    %p120 = scmp.ne.s32.totalorder %s112, %s115
    %p121 = scmp.eq.s32.totalorder %s13, 0
    %p122 = por %p120, %p121
    %p123 = scmp.ne.s32.totalorder %s112, %s115
    %p124 = scmp.eq.s32.totalorder %s18, 1
    %p125 = por %p123, %p124
    %p126 = scmp.ne.s32.totalorder %s115, %s116
    %p127 = scmp.eq.s32.totalorder %s18, 0
    %p128 = por %p126, %p127
    %p129 = scmp.ne.s32.totalorder %s115, %s116
    %p130 = scmp.eq.s32.totalorder %s19, 1
    %p131 = por %p129, %p130
    %p133 = scmp.ne.s32.totalorder %s116, %s132
    %p134 = scmp.eq.s32.totalorder %s19, 0
    %p135 = por %p133, %p134
    %s136 = ssub.s32 %s13, %s20
    %p137 = scmp.eq.s32.totalorder %s136, 0
    %s139 = sadd.s32 %s138, 1
    %s140 = scalar_select %p137, %s138, %s139
    %p143 = pneg %p137
    %p144 = scmp.eq.s32.totalorder %s13, 1
    %p145 = por %p143, %p144
    %p146 = scmp.ne.s32.totalorder %s138, %s141
    %p147 = scmp.eq.s32.totalorder %s13, 0
    %p148 = por %p146, %p147
    %p149 = scmp.ne.s32.totalorder %s138, %s141
    %p150 = scmp.eq.s32.totalorder %s18, 1
    %p151 = por %p149, %p150
    %p152 = scmp.ne.s32.totalorder %s141, %s142
    %p153 = scmp.eq.s32.totalorder %s18, 0
    %p154 = por %p152, %p153
    %p155 = scmp.ne.s32.totalorder %s141, %s142
    %p156 = scmp.eq.s32.totalorder %s19, 1
    %p157 = por %p155, %p156
    %p159 = scmp.ne.s32.totalorder %s142, %s158
    %p160 = scmp.eq.s32.totalorder %s19, 0
    %p161 = por %p159, %p160
    %s162 = ssub.s32 %s13, %s20
    %p163 = scmp.eq.s32.totalorder %s162, 0
    %s165 = sadd.s32 %s164, 1
    %s166 = scalar_select %p163, %s164, %s165
    %p169 = pneg %p163
    %p170 = scmp.eq.s32.totalorder %s13, 1
    %p171 = por %p169, %p170
    %p172 = scmp.ne.s32.totalorder %s164, %s167
    %p173 = scmp.eq.s32.totalorder %s13, 0
    %p174 = por %p172, %p173
    %p175 = scmp.ne.s32.totalorder %s164, %s167
    %p176 = scmp.eq.s32.totalorder %s18, 1
    %p177 = por %p175, %p176
    %p178 = scmp.ne.s32.totalorder %s167, %s168
    %p179 = scmp.eq.s32.totalorder %s18, 0
    %p180 = por %p178, %p179
    %p181 = scmp.ne.s32.totalorder %s167, %s168
    %p182 = scmp.eq.s32.totalorder %s19, 1
    %p183 = por %p181, %p182
    %p185 = scmp.ne.s32.totalorder %s168, %s184
    %p186 = scmp.eq.s32.totalorder %s19, 0
    %p187 = por %p185, %p186
    %p188 = scmp.le.s32.totalorder 1, %s13
    %p189 = scmp.lt.s32.totalorder %s13, 3
    %p190 = pnand %p188, %p189
    %p191 = pneg %p190
    // Predicated region
    $region9: #{basic_res_block.3} parent=5 // pred_check
      _
    $region10: #{basic_res_block.3} parent=5 // pred_check_branch
      %193 = sbr.rel (%p190) target = $region12
    $region11: #{basic_res_block.3} parent=5 // pred_region
      %s194 = ssub.s32 %s13, 1
      // Predicated region
      $region13: #{basic_res_block.3} parent=11 // pred_check
        %p195 = pneg %p60
      $region14: #{basic_res_block.3} parent=11 // pred_check_branch
        %197 = sbr.rel (%p195) target = $region16
      $region15: #{basic_res_block.3} parent=11 // pred_region
        _
      $region16: #{basic_res_block.3} parent=11 // pred_fallthru
        _
      // Predicated region
      $region17: #{basic_res_block.3} parent=11 // pred_check
        %p198 = pneg %p81
      $region18: #{basic_res_block.3} parent=11 // pred_check_branch
        %200 = sbr.rel (%p198) target = $region20
      $region19: #{basic_res_block.3} parent=11 // pred_region
        _
      $region20: #{basic_res_block.3} parent=11 // pred_fallthru
        _
      // Predicated region
      $region21: #{basic_res_block.3} parent=11 // pred_check
        %p201 = pneg %p102
      $region22: #{basic_res_block.3} parent=11 // pred_check_branch
        %203 = sbr.rel (%p201) target = $region24
      $region23: #{basic_res_block.3} parent=11 // pred_region
        _
      $region24: #{basic_res_block.3} parent=11 // pred_fallthru
        _
    $region12: #{basic_res_block.3} parent=5 // pred_fallthru
      _
    %p204 = scmp.lt.s32.totalorder %s13, 2
    // Predicated region
    $region25: #{basic_res_block.3} parent=5 // pred_check
      %p205 = pneg %p204
    $region26: #{basic_res_block.3} parent=5 // pred_check_branch
      %207 = sbr.rel (%p205) target = $region28
    $region27: #{basic_res_block.3} parent=5 // pred_region
      // Predicated region
      $region29: #{basic_res_block.3} parent=27 // pred_check
        %p208 = pneg %p33
      $region30: #{basic_res_block.3} parent=27 // pred_check_branch
        %210 = sbr.rel (%p208) target = $region32
      $region31: #{basic_res_block.3} parent=27 // pred_region
        %p211 = scmp.lt.s32.totalorder %s13, 1
        %s212 = scalar_select %p211, %s13, 1
        %s213 = smul.addr %s212, 54
        %s214 = smul.addr %s213, 4
        %s215 = scalar_lea.vmem %s0, %s214
      $region32: #{basic_res_block.3} parent=27 // pred_fallthru
        _
    $region28: #{basic_res_block.3} parent=5 // pred_fallthru
      _
    %p216 = scmp.le.s32.totalorder 1, %s13
    %p217 = scmp.lt.s32.totalorder %s13, 3
    %p218 = pnand %p216, %p217
    %p219 = pneg %p218
    // Predicated region
    $region33: #{basic_res_block.3} parent=5 // pred_check
      _
    $region34: #{basic_res_block.3} parent=5 // pred_check_branch
      %221 = sbr.rel (%p218) target = $region36
    $region35: #{basic_res_block.3} parent=5 // pred_region
      %s222 = ssub.s32 %s13, 1
      %p223 = scmp.lt.s32.totalorder %s18, 1
      %s224 = scalar_select %p223, %s18, 1
      %s225 = smul.addr %s224, 54
      %s226 = smul.addr %s225, 4
      %s227 = scalar_lea.vmem %s0, %s226
      %p228 = pneg %p39
      %p229 = pneg %p36
      %p230 = pneg %p60
      %p231 = pneg %p57
      %p232 = pneg %p81
      %p233 = pneg %p78
      %p234 = pneg %p102
      %p235 = pneg %p99
      %p236 = pneg %p128
      %p237 = pneg %p125
      %p238 = scmp.lt.s32.totalorder %s18, 1
      %s239 = scalar_select %p238, %s18, 1
      %s240 = smul.addr %s239, 32
      %s241 = smul.addr %s240, 8
      %s242 = scalar_lea.vmem %s4, %s241
      %p243 = pneg %p154
      %p244 = pneg %p151
      %p245 = scmp.lt.s32.totalorder %s18, 1
      %s246 = scalar_select %p245, %s18, 1
      %s247 = smul.addr %s246, 32
      %s248 = smul.addr %s247, 8
      %s249 = scalar_lea.vmem %s5, %s248
      %p250 = pneg %p180
      %p251 = pneg %p177
      %p252 = scmp.lt.s32.totalorder %s18, 1
      %s253 = scalar_select %p252, %s18, 1
      %s254 = smul.addr %s253, 2
      %s255 = scalar_lea.vmem %s6, %s254
      %p256 = scmp.lt.s32.totalorder %s18, 1
      %s257 = scalar_select %p256, %s18, 1
      %s258 = smul.addr %s257, 54
      %s259 = smul.addr %s258, 4
      %s260 = scalar_lea.vmem %s0, %s259
      %p261 = scmp.lt.s32.totalorder %s18, 1
      %s262 = scalar_select %p261, %s18, 1
      %s263 = smul.addr %s262, 32
      %s264 = smul.addr %s263, 8
      %s265 = scalar_lea.vmem %s4, %s264
      %p266 = scmp.lt.s32.totalorder %s18, 1
      %s267 = scalar_select %p266, %s18, 1
      %s268 = smul.addr %s267, 32
      %s269 = smul.addr %s268, 8
      %s270 = scalar_lea.vmem %s5, %s269
      %p271 = scmp.lt.s32.totalorder %s18, 1
      %s272 = scalar_select %p271, %s18, 1
      %s273 = smul.addr %s272, 2
      %s274 = scalar_lea.vmem %s6, %s273
      %s275 = scalar_lea.vmem %s260, 12
      %v276 = vld [vmem:[%s275] sm:$0xf]
      %v277 = vld [vmem:[%s275 + $0x4] sm:$0xf]
      %v278 = vld [vmem:[%s275 + $0x8] sm:$0x1]
      %v279 = vld [vmem:[%s275 + $0xc] sm:$0xf]
      %v280 = vld [vmem:[%s275 + $0x10] sm:$0xf]
      %v281 = vld [vmem:[%s275 + $0x14] sm:$0x1]
      %v282 = vld [vmem:[%s275 + $0x18] sm:$0xf]
      %v283 = vld [vmem:[%s275 + $0x1c] sm:$0xf]
      %v284 = vld [vmem:[%s275 + $0x20] sm:$0x1]
      %v285 = vld [vmem:[%s275 + $0x24] sm:$0xf]
      %v286 = vld [vmem:[%s275 + $0x28] sm:$0xf]
      %v287 = vld [vmem:[%s275 + $0x2c] sm:$0x1]
      %v288 = vld [vmem:[%s275 + $0x30] sm:$0xf]
      %v289 = vld [vmem:[%s275 + $0x34] sm:$0xf]
      %v290 = vld [vmem:[%s275 + $0x38] sm:$0x1]
      %v291 = vld [vmem:[%s275 + $0x3c] sm:$0xf]
      %v292 = vld [vmem:[%s275 + $0x40] sm:$0xf]
      %v293 = vld [vmem:[%s275 + $0x44] sm:$0x1]
      %v294 = vld [vmem:[%s275 + $0x48] sm:$0xf]
      %v295 = vld [vmem:[%s275 + $0x4c] sm:$0xf]
      %v296 = vld [vmem:[%s275 + $0x50] sm:$0x1]
      %v297 = vld [vmem:[%s275 + $0x54] sm:$0xf]
      %v298 = vld [vmem:[%s275 + $0x58] sm:$0xf]
      %v299 = vld [vmem:[%s275 + $0x5c] sm:$0x1]
      %v300 = vld [vmem:[%s275 + $0x60] sm:$0xf]
      %v301 = vld [vmem:[%s275 + $0x64] sm:$0xf]
      %v302 = vld [vmem:[%s275 + $0x68] sm:$0x1]
      %v303 = vld [vmem:[%s275 + $0x6c] sm:$0xf]
      %v304 = vld [vmem:[%s275 + $0x70] sm:$0xf]
      %v305 = vld [vmem:[%s275 + $0x74] sm:$0x1]
      %v306 = vld [vmem:[%s275 + $0x78] sm:$0xf]
      %v307 = vld [vmem:[%s275 + $0x7c] sm:$0xf]
      %v308 = vld [vmem:[%s275 + $0x80] sm:$0x1]
      %v309 = vld [vmem:[%s275 + $0x84] sm:$0xf]
      %v310 = vld [vmem:[%s275 + $0x88] sm:$0xf]
      %v311 = vld [vmem:[%s275 + $0x8c] sm:$0x1]
      %v312 = vld [vmem:[%s275 + $0x90] sm:$0xf]
      %v313 = vld [vmem:[%s275 + $0x94] sm:$0xf]
      %v314 = vld [vmem:[%s275 + $0x98] sm:$0x1]
      %v315 = vld [vmem:[%s275 + $0x9c] sm:$0xf]
      %v316 = vld [vmem:[%s275 + $0xa0] sm:$0xf]
      %v317 = vld [vmem:[%s275 + $0xa4] sm:$0x1]
      %v318 = vld [vmem:[%s275 + $0xa8] sm:$0xf]
      %v319 = vld [vmem:[%s275 + $0xac] sm:$0xf]
      %v320 = vld [vmem:[%s275 + $0xb0] sm:$0x1]
      %v321 = vld [vmem:[%s275 + $0xb4] sm:$0xf]
      %v322 = vld [vmem:[%s275 + $0xb8] sm:$0xf]
      %v323 = vld [vmem:[%s275 + $0xbc] sm:$0x1]
      %vm324 = vsmask.f32 3328
      %vm325 = vsmask.f32 7440
      %vm326 = vmor %vm324, %vm325
      %v328 = vshrl.u32 %v276, 16
      %v330 = vrot.slane %v328, 4
      %v331 = vshll.u32 %v276, 16
      %v333 = vrot.slane %v331, 5
      %v334 = vor.u32 %v330, %v333
      %v335 = vrot.slane %v334, 4
      %v337 = vshll.u32 %v277, 16
      %v339 = vrot.slane %v337, 5
      %v340 = vsel %vm326, %v335, %v339
      %v341 = vshrl.u32 %v277, 16
      %v343 = vrot.slane %v341, 4
      %v344 = vor.u32 %v343, %v339
      %v345 = vrot.slane %v344, 4
      %v347 = vshll.u32 %v278, 16
      %v349 = vrot.slane %v347, 5
      %v350 = vsel %vm326, %v345, %v349
      %v352 = vshrl.u32 %v279, 16
      %v354 = vrot.slane %v352, 4
      %v355 = vshll.u32 %v279, 16
      %v357 = vrot.slane %v355, 5
      %v358 = vor.u32 %v354, %v357
      %v359 = vrot.slane %v358, 4
      %v361 = vshll.u32 %v280, 16
      %v363 = vrot.slane %v361, 5
      %v364 = vsel %vm326, %v359, %v363
      %v365 = vshrl.u32 %v280, 16
      %v367 = vrot.slane %v365, 4
      %v368 = vor.u32 %v367, %v363
      %v369 = vrot.slane %v368, 4
      %v371 = vshll.u32 %v281, 16
      %v373 = vrot.slane %v371, 5
      %v374 = vsel %vm326, %v369, %v373
      %v376 = vshrl.u32 %v282, 16
      %v378 = vrot.slane %v376, 4
      %v379 = vshll.u32 %v282, 16
      %v381 = vrot.slane %v379, 5
      %v382 = vor.u32 %v378, %v381
      %v383 = vrot.slane %v382, 4
      %v385 = vshll.u32 %v283, 16
      %v387 = vrot.slane %v385, 5
      %v388 = vsel %vm326, %v383, %v387
      %v389 = vshrl.u32 %v283, 16
      %v391 = vrot.slane %v389, 4
      %v392 = vor.u32 %v391, %v387
      %v393 = vrot.slane %v392, 4
      %v395 = vshll.u32 %v284, 16
      %v397 = vrot.slane %v395, 5
      %v398 = vsel %vm326, %v393, %v397
      %v400 = vshrl.u32 %v285, 16
      %v402 = vrot.slane %v400, 4
      %v403 = vshll.u32 %v285, 16
      %v405 = vrot.slane %v403, 5
      %v406 = vor.u32 %v402, %v405
      %v407 = vrot.slane %v406, 4
      %v409 = vshll.u32 %v286, 16
      %v411 = vrot.slane %v409, 5
      %v412 = vsel %vm326, %v407, %v411
      %v413 = vshrl.u32 %v286, 16
      %v415 = vrot.slane %v413, 4
      %v416 = vor.u32 %v415, %v411
      %v417 = vrot.slane %v416, 4
      %v419 = vshll.u32 %v287, 16
      %v421 = vrot.slane %v419, 5
      %v422 = vsel %vm326, %v417, %v421
      %v424 = vshrl.u32 %v288, 16
      %v426 = vrot.slane %v424, 4
      %v427 = vshll.u32 %v288, 16
      %v429 = vrot.slane %v427, 5
      %v430 = vor.u32 %v426, %v429
      %v431 = vrot.slane %v430, 4
      %v433 = vshll.u32 %v289, 16
      %v435 = vrot.slane %v433, 5
      %v436 = vsel %vm326, %v431, %v435
      %v437 = vshrl.u32 %v289, 16
      %v439 = vrot.slane %v437, 4
      %v440 = vor.u32 %v439, %v435
      %v441 = vrot.slane %v440, 4
      %v443 = vshll.u32 %v290, 16
      %v445 = vrot.slane %v443, 5
      %v446 = vsel %vm326, %v441, %v445
      %v448 = vshrl.u32 %v291, 16
      %v450 = vrot.slane %v448, 4
      %v451 = vshll.u32 %v291, 16
      %v453 = vrot.slane %v451, 5
      %v454 = vor.u32 %v450, %v453
      %v455 = vrot.slane %v454, 4
      %v457 = vshll.u32 %v292, 16
      %v459 = vrot.slane %v457, 5
      %v460 = vsel %vm326, %v455, %v459
      %v461 = vshrl.u32 %v292, 16
      %v463 = vrot.slane %v461, 4
      %v464 = vor.u32 %v463, %v459
      %v465 = vrot.slane %v464, 4
      %v467 = vshll.u32 %v293, 16
      %v469 = vrot.slane %v467, 5
      %v470 = vsel %vm326, %v465, %v469
      %v472 = vshrl.u32 %v294, 16
      %v474 = vrot.slane %v472, 4
      %v475 = vshll.u32 %v294, 16
      %v477 = vrot.slane %v475, 5
      %v478 = vor.u32 %v474, %v477
      %v479 = vrot.slane %v478, 4
      %v481 = vshll.u32 %v295, 16
      %v483 = vrot.slane %v481, 5
      %v484 = vsel %vm326, %v479, %v483
      %v485 = vshrl.u32 %v295, 16
      %v487 = vrot.slane %v485, 4
      %v488 = vor.u32 %v487, %v483
      %v489 = vrot.slane %v488, 4
      %v491 = vshll.u32 %v296, 16
      %v493 = vrot.slane %v491, 5
      %v494 = vsel %vm326, %v489, %v493
      %v496 = vshrl.u32 %v297, 16
      %v498 = vrot.slane %v496, 4
      %v499 = vshll.u32 %v297, 16
      %v501 = vrot.slane %v499, 5
      %v502 = vor.u32 %v498, %v501
      %v503 = vrot.slane %v502, 4
      %v505 = vshll.u32 %v298, 16
      %v507 = vrot.slane %v505, 5
      %v508 = vsel %vm326, %v503, %v507
      %v509 = vshrl.u32 %v298, 16
      %v511 = vrot.slane %v509, 4
      %v512 = vor.u32 %v511, %v507
      %v513 = vrot.slane %v512, 4
      %v515 = vshll.u32 %v299, 16
      %v517 = vrot.slane %v515, 5
      %v518 = vsel %vm326, %v513, %v517
      %v520 = vshrl.u32 %v300, 16
      %v522 = vrot.slane %v520, 4
      %v523 = vshll.u32 %v300, 16
      %v525 = vrot.slane %v523, 5
      %v526 = vor.u32 %v522, %v525
      %v527 = vrot.slane %v526, 4
      %v529 = vshll.u32 %v301, 16
      %v531 = vrot.slane %v529, 5
      %v532 = vsel %vm326, %v527, %v531
      %v533 = vshrl.u32 %v301, 16
      %v535 = vrot.slane %v533, 4
      %v536 = vor.u32 %v535, %v531
      %v537 = vrot.slane %v536, 4
      %v539 = vshll.u32 %v302, 16
      %v541 = vrot.slane %v539, 5
      %v542 = vsel %vm326, %v537, %v541
      %v544 = vshrl.u32 %v303, 16
      %v546 = vrot.slane %v544, 4
      %v547 = vshll.u32 %v303, 16
      %v549 = vrot.slane %v547, 5
      %v550 = vor.u32 %v546, %v549
      %v551 = vrot.slane %v550, 4
      %v553 = vshll.u32 %v304, 16
      %v555 = vrot.slane %v553, 5
      %v556 = vsel %vm326, %v551, %v555
      %v557 = vshrl.u32 %v304, 16
      %v559 = vrot.slane %v557, 4
      %v560 = vor.u32 %v559, %v555
      %v561 = vrot.slane %v560, 4
      %v563 = vshll.u32 %v305, 16
      %v565 = vrot.slane %v563, 5
      %v566 = vsel %vm326, %v561, %v565
      %v568 = vshrl.u32 %v306, 16
      %v570 = vrot.slane %v568, 4
      %v571 = vshll.u32 %v306, 16
      %v573 = vrot.slane %v571, 5
      %v574 = vor.u32 %v570, %v573
      %v575 = vrot.slane %v574, 4
      %v577 = vshll.u32 %v307, 16
      %v579 = vrot.slane %v577, 5
      %v580 = vsel %vm326, %v575, %v579
      %v581 = vshrl.u32 %v307, 16
      %v583 = vrot.slane %v581, 4
      %v584 = vor.u32 %v583, %v579
      %v585 = vrot.slane %v584, 4
      %v587 = vshll.u32 %v308, 16
      %v589 = vrot.slane %v587, 5
      %v590 = vsel %vm326, %v585, %v589
      %v592 = vshrl.u32 %v309, 16
      %v594 = vrot.slane %v592, 4
      %v595 = vshll.u32 %v309, 16
      %v597 = vrot.slane %v595, 5
      %v598 = vor.u32 %v594, %v597
      %v599 = vrot.slane %v598, 4
      %v601 = vshll.u32 %v310, 16
      %v603 = vrot.slane %v601, 5
      %v604 = vsel %vm326, %v599, %v603
      %v605 = vshrl.u32 %v310, 16
      %v607 = vrot.slane %v605, 4
      %v608 = vor.u32 %v607, %v603
      %v609 = vrot.slane %v608, 4
      %v611 = vshll.u32 %v311, 16
      %v613 = vrot.slane %v611, 5
      %v614 = vsel %vm326, %v609, %v613
      %v616 = vshrl.u32 %v312, 16
      %v618 = vrot.slane %v616, 4
      %v619 = vshll.u32 %v312, 16
      %v621 = vrot.slane %v619, 5
      %v622 = vor.u32 %v618, %v621
      %v623 = vrot.slane %v622, 4
      %v625 = vshll.u32 %v313, 16
      %v627 = vrot.slane %v625, 5
      %v628 = vsel %vm326, %v623, %v627
      %v629 = vshrl.u32 %v313, 16
      %v631 = vrot.slane %v629, 4
      %v632 = vor.u32 %v631, %v627
      %v633 = vrot.slane %v632, 4
      %v635 = vshll.u32 %v314, 16
      %v637 = vrot.slane %v635, 5
      %v638 = vsel %vm326, %v633, %v637
      %v640 = vshrl.u32 %v315, 16
      %v642 = vrot.slane %v640, 4
      %v643 = vshll.u32 %v315, 16
      %v645 = vrot.slane %v643, 5
      %v646 = vor.u32 %v642, %v645
      %v647 = vrot.slane %v646, 4
      %v649 = vshll.u32 %v316, 16
      %v651 = vrot.slane %v649, 5
      %v652 = vsel %vm326, %v647, %v651
      %v653 = vshrl.u32 %v316, 16
      %v655 = vrot.slane %v653, 4
      %v656 = vor.u32 %v655, %v651
      %v657 = vrot.slane %v656, 4
      %v659 = vshll.u32 %v317, 16
      %v661 = vrot.slane %v659, 5
      %v662 = vsel %vm326, %v657, %v661
      %v664 = vshrl.u32 %v318, 16
      %v666 = vrot.slane %v664, 4
      %v667 = vshll.u32 %v318, 16
      %v669 = vrot.slane %v667, 5
      %v670 = vor.u32 %v666, %v669
      %v671 = vrot.slane %v670, 4
      %v673 = vshll.u32 %v319, 16
      %v675 = vrot.slane %v673, 5
      %v676 = vsel %vm326, %v671, %v675
      %v677 = vshrl.u32 %v319, 16
      %v679 = vrot.slane %v677, 4
      %v680 = vor.u32 %v679, %v675
      %v681 = vrot.slane %v680, 4
      %v683 = vshll.u32 %v320, 16
      %v685 = vrot.slane %v683, 5
      %v686 = vsel %vm326, %v681, %v685
      %v688 = vshrl.u32 %v321, 16
      %v690 = vrot.slane %v688, 4
      %v691 = vshll.u32 %v321, 16
      %v693 = vrot.slane %v691, 5
      %v694 = vor.u32 %v690, %v693
      %v695 = vrot.slane %v694, 4
      %v697 = vshll.u32 %v322, 16
      %v699 = vrot.slane %v697, 5
      %v700 = vsel %vm326, %v695, %v699
      %v701 = vshrl.u32 %v322, 16
      %v703 = vrot.slane %v701, 4
      %v704 = vor.u32 %v703, %v699
      %v705 = vrot.slane %v704, 4
      %v707 = vshll.u32 %v323, 16
      %v709 = vrot.slane %v707, 5
      %v710 = vsel %vm326, %v705, %v709
      %s711 = scalar_lea.vmem %s1, 256
      %v712 = vld [vmem:[%s711] sm:$0xf]
      %v713 = vld [vmem:[%s711 + $0x4] sm:$0xf]
      %v714 = vld [vmem:[%s711 + $0x8] sm:$0xf]
      %v715 = vld [vmem:[%s711 + $0xc] sm:$0xf]
      %v716 = vld [vmem:[%s711 + $0x10] sm:$0xf]
      %v717 = vld [vmem:[%s711 + $0x14] sm:$0xf]
      %v718 = vld [vmem:[%s711 + $0x18] sm:$0xf]
      %v719 = vld [vmem:[%s711 + $0x1c] sm:$0xf]
      %v720 = vld [vmem:[%s711 + $0x20] sm:$0xf]
      %v721 = vld [vmem:[%s711 + $0x24] sm:$0xf]
      %v722 = vld [vmem:[%s711 + $0x28] sm:$0xf]
      %v723 = vld [vmem:[%s711 + $0x2c] sm:$0xf]
      %v724 = vld [vmem:[%s711 + $0x30] sm:$0xf]
      %v725 = vld [vmem:[%s711 + $0x34] sm:$0xf]
      %v726 = vld [vmem:[%s711 + $0x38] sm:$0xf]
      %v727 = vld [vmem:[%s711 + $0x3c] sm:$0xf]
      %v728 = vld [vmem:[%s260] sm:$0xf]
      %v729 = vld [vmem:[%s260 + $0x4] sm:$0xf]
      %v730 = vld [vmem:[%s260 + $0xc] sm:$0xf]
      %v731 = vld [vmem:[%s260 + $0x10] sm:$0xf]
      %v732 = vld [vmem:[%s260 + $0x18] sm:$0xf]
      %v733 = vld [vmem:[%s260 + $0x1c] sm:$0xf]
      %v734 = vld [vmem:[%s260 + $0x24] sm:$0xf]
      %v735 = vld [vmem:[%s260 + $0x28] sm:$0xf]
      %v736 = vld [vmem:[%s260 + $0x30] sm:$0xf]
      %v737 = vld [vmem:[%s260 + $0x34] sm:$0xf]
      %v738 = vld [vmem:[%s260 + $0x3c] sm:$0xf]
      %v739 = vld [vmem:[%s260 + $0x40] sm:$0xf]
      %v740 = vld [vmem:[%s260 + $0x48] sm:$0xf]
      %v741 = vld [vmem:[%s260 + $0x4c] sm:$0xf]
      %v742 = vld [vmem:[%s260 + $0x54] sm:$0xf]
      %v743 = vld [vmem:[%s260 + $0x58] sm:$0xf]
      %v744 = vld [vmem:[%s260 + $0x60] sm:$0xf]
      %v745 = vld [vmem:[%s260 + $0x64] sm:$0xf]
      %v746 = vld [vmem:[%s260 + $0x6c] sm:$0xf]
      %v747 = vld [vmem:[%s260 + $0x70] sm:$0xf]
      %v748 = vld [vmem:[%s260 + $0x78] sm:$0xf]
      %v749 = vld [vmem:[%s260 + $0x7c] sm:$0xf]
      %v750 = vld [vmem:[%s260 + $0x84] sm:$0xf]
      %v751 = vld [vmem:[%s260 + $0x88] sm:$0xf]
      %v752 = vld [vmem:[%s260 + $0x90] sm:$0xf]
      %v753 = vld [vmem:[%s260 + $0x94] sm:$0xf]
      %v754 = vld [vmem:[%s260 + $0x9c] sm:$0xf]
      %v755 = vld [vmem:[%s260 + $0xa0] sm:$0xf]
      %v756 = vld [vmem:[%s260 + $0xa8] sm:$0xf]
      %v757 = vld [vmem:[%s260 + $0xac] sm:$0xf]
      %v758 = vld [vmem:[%s260 + $0xb4] sm:$0xf]
      %v759 = vld [vmem:[%s260 + $0xb8] sm:$0xf]
      %v760 = vld [vmem:[%s1] sm:$0xf]
      %v761 = vld [vmem:[%s1 + $0x4] sm:$0xf]
      %v762 = vld [vmem:[%s1 + $0x8] sm:$0xf]
      %v763 = vld [vmem:[%s1 + $0xc] sm:$0xf]
      %v764 = vld [vmem:[%s1 + $0x10] sm:$0xf]
      %v765 = vld [vmem:[%s1 + $0x14] sm:$0xf]
      %v766 = vld [vmem:[%s1 + $0x18] sm:$0xf]
      %v767 = vld [vmem:[%s1 + $0x1c] sm:$0xf]
      %v768 = vld [vmem:[%s1 + $0x20] sm:$0xf]
      %v769 = vld [vmem:[%s1 + $0x24] sm:$0xf]
      %v770 = vld [vmem:[%s1 + $0x28] sm:$0xf]
      %v771 = vld [vmem:[%s1 + $0x2c] sm:$0xf]
      %v772 = vld [vmem:[%s1 + $0x30] sm:$0xf]
      %v773 = vld [vmem:[%s1 + $0x34] sm:$0xf]
      %v774 = vld [vmem:[%s1 + $0x38] sm:$0xf]
      %v775 = vld [vmem:[%s1 + $0x3c] sm:$0xf]
      %v808 = vunpack.c.l.b16 %v728
      %v809 = vunpack.c.l.b16 %v729
      %v810 = vunpack.c.l.b16 %v730
      %v811 = vunpack.c.l.b16 %v731
      %v812 = vunpack.c.l.b16 %v732
      %v813 = vunpack.c.l.b16 %v733
      %v814 = vunpack.c.l.b16 %v734
      %v815 = vunpack.c.l.b16 %v735
      %v816 = vunpack.c.l.b16 %v736
      %v817 = vunpack.c.l.b16 %v737
      %v818 = vunpack.c.l.b16 %v738
      %v819 = vunpack.c.l.b16 %v739
      %v820 = vunpack.c.l.b16 %v740
      %v821 = vunpack.c.l.b16 %v741
      %v822 = vunpack.c.l.b16 %v742
      %v823 = vunpack.c.l.b16 %v743
      %v824 = vunpack.c.l.b16 %v744
      %v825 = vunpack.c.l.b16 %v745
      %v826 = vunpack.c.l.b16 %v746
      %v827 = vunpack.c.l.b16 %v747
      %v828 = vunpack.c.l.b16 %v748
      %v829 = vunpack.c.l.b16 %v749
      %v830 = vunpack.c.l.b16 %v750
      %v831 = vunpack.c.l.b16 %v751
      %v832 = vunpack.c.l.b16 %v752
      %v833 = vunpack.c.l.b16 %v753
      %v834 = vunpack.c.l.b16 %v754
      %v835 = vunpack.c.l.b16 %v755
      %v836 = vunpack.c.l.b16 %v756
      %v837 = vunpack.c.l.b16 %v757
      %v838 = vunpack.c.l.b16 %v758
      %v839 = vunpack.c.l.b16 %v759
      %v840 = vpack.c.b16 %v809, %v808
      %v841 = vpack.c.b16 %v811, %v810
      %v842 = vpack.c.b16 %v813, %v812
      %v843 = vpack.c.b16 %v815, %v814
      %v844 = vpack.c.b16 %v817, %v816
      %v845 = vpack.c.b16 %v819, %v818
      %v846 = vpack.c.b16 %v821, %v820
      %v847 = vpack.c.b16 %v823, %v822
      %v848 = vpack.c.b16 %v825, %v824
      %v849 = vpack.c.b16 %v827, %v826
      %v850 = vpack.c.b16 %v829, %v828
      %v851 = vpack.c.b16 %v831, %v830
      %v852 = vpack.c.b16 %v833, %v832
      %v853 = vpack.c.b16 %v835, %v834
      %v854 = vpack.c.b16 %v837, %v836
      %v855 = vpack.c.b16 %v839, %v838
      %v888 = vunpack.c.l.b16 %v760
      %v889 = vunpack.c.l.b16 %v761
      %v890 = vunpack.c.l.b16 %v762
      %v891 = vunpack.c.l.b16 %v763
      %v892 = vunpack.c.l.b16 %v764
      %v893 = vunpack.c.l.b16 %v765
      %v894 = vunpack.c.l.b16 %v766
      %v895 = vunpack.c.l.b16 %v767
      %v896 = vunpack.c.l.b16 %v768
      %v897 = vunpack.c.l.b16 %v769
      %v898 = vunpack.c.l.b16 %v770
      %v899 = vunpack.c.l.b16 %v771
      %v900 = vunpack.c.l.b16 %v772
      %v901 = vunpack.c.l.b16 %v773
      %v902 = vunpack.c.l.b16 %v774
      %v903 = vunpack.c.l.b16 %v775
      %v904 = vpack.c.b16 %v889, %v888
      %v905 = vpack.c.b16 %v891, %v890
      %v906 = vpack.c.b16 %v893, %v892
      %v907 = vpack.c.b16 %v895, %v894
      %v908 = vpack.c.b16 %v897, %v896
      %v909 = vpack.c.b16 %v899, %v898
      %v910 = vpack.c.b16 %v901, %v900
      %v911 = vpack.c.b16 %v903, %v902
      %920 = vmatpush.bf16.msra.mxu0 %v911
      %921 = vmatpush.bf16.msra.mxu0 %v910
      %922 = vmatpush.bf16.msra.mxu0 %v909
      %923 = vmatpush.bf16.msra.mxu0 %v908
      %924 = vmatpush.bf16.msra.mxu0 %v907
      %925 = vmatpush.bf16.msra.mxu0 %v906
      %926 = vmatpush.bf16.msra.mxu0 %v905
      %927 = vmatpush.bf16.msra.mxu0 %v904
      %928 = vmatmul.bf16.gmra.mxu0 %v840
      %v929 = vpop.f32.mrf.mxu0
      %v930 = vadd.f32 0.0, %v929
      %v931 = vpop.f32.mrf.mxu0
      %v932 = vadd.f32 0.0, %v931
      %933 = vmatmul.bf16.gmra.mxu0 %v841
      %v934 = vpop.f32.mrf.mxu0
      %v935 = vadd.f32 0.0, %v934
      %v936 = vpop.f32.mrf.mxu0
      %v937 = vadd.f32 0.0, %v936
      %938 = vmatmul.bf16.gmra.mxu0 %v842
      %v939 = vpop.f32.mrf.mxu0
      %v940 = vadd.f32 0.0, %v939
      %v941 = vpop.f32.mrf.mxu0
      %v942 = vadd.f32 0.0, %v941
      %943 = vmatmul.bf16.gmra.mxu0 %v843
      %v944 = vpop.f32.mrf.mxu0
      %v945 = vadd.f32 0.0, %v944
      %v946 = vpop.f32.mrf.mxu0
      %v947 = vadd.f32 0.0, %v946
      %948 = vmatmul.bf16.gmra.mxu0 %v844
      %v949 = vpop.f32.mrf.mxu0
      %v950 = vadd.f32 0.0, %v949
      %v951 = vpop.f32.mrf.mxu0
      %v952 = vadd.f32 0.0, %v951
      %953 = vmatmul.bf16.gmra.mxu0 %v845
      %v954 = vpop.f32.mrf.mxu0
      %v955 = vadd.f32 0.0, %v954
      %v956 = vpop.f32.mrf.mxu0
      %v957 = vadd.f32 0.0, %v956
      %958 = vmatmul.bf16.gmra.mxu0 %v846
      %v959 = vpop.f32.mrf.mxu0
      %v960 = vadd.f32 0.0, %v959
      %v961 = vpop.f32.mrf.mxu0
      %v962 = vadd.f32 0.0, %v961
      %963 = vmatmul.bf16.gmra.mxu0 %v847
      %v964 = vpop.f32.mrf.mxu0
      %v965 = vadd.f32 0.0, %v964
      %v966 = vpop.f32.mrf.mxu0
      %v967 = vadd.f32 0.0, %v966
      %968 = vmatmul.bf16.gmra.mxu0 %v848
      %v969 = vpop.f32.mrf.mxu0
      %v970 = vadd.f32 0.0, %v969
      %v971 = vpop.f32.mrf.mxu0
      %v972 = vadd.f32 0.0, %v971
      %973 = vmatmul.bf16.gmra.mxu0 %v849
      %v974 = vpop.f32.mrf.mxu0
      %v975 = vadd.f32 0.0, %v974
      %v976 = vpop.f32.mrf.mxu0
      %v977 = vadd.f32 0.0, %v976
      %978 = vmatmul.bf16.gmra.mxu0 %v850
      %v979 = vpop.f32.mrf.mxu0
      %v980 = vadd.f32 0.0, %v979
      %v981 = vpop.f32.mrf.mxu0
      %v982 = vadd.f32 0.0, %v981
      %983 = vmatmul.bf16.gmra.mxu0 %v851
      %v984 = vpop.f32.mrf.mxu0
      %v985 = vadd.f32 0.0, %v984
      %v986 = vpop.f32.mrf.mxu0
      %v987 = vadd.f32 0.0, %v986
      %988 = vmatmul.bf16.gmra.mxu0 %v852
      %v989 = vpop.f32.mrf.mxu0
      %v990 = vadd.f32 0.0, %v989
      %v991 = vpop.f32.mrf.mxu0
      %v992 = vadd.f32 0.0, %v991
      %993 = vmatmul.bf16.gmra.mxu0 %v853
      %v994 = vpop.f32.mrf.mxu0
      %v995 = vadd.f32 0.0, %v994
      %v996 = vpop.f32.mrf.mxu0
      %v997 = vadd.f32 0.0, %v996
      %998 = vmatmul.bf16.gmra.mxu0 %v854
      %v999 = vpop.f32.mrf.mxu0
      %v1000 = vadd.f32 0.0, %v999
      %v1001 = vpop.f32.mrf.mxu0
      %v1002 = vadd.f32 0.0, %v1001
      %1003 = vmatmul.bf16.gmra.mxu0 %v855
      %v1004 = vpop.f32.mrf.mxu0
      %v1005 = vadd.f32 0.0, %v1004
      %v1006 = vpop.f32.mrf.mxu0
      %v1007 = vadd.f32 0.0, %v1006
      %1008 = vdwg.mxu0
      %v1009 = vunpack.c.l.b16 %v340
      %v1010 = vunpack.c.l.b16 %v350
      %v1011 = vunpack.c.l.b16 %v364
      %v1012 = vunpack.c.l.b16 %v374
      %v1013 = vunpack.c.l.b16 %v388
      %v1014 = vunpack.c.l.b16 %v398
      %v1015 = vunpack.c.l.b16 %v412
      %v1016 = vunpack.c.l.b16 %v422
      %v1017 = vunpack.c.l.b16 %v436
      %v1018 = vunpack.c.l.b16 %v446
      %v1019 = vunpack.c.l.b16 %v460
      %v1020 = vunpack.c.l.b16 %v470
      %v1021 = vunpack.c.l.b16 %v484
      %v1022 = vunpack.c.l.b16 %v494
      %v1023 = vunpack.c.l.b16 %v508
      %v1024 = vunpack.c.l.b16 %v518
      %v1025 = vunpack.c.l.b16 %v532
      %v1026 = vunpack.c.l.b16 %v542
      %v1027 = vunpack.c.l.b16 %v556
      %v1028 = vunpack.c.l.b16 %v566
      %v1029 = vunpack.c.l.b16 %v580
      %v1030 = vunpack.c.l.b16 %v590
      %v1031 = vunpack.c.l.b16 %v604
      %v1032 = vunpack.c.l.b16 %v614
      %v1033 = vunpack.c.l.b16 %v628
      %v1034 = vunpack.c.l.b16 %v638
      %v1035 = vunpack.c.l.b16 %v652
      %v1036 = vunpack.c.l.b16 %v662
      %v1037 = vunpack.c.l.b16 %v676
      %v1038 = vunpack.c.l.b16 %v686
      %v1039 = vunpack.c.l.b16 %v700
      %v1040 = vunpack.c.l.b16 %v710
      %v1041 = vpack.c.b16 %v1010, %v1009
      %v1042 = vpack.c.b16 %v1012, %v1011
      %v1043 = vpack.c.b16 %v1014, %v1013
      %v1044 = vpack.c.b16 %v1016, %v1015
      %v1045 = vpack.c.b16 %v1018, %v1017
      %v1046 = vpack.c.b16 %v1020, %v1019
      %v1047 = vpack.c.b16 %v1022, %v1021
      %v1048 = vpack.c.b16 %v1024, %v1023
      %v1049 = vpack.c.b16 %v1026, %v1025
      %v1050 = vpack.c.b16 %v1028, %v1027
      %v1051 = vpack.c.b16 %v1030, %v1029
      %v1052 = vpack.c.b16 %v1032, %v1031
      %v1053 = vpack.c.b16 %v1034, %v1033
      %v1054 = vpack.c.b16 %v1036, %v1035
      %v1055 = vpack.c.b16 %v1038, %v1037
      %v1056 = vpack.c.b16 %v1040, %v1039
      %v1089 = vunpack.c.l.b16 %v712
      %v1090 = vunpack.c.l.b16 %v713
      %v1091 = vunpack.c.l.b16 %v714
      %v1092 = vunpack.c.l.b16 %v715
      %v1093 = vunpack.c.l.b16 %v716
      %v1094 = vunpack.c.l.b16 %v717
      %v1095 = vunpack.c.l.b16 %v718
      %v1096 = vunpack.c.l.b16 %v719
      %v1097 = vunpack.c.l.b16 %v720
      %v1098 = vunpack.c.l.b16 %v721
      %v1099 = vunpack.c.l.b16 %v722
      %v1100 = vunpack.c.l.b16 %v723
      %v1101 = vunpack.c.l.b16 %v724
      %v1102 = vunpack.c.l.b16 %v725
      %v1103 = vunpack.c.l.b16 %v726
      %v1104 = vunpack.c.l.b16 %v727
      %v1105 = vpack.c.b16 %v1090, %v1089
      %v1106 = vpack.c.b16 %v1092, %v1091
      %v1107 = vpack.c.b16 %v1094, %v1093
      %v1108 = vpack.c.b16 %v1096, %v1095
      %v1109 = vpack.c.b16 %v1098, %v1097
      %v1110 = vpack.c.b16 %v1100, %v1099
      %v1111 = vpack.c.b16 %v1102, %v1101
      %v1112 = vpack.c.b16 %v1104, %v1103
      %1121 = vmatpush.bf16.msra.mxu0 %v1112
      %1122 = vmatpush.bf16.msra.mxu0 %v1111
      %1123 = vmatpush.bf16.msra.mxu0 %v1110
      %1124 = vmatpush.bf16.msra.mxu0 %v1109
      %1125 = vmatpush.bf16.msra.mxu0 %v1108
      %1126 = vmatpush.bf16.msra.mxu0 %v1107
      %1127 = vmatpush.bf16.msra.mxu0 %v1106
      %1128 = vmatpush.bf16.msra.mxu0 %v1105
      %1129 = vmatmul.bf16.gmra.mxu0 %v1041
      %v1130 = vpop.f32.mrf.mxu0
      %v1131 = vadd.f32 %v930, %v1130
      %v1132 = vpop.f32.mrf.mxu0
      %v1133 = vadd.f32 %v932, %v1132
      %1134 = vmatmul.bf16.gmra.mxu0 %v1042
      %v1135 = vpop.f32.mrf.mxu0
      %v1136 = vadd.f32 %v935, %v1135
      %v1137 = vpop.f32.mrf.mxu0
      %v1138 = vadd.f32 %v937, %v1137
      %1139 = vmatmul.bf16.gmra.mxu0 %v1043
      %v1140 = vpop.f32.mrf.mxu0
      %v1141 = vadd.f32 %v940, %v1140
      %v1142 = vpop.f32.mrf.mxu0
      %v1143 = vadd.f32 %v942, %v1142
      %1144 = vmatmul.bf16.gmra.mxu0 %v1044
      %v1145 = vpop.f32.mrf.mxu0
      %v1146 = vadd.f32 %v945, %v1145
      %v1147 = vpop.f32.mrf.mxu0
      %v1148 = vadd.f32 %v947, %v1147
      %1149 = vmatmul.bf16.gmra.mxu0 %v1045
      %v1150 = vpop.f32.mrf.mxu0
      %v1151 = vadd.f32 %v950, %v1150
      %v1152 = vpop.f32.mrf.mxu0
      %v1153 = vadd.f32 %v952, %v1152
      %1154 = vmatmul.bf16.gmra.mxu0 %v1046
      %v1155 = vpop.f32.mrf.mxu0
      %v1156 = vadd.f32 %v955, %v1155
      %v1157 = vpop.f32.mrf.mxu0
      %v1158 = vadd.f32 %v957, %v1157
      %1159 = vmatmul.bf16.gmra.mxu0 %v1047
      %v1160 = vpop.f32.mrf.mxu0
      %v1161 = vadd.f32 %v960, %v1160
      %v1162 = vpop.f32.mrf.mxu0
      %v1163 = vadd.f32 %v962, %v1162
      %1164 = vmatmul.bf16.gmra.mxu0 %v1048
      %v1165 = vpop.f32.mrf.mxu0
      %v1166 = vadd.f32 %v965, %v1165
      %v1167 = vpop.f32.mrf.mxu0
      %v1168 = vadd.f32 %v967, %v1167
      %1169 = vmatmul.bf16.gmra.mxu0 %v1049
      %v1170 = vpop.f32.mrf.mxu0
      %v1171 = vadd.f32 %v970, %v1170
      %v1172 = vpop.f32.mrf.mxu0
      %v1173 = vadd.f32 %v972, %v1172
      %1174 = vmatmul.bf16.gmra.mxu0 %v1050
      %v1175 = vpop.f32.mrf.mxu0
      %v1176 = vadd.f32 %v975, %v1175
      %v1177 = vpop.f32.mrf.mxu0
      %v1178 = vadd.f32 %v977, %v1177
      %1179 = vmatmul.bf16.gmra.mxu0 %v1051
      %v1180 = vpop.f32.mrf.mxu0
      %v1181 = vadd.f32 %v980, %v1180
      %v1182 = vpop.f32.mrf.mxu0
      %v1183 = vadd.f32 %v982, %v1182
      %1184 = vmatmul.bf16.gmra.mxu0 %v1052
      %v1185 = vpop.f32.mrf.mxu0
      %v1186 = vadd.f32 %v985, %v1185
      %v1187 = vpop.f32.mrf.mxu0
      %v1188 = vadd.f32 %v987, %v1187
      %1189 = vmatmul.bf16.gmra.mxu0 %v1053
      %v1190 = vpop.f32.mrf.mxu0
      %v1191 = vadd.f32 %v990, %v1190
      %v1192 = vpop.f32.mrf.mxu0
      %v1193 = vadd.f32 %v992, %v1192
      %1194 = vmatmul.bf16.gmra.mxu0 %v1054
      %v1195 = vpop.f32.mrf.mxu0
      %v1196 = vadd.f32 %v995, %v1195
      %v1197 = vpop.f32.mrf.mxu0
      %v1198 = vadd.f32 %v997, %v1197
      %1199 = vmatmul.bf16.gmra.mxu0 %v1055
      %v1200 = vpop.f32.mrf.mxu0
      %v1201 = vadd.f32 %v1000, %v1200
      %v1202 = vpop.f32.mrf.mxu0
      %v1203 = vadd.f32 %v1002, %v1202
      %1204 = vmatmul.bf16.gmra.mxu0 %v1056
      %v1205 = vpop.f32.mrf.mxu0
      %v1206 = vadd.f32 %v1005, %v1205
      %v1207 = vpop.f32.mrf.mxu0
      %v1208 = vadd.f32 %v1007, %v1207
      %1209 = vdwg.mxu0
      %v1210 = vld [vmem:[%s260] sm:$0xf]
      %v1211 = vld [vmem:[%s260 + $0x4] sm:$0xf]
      %v1212 = vld [vmem:[%s260 + $0x8] sm:$0x1]
      %v1213 = vld [vmem:[%s260 + $0xc] sm:$0xf]
      %v1214 = vld [vmem:[%s260 + $0x10] sm:$0xf]
      %v1215 = vld [vmem:[%s260 + $0x14] sm:$0x1]
      %v1216 = vld [vmem:[%s260 + $0x18] sm:$0xf]
      %v1217 = vld [vmem:[%s260 + $0x1c] sm:$0xf]
      %v1218 = vld [vmem:[%s260 + $0x20] sm:$0x1]
      %v1219 = vld [vmem:[%s260 + $0x24] sm:$0xf]
      %v1220 = vld [vmem:[%s260 + $0x28] sm:$0xf]
      %v1221 = vld [vmem:[%s260 + $0x2c] sm:$0x1]
      %v1222 = vld [vmem:[%s260 + $0x30] sm:$0xf]
      %v1223 = vld [vmem:[%s260 + $0x34] sm:$0xf]
      %v1224 = vld [vmem:[%s260 + $0x38] sm:$0x1]
      %v1225 = vld [vmem:[%s260 + $0x3c] sm:$0xf]
      %v1226 = vld [vmem:[%s260 + $0x40] sm:$0xf]
      %v1227 = vld [vmem:[%s260 + $0x44] sm:$0x1]
      %v1228 = vld [vmem:[%s260 + $0x48] sm:$0xf]
      %v1229 = vld [vmem:[%s260 + $0x4c] sm:$0xf]
      %v1230 = vld [vmem:[%s260 + $0x50] sm:$0x1]
      %v1231 = vld [vmem:[%s260 + $0x54] sm:$0xf]
      %v1232 = vld [vmem:[%s260 + $0x58] sm:$0xf]
      %v1233 = vld [vmem:[%s260 + $0x5c] sm:$0x1]
      %v1234 = vld [vmem:[%s260 + $0x60] sm:$0xf]
      %v1235 = vld [vmem:[%s260 + $0x64] sm:$0xf]
      %v1236 = vld [vmem:[%s260 + $0x68] sm:$0x1]
      %v1237 = vld [vmem:[%s260 + $0x6c] sm:$0xf]
      %v1238 = vld [vmem:[%s260 + $0x70] sm:$0xf]
      %v1239 = vld [vmem:[%s260 + $0x74] sm:$0x1]
      %v1240 = vld [vmem:[%s260 + $0x78] sm:$0xf]
      %v1241 = vld [vmem:[%s260 + $0x7c] sm:$0xf]
      %v1242 = vld [vmem:[%s260 + $0x80] sm:$0x1]
      %v1243 = vld [vmem:[%s260 + $0x84] sm:$0xf]
      %v1244 = vld [vmem:[%s260 + $0x88] sm:$0xf]
      %v1245 = vld [vmem:[%s260 + $0x8c] sm:$0x1]
      %v1246 = vld [vmem:[%s260 + $0x90] sm:$0xf]
      %v1247 = vld [vmem:[%s260 + $0x94] sm:$0xf]
      %v1248 = vld [vmem:[%s260 + $0x98] sm:$0x1]
      %v1249 = vld [vmem:[%s260 + $0x9c] sm:$0xf]
      %v1250 = vld [vmem:[%s260 + $0xa0] sm:$0xf]
      %v1251 = vld [vmem:[%s260 + $0xa4] sm:$0x1]
      %v1252 = vld [vmem:[%s260 + $0xa8] sm:$0xf]
      %v1253 = vld [vmem:[%s260 + $0xac] sm:$0xf]
      %v1254 = vld [vmem:[%s260 + $0xb0] sm:$0x1]
      %v1255 = vld [vmem:[%s260 + $0xb4] sm:$0xf]
      %v1256 = vld [vmem:[%s260 + $0xb8] sm:$0xf]
      %v1257 = vld [vmem:[%s260 + $0xbc] sm:$0x1]
      %v1259 = vshrl.u32 %v1210, 16
      %v1261 = vrot.slane %v1259, 4
      %v1262 = vshll.u32 %v1210, 16
      %v1264 = vrot.slane %v1262, 5
      %v1265 = vor.u32 %v1261, %v1264
      %v1266 = vrot.slane %v1265, 4
      %v1268 = vshll.u32 %v1211, 16
      %v1270 = vrot.slane %v1268, 5
      %v1271 = vsel %vm326, %v1266, %v1270
      %v1272 = vshrl.u32 %v1211, 16
      %v1274 = vrot.slane %v1272, 4
      %v1275 = vor.u32 %v1274, %v1270
      %v1276 = vrot.slane %v1275, 4
      %v1278 = vshll.u32 %v1212, 16
      %v1280 = vrot.slane %v1278, 5
      %v1281 = vsel %vm326, %v1276, %v1280
      %v1283 = vshrl.u32 %v1213, 16
      %v1285 = vrot.slane %v1283, 4
      %v1286 = vshll.u32 %v1213, 16
      %v1288 = vrot.slane %v1286, 5
      %v1289 = vor.u32 %v1285, %v1288
      %v1290 = vrot.slane %v1289, 4
      %v1292 = vshll.u32 %v1214, 16
      %v1294 = vrot.slane %v1292, 5
      %v1295 = vsel %vm326, %v1290, %v1294
      %v1296 = vshrl.u32 %v1214, 16
      %v1298 = vrot.slane %v1296, 4
      %v1299 = vor.u32 %v1298, %v1294
      %v1300 = vrot.slane %v1299, 4
      %v1302 = vshll.u32 %v1215, 16
      %v1304 = vrot.slane %v1302, 5
      %v1305 = vsel %vm326, %v1300, %v1304
      %v1307 = vshrl.u32 %v1216, 16
      %v1309 = vrot.slane %v1307, 4
      %v1310 = vshll.u32 %v1216, 16
      %v1312 = vrot.slane %v1310, 5
      %v1313 = vor.u32 %v1309, %v1312
      %v1314 = vrot.slane %v1313, 4
      %v1316 = vshll.u32 %v1217, 16
      %v1318 = vrot.slane %v1316, 5
      %v1319 = vsel %vm326, %v1314, %v1318
      %v1320 = vshrl.u32 %v1217, 16
      %v1322 = vrot.slane %v1320, 4
      %v1323 = vor.u32 %v1322, %v1318
      %v1324 = vrot.slane %v1323, 4
      %v1326 = vshll.u32 %v1218, 16
      %v1328 = vrot.slane %v1326, 5
      %v1329 = vsel %vm326, %v1324, %v1328
      %v1331 = vshrl.u32 %v1219, 16
      %v1333 = vrot.slane %v1331, 4
      %v1334 = vshll.u32 %v1219, 16
      %v1336 = vrot.slane %v1334, 5
      %v1337 = vor.u32 %v1333, %v1336
      %v1338 = vrot.slane %v1337, 4
      %v1340 = vshll.u32 %v1220, 16
      %v1342 = vrot.slane %v1340, 5
      %v1343 = vsel %vm326, %v1338, %v1342
      %v1344 = vshrl.u32 %v1220, 16
      %v1346 = vrot.slane %v1344, 4
      %v1347 = vor.u32 %v1346, %v1342
      %v1348 = vrot.slane %v1347, 4
      %v1350 = vshll.u32 %v1221, 16
      %v1352 = vrot.slane %v1350, 5
      %v1353 = vsel %vm326, %v1348, %v1352
      %v1355 = vshrl.u32 %v1222, 16
      %v1357 = vrot.slane %v1355, 4
      %v1358 = vshll.u32 %v1222, 16
      %v1360 = vrot.slane %v1358, 5
      %v1361 = vor.u32 %v1357, %v1360
      %v1362 = vrot.slane %v1361, 4
      %v1364 = vshll.u32 %v1223, 16
      %v1366 = vrot.slane %v1364, 5
      %v1367 = vsel %vm326, %v1362, %v1366
      %v1368 = vshrl.u32 %v1223, 16
      %v1370 = vrot.slane %v1368, 4
      %v1371 = vor.u32 %v1370, %v1366
      %v1372 = vrot.slane %v1371, 4
      %v1374 = vshll.u32 %v1224, 16
      %v1376 = vrot.slane %v1374, 5
      %v1377 = vsel %vm326, %v1372, %v1376
      %v1379 = vshrl.u32 %v1225, 16
      %v1381 = vrot.slane %v1379, 4
      %v1382 = vshll.u32 %v1225, 16
      %v1384 = vrot.slane %v1382, 5
      %v1385 = vor.u32 %v1381, %v1384
      %v1386 = vrot.slane %v1385, 4
      %v1388 = vshll.u32 %v1226, 16
      %v1390 = vrot.slane %v1388, 5
      %v1391 = vsel %vm326, %v1386, %v1390
      %v1392 = vshrl.u32 %v1226, 16
      %v1394 = vrot.slane %v1392, 4
      %v1395 = vor.u32 %v1394, %v1390
      %v1396 = vrot.slane %v1395, 4
      %v1398 = vshll.u32 %v1227, 16
      %v1400 = vrot.slane %v1398, 5
      %v1401 = vsel %vm326, %v1396, %v1400
      %v1403 = vshrl.u32 %v1228, 16
      %v1405 = vrot.slane %v1403, 4
      %v1406 = vshll.u32 %v1228, 16
      %v1408 = vrot.slane %v1406, 5
      %v1409 = vor.u32 %v1405, %v1408
      %v1410 = vrot.slane %v1409, 4
      %v1412 = vshll.u32 %v1229, 16
      %v1414 = vrot.slane %v1412, 5
      %v1415 = vsel %vm326, %v1410, %v1414
      %v1416 = vshrl.u32 %v1229, 16
      %v1418 = vrot.slane %v1416, 4
      %v1419 = vor.u32 %v1418, %v1414
      %v1420 = vrot.slane %v1419, 4
      %v1422 = vshll.u32 %v1230, 16
      %v1424 = vrot.slane %v1422, 5
      %v1425 = vsel %vm326, %v1420, %v1424
      %v1427 = vshrl.u32 %v1231, 16
      %v1429 = vrot.slane %v1427, 4
      %v1430 = vshll.u32 %v1231, 16
      %v1432 = vrot.slane %v1430, 5
      %v1433 = vor.u32 %v1429, %v1432
      %v1434 = vrot.slane %v1433, 4
      %v1436 = vshll.u32 %v1232, 16
      %v1438 = vrot.slane %v1436, 5
      %v1439 = vsel %vm326, %v1434, %v1438
      %v1440 = vshrl.u32 %v1232, 16
      %v1442 = vrot.slane %v1440, 4
      %v1443 = vor.u32 %v1442, %v1438
      %v1444 = vrot.slane %v1443, 4
      %v1446 = vshll.u32 %v1233, 16
      %v1448 = vrot.slane %v1446, 5
      %v1449 = vsel %vm326, %v1444, %v1448
      %v1451 = vshrl.u32 %v1234, 16
      %v1453 = vrot.slane %v1451, 4
      %v1454 = vshll.u32 %v1234, 16
      %v1456 = vrot.slane %v1454, 5
      %v1457 = vor.u32 %v1453, %v1456
      %v1458 = vrot.slane %v1457, 4
      %v1460 = vshll.u32 %v1235, 16
      %v1462 = vrot.slane %v1460, 5
      %v1463 = vsel %vm326, %v1458, %v1462
      %v1464 = vshrl.u32 %v1235, 16
      %v1466 = vrot.slane %v1464, 4
      %v1467 = vor.u32 %v1466, %v1462
      %v1468 = vrot.slane %v1467, 4
      %v1470 = vshll.u32 %v1236, 16
      %v1472 = vrot.slane %v1470, 5
      %v1473 = vsel %vm326, %v1468, %v1472
      %v1475 = vshrl.u32 %v1237, 16
      %v1477 = vrot.slane %v1475, 4
      %v1478 = vshll.u32 %v1237, 16
      %v1480 = vrot.slane %v1478, 5
      %v1481 = vor.u32 %v1477, %v1480
      %v1482 = vrot.slane %v1481, 4
      %v1484 = vshll.u32 %v1238, 16
      %v1486 = vrot.slane %v1484, 5
      %v1487 = vsel %vm326, %v1482, %v1486
      %v1488 = vshrl.u32 %v1238, 16
      %v1490 = vrot.slane %v1488, 4
      %v1491 = vor.u32 %v1490, %v1486
      %v1492 = vrot.slane %v1491, 4
      %v1494 = vshll.u32 %v1239, 16
      %v1496 = vrot.slane %v1494, 5
      %v1497 = vsel %vm326, %v1492, %v1496
      %v1499 = vshrl.u32 %v1240, 16
      %v1501 = vrot.slane %v1499, 4
      %v1502 = vshll.u32 %v1240, 16
      %v1504 = vrot.slane %v1502, 5
      %v1505 = vor.u32 %v1501, %v1504
      %v1506 = vrot.slane %v1505, 4
      %v1508 = vshll.u32 %v1241, 16
      %v1510 = vrot.slane %v1508, 5
      %v1511 = vsel %vm326, %v1506, %v1510
      %v1512 = vshrl.u32 %v1241, 16
      %v1514 = vrot.slane %v1512, 4
      %v1515 = vor.u32 %v1514, %v1510
      %v1516 = vrot.slane %v1515, 4
      %v1518 = vshll.u32 %v1242, 16
      %v1520 = vrot.slane %v1518, 5
      %v1521 = vsel %vm326, %v1516, %v1520
      %v1523 = vshrl.u32 %v1243, 16
      %v1525 = vrot.slane %v1523, 4
      %v1526 = vshll.u32 %v1243, 16
      %v1528 = vrot.slane %v1526, 5
      %v1529 = vor.u32 %v1525, %v1528
      %v1530 = vrot.slane %v1529, 4
      %v1532 = vshll.u32 %v1244, 16
      %v1534 = vrot.slane %v1532, 5
      %v1535 = vsel %vm326, %v1530, %v1534
      %v1536 = vshrl.u32 %v1244, 16
      %v1538 = vrot.slane %v1536, 4
      %v1539 = vor.u32 %v1538, %v1534
      %v1540 = vrot.slane %v1539, 4
      %v1542 = vshll.u32 %v1245, 16
      %v1544 = vrot.slane %v1542, 5
      %v1545 = vsel %vm326, %v1540, %v1544
      %v1547 = vshrl.u32 %v1246, 16
      %v1549 = vrot.slane %v1547, 4
      %v1550 = vshll.u32 %v1246, 16
      %v1552 = vrot.slane %v1550, 5
      %v1553 = vor.u32 %v1549, %v1552
      %v1554 = vrot.slane %v1553, 4
      %v1556 = vshll.u32 %v1247, 16
      %v1558 = vrot.slane %v1556, 5
      %v1559 = vsel %vm326, %v1554, %v1558
      %v1560 = vshrl.u32 %v1247, 16
      %v1562 = vrot.slane %v1560, 4
      %v1563 = vor.u32 %v1562, %v1558
      %v1564 = vrot.slane %v1563, 4
      %v1566 = vshll.u32 %v1248, 16
      %v1568 = vrot.slane %v1566, 5
      %v1569 = vsel %vm326, %v1564, %v1568
      %v1571 = vshrl.u32 %v1249, 16
      %v1573 = vrot.slane %v1571, 4
      %v1574 = vshll.u32 %v1249, 16
      %v1576 = vrot.slane %v1574, 5
      %v1577 = vor.u32 %v1573, %v1576
      %v1578 = vrot.slane %v1577, 4
      %v1580 = vshll.u32 %v1250, 16
      %v1582 = vrot.slane %v1580, 5
      %v1583 = vsel %vm326, %v1578, %v1582
      %v1584 = vshrl.u32 %v1250, 16
      %v1586 = vrot.slane %v1584, 4
      %v1587 = vor.u32 %v1586, %v1582
      %v1588 = vrot.slane %v1587, 4
      %v1590 = vshll.u32 %v1251, 16
      %v1592 = vrot.slane %v1590, 5
      %v1593 = vsel %vm326, %v1588, %v1592
      %v1595 = vshrl.u32 %v1252, 16
      %v1597 = vrot.slane %v1595, 4
      %v1598 = vshll.u32 %v1252, 16
      %v1600 = vrot.slane %v1598, 5
      %v1601 = vor.u32 %v1597, %v1600
      %v1602 = vrot.slane %v1601, 4
      %v1604 = vshll.u32 %v1253, 16
      %v1606 = vrot.slane %v1604, 5
      %v1607 = vsel %vm326, %v1602, %v1606
      %v1608 = vshrl.u32 %v1253, 16
      %v1610 = vrot.slane %v1608, 4
      %v1611 = vor.u32 %v1610, %v1606
      %v1612 = vrot.slane %v1611, 4
      %v1614 = vshll.u32 %v1254, 16
      %v1616 = vrot.slane %v1614, 5
      %v1617 = vsel %vm326, %v1612, %v1616
      %v1619 = vshrl.u32 %v1255, 16
      %v1621 = vrot.slane %v1619, 4
      %v1622 = vshll.u32 %v1255, 16
      %v1624 = vrot.slane %v1622, 5
      %v1625 = vor.u32 %v1621, %v1624
      %v1626 = vrot.slane %v1625, 4
      %v1628 = vshll.u32 %v1256, 16
      %v1630 = vrot.slane %v1628, 5
      %v1631 = vsel %vm326, %v1626, %v1630
      %v1632 = vshrl.u32 %v1256, 16
      %v1634 = vrot.slane %v1632, 4
      %v1635 = vor.u32 %v1634, %v1630
      %v1636 = vrot.slane %v1635, 4
      %v1638 = vshll.u32 %v1257, 16
      %v1640 = vrot.slane %v1638, 5
      %v1641 = vsel %vm326, %v1636, %v1640
      %s1642 = scalar_lea.vmem %s1, 64
      %v1643 = vld [vmem:[%s1642] sm:$0xf]
      %v1644 = vld [vmem:[%s1642 + $0x4] sm:$0xf]
      %v1645 = vld [vmem:[%s1642 + $0x8] sm:$0xf]
      %v1646 = vld [vmem:[%s1642 + $0xc] sm:$0xf]
      %v1647 = vld [vmem:[%s1642 + $0x10] sm:$0xf]
      %v1648 = vld [vmem:[%s1642 + $0x14] sm:$0xf]
      %v1649 = vld [vmem:[%s1642 + $0x18] sm:$0xf]
      %v1650 = vld [vmem:[%s1642 + $0x1c] sm:$0xf]
      %v1651 = vld [vmem:[%s1642 + $0x20] sm:$0xf]
      %v1652 = vld [vmem:[%s1642 + $0x24] sm:$0xf]
      %v1653 = vld [vmem:[%s1642 + $0x28] sm:$0xf]
      %v1654 = vld [vmem:[%s1642 + $0x2c] sm:$0xf]
      %v1655 = vld [vmem:[%s1642 + $0x30] sm:$0xf]
      %v1656 = vld [vmem:[%s1642 + $0x34] sm:$0xf]
      %v1657 = vld [vmem:[%s1642 + $0x38] sm:$0xf]
      %v1658 = vld [vmem:[%s1642 + $0x3c] sm:$0xf]
      %v1659 = vunpack.c.l.b16 %v1271
      %v1660 = vunpack.c.l.b16 %v1281
      %v1661 = vunpack.c.l.b16 %v1295
      %v1662 = vunpack.c.l.b16 %v1305
      %v1663 = vunpack.c.l.b16 %v1319
      %v1664 = vunpack.c.l.b16 %v1329
      %v1665 = vunpack.c.l.b16 %v1343
      %v1666 = vunpack.c.l.b16 %v1353
      %v1667 = vunpack.c.l.b16 %v1367
      %v1668 = vunpack.c.l.b16 %v1377
      %v1669 = vunpack.c.l.b16 %v1391
      %v1670 = vunpack.c.l.b16 %v1401
      %v1671 = vunpack.c.l.b16 %v1415
      %v1672 = vunpack.c.l.b16 %v1425
      %v1673 = vunpack.c.l.b16 %v1439
      %v1674 = vunpack.c.l.b16 %v1449
      %v1675 = vunpack.c.l.b16 %v1463
      %v1676 = vunpack.c.l.b16 %v1473
      %v1677 = vunpack.c.l.b16 %v1487
      %v1678 = vunpack.c.l.b16 %v1497
      %v1679 = vunpack.c.l.b16 %v1511
      %v1680 = vunpack.c.l.b16 %v1521
      %v1681 = vunpack.c.l.b16 %v1535
      %v1682 = vunpack.c.l.b16 %v1545
      %v1683 = vunpack.c.l.b16 %v1559
      %v1684 = vunpack.c.l.b16 %v1569
      %v1685 = vunpack.c.l.b16 %v1583
      %v1686 = vunpack.c.l.b16 %v1593
      %v1687 = vunpack.c.l.b16 %v1607
      %v1688 = vunpack.c.l.b16 %v1617
      %v1689 = vunpack.c.l.b16 %v1631
      %v1690 = vunpack.c.l.b16 %v1641
      %v1691 = vpack.c.b16 %v1660, %v1659
      %v1692 = vpack.c.b16 %v1662, %v1661
      %v1693 = vpack.c.b16 %v1664, %v1663
      %v1694 = vpack.c.b16 %v1666, %v1665
      %v1695 = vpack.c.b16 %v1668, %v1667
      %v1696 = vpack.c.b16 %v1670, %v1669
      %v1697 = vpack.c.b16 %v1672, %v1671
      %v1698 = vpack.c.b16 %v1674, %v1673
      %v1699 = vpack.c.b16 %v1676, %v1675
      %v1700 = vpack.c.b16 %v1678, %v1677
      %v1701 = vpack.c.b16 %v1680, %v1679
      %v1702 = vpack.c.b16 %v1682, %v1681
      %v1703 = vpack.c.b16 %v1684, %v1683
      %v1704 = vpack.c.b16 %v1686, %v1685
      %v1705 = vpack.c.b16 %v1688, %v1687
      %v1706 = vpack.c.b16 %v1690, %v1689
      %v1739 = vunpack.c.l.b16 %v1643
      %v1740 = vunpack.c.l.b16 %v1644
      %v1741 = vunpack.c.l.b16 %v1645
      %v1742 = vunpack.c.l.b16 %v1646
      %v1743 = vunpack.c.l.b16 %v1647
      %v1744 = vunpack.c.l.b16 %v1648
      %v1745 = vunpack.c.l.b16 %v1649
      %v1746 = vunpack.c.l.b16 %v1650
      %v1747 = vunpack.c.l.b16 %v1651
      %v1748 = vunpack.c.l.b16 %v1652
      %v1749 = vunpack.c.l.b16 %v1653
      %v1750 = vunpack.c.l.b16 %v1654
      %v1751 = vunpack.c.l.b16 %v1655
      %v1752 = vunpack.c.l.b16 %v1656
      %v1753 = vunpack.c.l.b16 %v1657
      %v1754 = vunpack.c.l.b16 %v1658
      %v1755 = vpack.c.b16 %v1740, %v1739
      %v1756 = vpack.c.b16 %v1742, %v1741
      %v1757 = vpack.c.b16 %v1744, %v1743
      %v1758 = vpack.c.b16 %v1746, %v1745
      %v1759 = vpack.c.b16 %v1748, %v1747
      %v1760 = vpack.c.b16 %v1750, %v1749
      %v1761 = vpack.c.b16 %v1752, %v1751
      %v1762 = vpack.c.b16 %v1754, %v1753
      %1771 = vmatpush.bf16.msra.mxu0 %v1762
      %1772 = vmatpush.bf16.msra.mxu0 %v1761
      %1773 = vmatpush.bf16.msra.mxu0 %v1760
      %1774 = vmatpush.bf16.msra.mxu0 %v1759
      %1775 = vmatpush.bf16.msra.mxu0 %v1758
      %1776 = vmatpush.bf16.msra.mxu0 %v1757
      %1777 = vmatpush.bf16.msra.mxu0 %v1756
      %1778 = vmatpush.bf16.msra.mxu0 %v1755
      %1779 = vmatmul.bf16.gmra.mxu0 %v1691
      %v1780 = vpop.f32.mrf.mxu0
      %v1781 = vadd.f32 0.0, %v1780
      %v1782 = vpop.f32.mrf.mxu0
      %v1783 = vadd.f32 0.0, %v1782
      %1784 = vmatmul.bf16.gmra.mxu0 %v1692
      %v1785 = vpop.f32.mrf.mxu0
      %v1786 = vadd.f32 0.0, %v1785
      %v1787 = vpop.f32.mrf.mxu0
      %v1788 = vadd.f32 0.0, %v1787
      %1789 = vmatmul.bf16.gmra.mxu0 %v1693
      %v1790 = vpop.f32.mrf.mxu0
      %v1791 = vadd.f32 0.0, %v1790
      %v1792 = vpop.f32.mrf.mxu0
      %v1793 = vadd.f32 0.0, %v1792
      %1794 = vmatmul.bf16.gmra.mxu0 %v1694
      %v1795 = vpop.f32.mrf.mxu0
      %v1796 = vadd.f32 0.0, %v1795
      %v1797 = vpop.f32.mrf.mxu0
      %v1798 = vadd.f32 0.0, %v1797
      %1799 = vmatmul.bf16.gmra.mxu0 %v1695
      %v1800 = vpop.f32.mrf.mxu0
      %v1801 = vadd.f32 0.0, %v1800
      %v1802 = vpop.f32.mrf.mxu0
      %v1803 = vadd.f32 0.0, %v1802
      %1804 = vmatmul.bf16.gmra.mxu0 %v1696
      %v1805 = vpop.f32.mrf.mxu0
      %v1806 = vadd.f32 0.0, %v1805
      %v1807 = vpop.f32.mrf.mxu0
      %v1808 = vadd.f32 0.0, %v1807
      %1809 = vmatmul.bf16.gmra.mxu0 %v1697
      %v1810 = vpop.f32.mrf.mxu0
      %v1811 = vadd.f32 0.0, %v1810
      %v1812 = vpop.f32.mrf.mxu0
      %v1813 = vadd.f32 0.0, %v1812
      %1814 = vmatmul.bf16.gmra.mxu0 %v1698
      %v1815 = vpop.f32.mrf.mxu0
      %v1816 = vadd.f32 0.0, %v1815
      %v1817 = vpop.f32.mrf.mxu0
      %v1818 = vadd.f32 0.0, %v1817
      %1819 = vmatmul.bf16.gmra.mxu0 %v1699
      %v1820 = vpop.f32.mrf.mxu0
      %v1821 = vadd.f32 0.0, %v1820
      %v1822 = vpop.f32.mrf.mxu0
      %v1823 = vadd.f32 0.0, %v1822
      %1824 = vmatmul.bf16.gmra.mxu0 %v1700
      %v1825 = vpop.f32.mrf.mxu0
      %v1826 = vadd.f32 0.0, %v1825
      %v1827 = vpop.f32.mrf.mxu0
      %v1828 = vadd.f32 0.0, %v1827
      %1829 = vmatmul.bf16.gmra.mxu0 %v1701
      %v1830 = vpop.f32.mrf.mxu0
      %v1831 = vadd.f32 0.0, %v1830
      %v1832 = vpop.f32.mrf.mxu0
      %v1833 = vadd.f32 0.0, %v1832
      %1834 = vmatmul.bf16.gmra.mxu0 %v1702
      %v1835 = vpop.f32.mrf.mxu0
      %v1836 = vadd.f32 0.0, %v1835
      %v1837 = vpop.f32.mrf.mxu0
      %v1838 = vadd.f32 0.0, %v1837
      %1839 = vmatmul.bf16.gmra.mxu0 %v1703
      %v1840 = vpop.f32.mrf.mxu0
      %v1841 = vadd.f32 0.0, %v1840
      %v1842 = vpop.f32.mrf.mxu0
      %v1843 = vadd.f32 0.0, %v1842
      %1844 = vmatmul.bf16.gmra.mxu0 %v1704
      %v1845 = vpop.f32.mrf.mxu0
      %v1846 = vadd.f32 0.0, %v1845
      %v1847 = vpop.f32.mrf.mxu0
      %v1848 = vadd.f32 0.0, %v1847
      %1849 = vmatmul.bf16.gmra.mxu0 %v1705
      %v1850 = vpop.f32.mrf.mxu0
      %v1851 = vadd.f32 0.0, %v1850
      %v1852 = vpop.f32.mrf.mxu0
      %v1853 = vadd.f32 0.0, %v1852
      %1854 = vmatmul.bf16.gmra.mxu0 %v1706
      %v1855 = vpop.f32.mrf.mxu0
      %v1856 = vadd.f32 0.0, %v1855
      %v1857 = vpop.f32.mrf.mxu0
      %v1858 = vadd.f32 0.0, %v1857
      %1859 = vdwg.mxu0
      %v1860 = vadd.f32 %v1131, %v1781
      %v1861 = vadd.f32 %v1133, %v1783
      %v1862 = vadd.f32 %v1136, %v1786
      %v1863 = vadd.f32 %v1138, %v1788
      %v1864 = vadd.f32 %v1141, %v1791
      %v1865 = vadd.f32 %v1143, %v1793
      %v1866 = vadd.f32 %v1146, %v1796
      %v1867 = vadd.f32 %v1148, %v1798
      %v1868 = vadd.f32 %v1151, %v1801
      %v1869 = vadd.f32 %v1153, %v1803
      %v1870 = vadd.f32 %v1156, %v1806
      %v1871 = vadd.f32 %v1158, %v1808
      %v1872 = vadd.f32 %v1161, %v1811
      %v1873 = vadd.f32 %v1163, %v1813
      %v1874 = vadd.f32 %v1166, %v1816
      %v1875 = vadd.f32 %v1168, %v1818
      %v1876 = vadd.f32 %v1171, %v1821
      %v1877 = vadd.f32 %v1173, %v1823
      %v1878 = vadd.f32 %v1176, %v1826
      %v1879 = vadd.f32 %v1178, %v1828
      %v1880 = vadd.f32 %v1181, %v1831
      %v1881 = vadd.f32 %v1183, %v1833
      %v1882 = vadd.f32 %v1186, %v1836
      %v1883 = vadd.f32 %v1188, %v1838
      %v1884 = vadd.f32 %v1191, %v1841
      %v1885 = vadd.f32 %v1193, %v1843
      %v1886 = vadd.f32 %v1196, %v1846
      %v1887 = vadd.f32 %v1198, %v1848
      %v1888 = vadd.f32 %v1201, %v1851
      %v1889 = vadd.f32 %v1203, %v1853
      %v1890 = vadd.f32 %v1206, %v1856
      %v1891 = vadd.f32 %v1208, %v1858
      %v1892 = vld [vmem:[%s260] sm:$0xe]
      %v1893 = vld [vmem:[%s260 + $0xc] sm:$0xe]
      %v1894 = vld [vmem:[%s260 + $0x18] sm:$0xe]
      %v1895 = vld [vmem:[%s260 + $0x24] sm:$0xe]
      %v1896 = vld [vmem:[%s260 + $0x30] sm:$0xe]
      %v1897 = vld [vmem:[%s260 + $0x3c] sm:$0xe]
      %v1898 = vld [vmem:[%s260 + $0x48] sm:$0xe]
      %v1899 = vld [vmem:[%s260 + $0x54] sm:$0xe]
      %v1900 = vld [vmem:[%s260 + $0x60] sm:$0xe]
      %v1901 = vld [vmem:[%s260 + $0x6c] sm:$0xe]
      %v1902 = vld [vmem:[%s260 + $0x78] sm:$0xe]
      %v1903 = vld [vmem:[%s260 + $0x84] sm:$0xe]
      %v1904 = vld [vmem:[%s260 + $0x90] sm:$0xe]
      %v1905 = vld [vmem:[%s260 + $0x9c] sm:$0xe]
      %v1906 = vld [vmem:[%s260 + $0xa8] sm:$0xe]
      %v1907 = vld [vmem:[%s260 + $0xb4] sm:$0xe]
      %vm1956 = vcmask 1042432
      %vm1957 = vcmask 1046532
      %vm1958 = vmor %vm1956, %vm1957
      %v1959 = vrot.slane %v1892, 5
      %v1960 = vrot.slane %v1959, 4
      %v1961 = vrot.slane %v1211, 5
      %v1962 = vsel %vm1958, %v1960, %v1961
      %v1963 = vrot.slane %v1961, 4
      %v1964 = vrot.slane %v1212, 5
      %v1965 = vsel %vm1958, %v1963, %v1964
      %v1966 = vrot.slane %v1893, 5
      %v1967 = vrot.slane %v1966, 4
      %v1968 = vrot.slane %v1214, 5
      %v1969 = vsel %vm1958, %v1967, %v1968
      %v1970 = vrot.slane %v1968, 4
      %v1971 = vrot.slane %v1215, 5
      %v1972 = vsel %vm1958, %v1970, %v1971
      %v1973 = vrot.slane %v1894, 5
      %v1974 = vrot.slane %v1973, 4
      %v1975 = vrot.slane %v1217, 5
      %v1976 = vsel %vm1958, %v1974, %v1975
      %v1977 = vrot.slane %v1975, 4
      %v1978 = vrot.slane %v1218, 5
      %v1979 = vsel %vm1958, %v1977, %v1978
      %v1980 = vrot.slane %v1895, 5
      %v1981 = vrot.slane %v1980, 4
      %v1982 = vrot.slane %v1220, 5
      %v1983 = vsel %vm1958, %v1981, %v1982
      %v1984 = vrot.slane %v1982, 4
      %v1985 = vrot.slane %v1221, 5
      %v1986 = vsel %vm1958, %v1984, %v1985
      %v1987 = vrot.slane %v1896, 5
      %v1988 = vrot.slane %v1987, 4
      %v1989 = vrot.slane %v1223, 5
      %v1990 = vsel %vm1958, %v1988, %v1989
      %v1991 = vrot.slane %v1989, 4
      %v1992 = vrot.slane %v1224, 5
      %v1993 = vsel %vm1958, %v1991, %v1992
      %v1994 = vrot.slane %v1897, 5
      %v1995 = vrot.slane %v1994, 4
      %v1996 = vrot.slane %v1226, 5
      %v1997 = vsel %vm1958, %v1995, %v1996
      %v1998 = vrot.slane %v1996, 4
      %v1999 = vrot.slane %v1227, 5
      %v2000 = vsel %vm1958, %v1998, %v1999
      %v2001 = vrot.slane %v1898, 5
      %v2002 = vrot.slane %v2001, 4
      %v2003 = vrot.slane %v1229, 5
      %v2004 = vsel %vm1958, %v2002, %v2003
      %v2005 = vrot.slane %v2003, 4
      %v2006 = vrot.slane %v1230, 5
      %v2007 = vsel %vm1958, %v2005, %v2006
      %v2008 = vrot.slane %v1899, 5
      %v2009 = vrot.slane %v2008, 4
      %v2010 = vrot.slane %v1232, 5
      %v2011 = vsel %vm1958, %v2009, %v2010
      %v2012 = vrot.slane %v2010, 4
      %v2013 = vrot.slane %v1233, 5
      %v2014 = vsel %vm1958, %v2012, %v2013
      %v2015 = vrot.slane %v1900, 5
      %v2016 = vrot.slane %v2015, 4
      %v2017 = vrot.slane %v1235, 5
      %v2018 = vsel %vm1958, %v2016, %v2017
      %v2019 = vrot.slane %v2017, 4
      %v2020 = vrot.slane %v1236, 5
      %v2021 = vsel %vm1958, %v2019, %v2020
      %v2022 = vrot.slane %v1901, 5
      %v2023 = vrot.slane %v2022, 4
      %v2024 = vrot.slane %v1238, 5
      %v2025 = vsel %vm1958, %v2023, %v2024
      %v2026 = vrot.slane %v2024, 4
      %v2027 = vrot.slane %v1239, 5
      %v2028 = vsel %vm1958, %v2026, %v2027
      %v2029 = vrot.slane %v1902, 5
      %v2030 = vrot.slane %v2029, 4
      %v2031 = vrot.slane %v1241, 5
      %v2032 = vsel %vm1958, %v2030, %v2031
      %v2033 = vrot.slane %v2031, 4
      %v2034 = vrot.slane %v1242, 5
      %v2035 = vsel %vm1958, %v2033, %v2034
      %v2036 = vrot.slane %v1903, 5
      %v2037 = vrot.slane %v2036, 4
      %v2038 = vrot.slane %v1244, 5
      %v2039 = vsel %vm1958, %v2037, %v2038
      %v2040 = vrot.slane %v2038, 4
      %v2041 = vrot.slane %v1245, 5
      %v2042 = vsel %vm1958, %v2040, %v2041
      %v2043 = vrot.slane %v1904, 5
      %v2044 = vrot.slane %v2043, 4
      %v2045 = vrot.slane %v1247, 5
      %v2046 = vsel %vm1958, %v2044, %v2045
      %v2047 = vrot.slane %v2045, 4
      %v2048 = vrot.slane %v1248, 5
      %v2049 = vsel %vm1958, %v2047, %v2048
      %v2050 = vrot.slane %v1905, 5
      %v2051 = vrot.slane %v2050, 4
      %v2052 = vrot.slane %v1250, 5
      %v2053 = vsel %vm1958, %v2051, %v2052
      %v2054 = vrot.slane %v2052, 4
      %v2055 = vrot.slane %v1251, 5
      %v2056 = vsel %vm1958, %v2054, %v2055
      %v2057 = vrot.slane %v1906, 5
      %v2058 = vrot.slane %v2057, 4
      %v2059 = vrot.slane %v1253, 5
      %v2060 = vsel %vm1958, %v2058, %v2059
      %v2061 = vrot.slane %v2059, 4
      %v2062 = vrot.slane %v1254, 5
      %v2063 = vsel %vm1958, %v2061, %v2062
      %v2064 = vrot.slane %v1907, 5
      %v2065 = vrot.slane %v2064, 4
      %v2066 = vrot.slane %v1256, 5
      %v2067 = vsel %vm1958, %v2065, %v2066
      %v2068 = vrot.slane %v2066, 4
      %v2069 = vrot.slane %v1257, 5
      %v2070 = vsel %vm1958, %v2068, %v2069
      %s2071 = scalar_lea.vmem %s1, 128
      %v2072 = vld [vmem:[%s2071] sm:$0xf]
      %v2073 = vld [vmem:[%s2071 + $0x4] sm:$0xf]
      %v2074 = vld [vmem:[%s2071 + $0x8] sm:$0xf]
      %v2075 = vld [vmem:[%s2071 + $0xc] sm:$0xf]
      %v2076 = vld [vmem:[%s2071 + $0x10] sm:$0xf]
      %v2077 = vld [vmem:[%s2071 + $0x14] sm:$0xf]
      %v2078 = vld [vmem:[%s2071 + $0x18] sm:$0xf]
      %v2079 = vld [vmem:[%s2071 + $0x1c] sm:$0xf]
      %v2080 = vld [vmem:[%s2071 + $0x20] sm:$0xf]
      %v2081 = vld [vmem:[%s2071 + $0x24] sm:$0xf]
      %v2082 = vld [vmem:[%s2071 + $0x28] sm:$0xf]
      %v2083 = vld [vmem:[%s2071 + $0x2c] sm:$0xf]
      %v2084 = vld [vmem:[%s2071 + $0x30] sm:$0xf]
      %v2085 = vld [vmem:[%s2071 + $0x34] sm:$0xf]
      %v2086 = vld [vmem:[%s2071 + $0x38] sm:$0xf]
      %v2087 = vld [vmem:[%s2071 + $0x3c] sm:$0xf]
      %v2088 = vunpack.c.l.b16 %v1962
      %v2089 = vunpack.c.l.b16 %v1965
      %v2090 = vunpack.c.l.b16 %v1969
      %v2091 = vunpack.c.l.b16 %v1972
      %v2092 = vunpack.c.l.b16 %v1976
      %v2093 = vunpack.c.l.b16 %v1979
      %v2094 = vunpack.c.l.b16 %v1983
      %v2095 = vunpack.c.l.b16 %v1986
      %v2096 = vunpack.c.l.b16 %v1990
      %v2097 = vunpack.c.l.b16 %v1993
      %v2098 = vunpack.c.l.b16 %v1997
      %v2099 = vunpack.c.l.b16 %v2000
      %v2100 = vunpack.c.l.b16 %v2004
      %v2101 = vunpack.c.l.b16 %v2007
      %v2102 = vunpack.c.l.b16 %v2011
      %v2103 = vunpack.c.l.b16 %v2014
      %v2104 = vunpack.c.l.b16 %v2018
      %v2105 = vunpack.c.l.b16 %v2021
      %v2106 = vunpack.c.l.b16 %v2025
      %v2107 = vunpack.c.l.b16 %v2028
      %v2108 = vunpack.c.l.b16 %v2032
      %v2109 = vunpack.c.l.b16 %v2035
      %v2110 = vunpack.c.l.b16 %v2039
      %v2111 = vunpack.c.l.b16 %v2042
      %v2112 = vunpack.c.l.b16 %v2046
      %v2113 = vunpack.c.l.b16 %v2049
      %v2114 = vunpack.c.l.b16 %v2053
      %v2115 = vunpack.c.l.b16 %v2056
      %v2116 = vunpack.c.l.b16 %v2060
      %v2117 = vunpack.c.l.b16 %v2063
      %v2118 = vunpack.c.l.b16 %v2067
      %v2119 = vunpack.c.l.b16 %v2070
      %v2120 = vpack.c.b16 %v2089, %v2088
      %v2121 = vpack.c.b16 %v2091, %v2090
      %v2122 = vpack.c.b16 %v2093, %v2092
      %v2123 = vpack.c.b16 %v2095, %v2094
      %v2124 = vpack.c.b16 %v2097, %v2096
      %v2125 = vpack.c.b16 %v2099, %v2098
      %v2126 = vpack.c.b16 %v2101, %v2100
      %v2127 = vpack.c.b16 %v2103, %v2102
      %v2128 = vpack.c.b16 %v2105, %v2104
      %v2129 = vpack.c.b16 %v2107, %v2106
      %v2130 = vpack.c.b16 %v2109, %v2108
      %v2131 = vpack.c.b16 %v2111, %v2110
      %v2132 = vpack.c.b16 %v2113, %v2112
      %v2133 = vpack.c.b16 %v2115, %v2114
      %v2134 = vpack.c.b16 %v2117, %v2116
      %v2135 = vpack.c.b16 %v2119, %v2118
      %v2168 = vunpack.c.l.b16 %v2072
      %v2169 = vunpack.c.l.b16 %v2073
      %v2170 = vunpack.c.l.b16 %v2074
      %v2171 = vunpack.c.l.b16 %v2075
      %v2172 = vunpack.c.l.b16 %v2076
      %v2173 = vunpack.c.l.b16 %v2077
      %v2174 = vunpack.c.l.b16 %v2078
      %v2175 = vunpack.c.l.b16 %v2079
      %v2176 = vunpack.c.l.b16 %v2080
      %v2177 = vunpack.c.l.b16 %v2081
      %v2178 = vunpack.c.l.b16 %v2082
      %v2179 = vunpack.c.l.b16 %v2083
      %v2180 = vunpack.c.l.b16 %v2084
      %v2181 = vunpack.c.l.b16 %v2085
      %v2182 = vunpack.c.l.b16 %v2086
      %v2183 = vunpack.c.l.b16 %v2087
      %v2184 = vpack.c.b16 %v2169, %v2168
      %v2185 = vpack.c.b16 %v2171, %v2170
      %v2186 = vpack.c.b16 %v2173, %v2172
      %v2187 = vpack.c.b16 %v2175, %v2174
      %v2188 = vpack.c.b16 %v2177, %v2176
      %v2189 = vpack.c.b16 %v2179, %v2178
      %v2190 = vpack.c.b16 %v2181, %v2180
      %v2191 = vpack.c.b16 %v2183, %v2182
      %2200 = vmatpush.bf16.msra.mxu0 %v2191
      %2201 = vmatpush.bf16.msra.mxu0 %v2190
      %2202 = vmatpush.bf16.msra.mxu0 %v2189
      %2203 = vmatpush.bf16.msra.mxu0 %v2188
      %2204 = vmatpush.bf16.msra.mxu0 %v2187
      %2205 = vmatpush.bf16.msra.mxu0 %v2186
      %2206 = vmatpush.bf16.msra.mxu0 %v2185
      %2207 = vmatpush.bf16.msra.mxu0 %v2184
      %2208 = vmatmul.bf16.gmra.mxu0 %v2120
      %v2209 = vpop.f32.mrf.mxu0
      %v2210 = vadd.f32 0.0, %v2209
      %v2211 = vpop.f32.mrf.mxu0
      %v2212 = vadd.f32 0.0, %v2211
      %2213 = vmatmul.bf16.gmra.mxu0 %v2121
      %v2214 = vpop.f32.mrf.mxu0
      %v2215 = vadd.f32 0.0, %v2214
      %v2216 = vpop.f32.mrf.mxu0
      %v2217 = vadd.f32 0.0, %v2216
      %2218 = vmatmul.bf16.gmra.mxu0 %v2122
      %v2219 = vpop.f32.mrf.mxu0
      %v2220 = vadd.f32 0.0, %v2219
      %v2221 = vpop.f32.mrf.mxu0
      %v2222 = vadd.f32 0.0, %v2221
      %2223 = vmatmul.bf16.gmra.mxu0 %v2123
      %v2224 = vpop.f32.mrf.mxu0
      %v2225 = vadd.f32 0.0, %v2224
      %v2226 = vpop.f32.mrf.mxu0
      %v2227 = vadd.f32 0.0, %v2226
      %2228 = vmatmul.bf16.gmra.mxu0 %v2124
      %v2229 = vpop.f32.mrf.mxu0
      %v2230 = vadd.f32 0.0, %v2229
      %v2231 = vpop.f32.mrf.mxu0
      %v2232 = vadd.f32 0.0, %v2231
      %2233 = vmatmul.bf16.gmra.mxu0 %v2125
      %v2234 = vpop.f32.mrf.mxu0
      %v2235 = vadd.f32 0.0, %v2234
      %v2236 = vpop.f32.mrf.mxu0
      %v2237 = vadd.f32 0.0, %v2236
      %2238 = vmatmul.bf16.gmra.mxu0 %v2126
      %v2239 = vpop.f32.mrf.mxu0
      %v2240 = vadd.f32 0.0, %v2239
      %v2241 = vpop.f32.mrf.mxu0
      %v2242 = vadd.f32 0.0, %v2241
      %2243 = vmatmul.bf16.gmra.mxu0 %v2127
      %v2244 = vpop.f32.mrf.mxu0
      %v2245 = vadd.f32 0.0, %v2244
      %v2246 = vpop.f32.mrf.mxu0
      %v2247 = vadd.f32 0.0, %v2246
      %2248 = vmatmul.bf16.gmra.mxu0 %v2128
      %v2249 = vpop.f32.mrf.mxu0
      %v2250 = vadd.f32 0.0, %v2249
      %v2251 = vpop.f32.mrf.mxu0
      %v2252 = vadd.f32 0.0, %v2251
      %2253 = vmatmul.bf16.gmra.mxu0 %v2129
      %v2254 = vpop.f32.mrf.mxu0
      %v2255 = vadd.f32 0.0, %v2254
      %v2256 = vpop.f32.mrf.mxu0
      %v2257 = vadd.f32 0.0, %v2256
      %2258 = vmatmul.bf16.gmra.mxu0 %v2130
      %v2259 = vpop.f32.mrf.mxu0
      %v2260 = vadd.f32 0.0, %v2259
      %v2261 = vpop.f32.mrf.mxu0
      %v2262 = vadd.f32 0.0, %v2261
      %2263 = vmatmul.bf16.gmra.mxu0 %v2131
      %v2264 = vpop.f32.mrf.mxu0
      %v2265 = vadd.f32 0.0, %v2264
      %v2266 = vpop.f32.mrf.mxu0
      %v2267 = vadd.f32 0.0, %v2266
      %2268 = vmatmul.bf16.gmra.mxu0 %v2132
      %v2269 = vpop.f32.mrf.mxu0
      %v2270 = vadd.f32 0.0, %v2269
      %v2271 = vpop.f32.mrf.mxu0
      %v2272 = vadd.f32 0.0, %v2271
      %2273 = vmatmul.bf16.gmra.mxu0 %v2133
      %v2274 = vpop.f32.mrf.mxu0
      %v2275 = vadd.f32 0.0, %v2274
      %v2276 = vpop.f32.mrf.mxu0
      %v2277 = vadd.f32 0.0, %v2276
      %2278 = vmatmul.bf16.gmra.mxu0 %v2134
      %v2279 = vpop.f32.mrf.mxu0
      %v2280 = vadd.f32 0.0, %v2279
      %v2281 = vpop.f32.mrf.mxu0
      %v2282 = vadd.f32 0.0, %v2281
      %2283 = vmatmul.bf16.gmra.mxu0 %v2135
      %v2284 = vpop.f32.mrf.mxu0
      %v2285 = vadd.f32 0.0, %v2284
      %v2286 = vpop.f32.mrf.mxu0
      %v2287 = vadd.f32 0.0, %v2286
      %2288 = vdwg.mxu0
      %v2289 = vadd.f32 %v1860, %v2210
      %v2290 = vadd.f32 %v1861, %v2212
      %v2291 = vadd.f32 %v1862, %v2215
      %v2292 = vadd.f32 %v1863, %v2217
      %v2293 = vadd.f32 %v1864, %v2220
      %v2294 = vadd.f32 %v1865, %v2222
      %v2295 = vadd.f32 %v1866, %v2225
      %v2296 = vadd.f32 %v1867, %v2227
      %v2297 = vadd.f32 %v1868, %v2230
      %v2298 = vadd.f32 %v1869, %v2232
      %v2299 = vadd.f32 %v1870, %v2235
      %v2300 = vadd.f32 %v1871, %v2237
      %v2301 = vadd.f32 %v1872, %v2240
      %v2302 = vadd.f32 %v1873, %v2242
      %v2303 = vadd.f32 %v1874, %v2245
      %v2304 = vadd.f32 %v1875, %v2247
      %v2305 = vadd.f32 %v1876, %v2250
      %v2306 = vadd.f32 %v1877, %v2252
      %v2307 = vadd.f32 %v1878, %v2255
      %v2308 = vadd.f32 %v1879, %v2257
      %v2309 = vadd.f32 %v1880, %v2260
      %v2310 = vadd.f32 %v1881, %v2262
      %v2311 = vadd.f32 %v1882, %v2265
      %v2312 = vadd.f32 %v1883, %v2267
      %v2313 = vadd.f32 %v1884, %v2270
      %v2314 = vadd.f32 %v1885, %v2272
      %v2315 = vadd.f32 %v1886, %v2275
      %v2316 = vadd.f32 %v1887, %v2277
      %v2317 = vadd.f32 %v1888, %v2280
      %v2318 = vadd.f32 %v1889, %v2282
      %v2319 = vadd.f32 %v1890, %v2285
      %v2320 = vadd.f32 %v1891, %v2287
      %v2321 = vld [vmem:[%s275] sm:$0xf]
      %v2322 = vld [vmem:[%s275 + $0x4] sm:$0xf]
      %v2323 = vld [vmem:[%s275 + $0xc] sm:$0xf]
      %v2324 = vld [vmem:[%s275 + $0x10] sm:$0xf]
      %v2325 = vld [vmem:[%s275 + $0x18] sm:$0xf]
      %v2326 = vld [vmem:[%s275 + $0x1c] sm:$0xf]
      %v2327 = vld [vmem:[%s275 + $0x24] sm:$0xf]
      %v2328 = vld [vmem:[%s275 + $0x28] sm:$0xf]
      %v2329 = vld [vmem:[%s275 + $0x30] sm:$0xf]
      %v2330 = vld [vmem:[%s275 + $0x34] sm:$0xf]
      %v2331 = vld [vmem:[%s275 + $0x3c] sm:$0xf]
      %v2332 = vld [vmem:[%s275 + $0x40] sm:$0xf]
      %v2333 = vld [vmem:[%s275 + $0x48] sm:$0xf]
      %v2334 = vld [vmem:[%s275 + $0x4c] sm:$0xf]
      %v2335 = vld [vmem:[%s275 + $0x54] sm:$0xf]
      %v2336 = vld [vmem:[%s275 + $0x58] sm:$0xf]
      %v2337 = vld [vmem:[%s275 + $0x60] sm:$0xf]
      %v2338 = vld [vmem:[%s275 + $0x64] sm:$0xf]
      %v2339 = vld [vmem:[%s275 + $0x6c] sm:$0xf]
      %v2340 = vld [vmem:[%s275 + $0x70] sm:$0xf]
      %v2341 = vld [vmem:[%s275 + $0x78] sm:$0xf]
      %v2342 = vld [vmem:[%s275 + $0x7c] sm:$0xf]
      %v2343 = vld [vmem:[%s275 + $0x84] sm:$0xf]
      %v2344 = vld [vmem:[%s275 + $0x88] sm:$0xf]
      %v2345 = vld [vmem:[%s275 + $0x90] sm:$0xf]
      %v2346 = vld [vmem:[%s275 + $0x94] sm:$0xf]
      %v2347 = vld [vmem:[%s275 + $0x9c] sm:$0xf]
      %v2348 = vld [vmem:[%s275 + $0xa0] sm:$0xf]
      %v2349 = vld [vmem:[%s275 + $0xa8] sm:$0xf]
      %v2350 = vld [vmem:[%s275 + $0xac] sm:$0xf]
      %v2351 = vld [vmem:[%s275 + $0xb4] sm:$0xf]
      %v2352 = vld [vmem:[%s275 + $0xb8] sm:$0xf]
      %s2353 = scalar_lea.vmem %s1, 192
      %v2354 = vld [vmem:[%s2353] sm:$0xf]
      %v2355 = vld [vmem:[%s2353 + $0x4] sm:$0xf]
      %v2356 = vld [vmem:[%s2353 + $0x8] sm:$0xf]
      %v2357 = vld [vmem:[%s2353 + $0xc] sm:$0xf]
      %v2358 = vld [vmem:[%s2353 + $0x10] sm:$0xf]
      %v2359 = vld [vmem:[%s2353 + $0x14] sm:$0xf]
      %v2360 = vld [vmem:[%s2353 + $0x18] sm:$0xf]
      %v2361 = vld [vmem:[%s2353 + $0x1c] sm:$0xf]
      %v2362 = vld [vmem:[%s2353 + $0x20] sm:$0xf]
      %v2363 = vld [vmem:[%s2353 + $0x24] sm:$0xf]
      %v2364 = vld [vmem:[%s2353 + $0x28] sm:$0xf]
      %v2365 = vld [vmem:[%s2353 + $0x2c] sm:$0xf]
      %v2366 = vld [vmem:[%s2353 + $0x30] sm:$0xf]
      %v2367 = vld [vmem:[%s2353 + $0x34] sm:$0xf]
      %v2368 = vld [vmem:[%s2353 + $0x38] sm:$0xf]
      %v2369 = vld [vmem:[%s2353 + $0x3c] sm:$0xf]
      %v2402 = vunpack.c.l.b16 %v2321
      %v2403 = vunpack.c.l.b16 %v2322
      %v2404 = vunpack.c.l.b16 %v2323
      %v2405 = vunpack.c.l.b16 %v2324
      %v2406 = vunpack.c.l.b16 %v2325
      %v2407 = vunpack.c.l.b16 %v2326
      %v2408 = vunpack.c.l.b16 %v2327
      %v2409 = vunpack.c.l.b16 %v2328
      %v2410 = vunpack.c.l.b16 %v2329
      %v2411 = vunpack.c.l.b16 %v2330
      %v2412 = vunpack.c.l.b16 %v2331
      %v2413 = vunpack.c.l.b16 %v2332
      %v2414 = vunpack.c.l.b16 %v2333
      %v2415 = vunpack.c.l.b16 %v2334
      %v2416 = vunpack.c.l.b16 %v2335
      %v2417 = vunpack.c.l.b16 %v2336
      %v2418 = vunpack.c.l.b16 %v2337
      %v2419 = vunpack.c.l.b16 %v2338
      %v2420 = vunpack.c.l.b16 %v2339
      %v2421 = vunpack.c.l.b16 %v2340
      %v2422 = vunpack.c.l.b16 %v2341
      %v2423 = vunpack.c.l.b16 %v2342
      %v2424 = vunpack.c.l.b16 %v2343
      %v2425 = vunpack.c.l.b16 %v2344
      %v2426 = vunpack.c.l.b16 %v2345
      %v2427 = vunpack.c.l.b16 %v2346
      %v2428 = vunpack.c.l.b16 %v2347
      %v2429 = vunpack.c.l.b16 %v2348
      %v2430 = vunpack.c.l.b16 %v2349
      %v2431 = vunpack.c.l.b16 %v2350
      %v2432 = vunpack.c.l.b16 %v2351
      %v2433 = vunpack.c.l.b16 %v2352
      %v2434 = vpack.c.b16 %v2403, %v2402
      %v2435 = vpack.c.b16 %v2405, %v2404
      %v2436 = vpack.c.b16 %v2407, %v2406
      %v2437 = vpack.c.b16 %v2409, %v2408
      %v2438 = vpack.c.b16 %v2411, %v2410
      %v2439 = vpack.c.b16 %v2413, %v2412
      %v2440 = vpack.c.b16 %v2415, %v2414
      %v2441 = vpack.c.b16 %v2417, %v2416
      %v2442 = vpack.c.b16 %v2419, %v2418
      %v2443 = vpack.c.b16 %v2421, %v2420
      %v2444 = vpack.c.b16 %v2423, %v2422
      %v2445 = vpack.c.b16 %v2425, %v2424
      %v2446 = vpack.c.b16 %v2427, %v2426
      %v2447 = vpack.c.b16 %v2429, %v2428
      %v2448 = vpack.c.b16 %v2431, %v2430
      %v2449 = vpack.c.b16 %v2433, %v2432
      %v2482 = vunpack.c.l.b16 %v2354
      %v2483 = vunpack.c.l.b16 %v2355
      %v2484 = vunpack.c.l.b16 %v2356
      %v2485 = vunpack.c.l.b16 %v2357
      %v2486 = vunpack.c.l.b16 %v2358
      %v2487 = vunpack.c.l.b16 %v2359
      %v2488 = vunpack.c.l.b16 %v2360
      %v2489 = vunpack.c.l.b16 %v2361
      %v2490 = vunpack.c.l.b16 %v2362
      %v2491 = vunpack.c.l.b16 %v2363
      %v2492 = vunpack.c.l.b16 %v2364
      %v2493 = vunpack.c.l.b16 %v2365
      %v2494 = vunpack.c.l.b16 %v2366
      %v2495 = vunpack.c.l.b16 %v2367
      %v2496 = vunpack.c.l.b16 %v2368
      %v2497 = vunpack.c.l.b16 %v2369
      %v2498 = vpack.c.b16 %v2483, %v2482
      %v2499 = vpack.c.b16 %v2485, %v2484
      %v2500 = vpack.c.b16 %v2487, %v2486
      %v2501 = vpack.c.b16 %v2489, %v2488
      %v2502 = vpack.c.b16 %v2491, %v2490
      %v2503 = vpack.c.b16 %v2493, %v2492
      %v2504 = vpack.c.b16 %v2495, %v2494
      %v2505 = vpack.c.b16 %v2497, %v2496
      %2514 = vmatpush.bf16.msra.mxu0 %v2505
      %2515 = vmatpush.bf16.msra.mxu0 %v2504
      %2516 = vmatpush.bf16.msra.mxu0 %v2503
      %2517 = vmatpush.bf16.msra.mxu0 %v2502
      %2518 = vmatpush.bf16.msra.mxu0 %v2501
      %2519 = vmatpush.bf16.msra.mxu0 %v2500
      %2520 = vmatpush.bf16.msra.mxu0 %v2499
      %2521 = vmatpush.bf16.msra.mxu0 %v2498
      %2522 = vmatmul.bf16.gmra.mxu0 %v2434
      %v2523 = vpop.f32.mrf.mxu0
      %v2524 = vadd.f32 0.0, %v2523
      %v2525 = vpop.f32.mrf.mxu0
      %v2526 = vadd.f32 0.0, %v2525
      %2527 = vmatmul.bf16.gmra.mxu0 %v2435
      %v2528 = vpop.f32.mrf.mxu0
      %v2529 = vadd.f32 0.0, %v2528
      %v2530 = vpop.f32.mrf.mxu0
      %v2531 = vadd.f32 0.0, %v2530
      %2532 = vmatmul.bf16.gmra.mxu0 %v2436
      %v2533 = vpop.f32.mrf.mxu0
      %v2534 = vadd.f32 0.0, %v2533
      %v2535 = vpop.f32.mrf.mxu0
      %v2536 = vadd.f32 0.0, %v2535
      %2537 = vmatmul.bf16.gmra.mxu0 %v2437
      %v2538 = vpop.f32.mrf.mxu0
      %v2539 = vadd.f32 0.0, %v2538
      %v2540 = vpop.f32.mrf.mxu0
      %v2541 = vadd.f32 0.0, %v2540
      %2542 = vmatmul.bf16.gmra.mxu0 %v2438
      %v2543 = vpop.f32.mrf.mxu0
      %v2544 = vadd.f32 0.0, %v2543
      %v2545 = vpop.f32.mrf.mxu0
      %v2546 = vadd.f32 0.0, %v2545
      %2547 = vmatmul.bf16.gmra.mxu0 %v2439
      %v2548 = vpop.f32.mrf.mxu0
      %v2549 = vadd.f32 0.0, %v2548
      %v2550 = vpop.f32.mrf.mxu0
      %v2551 = vadd.f32 0.0, %v2550
      %2552 = vmatmul.bf16.gmra.mxu0 %v2440
      %v2553 = vpop.f32.mrf.mxu0
      %v2554 = vadd.f32 0.0, %v2553
      %v2555 = vpop.f32.mrf.mxu0
      %v2556 = vadd.f32 0.0, %v2555
      %2557 = vmatmul.bf16.gmra.mxu0 %v2441
      %v2558 = vpop.f32.mrf.mxu0
      %v2559 = vadd.f32 0.0, %v2558
      %v2560 = vpop.f32.mrf.mxu0
      %v2561 = vadd.f32 0.0, %v2560
      %2562 = vmatmul.bf16.gmra.mxu0 %v2442
      %v2563 = vpop.f32.mrf.mxu0
      %v2564 = vadd.f32 0.0, %v2563
      %v2565 = vpop.f32.mrf.mxu0
      %v2566 = vadd.f32 0.0, %v2565
      %2567 = vmatmul.bf16.gmra.mxu0 %v2443
      %v2568 = vpop.f32.mrf.mxu0
      %v2569 = vadd.f32 0.0, %v2568
      %v2570 = vpop.f32.mrf.mxu0
      %v2571 = vadd.f32 0.0, %v2570
      %2572 = vmatmul.bf16.gmra.mxu0 %v2444
      %v2573 = vpop.f32.mrf.mxu0
      %v2574 = vadd.f32 0.0, %v2573
      %v2575 = vpop.f32.mrf.mxu0
      %v2576 = vadd.f32 0.0, %v2575
      %2577 = vmatmul.bf16.gmra.mxu0 %v2445
      %v2578 = vpop.f32.mrf.mxu0
      %v2579 = vadd.f32 0.0, %v2578
      %v2580 = vpop.f32.mrf.mxu0
      %v2581 = vadd.f32 0.0, %v2580
      %2582 = vmatmul.bf16.gmra.mxu0 %v2446
      %v2583 = vpop.f32.mrf.mxu0
      %v2584 = vadd.f32 0.0, %v2583
      %v2585 = vpop.f32.mrf.mxu0
      %v2586 = vadd.f32 0.0, %v2585
      %2587 = vmatmul.bf16.gmra.mxu0 %v2447
      %v2588 = vpop.f32.mrf.mxu0
      %v2589 = vadd.f32 0.0, %v2588
      %v2590 = vpop.f32.mrf.mxu0
      %v2591 = vadd.f32 0.0, %v2590
      %2592 = vmatmul.bf16.gmra.mxu0 %v2448
      %v2593 = vpop.f32.mrf.mxu0
      %v2594 = vadd.f32 0.0, %v2593
      %v2595 = vpop.f32.mrf.mxu0
      %v2596 = vadd.f32 0.0, %v2595
      %2597 = vmatmul.bf16.gmra.mxu0 %v2449
      %v2598 = vpop.f32.mrf.mxu0
      %v2599 = vadd.f32 0.0, %v2598
      %v2600 = vpop.f32.mrf.mxu0
      %v2601 = vadd.f32 0.0, %v2600
      %2602 = vdwg.mxu0
      %v2603 = vadd.f32 %v2289, %v2524
      %v2604 = vadd.f32 %v2290, %v2526
      %v2605 = vadd.f32 %v2291, %v2529
      %v2606 = vadd.f32 %v2292, %v2531
      %v2607 = vadd.f32 %v2293, %v2534
      %v2608 = vadd.f32 %v2294, %v2536
      %v2609 = vadd.f32 %v2295, %v2539
      %v2610 = vadd.f32 %v2296, %v2541
      %v2611 = vadd.f32 %v2297, %v2544
      %v2612 = vadd.f32 %v2298, %v2546
      %v2613 = vadd.f32 %v2299, %v2549
      %v2614 = vadd.f32 %v2300, %v2551
      %v2615 = vadd.f32 %v2301, %v2554
      %v2616 = vadd.f32 %v2302, %v2556
      %v2617 = vadd.f32 %v2303, %v2559
      %v2618 = vadd.f32 %v2304, %v2561
      %v2619 = vadd.f32 %v2305, %v2564
      %v2620 = vadd.f32 %v2306, %v2566
      %v2621 = vadd.f32 %v2307, %v2569
      %v2622 = vadd.f32 %v2308, %v2571
      %v2623 = vadd.f32 %v2309, %v2574
      %v2624 = vadd.f32 %v2310, %v2576
      %v2625 = vadd.f32 %v2311, %v2579
      %v2626 = vadd.f32 %v2312, %v2581
      %v2627 = vadd.f32 %v2313, %v2584
      %v2628 = vadd.f32 %v2314, %v2586
      %v2629 = vadd.f32 %v2315, %v2589
      %v2630 = vadd.f32 %v2316, %v2591
      %v2631 = vadd.f32 %v2317, %v2594
      %v2632 = vadd.f32 %v2318, %v2596
      %v2633 = vadd.f32 %v2319, %v2599
      %v2634 = vadd.f32 %v2320, %v2601
      %v2635 = vld [vmem:[%s275] sm:$0xe]
      %v2636 = vld [vmem:[%s275 + $0xc] sm:$0xe]
      %v2637 = vld [vmem:[%s275 + $0x18] sm:$0xe]
      %v2638 = vld [vmem:[%s275 + $0x24] sm:$0xe]
      %v2639 = vld [vmem:[%s275 + $0x30] sm:$0xe]
      %v2640 = vld [vmem:[%s275 + $0x3c] sm:$0xe]
      %v2641 = vld [vmem:[%s275 + $0x48] sm:$0xe]
      %v2642 = vld [vmem:[%s275 + $0x54] sm:$0xe]
      %v2643 = vld [vmem:[%s275 + $0x60] sm:$0xe]
      %v2644 = vld [vmem:[%s275 + $0x6c] sm:$0xe]
      %v2645 = vld [vmem:[%s275 + $0x78] sm:$0xe]
      %v2646 = vld [vmem:[%s275 + $0x84] sm:$0xe]
      %v2647 = vld [vmem:[%s275 + $0x90] sm:$0xe]
      %v2648 = vld [vmem:[%s275 + $0x9c] sm:$0xe]
      %v2649 = vld [vmem:[%s275 + $0xa8] sm:$0xe]
      %v2650 = vld [vmem:[%s275 + $0xb4] sm:$0xe]
      %v2699 = vrot.slane %v2635, 5
      %v2700 = vrot.slane %v2699, 4
      %v2701 = vrot.slane %v277, 5
      %v2702 = vsel %vm1958, %v2700, %v2701
      %v2703 = vrot.slane %v2701, 4
      %v2704 = vrot.slane %v278, 5
      %v2705 = vsel %vm1958, %v2703, %v2704
      %v2706 = vrot.slane %v2636, 5
      %v2707 = vrot.slane %v2706, 4
      %v2708 = vrot.slane %v280, 5
      %v2709 = vsel %vm1958, %v2707, %v2708
      %v2710 = vrot.slane %v2708, 4
      %v2711 = vrot.slane %v281, 5
      %v2712 = vsel %vm1958, %v2710, %v2711
      %v2713 = vrot.slane %v2637, 5
      %v2714 = vrot.slane %v2713, 4
      %v2715 = vrot.slane %v283, 5
      %v2716 = vsel %vm1958, %v2714, %v2715
      %v2717 = vrot.slane %v2715, 4
      %v2718 = vrot.slane %v284, 5
      %v2719 = vsel %vm1958, %v2717, %v2718
      %v2720 = vrot.slane %v2638, 5
      %v2721 = vrot.slane %v2720, 4
      %v2722 = vrot.slane %v286, 5
      %v2723 = vsel %vm1958, %v2721, %v2722
      %v2724 = vrot.slane %v2722, 4
      %v2725 = vrot.slane %v287, 5
      %v2726 = vsel %vm1958, %v2724, %v2725
      %v2727 = vrot.slane %v2639, 5
      %v2728 = vrot.slane %v2727, 4
      %v2729 = vrot.slane %v289, 5
      %v2730 = vsel %vm1958, %v2728, %v2729
      %v2731 = vrot.slane %v2729, 4
      %v2732 = vrot.slane %v290, 5
      %v2733 = vsel %vm1958, %v2731, %v2732
      %v2734 = vrot.slane %v2640, 5
      %v2735 = vrot.slane %v2734, 4
      %v2736 = vrot.slane %v292, 5
      %v2737 = vsel %vm1958, %v2735, %v2736
      %v2738 = vrot.slane %v2736, 4
      %v2739 = vrot.slane %v293, 5
      %v2740 = vsel %vm1958, %v2738, %v2739
      %v2741 = vrot.slane %v2641, 5
      %v2742 = vrot.slane %v2741, 4
      %v2743 = vrot.slane %v295, 5
      %v2744 = vsel %vm1958, %v2742, %v2743
      %v2745 = vrot.slane %v2743, 4
      %v2746 = vrot.slane %v296, 5
      %v2747 = vsel %vm1958, %v2745, %v2746
      %v2748 = vrot.slane %v2642, 5
      %v2749 = vrot.slane %v2748, 4
      %v2750 = vrot.slane %v298, 5
      %v2751 = vsel %vm1958, %v2749, %v2750
      %v2752 = vrot.slane %v2750, 4
      %v2753 = vrot.slane %v299, 5
      %v2754 = vsel %vm1958, %v2752, %v2753
      %v2755 = vrot.slane %v2643, 5
      %v2756 = vrot.slane %v2755, 4
      %v2757 = vrot.slane %v301, 5
      %v2758 = vsel %vm1958, %v2756, %v2757
      %v2759 = vrot.slane %v2757, 4
      %v2760 = vrot.slane %v302, 5
      %v2761 = vsel %vm1958, %v2759, %v2760
      %v2762 = vrot.slane %v2644, 5
      %v2763 = vrot.slane %v2762, 4
      %v2764 = vrot.slane %v304, 5
      %v2765 = vsel %vm1958, %v2763, %v2764
      %v2766 = vrot.slane %v2764, 4
      %v2767 = vrot.slane %v305, 5
      %v2768 = vsel %vm1958, %v2766, %v2767
      %v2769 = vrot.slane %v2645, 5
      %v2770 = vrot.slane %v2769, 4
      %v2771 = vrot.slane %v307, 5
      %v2772 = vsel %vm1958, %v2770, %v2771
      %v2773 = vrot.slane %v2771, 4
      %v2774 = vrot.slane %v308, 5
      %v2775 = vsel %vm1958, %v2773, %v2774
      %v2776 = vrot.slane %v2646, 5
      %v2777 = vrot.slane %v2776, 4
      %v2778 = vrot.slane %v310, 5
      %v2779 = vsel %vm1958, %v2777, %v2778
      %v2780 = vrot.slane %v2778, 4
      %v2781 = vrot.slane %v311, 5
      %v2782 = vsel %vm1958, %v2780, %v2781
      %v2783 = vrot.slane %v2647, 5
      %v2784 = vrot.slane %v2783, 4
      %v2785 = vrot.slane %v313, 5
      %v2786 = vsel %vm1958, %v2784, %v2785
      %v2787 = vrot.slane %v2785, 4
      %v2788 = vrot.slane %v314, 5
      %v2789 = vsel %vm1958, %v2787, %v2788
      %v2790 = vrot.slane %v2648, 5
      %v2791 = vrot.slane %v2790, 4
      %v2792 = vrot.slane %v316, 5
      %v2793 = vsel %vm1958, %v2791, %v2792
      %v2794 = vrot.slane %v2792, 4
      %v2795 = vrot.slane %v317, 5
      %v2796 = vsel %vm1958, %v2794, %v2795
      %v2797 = vrot.slane %v2649, 5
      %v2798 = vrot.slane %v2797, 4
      %v2799 = vrot.slane %v319, 5
      %v2800 = vsel %vm1958, %v2798, %v2799
      %v2801 = vrot.slane %v2799, 4
      %v2802 = vrot.slane %v320, 5
      %v2803 = vsel %vm1958, %v2801, %v2802
      %v2804 = vrot.slane %v2650, 5
      %v2805 = vrot.slane %v2804, 4
      %v2806 = vrot.slane %v322, 5
      %v2807 = vsel %vm1958, %v2805, %v2806
      %v2808 = vrot.slane %v2806, 4
      %v2809 = vrot.slane %v323, 5
      %v2810 = vsel %vm1958, %v2808, %v2809
      %s2811 = scalar_lea.vmem %s1, 320
      %v2812 = vld [vmem:[%s2811] sm:$0xf]
      %v2813 = vld [vmem:[%s2811 + $0x4] sm:$0xf]
      %v2814 = vld [vmem:[%s2811 + $0x8] sm:$0xf]
      %v2815 = vld [vmem:[%s2811 + $0xc] sm:$0xf]
      %v2816 = vld [vmem:[%s2811 + $0x10] sm:$0xf]
      %v2817 = vld [vmem:[%s2811 + $0x14] sm:$0xf]
      %v2818 = vld [vmem:[%s2811 + $0x18] sm:$0xf]
      %v2819 = vld [vmem:[%s2811 + $0x1c] sm:$0xf]
      %v2820 = vld [vmem:[%s2811 + $0x20] sm:$0xf]
      %v2821 = vld [vmem:[%s2811 + $0x24] sm:$0xf]
      %v2822 = vld [vmem:[%s2811 + $0x28] sm:$0xf]
      %v2823 = vld [vmem:[%s2811 + $0x2c] sm:$0xf]
      %v2824 = vld [vmem:[%s2811 + $0x30] sm:$0xf]
      %v2825 = vld [vmem:[%s2811 + $0x34] sm:$0xf]
      %v2826 = vld [vmem:[%s2811 + $0x38] sm:$0xf]
      %v2827 = vld [vmem:[%s2811 + $0x3c] sm:$0xf]
      %v2828 = vunpack.c.l.b16 %v2702
      %v2829 = vunpack.c.l.b16 %v2705
      %v2830 = vunpack.c.l.b16 %v2709
      %v2831 = vunpack.c.l.b16 %v2712
      %v2832 = vunpack.c.l.b16 %v2716
      %v2833 = vunpack.c.l.b16 %v2719
      %v2834 = vunpack.c.l.b16 %v2723
      %v2835 = vunpack.c.l.b16 %v2726
      %v2836 = vunpack.c.l.b16 %v2730
      %v2837 = vunpack.c.l.b16 %v2733
      %v2838 = vunpack.c.l.b16 %v2737
      %v2839 = vunpack.c.l.b16 %v2740
      %v2840 = vunpack.c.l.b16 %v2744
      %v2841 = vunpack.c.l.b16 %v2747
      %v2842 = vunpack.c.l.b16 %v2751
      %v2843 = vunpack.c.l.b16 %v2754
      %v2844 = vunpack.c.l.b16 %v2758
      %v2845 = vunpack.c.l.b16 %v2761
      %v2846 = vunpack.c.l.b16 %v2765
      %v2847 = vunpack.c.l.b16 %v2768
      %v2848 = vunpack.c.l.b16 %v2772
      %v2849 = vunpack.c.l.b16 %v2775
      %v2850 = vunpack.c.l.b16 %v2779
      %v2851 = vunpack.c.l.b16 %v2782
      %v2852 = vunpack.c.l.b16 %v2786
      %v2853 = vunpack.c.l.b16 %v2789
      %v2854 = vunpack.c.l.b16 %v2793
      %v2855 = vunpack.c.l.b16 %v2796
      %v2856 = vunpack.c.l.b16 %v2800
      %v2857 = vunpack.c.l.b16 %v2803
      %v2858 = vunpack.c.l.b16 %v2807
      %v2859 = vunpack.c.l.b16 %v2810
      %v2860 = vpack.c.b16 %v2829, %v2828
      %v2861 = vpack.c.b16 %v2831, %v2830
      %v2862 = vpack.c.b16 %v2833, %v2832
      %v2863 = vpack.c.b16 %v2835, %v2834
      %v2864 = vpack.c.b16 %v2837, %v2836
      %v2865 = vpack.c.b16 %v2839, %v2838
      %v2866 = vpack.c.b16 %v2841, %v2840
      %v2867 = vpack.c.b16 %v2843, %v2842
      %v2868 = vpack.c.b16 %v2845, %v2844
      %v2869 = vpack.c.b16 %v2847, %v2846
      %v2870 = vpack.c.b16 %v2849, %v2848
      %v2871 = vpack.c.b16 %v2851, %v2850
      %v2872 = vpack.c.b16 %v2853, %v2852
      %v2873 = vpack.c.b16 %v2855, %v2854
      %v2874 = vpack.c.b16 %v2857, %v2856
      %v2875 = vpack.c.b16 %v2859, %v2858
      %v2908 = vunpack.c.l.b16 %v2812
      %v2909 = vunpack.c.l.b16 %v2813
      %v2910 = vunpack.c.l.b16 %v2814
      %v2911 = vunpack.c.l.b16 %v2815
      %v2912 = vunpack.c.l.b16 %v2816
      %v2913 = vunpack.c.l.b16 %v2817
      %v2914 = vunpack.c.l.b16 %v2818
      %v2915 = vunpack.c.l.b16 %v2819
      %v2916 = vunpack.c.l.b16 %v2820
      %v2917 = vunpack.c.l.b16 %v2821
      %v2918 = vunpack.c.l.b16 %v2822
      %v2919 = vunpack.c.l.b16 %v2823
      %v2920 = vunpack.c.l.b16 %v2824
      %v2921 = vunpack.c.l.b16 %v2825
      %v2922 = vunpack.c.l.b16 %v2826
      %v2923 = vunpack.c.l.b16 %v2827
      %v2924 = vpack.c.b16 %v2909, %v2908
      %v2925 = vpack.c.b16 %v2911, %v2910
      %v2926 = vpack.c.b16 %v2913, %v2912
      %v2927 = vpack.c.b16 %v2915, %v2914
      %v2928 = vpack.c.b16 %v2917, %v2916
      %v2929 = vpack.c.b16 %v2919, %v2918
      %v2930 = vpack.c.b16 %v2921, %v2920
      %v2931 = vpack.c.b16 %v2923, %v2922
      %2940 = vmatpush.bf16.msra.mxu0 %v2931
      %2941 = vmatpush.bf16.msra.mxu0 %v2930
      %2942 = vmatpush.bf16.msra.mxu0 %v2929
      %2943 = vmatpush.bf16.msra.mxu0 %v2928
      %2944 = vmatpush.bf16.msra.mxu0 %v2927
      %2945 = vmatpush.bf16.msra.mxu0 %v2926
      %2946 = vmatpush.bf16.msra.mxu0 %v2925
      %2947 = vmatpush.bf16.msra.mxu0 %v2924
      %2948 = vmatmul.bf16.gmra.mxu0 %v2860
      %v2949 = vpop.f32.mrf.mxu0
      %v2950 = vadd.f32 0.0, %v2949
      %v2951 = vpop.f32.mrf.mxu0
      %v2952 = vadd.f32 0.0, %v2951
      %2953 = vmatmul.bf16.gmra.mxu0 %v2861
      %v2954 = vpop.f32.mrf.mxu0
      %v2955 = vadd.f32 0.0, %v2954
      %v2956 = vpop.f32.mrf.mxu0
      %v2957 = vadd.f32 0.0, %v2956
      %2958 = vmatmul.bf16.gmra.mxu0 %v2862
      %v2959 = vpop.f32.mrf.mxu0
      %v2960 = vadd.f32 0.0, %v2959
      %v2961 = vpop.f32.mrf.mxu0
      %v2962 = vadd.f32 0.0, %v2961
      %2963 = vmatmul.bf16.gmra.mxu0 %v2863
      %v2964 = vpop.f32.mrf.mxu0
      %v2965 = vadd.f32 0.0, %v2964
      %v2966 = vpop.f32.mrf.mxu0
      %v2967 = vadd.f32 0.0, %v2966
      %2968 = vmatmul.bf16.gmra.mxu0 %v2864
      %v2969 = vpop.f32.mrf.mxu0
      %v2970 = vadd.f32 0.0, %v2969
      %v2971 = vpop.f32.mrf.mxu0
      %v2972 = vadd.f32 0.0, %v2971
      %2973 = vmatmul.bf16.gmra.mxu0 %v2865
      %v2974 = vpop.f32.mrf.mxu0
      %v2975 = vadd.f32 0.0, %v2974
      %v2976 = vpop.f32.mrf.mxu0
      %v2977 = vadd.f32 0.0, %v2976
      %2978 = vmatmul.bf16.gmra.mxu0 %v2866
      %v2979 = vpop.f32.mrf.mxu0
      %v2980 = vadd.f32 0.0, %v2979
      %v2981 = vpop.f32.mrf.mxu0
      %v2982 = vadd.f32 0.0, %v2981
      %2983 = vmatmul.bf16.gmra.mxu0 %v2867
      %v2984 = vpop.f32.mrf.mxu0
      %v2985 = vadd.f32 0.0, %v2984
      %v2986 = vpop.f32.mrf.mxu0
      %v2987 = vadd.f32 0.0, %v2986
      %2988 = vmatmul.bf16.gmra.mxu0 %v2868
      %v2989 = vpop.f32.mrf.mxu0
      %v2990 = vadd.f32 0.0, %v2989
      %v2991 = vpop.f32.mrf.mxu0
      %v2992 = vadd.f32 0.0, %v2991
      %2993 = vmatmul.bf16.gmra.mxu0 %v2869
      %v2994 = vpop.f32.mrf.mxu0
      %v2995 = vadd.f32 0.0, %v2994
      %v2996 = vpop.f32.mrf.mxu0
      %v2997 = vadd.f32 0.0, %v2996
      %2998 = vmatmul.bf16.gmra.mxu0 %v2870
      %v2999 = vpop.f32.mrf.mxu0
      %v3000 = vadd.f32 0.0, %v2999
      %v3001 = vpop.f32.mrf.mxu0
      %v3002 = vadd.f32 0.0, %v3001
      %3003 = vmatmul.bf16.gmra.mxu0 %v2871
      %v3004 = vpop.f32.mrf.mxu0
      %v3005 = vadd.f32 0.0, %v3004
      %v3006 = vpop.f32.mrf.mxu0
      %v3007 = vadd.f32 0.0, %v3006
      %3008 = vmatmul.bf16.gmra.mxu0 %v2872
      %v3009 = vpop.f32.mrf.mxu0
      %v3010 = vadd.f32 0.0, %v3009
      %v3011 = vpop.f32.mrf.mxu0
      %v3012 = vadd.f32 0.0, %v3011
      %3013 = vmatmul.bf16.gmra.mxu0 %v2873
      %v3014 = vpop.f32.mrf.mxu0
      %v3015 = vadd.f32 0.0, %v3014
      %v3016 = vpop.f32.mrf.mxu0
      %v3017 = vadd.f32 0.0, %v3016
      %3018 = vmatmul.bf16.gmra.mxu0 %v2874
      %v3019 = vpop.f32.mrf.mxu0
      %v3020 = vadd.f32 0.0, %v3019
      %v3021 = vpop.f32.mrf.mxu0
      %v3022 = vadd.f32 0.0, %v3021
      %3023 = vmatmul.bf16.gmra.mxu0 %v2875
      %v3024 = vpop.f32.mrf.mxu0
      %v3025 = vadd.f32 0.0, %v3024
      %v3026 = vpop.f32.mrf.mxu0
      %v3027 = vadd.f32 0.0, %v3026
      %3028 = vdwg.mxu0
      %v3029 = vadd.f32 %v2603, %v2950
      %v3030 = vadd.f32 %v2604, %v2952
      %v3031 = vadd.f32 %v2605, %v2955
      %v3032 = vadd.f32 %v2606, %v2957
      %v3033 = vadd.f32 %v2607, %v2960
      %v3034 = vadd.f32 %v2608, %v2962
      %v3035 = vadd.f32 %v2609, %v2965
      %v3036 = vadd.f32 %v2610, %v2967
      %v3037 = vadd.f32 %v2611, %v2970
      %v3038 = vadd.f32 %v2612, %v2972
      %v3039 = vadd.f32 %v2613, %v2975
      %v3040 = vadd.f32 %v2614, %v2977
      %v3041 = vadd.f32 %v2615, %v2980
      %v3042 = vadd.f32 %v2616, %v2982
      %v3043 = vadd.f32 %v2617, %v2985
      %v3044 = vadd.f32 %v2618, %v2987
      %v3045 = vadd.f32 %v2619, %v2990
      %v3046 = vadd.f32 %v2620, %v2992
      %v3047 = vadd.f32 %v2621, %v2995
      %v3048 = vadd.f32 %v2622, %v2997
      %v3049 = vadd.f32 %v2623, %v3000
      %v3050 = vadd.f32 %v2624, %v3002
      %v3051 = vadd.f32 %v2625, %v3005
      %v3052 = vadd.f32 %v2626, %v3007
      %v3053 = vadd.f32 %v2627, %v3010
      %v3054 = vadd.f32 %v2628, %v3012
      %v3055 = vadd.f32 %v2629, %v3015
      %v3056 = vadd.f32 %v2630, %v3017
      %v3057 = vadd.f32 %v2631, %v3020
      %v3058 = vadd.f32 %v2632, %v3022
      %v3059 = vadd.f32 %v2633, %v3025
      %v3060 = vadd.f32 %v2634, %v3027
      %s3061 = scalar_lea.vmem %s260, 24
      %v3062 = vld [vmem:[%s3061] sm:$0xf]
      %v3063 = vld [vmem:[%s3061 + $0x4] sm:$0xf]
      %v3064 = vld [vmem:[%s3061 + $0xc] sm:$0xf]
      %v3065 = vld [vmem:[%s3061 + $0x10] sm:$0xf]
      %v3066 = vld [vmem:[%s3061 + $0x18] sm:$0xf]
      %v3067 = vld [vmem:[%s3061 + $0x1c] sm:$0xf]
      %v3068 = vld [vmem:[%s3061 + $0x24] sm:$0xf]
      %v3069 = vld [vmem:[%s3061 + $0x28] sm:$0xf]
      %v3070 = vld [vmem:[%s3061 + $0x30] sm:$0xf]
      %v3071 = vld [vmem:[%s3061 + $0x34] sm:$0xf]
      %v3072 = vld [vmem:[%s3061 + $0x3c] sm:$0xf]
      %v3073 = vld [vmem:[%s3061 + $0x40] sm:$0xf]
      %v3074 = vld [vmem:[%s3061 + $0x48] sm:$0xf]
      %v3075 = vld [vmem:[%s3061 + $0x4c] sm:$0xf]
      %v3076 = vld [vmem:[%s3061 + $0x54] sm:$0xf]
      %v3077 = vld [vmem:[%s3061 + $0x58] sm:$0xf]
      %v3078 = vld [vmem:[%s3061 + $0x60] sm:$0xf]
      %v3079 = vld [vmem:[%s3061 + $0x64] sm:$0xf]
      %v3080 = vld [vmem:[%s3061 + $0x6c] sm:$0xf]
      %v3081 = vld [vmem:[%s3061 + $0x70] sm:$0xf]
      %v3082 = vld [vmem:[%s3061 + $0x78] sm:$0xf]
      %v3083 = vld [vmem:[%s3061 + $0x7c] sm:$0xf]
      %v3084 = vld [vmem:[%s3061 + $0x84] sm:$0xf]
      %v3085 = vld [vmem:[%s3061 + $0x88] sm:$0xf]
      %v3086 = vld [vmem:[%s3061 + $0x90] sm:$0xf]
      %v3087 = vld [vmem:[%s3061 + $0x94] sm:$0xf]
      %v3088 = vld [vmem:[%s3061 + $0x9c] sm:$0xf]
      %v3089 = vld [vmem:[%s3061 + $0xa0] sm:$0xf]
      %v3090 = vld [vmem:[%s3061 + $0xa8] sm:$0xf]
      %v3091 = vld [vmem:[%s3061 + $0xac] sm:$0xf]
      %v3092 = vld [vmem:[%s3061 + $0xb4] sm:$0xf]
      %v3093 = vld [vmem:[%s3061 + $0xb8] sm:$0xf]
      %s3094 = scalar_lea.vmem %s1, 384
      %v3095 = vld [vmem:[%s3094] sm:$0xf]
      %v3096 = vld [vmem:[%s3094 + $0x4] sm:$0xf]
      %v3097 = vld [vmem:[%s3094 + $0x8] sm:$0xf]
      %v3098 = vld [vmem:[%s3094 + $0xc] sm:$0xf]
      %v3099 = vld [vmem:[%s3094 + $0x10] sm:$0xf]
      %v3100 = vld [vmem:[%s3094 + $0x14] sm:$0xf]
      %v3101 = vld [vmem:[%s3094 + $0x18] sm:$0xf]
      %v3102 = vld [vmem:[%s3094 + $0x1c] sm:$0xf]
      %v3103 = vld [vmem:[%s3094 + $0x20] sm:$0xf]
      %v3104 = vld [vmem:[%s3094 + $0x24] sm:$0xf]
      %v3105 = vld [vmem:[%s3094 + $0x28] sm:$0xf]
      %v3106 = vld [vmem:[%s3094 + $0x2c] sm:$0xf]
      %v3107 = vld [vmem:[%s3094 + $0x30] sm:$0xf]
      %v3108 = vld [vmem:[%s3094 + $0x34] sm:$0xf]
      %v3109 = vld [vmem:[%s3094 + $0x38] sm:$0xf]
      %v3110 = vld [vmem:[%s3094 + $0x3c] sm:$0xf]
      %v3143 = vunpack.c.l.b16 %v3062
      %v3144 = vunpack.c.l.b16 %v3063
      %v3145 = vunpack.c.l.b16 %v3064
      %v3146 = vunpack.c.l.b16 %v3065
      %v3147 = vunpack.c.l.b16 %v3066
      %v3148 = vunpack.c.l.b16 %v3067
      %v3149 = vunpack.c.l.b16 %v3068
      %v3150 = vunpack.c.l.b16 %v3069
      %v3151 = vunpack.c.l.b16 %v3070
      %v3152 = vunpack.c.l.b16 %v3071
      %v3153 = vunpack.c.l.b16 %v3072
      %v3154 = vunpack.c.l.b16 %v3073
      %v3155 = vunpack.c.l.b16 %v3074
      %v3156 = vunpack.c.l.b16 %v3075
      %v3157 = vunpack.c.l.b16 %v3076
      %v3158 = vunpack.c.l.b16 %v3077
      %v3159 = vunpack.c.l.b16 %v3078
      %v3160 = vunpack.c.l.b16 %v3079
      %v3161 = vunpack.c.l.b16 %v3080
      %v3162 = vunpack.c.l.b16 %v3081
      %v3163 = vunpack.c.l.b16 %v3082
      %v3164 = vunpack.c.l.b16 %v3083
      %v3165 = vunpack.c.l.b16 %v3084
      %v3166 = vunpack.c.l.b16 %v3085
      %v3167 = vunpack.c.l.b16 %v3086
      %v3168 = vunpack.c.l.b16 %v3087
      %v3169 = vunpack.c.l.b16 %v3088
      %v3170 = vunpack.c.l.b16 %v3089
      %v3171 = vunpack.c.l.b16 %v3090
      %v3172 = vunpack.c.l.b16 %v3091
      %v3173 = vunpack.c.l.b16 %v3092
      %v3174 = vunpack.c.l.b16 %v3093
      %v3175 = vpack.c.b16 %v3144, %v3143
      %v3176 = vpack.c.b16 %v3146, %v3145
      %v3177 = vpack.c.b16 %v3148, %v3147
      %v3178 = vpack.c.b16 %v3150, %v3149
      %v3179 = vpack.c.b16 %v3152, %v3151
      %v3180 = vpack.c.b16 %v3154, %v3153
      %v3181 = vpack.c.b16 %v3156, %v3155
      %v3182 = vpack.c.b16 %v3158, %v3157
      %v3183 = vpack.c.b16 %v3160, %v3159
      %v3184 = vpack.c.b16 %v3162, %v3161
      %v3185 = vpack.c.b16 %v3164, %v3163
      %v3186 = vpack.c.b16 %v3166, %v3165
      %v3187 = vpack.c.b16 %v3168, %v3167
      %v3188 = vpack.c.b16 %v3170, %v3169
      %v3189 = vpack.c.b16 %v3172, %v3171
      %v3190 = vpack.c.b16 %v3174, %v3173
      %v3223 = vunpack.c.l.b16 %v3095
      %v3224 = vunpack.c.l.b16 %v3096
      %v3225 = vunpack.c.l.b16 %v3097
      %v3226 = vunpack.c.l.b16 %v3098
      %v3227 = vunpack.c.l.b16 %v3099
      %v3228 = vunpack.c.l.b16 %v3100
      %v3229 = vunpack.c.l.b16 %v3101
      %v3230 = vunpack.c.l.b16 %v3102
      %v3231 = vunpack.c.l.b16 %v3103
      %v3232 = vunpack.c.l.b16 %v3104
      %v3233 = vunpack.c.l.b16 %v3105
      %v3234 = vunpack.c.l.b16 %v3106
      %v3235 = vunpack.c.l.b16 %v3107
      %v3236 = vunpack.c.l.b16 %v3108
      %v3237 = vunpack.c.l.b16 %v3109
      %v3238 = vunpack.c.l.b16 %v3110
      %v3239 = vpack.c.b16 %v3224, %v3223
      %v3240 = vpack.c.b16 %v3226, %v3225
      %v3241 = vpack.c.b16 %v3228, %v3227
      %v3242 = vpack.c.b16 %v3230, %v3229
      %v3243 = vpack.c.b16 %v3232, %v3231
      %v3244 = vpack.c.b16 %v3234, %v3233
      %v3245 = vpack.c.b16 %v3236, %v3235
      %v3246 = vpack.c.b16 %v3238, %v3237
      %3255 = vmatpush.bf16.msra.mxu0 %v3246
      %3256 = vmatpush.bf16.msra.mxu0 %v3245
      %3257 = vmatpush.bf16.msra.mxu0 %v3244
      %3258 = vmatpush.bf16.msra.mxu0 %v3243
      %3259 = vmatpush.bf16.msra.mxu0 %v3242
      %3260 = vmatpush.bf16.msra.mxu0 %v3241
      %3261 = vmatpush.bf16.msra.mxu0 %v3240
      %3262 = vmatpush.bf16.msra.mxu0 %v3239
      %3263 = vmatmul.bf16.gmra.mxu0 %v3175
      %v3264 = vpop.f32.mrf.mxu0
      %v3265 = vadd.f32 0.0, %v3264
      %v3266 = vpop.f32.mrf.mxu0
      %v3267 = vadd.f32 0.0, %v3266
      %3268 = vmatmul.bf16.gmra.mxu0 %v3176
      %v3269 = vpop.f32.mrf.mxu0
      %v3270 = vadd.f32 0.0, %v3269
      %v3271 = vpop.f32.mrf.mxu0
      %v3272 = vadd.f32 0.0, %v3271
      %3273 = vmatmul.bf16.gmra.mxu0 %v3177
      %v3274 = vpop.f32.mrf.mxu0
      %v3275 = vadd.f32 0.0, %v3274
      %v3276 = vpop.f32.mrf.mxu0
      %v3277 = vadd.f32 0.0, %v3276
      %3278 = vmatmul.bf16.gmra.mxu0 %v3178
      %v3279 = vpop.f32.mrf.mxu0
      %v3280 = vadd.f32 0.0, %v3279
      %v3281 = vpop.f32.mrf.mxu0
      %v3282 = vadd.f32 0.0, %v3281
      %3283 = vmatmul.bf16.gmra.mxu0 %v3179
      %v3284 = vpop.f32.mrf.mxu0
      %v3285 = vadd.f32 0.0, %v3284
      %v3286 = vpop.f32.mrf.mxu0
      %v3287 = vadd.f32 0.0, %v3286
      %3288 = vmatmul.bf16.gmra.mxu0 %v3180
      %v3289 = vpop.f32.mrf.mxu0
      %v3290 = vadd.f32 0.0, %v3289
      %v3291 = vpop.f32.mrf.mxu0
      %v3292 = vadd.f32 0.0, %v3291
      %3293 = vmatmul.bf16.gmra.mxu0 %v3181
      %v3294 = vpop.f32.mrf.mxu0
      %v3295 = vadd.f32 0.0, %v3294
      %v3296 = vpop.f32.mrf.mxu0
      %v3297 = vadd.f32 0.0, %v3296
      %3298 = vmatmul.bf16.gmra.mxu0 %v3182
      %v3299 = vpop.f32.mrf.mxu0
      %v3300 = vadd.f32 0.0, %v3299
      %v3301 = vpop.f32.mrf.mxu0
      %v3302 = vadd.f32 0.0, %v3301
      %3303 = vmatmul.bf16.gmra.mxu0 %v3183
      %v3304 = vpop.f32.mrf.mxu0
      %v3305 = vadd.f32 0.0, %v3304
      %v3306 = vpop.f32.mrf.mxu0
      %v3307 = vadd.f32 0.0, %v3306
      %3308 = vmatmul.bf16.gmra.mxu0 %v3184
      %v3309 = vpop.f32.mrf.mxu0
      %v3310 = vadd.f32 0.0, %v3309
      %v3311 = vpop.f32.mrf.mxu0
      %v3312 = vadd.f32 0.0, %v3311
      %3313 = vmatmul.bf16.gmra.mxu0 %v3185
      %v3314 = vpop.f32.mrf.mxu0
      %v3315 = vadd.f32 0.0, %v3314
      %v3316 = vpop.f32.mrf.mxu0
      %v3317 = vadd.f32 0.0, %v3316
      %3318 = vmatmul.bf16.gmra.mxu0 %v3186
      %v3319 = vpop.f32.mrf.mxu0
      %v3320 = vadd.f32 0.0, %v3319
      %v3321 = vpop.f32.mrf.mxu0
      %v3322 = vadd.f32 0.0, %v3321
      %3323 = vmatmul.bf16.gmra.mxu0 %v3187
      %v3324 = vpop.f32.mrf.mxu0
      %v3325 = vadd.f32 0.0, %v3324
      %v3326 = vpop.f32.mrf.mxu0
      %v3327 = vadd.f32 0.0, %v3326
      %3328 = vmatmul.bf16.gmra.mxu0 %v3188
      %v3329 = vpop.f32.mrf.mxu0
      %v3330 = vadd.f32 0.0, %v3329
      %v3331 = vpop.f32.mrf.mxu0
      %v3332 = vadd.f32 0.0, %v3331
      %3333 = vmatmul.bf16.gmra.mxu0 %v3189
      %v3334 = vpop.f32.mrf.mxu0
      %v3335 = vadd.f32 0.0, %v3334
      %v3336 = vpop.f32.mrf.mxu0
      %v3337 = vadd.f32 0.0, %v3336
      %3338 = vmatmul.bf16.gmra.mxu0 %v3190
      %v3339 = vpop.f32.mrf.mxu0
      %v3340 = vadd.f32 0.0, %v3339
      %v3341 = vpop.f32.mrf.mxu0
      %v3342 = vadd.f32 0.0, %v3341
      %3343 = vdwg.mxu0
      %v3344 = vadd.f32 %v3029, %v3265
      %v3345 = vadd.f32 %v3030, %v3267
      %v3346 = vadd.f32 %v3031, %v3270
      %v3347 = vadd.f32 %v3032, %v3272
      %v3348 = vadd.f32 %v3033, %v3275
      %v3349 = vadd.f32 %v3034, %v3277
      %v3350 = vadd.f32 %v3035, %v3280
      %v3351 = vadd.f32 %v3036, %v3282
      %v3352 = vadd.f32 %v3037, %v3285
      %v3353 = vadd.f32 %v3038, %v3287
      %v3354 = vadd.f32 %v3039, %v3290
      %v3355 = vadd.f32 %v3040, %v3292
      %v3356 = vadd.f32 %v3041, %v3295
      %v3357 = vadd.f32 %v3042, %v3297
      %v3358 = vadd.f32 %v3043, %v3300
      %v3359 = vadd.f32 %v3044, %v3302
      %v3360 = vadd.f32 %v3045, %v3305
      %v3361 = vadd.f32 %v3046, %v3307
      %v3362 = vadd.f32 %v3047, %v3310
      %v3363 = vadd.f32 %v3048, %v3312
      %v3364 = vadd.f32 %v3049, %v3315
      %v3365 = vadd.f32 %v3050, %v3317
      %v3366 = vadd.f32 %v3051, %v3320
      %v3367 = vadd.f32 %v3052, %v3322
      %v3368 = vadd.f32 %v3053, %v3325
      %v3369 = vadd.f32 %v3054, %v3327
      %v3370 = vadd.f32 %v3055, %v3330
      %v3371 = vadd.f32 %v3056, %v3332
      %v3372 = vadd.f32 %v3057, %v3335
      %v3373 = vadd.f32 %v3058, %v3337
      %v3374 = vadd.f32 %v3059, %v3340
      %v3375 = vadd.f32 %v3060, %v3342
      %v3376 = vld [vmem:[%s3061] sm:$0xf]
      %v3377 = vld [vmem:[%s3061 + $0x4] sm:$0xf]
      %v3378 = vld [vmem:[%s3061 + $0x8] sm:$0x1]
      %v3379 = vld [vmem:[%s3061 + $0xc] sm:$0xf]
      %v3380 = vld [vmem:[%s3061 + $0x10] sm:$0xf]
      %v3381 = vld [vmem:[%s3061 + $0x14] sm:$0x1]
      %v3382 = vld [vmem:[%s3061 + $0x18] sm:$0xf]
      %v3383 = vld [vmem:[%s3061 + $0x1c] sm:$0xf]
      %v3384 = vld [vmem:[%s3061 + $0x20] sm:$0x1]
      %v3385 = vld [vmem:[%s3061 + $0x24] sm:$0xf]
      %v3386 = vld [vmem:[%s3061 + $0x28] sm:$0xf]
      %v3387 = vld [vmem:[%s3061 + $0x2c] sm:$0x1]
      %v3388 = vld [vmem:[%s3061 + $0x30] sm:$0xf]
      %v3389 = vld [vmem:[%s3061 + $0x34] sm:$0xf]
      %v3390 = vld [vmem:[%s3061 + $0x38] sm:$0x1]
      %v3391 = vld [vmem:[%s3061 + $0x3c] sm:$0xf]
      %v3392 = vld [vmem:[%s3061 + $0x40] sm:$0xf]
      %v3393 = vld [vmem:[%s3061 + $0x44] sm:$0x1]
      %v3394 = vld [vmem:[%s3061 + $0x48] sm:$0xf]
      %v3395 = vld [vmem:[%s3061 + $0x4c] sm:$0xf]
      %v3396 = vld [vmem:[%s3061 + $0x50] sm:$0x1]
      %v3397 = vld [vmem:[%s3061 + $0x54] sm:$0xf]
      %v3398 = vld [vmem:[%s3061 + $0x58] sm:$0xf]
      %v3399 = vld [vmem:[%s3061 + $0x5c] sm:$0x1]
      %v3400 = vld [vmem:[%s3061 + $0x60] sm:$0xf]
      %v3401 = vld [vmem:[%s3061 + $0x64] sm:$0xf]
      %v3402 = vld [vmem:[%s3061 + $0x68] sm:$0x1]
      %v3403 = vld [vmem:[%s3061 + $0x6c] sm:$0xf]
      %v3404 = vld [vmem:[%s3061 + $0x70] sm:$0xf]
      %v3405 = vld [vmem:[%s3061 + $0x74] sm:$0x1]
      %v3406 = vld [vmem:[%s3061 + $0x78] sm:$0xf]
      %v3407 = vld [vmem:[%s3061 + $0x7c] sm:$0xf]
      %v3408 = vld [vmem:[%s3061 + $0x80] sm:$0x1]
      %v3409 = vld [vmem:[%s3061 + $0x84] sm:$0xf]
      %v3410 = vld [vmem:[%s3061 + $0x88] sm:$0xf]
      %v3411 = vld [vmem:[%s3061 + $0x8c] sm:$0x1]
      %v3412 = vld [vmem:[%s3061 + $0x90] sm:$0xf]
      %v3413 = vld [vmem:[%s3061 + $0x94] sm:$0xf]
      %v3414 = vld [vmem:[%s3061 + $0x98] sm:$0x1]
      %v3415 = vld [vmem:[%s3061 + $0x9c] sm:$0xf]
      %v3416 = vld [vmem:[%s3061 + $0xa0] sm:$0xf]
      %v3417 = vld [vmem:[%s3061 + $0xa4] sm:$0x1]
      %v3418 = vld [vmem:[%s3061 + $0xa8] sm:$0xf]
      %v3419 = vld [vmem:[%s3061 + $0xac] sm:$0xf]
      %v3420 = vld [vmem:[%s3061 + $0xb0] sm:$0x1]
      %v3421 = vld [vmem:[%s3061 + $0xb4] sm:$0xf]
      %v3422 = vld [vmem:[%s3061 + $0xb8] sm:$0xf]
      %v3423 = vld [vmem:[%s3061 + $0xbc] sm:$0x1]
      %v3425 = vshrl.u32 %v3376, 16
      %v3427 = vrot.slane %v3425, 4
      %v3428 = vshll.u32 %v3376, 16
      %v3430 = vrot.slane %v3428, 5
      %v3431 = vor.u32 %v3427, %v3430
      %v3432 = vrot.slane %v3431, 4
      %v3434 = vshll.u32 %v3377, 16
      %v3436 = vrot.slane %v3434, 5
      %v3437 = vsel %vm326, %v3432, %v3436
      %v3438 = vshrl.u32 %v3377, 16
      %v3440 = vrot.slane %v3438, 4
      %v3441 = vor.u32 %v3440, %v3436
      %v3442 = vrot.slane %v3441, 4
      %v3444 = vshll.u32 %v3378, 16
      %v3446 = vrot.slane %v3444, 5
      %v3447 = vsel %vm326, %v3442, %v3446
      %v3449 = vshrl.u32 %v3379, 16
      %v3451 = vrot.slane %v3449, 4
      %v3452 = vshll.u32 %v3379, 16
      %v3454 = vrot.slane %v3452, 5
      %v3455 = vor.u32 %v3451, %v3454
      %v3456 = vrot.slane %v3455, 4
      %v3458 = vshll.u32 %v3380, 16
      %v3460 = vrot.slane %v3458, 5
      %v3461 = vsel %vm326, %v3456, %v3460
      %v3462 = vshrl.u32 %v3380, 16
      %v3464 = vrot.slane %v3462, 4
      %v3465 = vor.u32 %v3464, %v3460
      %v3466 = vrot.slane %v3465, 4
      %v3468 = vshll.u32 %v3381, 16
      %v3470 = vrot.slane %v3468, 5
      %v3471 = vsel %vm326, %v3466, %v3470
      %v3473 = vshrl.u32 %v3382, 16
      %v3475 = vrot.slane %v3473, 4
      %v3476 = vshll.u32 %v3382, 16
      %v3478 = vrot.slane %v3476, 5
      %v3479 = vor.u32 %v3475, %v3478
      %v3480 = vrot.slane %v3479, 4
      %v3482 = vshll.u32 %v3383, 16
      %v3484 = vrot.slane %v3482, 5
      %v3485 = vsel %vm326, %v3480, %v3484
      %v3486 = vshrl.u32 %v3383, 16
      %v3488 = vrot.slane %v3486, 4
      %v3489 = vor.u32 %v3488, %v3484
      %v3490 = vrot.slane %v3489, 4
      %v3492 = vshll.u32 %v3384, 16
      %v3494 = vrot.slane %v3492, 5
      %v3495 = vsel %vm326, %v3490, %v3494
      %v3497 = vshrl.u32 %v3385, 16
      %v3499 = vrot.slane %v3497, 4
      %v3500 = vshll.u32 %v3385, 16
      %v3502 = vrot.slane %v3500, 5
      %v3503 = vor.u32 %v3499, %v3502
      %v3504 = vrot.slane %v3503, 4
      %v3506 = vshll.u32 %v3386, 16
      %v3508 = vrot.slane %v3506, 5
      %v3509 = vsel %vm326, %v3504, %v3508
      %v3510 = vshrl.u32 %v3386, 16
      %v3512 = vrot.slane %v3510, 4
      %v3513 = vor.u32 %v3512, %v3508
      %v3514 = vrot.slane %v3513, 4
      %v3516 = vshll.u32 %v3387, 16
      %v3518 = vrot.slane %v3516, 5
      %v3519 = vsel %vm326, %v3514, %v3518
      %v3521 = vshrl.u32 %v3388, 16
      %v3523 = vrot.slane %v3521, 4
      %v3524 = vshll.u32 %v3388, 16
      %v3526 = vrot.slane %v3524, 5
      %v3527 = vor.u32 %v3523, %v3526
      %v3528 = vrot.slane %v3527, 4
      %v3530 = vshll.u32 %v3389, 16
      %v3532 = vrot.slane %v3530, 5
      %v3533 = vsel %vm326, %v3528, %v3532
      %v3534 = vshrl.u32 %v3389, 16
      %v3536 = vrot.slane %v3534, 4
      %v3537 = vor.u32 %v3536, %v3532
      %v3538 = vrot.slane %v3537, 4
      %v3540 = vshll.u32 %v3390, 16
      %v3542 = vrot.slane %v3540, 5
      %v3543 = vsel %vm326, %v3538, %v3542
      %v3545 = vshrl.u32 %v3391, 16
      %v3547 = vrot.slane %v3545, 4
      %v3548 = vshll.u32 %v3391, 16
      %v3550 = vrot.slane %v3548, 5
      %v3551 = vor.u32 %v3547, %v3550
      %v3552 = vrot.slane %v3551, 4
      %v3554 = vshll.u32 %v3392, 16
      %v3556 = vrot.slane %v3554, 5
      %v3557 = vsel %vm326, %v3552, %v3556
      %v3558 = vshrl.u32 %v3392, 16
      %v3560 = vrot.slane %v3558, 4
      %v3561 = vor.u32 %v3560, %v3556
      %v3562 = vrot.slane %v3561, 4
      %v3564 = vshll.u32 %v3393, 16
      %v3566 = vrot.slane %v3564, 5
      %v3567 = vsel %vm326, %v3562, %v3566
      %v3569 = vshrl.u32 %v3394, 16
      %v3571 = vrot.slane %v3569, 4
      %v3572 = vshll.u32 %v3394, 16
      %v3574 = vrot.slane %v3572, 5
      %v3575 = vor.u32 %v3571, %v3574
      %v3576 = vrot.slane %v3575, 4
      %v3578 = vshll.u32 %v3395, 16
      %v3580 = vrot.slane %v3578, 5
      %v3581 = vsel %vm326, %v3576, %v3580
      %v3582 = vshrl.u32 %v3395, 16
      %v3584 = vrot.slane %v3582, 4
      %v3585 = vor.u32 %v3584, %v3580
      %v3586 = vrot.slane %v3585, 4
      %v3588 = vshll.u32 %v3396, 16
      %v3590 = vrot.slane %v3588, 5
      %v3591 = vsel %vm326, %v3586, %v3590
      %v3593 = vshrl.u32 %v3397, 16
      %v3595 = vrot.slane %v3593, 4
      %v3596 = vshll.u32 %v3397, 16
      %v3598 = vrot.slane %v3596, 5
      %v3599 = vor.u32 %v3595, %v3598
      %v3600 = vrot.slane %v3599, 4
      %v3602 = vshll.u32 %v3398, 16
      %v3604 = vrot.slane %v3602, 5
      %v3605 = vsel %vm326, %v3600, %v3604
      %v3606 = vshrl.u32 %v3398, 16
      %v3608 = vrot.slane %v3606, 4
      %v3609 = vor.u32 %v3608, %v3604
      %v3610 = vrot.slane %v3609, 4
      %v3612 = vshll.u32 %v3399, 16
      %v3614 = vrot.slane %v3612, 5
      %v3615 = vsel %vm326, %v3610, %v3614
      %v3617 = vshrl.u32 %v3400, 16
      %v3619 = vrot.slane %v3617, 4
      %v3620 = vshll.u32 %v3400, 16
      %v3622 = vrot.slane %v3620, 5
      %v3623 = vor.u32 %v3619, %v3622
      %v3624 = vrot.slane %v3623, 4
      %v3626 = vshll.u32 %v3401, 16
      %v3628 = vrot.slane %v3626, 5
      %v3629 = vsel %vm326, %v3624, %v3628
      %v3630 = vshrl.u32 %v3401, 16
      %v3632 = vrot.slane %v3630, 4
      %v3633 = vor.u32 %v3632, %v3628
      %v3634 = vrot.slane %v3633, 4
      %v3636 = vshll.u32 %v3402, 16
      %v3638 = vrot.slane %v3636, 5
      %v3639 = vsel %vm326, %v3634, %v3638
      %v3641 = vshrl.u32 %v3403, 16
      %v3643 = vrot.slane %v3641, 4
      %v3644 = vshll.u32 %v3403, 16
      %v3646 = vrot.slane %v3644, 5
      %v3647 = vor.u32 %v3643, %v3646
      %v3648 = vrot.slane %v3647, 4
      %v3650 = vshll.u32 %v3404, 16
      %v3652 = vrot.slane %v3650, 5
      %v3653 = vsel %vm326, %v3648, %v3652
      %v3654 = vshrl.u32 %v3404, 16
      %v3656 = vrot.slane %v3654, 4
      %v3657 = vor.u32 %v3656, %v3652
      %v3658 = vrot.slane %v3657, 4
      %v3660 = vshll.u32 %v3405, 16
      %v3662 = vrot.slane %v3660, 5
      %v3663 = vsel %vm326, %v3658, %v3662
      %v3665 = vshrl.u32 %v3406, 16
      %v3667 = vrot.slane %v3665, 4
      %v3668 = vshll.u32 %v3406, 16
      %v3670 = vrot.slane %v3668, 5
      %v3671 = vor.u32 %v3667, %v3670
      %v3672 = vrot.slane %v3671, 4
      %v3674 = vshll.u32 %v3407, 16
      %v3676 = vrot.slane %v3674, 5
      %v3677 = vsel %vm326, %v3672, %v3676
      %v3678 = vshrl.u32 %v3407, 16
      %v3680 = vrot.slane %v3678, 4
      %v3681 = vor.u32 %v3680, %v3676
      %v3682 = vrot.slane %v3681, 4
      %v3684 = vshll.u32 %v3408, 16
      %v3686 = vrot.slane %v3684, 5
      %v3687 = vsel %vm326, %v3682, %v3686
      %v3689 = vshrl.u32 %v3409, 16
      %v3691 = vrot.slane %v3689, 4
      %v3692 = vshll.u32 %v3409, 16
      %v3694 = vrot.slane %v3692, 5
      %v3695 = vor.u32 %v3691, %v3694
      %v3696 = vrot.slane %v3695, 4
      %v3698 = vshll.u32 %v3410, 16
      %v3700 = vrot.slane %v3698, 5
      %v3701 = vsel %vm326, %v3696, %v3700
      %v3702 = vshrl.u32 %v3410, 16
      %v3704 = vrot.slane %v3702, 4
      %v3705 = vor.u32 %v3704, %v3700
      %v3706 = vrot.slane %v3705, 4
      %v3708 = vshll.u32 %v3411, 16
      %v3710 = vrot.slane %v3708, 5
      %v3711 = vsel %vm326, %v3706, %v3710
      %v3713 = vshrl.u32 %v3412, 16
      %v3715 = vrot.slane %v3713, 4
      %v3716 = vshll.u32 %v3412, 16
      %v3718 = vrot.slane %v3716, 5
      %v3719 = vor.u32 %v3715, %v3718
      %v3720 = vrot.slane %v3719, 4
      %v3722 = vshll.u32 %v3413, 16
      %v3724 = vrot.slane %v3722, 5
      %v3725 = vsel %vm326, %v3720, %v3724
      %v3726 = vshrl.u32 %v3413, 16
      %v3728 = vrot.slane %v3726, 4
      %v3729 = vor.u32 %v3728, %v3724
      %v3730 = vrot.slane %v3729, 4
      %v3732 = vshll.u32 %v3414, 16
      %v3734 = vrot.slane %v3732, 5
      %v3735 = vsel %vm326, %v3730, %v3734
      %v3737 = vshrl.u32 %v3415, 16
      %v3739 = vrot.slane %v3737, 4
      %v3740 = vshll.u32 %v3415, 16
      %v3742 = vrot.slane %v3740, 5
      %v3743 = vor.u32 %v3739, %v3742
      %v3744 = vrot.slane %v3743, 4
      %v3746 = vshll.u32 %v3416, 16
      %v3748 = vrot.slane %v3746, 5
      %v3749 = vsel %vm326, %v3744, %v3748
      %v3750 = vshrl.u32 %v3416, 16
      %v3752 = vrot.slane %v3750, 4
      %v3753 = vor.u32 %v3752, %v3748
      %v3754 = vrot.slane %v3753, 4
      %v3756 = vshll.u32 %v3417, 16
      %v3758 = vrot.slane %v3756, 5
      %v3759 = vsel %vm326, %v3754, %v3758
      %v3761 = vshrl.u32 %v3418, 16
      %v3763 = vrot.slane %v3761, 4
      %v3764 = vshll.u32 %v3418, 16
      %v3766 = vrot.slane %v3764, 5
      %v3767 = vor.u32 %v3763, %v3766
      %v3768 = vrot.slane %v3767, 4
      %v3770 = vshll.u32 %v3419, 16
      %v3772 = vrot.slane %v3770, 5
      %v3773 = vsel %vm326, %v3768, %v3772
      %v3774 = vshrl.u32 %v3419, 16
      %v3776 = vrot.slane %v3774, 4
      %v3777 = vor.u32 %v3776, %v3772
      %v3778 = vrot.slane %v3777, 4
      %v3780 = vshll.u32 %v3420, 16
      %v3782 = vrot.slane %v3780, 5
      %v3783 = vsel %vm326, %v3778, %v3782
      %v3785 = vshrl.u32 %v3421, 16
      %v3787 = vrot.slane %v3785, 4
      %v3788 = vshll.u32 %v3421, 16
      %v3790 = vrot.slane %v3788, 5
      %v3791 = vor.u32 %v3787, %v3790
      %v3792 = vrot.slane %v3791, 4
      %v3794 = vshll.u32 %v3422, 16
      %v3796 = vrot.slane %v3794, 5
      %v3797 = vsel %vm326, %v3792, %v3796
      %v3798 = vshrl.u32 %v3422, 16
      %v3800 = vrot.slane %v3798, 4
      %v3801 = vor.u32 %v3800, %v3796
      %v3802 = vrot.slane %v3801, 4
      %v3804 = vshll.u32 %v3423, 16
      %v3806 = vrot.slane %v3804, 5
      %v3807 = vsel %vm326, %v3802, %v3806
      %s3808 = scalar_lea.vmem %s1, 448
      %v3809 = vld [vmem:[%s3808] sm:$0xf]
      %v3810 = vld [vmem:[%s3808 + $0x4] sm:$0xf]
      %v3811 = vld [vmem:[%s3808 + $0x8] sm:$0xf]
      %v3812 = vld [vmem:[%s3808 + $0xc] sm:$0xf]
      %v3813 = vld [vmem:[%s3808 + $0x10] sm:$0xf]
      %v3814 = vld [vmem:[%s3808 + $0x14] sm:$0xf]
      %v3815 = vld [vmem:[%s3808 + $0x18] sm:$0xf]
      %v3816 = vld [vmem:[%s3808 + $0x1c] sm:$0xf]
      %v3817 = vld [vmem:[%s3808 + $0x20] sm:$0xf]
      %v3818 = vld [vmem:[%s3808 + $0x24] sm:$0xf]
      %v3819 = vld [vmem:[%s3808 + $0x28] sm:$0xf]
      %v3820 = vld [vmem:[%s3808 + $0x2c] sm:$0xf]
      %v3821 = vld [vmem:[%s3808 + $0x30] sm:$0xf]
      %v3822 = vld [vmem:[%s3808 + $0x34] sm:$0xf]
      %v3823 = vld [vmem:[%s3808 + $0x38] sm:$0xf]
      %v3824 = vld [vmem:[%s3808 + $0x3c] sm:$0xf]
      %v3825 = vunpack.c.l.b16 %v3437
      %v3826 = vunpack.c.l.b16 %v3447
      %v3827 = vunpack.c.l.b16 %v3461
      %v3828 = vunpack.c.l.b16 %v3471
      %v3829 = vunpack.c.l.b16 %v3485
      %v3830 = vunpack.c.l.b16 %v3495
      %v3831 = vunpack.c.l.b16 %v3509
      %v3832 = vunpack.c.l.b16 %v3519
      %v3833 = vunpack.c.l.b16 %v3533
      %v3834 = vunpack.c.l.b16 %v3543
      %v3835 = vunpack.c.l.b16 %v3557
      %v3836 = vunpack.c.l.b16 %v3567
      %v3837 = vunpack.c.l.b16 %v3581
      %v3838 = vunpack.c.l.b16 %v3591
      %v3839 = vunpack.c.l.b16 %v3605
      %v3840 = vunpack.c.l.b16 %v3615
      %v3841 = vunpack.c.l.b16 %v3629
      %v3842 = vunpack.c.l.b16 %v3639
      %v3843 = vunpack.c.l.b16 %v3653
      %v3844 = vunpack.c.l.b16 %v3663
      %v3845 = vunpack.c.l.b16 %v3677
      %v3846 = vunpack.c.l.b16 %v3687
      %v3847 = vunpack.c.l.b16 %v3701
      %v3848 = vunpack.c.l.b16 %v3711
      %v3849 = vunpack.c.l.b16 %v3725
      %v3850 = vunpack.c.l.b16 %v3735
      %v3851 = vunpack.c.l.b16 %v3749
      %v3852 = vunpack.c.l.b16 %v3759
      %v3853 = vunpack.c.l.b16 %v3773
      %v3854 = vunpack.c.l.b16 %v3783
      %v3855 = vunpack.c.l.b16 %v3797
      %v3856 = vunpack.c.l.b16 %v3807
      %v3857 = vpack.c.b16 %v3826, %v3825
      %v3858 = vpack.c.b16 %v3828, %v3827
      %v3859 = vpack.c.b16 %v3830, %v3829
      %v3860 = vpack.c.b16 %v3832, %v3831
      %v3861 = vpack.c.b16 %v3834, %v3833
      %v3862 = vpack.c.b16 %v3836, %v3835
      %v3863 = vpack.c.b16 %v3838, %v3837
      %v3864 = vpack.c.b16 %v3840, %v3839
      %v3865 = vpack.c.b16 %v3842, %v3841
      %v3866 = vpack.c.b16 %v3844, %v3843
      %v3867 = vpack.c.b16 %v3846, %v3845
      %v3868 = vpack.c.b16 %v3848, %v3847
      %v3869 = vpack.c.b16 %v3850, %v3849
      %v3870 = vpack.c.b16 %v3852, %v3851
      %v3871 = vpack.c.b16 %v3854, %v3853
      %v3872 = vpack.c.b16 %v3856, %v3855
      %v3905 = vunpack.c.l.b16 %v3809
      %v3906 = vunpack.c.l.b16 %v3810
      %v3907 = vunpack.c.l.b16 %v3811
      %v3908 = vunpack.c.l.b16 %v3812
      %v3909 = vunpack.c.l.b16 %v3813
      %v3910 = vunpack.c.l.b16 %v3814
      %v3911 = vunpack.c.l.b16 %v3815
      %v3912 = vunpack.c.l.b16 %v3816
      %v3913 = vunpack.c.l.b16 %v3817
      %v3914 = vunpack.c.l.b16 %v3818
      %v3915 = vunpack.c.l.b16 %v3819
      %v3916 = vunpack.c.l.b16 %v3820
      %v3917 = vunpack.c.l.b16 %v3821
      %v3918 = vunpack.c.l.b16 %v3822
      %v3919 = vunpack.c.l.b16 %v3823
      %v3920 = vunpack.c.l.b16 %v3824
      %v3921 = vpack.c.b16 %v3906, %v3905
      %v3922 = vpack.c.b16 %v3908, %v3907
      %v3923 = vpack.c.b16 %v3910, %v3909
      %v3924 = vpack.c.b16 %v3912, %v3911
      %v3925 = vpack.c.b16 %v3914, %v3913
      %v3926 = vpack.c.b16 %v3916, %v3915
      %v3927 = vpack.c.b16 %v3918, %v3917
      %v3928 = vpack.c.b16 %v3920, %v3919
      %3937 = vmatpush.bf16.msra.mxu0 %v3928
      %3938 = vmatpush.bf16.msra.mxu0 %v3927
      %3939 = vmatpush.bf16.msra.mxu0 %v3926
      %3940 = vmatpush.bf16.msra.mxu0 %v3925
      %3941 = vmatpush.bf16.msra.mxu0 %v3924
      %3942 = vmatpush.bf16.msra.mxu0 %v3923
      %3943 = vmatpush.bf16.msra.mxu0 %v3922
      %3944 = vmatpush.bf16.msra.mxu0 %v3921
      %3945 = vmatmul.bf16.gmra.mxu0 %v3857
      %v3946 = vpop.f32.mrf.mxu0
      %v3947 = vadd.f32 0.0, %v3946
      %v3948 = vpop.f32.mrf.mxu0
      %v3949 = vadd.f32 0.0, %v3948
      %3950 = vmatmul.bf16.gmra.mxu0 %v3858
      %v3951 = vpop.f32.mrf.mxu0
      %v3952 = vadd.f32 0.0, %v3951
      %v3953 = vpop.f32.mrf.mxu0
      %v3954 = vadd.f32 0.0, %v3953
      %3955 = vmatmul.bf16.gmra.mxu0 %v3859
      %v3956 = vpop.f32.mrf.mxu0
      %v3957 = vadd.f32 0.0, %v3956
      %v3958 = vpop.f32.mrf.mxu0
      %v3959 = vadd.f32 0.0, %v3958
      %3960 = vmatmul.bf16.gmra.mxu0 %v3860
      %v3961 = vpop.f32.mrf.mxu0
      %v3962 = vadd.f32 0.0, %v3961
      %v3963 = vpop.f32.mrf.mxu0
      %v3964 = vadd.f32 0.0, %v3963
      %3965 = vmatmul.bf16.gmra.mxu0 %v3861
      %v3966 = vpop.f32.mrf.mxu0
      %v3967 = vadd.f32 0.0, %v3966
      %v3968 = vpop.f32.mrf.mxu0
      %v3969 = vadd.f32 0.0, %v3968
      %3970 = vmatmul.bf16.gmra.mxu0 %v3862
      %v3971 = vpop.f32.mrf.mxu0
      %v3972 = vadd.f32 0.0, %v3971
      %v3973 = vpop.f32.mrf.mxu0
      %v3974 = vadd.f32 0.0, %v3973
      %3975 = vmatmul.bf16.gmra.mxu0 %v3863
      %v3976 = vpop.f32.mrf.mxu0
      %v3977 = vadd.f32 0.0, %v3976
      %v3978 = vpop.f32.mrf.mxu0
      %v3979 = vadd.f32 0.0, %v3978
      %3980 = vmatmul.bf16.gmra.mxu0 %v3864
      %v3981 = vpop.f32.mrf.mxu0
      %v3982 = vadd.f32 0.0, %v3981
      %v3983 = vpop.f32.mrf.mxu0
      %v3984 = vadd.f32 0.0, %v3983
      %3985 = vmatmul.bf16.gmra.mxu0 %v3865
      %v3986 = vpop.f32.mrf.mxu0
      %v3987 = vadd.f32 0.0, %v3986
      %v3988 = vpop.f32.mrf.mxu0
      %v3989 = vadd.f32 0.0, %v3988
      %3990 = vmatmul.bf16.gmra.mxu0 %v3866
      %v3991 = vpop.f32.mrf.mxu0
      %v3992 = vadd.f32 0.0, %v3991
      %v3993 = vpop.f32.mrf.mxu0
      %v3994 = vadd.f32 0.0, %v3993
      %3995 = vmatmul.bf16.gmra.mxu0 %v3867
      %v3996 = vpop.f32.mrf.mxu0
      %v3997 = vadd.f32 0.0, %v3996
      %v3998 = vpop.f32.mrf.mxu0
      %v3999 = vadd.f32 0.0, %v3998
      %4000 = vmatmul.bf16.gmra.mxu0 %v3868
      %v4001 = vpop.f32.mrf.mxu0
      %v4002 = vadd.f32 0.0, %v4001
      %v4003 = vpop.f32.mrf.mxu0
      %v4004 = vadd.f32 0.0, %v4003
      %4005 = vmatmul.bf16.gmra.mxu0 %v3869
      %v4006 = vpop.f32.mrf.mxu0
      %v4007 = vadd.f32 0.0, %v4006
      %v4008 = vpop.f32.mrf.mxu0
      %v4009 = vadd.f32 0.0, %v4008
      %4010 = vmatmul.bf16.gmra.mxu0 %v3870
      %v4011 = vpop.f32.mrf.mxu0
      %v4012 = vadd.f32 0.0, %v4011
      %v4013 = vpop.f32.mrf.mxu0
      %v4014 = vadd.f32 0.0, %v4013
      %4015 = vmatmul.bf16.gmra.mxu0 %v3871
      %v4016 = vpop.f32.mrf.mxu0
      %v4017 = vadd.f32 0.0, %v4016
      %v4018 = vpop.f32.mrf.mxu0
      %v4019 = vadd.f32 0.0, %v4018
      %4020 = vmatmul.bf16.gmra.mxu0 %v3872
      %v4021 = vpop.f32.mrf.mxu0
      %v4022 = vadd.f32 0.0, %v4021
      %v4023 = vpop.f32.mrf.mxu0
      %v4024 = vadd.f32 0.0, %v4023
      %4025 = vdwg.mxu0
      %v4026 = vadd.f32 %v3344, %v3947
      %v4027 = vadd.f32 %v3345, %v3949
      %v4028 = vadd.f32 %v3346, %v3952
      %v4029 = vadd.f32 %v3347, %v3954
      %v4030 = vadd.f32 %v3348, %v3957
      %v4031 = vadd.f32 %v3349, %v3959
      %v4032 = vadd.f32 %v3350, %v3962
      %v4033 = vadd.f32 %v3351, %v3964
      %v4034 = vadd.f32 %v3352, %v3967
      %v4035 = vadd.f32 %v3353, %v3969
      %v4036 = vadd.f32 %v3354, %v3972
      %v4037 = vadd.f32 %v3355, %v3974
      %v4038 = vadd.f32 %v3356, %v3977
      %v4039 = vadd.f32 %v3357, %v3979
      %v4040 = vadd.f32 %v3358, %v3982
      %v4041 = vadd.f32 %v3359, %v3984
      %v4042 = vadd.f32 %v3360, %v3987
      %v4043 = vadd.f32 %v3361, %v3989
      %v4044 = vadd.f32 %v3362, %v3992
      %v4045 = vadd.f32 %v3363, %v3994
      %v4046 = vadd.f32 %v3364, %v3997
      %v4047 = vadd.f32 %v3365, %v3999
      %v4048 = vadd.f32 %v3366, %v4002
      %v4049 = vadd.f32 %v3367, %v4004
      %v4050 = vadd.f32 %v3368, %v4007
      %v4051 = vadd.f32 %v3369, %v4009
      %v4052 = vadd.f32 %v3370, %v4012
      %v4053 = vadd.f32 %v3371, %v4014
      %v4054 = vadd.f32 %v3372, %v4017
      %v4055 = vadd.f32 %v3373, %v4019
      %v4056 = vadd.f32 %v3374, %v4022
      %v4057 = vadd.f32 %v3375, %v4024
      %v4058 = vld [vmem:[%s3061] sm:$0xe]
      %v4059 = vld [vmem:[%s3061 + $0xc] sm:$0xe]
      %v4060 = vld [vmem:[%s3061 + $0x18] sm:$0xe]
      %v4061 = vld [vmem:[%s3061 + $0x24] sm:$0xe]
      %v4062 = vld [vmem:[%s3061 + $0x30] sm:$0xe]
      %v4063 = vld [vmem:[%s3061 + $0x3c] sm:$0xe]
      %v4064 = vld [vmem:[%s3061 + $0x48] sm:$0xe]
      %v4065 = vld [vmem:[%s3061 + $0x54] sm:$0xe]
      %v4066 = vld [vmem:[%s3061 + $0x60] sm:$0xe]
      %v4067 = vld [vmem:[%s3061 + $0x6c] sm:$0xe]
      %v4068 = vld [vmem:[%s3061 + $0x78] sm:$0xe]
      %v4069 = vld [vmem:[%s3061 + $0x84] sm:$0xe]
      %v4070 = vld [vmem:[%s3061 + $0x90] sm:$0xe]
      %v4071 = vld [vmem:[%s3061 + $0x9c] sm:$0xe]
      %v4072 = vld [vmem:[%s3061 + $0xa8] sm:$0xe]
      %v4073 = vld [vmem:[%s3061 + $0xb4] sm:$0xe]
      %v4122 = vrot.slane %v4058, 5
      %v4123 = vrot.slane %v4122, 4
      %v4124 = vrot.slane %v3377, 5
      %v4125 = vsel %vm1958, %v4123, %v4124
      %v4126 = vrot.slane %v4124, 4
      %v4127 = vrot.slane %v3378, 5
      %v4128 = vsel %vm1958, %v4126, %v4127
      %v4129 = vrot.slane %v4059, 5
      %v4130 = vrot.slane %v4129, 4
      %v4131 = vrot.slane %v3380, 5
      %v4132 = vsel %vm1958, %v4130, %v4131
      %v4133 = vrot.slane %v4131, 4
      %v4134 = vrot.slane %v3381, 5
      %v4135 = vsel %vm1958, %v4133, %v4134
      %v4136 = vrot.slane %v4060, 5
      %v4137 = vrot.slane %v4136, 4
      %v4138 = vrot.slane %v3383, 5
      %v4139 = vsel %vm1958, %v4137, %v4138
      %v4140 = vrot.slane %v4138, 4
      %v4141 = vrot.slane %v3384, 5
      %v4142 = vsel %vm1958, %v4140, %v4141
      %v4143 = vrot.slane %v4061, 5
      %v4144 = vrot.slane %v4143, 4
      %v4145 = vrot.slane %v3386, 5
      %v4146 = vsel %vm1958, %v4144, %v4145
      %v4147 = vrot.slane %v4145, 4
      %v4148 = vrot.slane %v3387, 5
      %v4149 = vsel %vm1958, %v4147, %v4148
      %v4150 = vrot.slane %v4062, 5
      %v4151 = vrot.slane %v4150, 4
      %v4152 = vrot.slane %v3389, 5
      %v4153 = vsel %vm1958, %v4151, %v4152
      %v4154 = vrot.slane %v4152, 4
      %v4155 = vrot.slane %v3390, 5
      %v4156 = vsel %vm1958, %v4154, %v4155
      %v4157 = vrot.slane %v4063, 5
      %v4158 = vrot.slane %v4157, 4
      %v4159 = vrot.slane %v3392, 5
      %v4160 = vsel %vm1958, %v4158, %v4159
      %v4161 = vrot.slane %v4159, 4
      %v4162 = vrot.slane %v3393, 5
      %v4163 = vsel %vm1958, %v4161, %v4162
      %v4164 = vrot.slane %v4064, 5
      %v4165 = vrot.slane %v4164, 4
      %v4166 = vrot.slane %v3395, 5
      %v4167 = vsel %vm1958, %v4165, %v4166
      %v4168 = vrot.slane %v4166, 4
      %v4169 = vrot.slane %v3396, 5
      %v4170 = vsel %vm1958, %v4168, %v4169
      %v4171 = vrot.slane %v4065, 5
      %v4172 = vrot.slane %v4171, 4
      %v4173 = vrot.slane %v3398, 5
      %v4174 = vsel %vm1958, %v4172, %v4173
      %v4175 = vrot.slane %v4173, 4
      %v4176 = vrot.slane %v3399, 5
      %v4177 = vsel %vm1958, %v4175, %v4176
      %v4178 = vrot.slane %v4066, 5
      %v4179 = vrot.slane %v4178, 4
      %v4180 = vrot.slane %v3401, 5
      %v4181 = vsel %vm1958, %v4179, %v4180
      %v4182 = vrot.slane %v4180, 4
      %v4183 = vrot.slane %v3402, 5
      %v4184 = vsel %vm1958, %v4182, %v4183
      %v4185 = vrot.slane %v4067, 5
      %v4186 = vrot.slane %v4185, 4
      %v4187 = vrot.slane %v3404, 5
      %v4188 = vsel %vm1958, %v4186, %v4187
      %v4189 = vrot.slane %v4187, 4
      %v4190 = vrot.slane %v3405, 5
      %v4191 = vsel %vm1958, %v4189, %v4190
      %v4192 = vrot.slane %v4068, 5
      %v4193 = vrot.slane %v4192, 4
      %v4194 = vrot.slane %v3407, 5
      %v4195 = vsel %vm1958, %v4193, %v4194
      %v4196 = vrot.slane %v4194, 4
      %v4197 = vrot.slane %v3408, 5
      %v4198 = vsel %vm1958, %v4196, %v4197
      %v4199 = vrot.slane %v4069, 5
      %v4200 = vrot.slane %v4199, 4
      %v4201 = vrot.slane %v3410, 5
      %v4202 = vsel %vm1958, %v4200, %v4201
      %v4203 = vrot.slane %v4201, 4
      %v4204 = vrot.slane %v3411, 5
      %v4205 = vsel %vm1958, %v4203, %v4204
      %v4206 = vrot.slane %v4070, 5
      %v4207 = vrot.slane %v4206, 4
      %v4208 = vrot.slane %v3413, 5
      %v4209 = vsel %vm1958, %v4207, %v4208
      %v4210 = vrot.slane %v4208, 4
      %v4211 = vrot.slane %v3414, 5
      %v4212 = vsel %vm1958, %v4210, %v4211
      %v4213 = vrot.slane %v4071, 5
      %v4214 = vrot.slane %v4213, 4
      %v4215 = vrot.slane %v3416, 5
      %v4216 = vsel %vm1958, %v4214, %v4215
      %v4217 = vrot.slane %v4215, 4
      %v4218 = vrot.slane %v3417, 5
      %v4219 = vsel %vm1958, %v4217, %v4218
      %v4220 = vrot.slane %v4072, 5
      %v4221 = vrot.slane %v4220, 4
      %v4222 = vrot.slane %v3419, 5
      %v4223 = vsel %vm1958, %v4221, %v4222
      %v4224 = vrot.slane %v4222, 4
      %v4225 = vrot.slane %v3420, 5
      %v4226 = vsel %vm1958, %v4224, %v4225
      %v4227 = vrot.slane %v4073, 5
      %v4228 = vrot.slane %v4227, 4
      %v4229 = vrot.slane %v3422, 5
      %v4230 = vsel %vm1958, %v4228, %v4229
      %v4231 = vrot.slane %v4229, 4
      %v4232 = vrot.slane %v3423, 5
      %v4233 = vsel %vm1958, %v4231, %v4232
      %s4234 = scalar_lea.vmem %s1, 512
      %v4235 = vld [vmem:[%s4234] sm:$0xf]
      %v4236 = vld [vmem:[%s4234 + $0x4] sm:$0xf]
      %v4237 = vld [vmem:[%s4234 + $0x8] sm:$0xf]
      %v4238 = vld [vmem:[%s4234 + $0xc] sm:$0xf]
      %v4239 = vld [vmem:[%s4234 + $0x10] sm:$0xf]
      %v4240 = vld [vmem:[%s4234 + $0x14] sm:$0xf]
      %v4241 = vld [vmem:[%s4234 + $0x18] sm:$0xf]
      %v4242 = vld [vmem:[%s4234 + $0x1c] sm:$0xf]
      %v4243 = vld [vmem:[%s4234 + $0x20] sm:$0xf]
      %v4244 = vld [vmem:[%s4234 + $0x24] sm:$0xf]
      %v4245 = vld [vmem:[%s4234 + $0x28] sm:$0xf]
      %v4246 = vld [vmem:[%s4234 + $0x2c] sm:$0xf]
      %v4247 = vld [vmem:[%s4234 + $0x30] sm:$0xf]
      %v4248 = vld [vmem:[%s4234 + $0x34] sm:$0xf]
      %v4249 = vld [vmem:[%s4234 + $0x38] sm:$0xf]
      %v4250 = vld [vmem:[%s4234 + $0x3c] sm:$0xf]
      %v4251 = vunpack.c.l.b16 %v4125
      %v4252 = vunpack.c.l.b16 %v4128
      %v4253 = vunpack.c.l.b16 %v4132
      %v4254 = vunpack.c.l.b16 %v4135
      %v4255 = vunpack.c.l.b16 %v4139
      %v4256 = vunpack.c.l.b16 %v4142
      %v4257 = vunpack.c.l.b16 %v4146
      %v4258 = vunpack.c.l.b16 %v4149
      %v4259 = vunpack.c.l.b16 %v4153
      %v4260 = vunpack.c.l.b16 %v4156
      %v4261 = vunpack.c.l.b16 %v4160
      %v4262 = vunpack.c.l.b16 %v4163
      %v4263 = vunpack.c.l.b16 %v4167
      %v4264 = vunpack.c.l.b16 %v4170
      %v4265 = vunpack.c.l.b16 %v4174
      %v4266 = vunpack.c.l.b16 %v4177
      %v4267 = vunpack.c.l.b16 %v4181
      %v4268 = vunpack.c.l.b16 %v4184
      %v4269 = vunpack.c.l.b16 %v4188
      %v4270 = vunpack.c.l.b16 %v4191
      %v4271 = vunpack.c.l.b16 %v4195
      %v4272 = vunpack.c.l.b16 %v4198
      %v4273 = vunpack.c.l.b16 %v4202
      %v4274 = vunpack.c.l.b16 %v4205
      %v4275 = vunpack.c.l.b16 %v4209
      %v4276 = vunpack.c.l.b16 %v4212
      %v4277 = vunpack.c.l.b16 %v4216
      %v4278 = vunpack.c.l.b16 %v4219
      %v4279 = vunpack.c.l.b16 %v4223
      %v4280 = vunpack.c.l.b16 %v4226
      %v4281 = vunpack.c.l.b16 %v4230
      %v4282 = vunpack.c.l.b16 %v4233
      %v4283 = vpack.c.b16 %v4252, %v4251
      %v4284 = vpack.c.b16 %v4254, %v4253
      %v4285 = vpack.c.b16 %v4256, %v4255
      %v4286 = vpack.c.b16 %v4258, %v4257
      %v4287 = vpack.c.b16 %v4260, %v4259
      %v4288 = vpack.c.b16 %v4262, %v4261
      %v4289 = vpack.c.b16 %v4264, %v4263
      %v4290 = vpack.c.b16 %v4266, %v4265
      %v4291 = vpack.c.b16 %v4268, %v4267
      %v4292 = vpack.c.b16 %v4270, %v4269
      %v4293 = vpack.c.b16 %v4272, %v4271
      %v4294 = vpack.c.b16 %v4274, %v4273
      %v4295 = vpack.c.b16 %v4276, %v4275
      %v4296 = vpack.c.b16 %v4278, %v4277
      %v4297 = vpack.c.b16 %v4280, %v4279
      %v4298 = vpack.c.b16 %v4282, %v4281
      %v4331 = vunpack.c.l.b16 %v4235
      %v4332 = vunpack.c.l.b16 %v4236
      %v4333 = vunpack.c.l.b16 %v4237
      %v4334 = vunpack.c.l.b16 %v4238
      %v4335 = vunpack.c.l.b16 %v4239
      %v4336 = vunpack.c.l.b16 %v4240
      %v4337 = vunpack.c.l.b16 %v4241
      %v4338 = vunpack.c.l.b16 %v4242
      %v4339 = vunpack.c.l.b16 %v4243
      %v4340 = vunpack.c.l.b16 %v4244
      %v4341 = vunpack.c.l.b16 %v4245
      %v4342 = vunpack.c.l.b16 %v4246
      %v4343 = vunpack.c.l.b16 %v4247
      %v4344 = vunpack.c.l.b16 %v4248
      %v4345 = vunpack.c.l.b16 %v4249
      %v4346 = vunpack.c.l.b16 %v4250
      %v4347 = vpack.c.b16 %v4332, %v4331
      %v4348 = vpack.c.b16 %v4334, %v4333
      %v4349 = vpack.c.b16 %v4336, %v4335
      %v4350 = vpack.c.b16 %v4338, %v4337
      %v4351 = vpack.c.b16 %v4340, %v4339
      %v4352 = vpack.c.b16 %v4342, %v4341
      %v4353 = vpack.c.b16 %v4344, %v4343
      %v4354 = vpack.c.b16 %v4346, %v4345
      %4363 = vmatpush.bf16.msra.mxu0 %v4354
      %4364 = vmatpush.bf16.msra.mxu0 %v4353
      %4365 = vmatpush.bf16.msra.mxu0 %v4352
      %4366 = vmatpush.bf16.msra.mxu0 %v4351
      %4367 = vmatpush.bf16.msra.mxu0 %v4350
      %4368 = vmatpush.bf16.msra.mxu0 %v4349
      %4369 = vmatpush.bf16.msra.mxu0 %v4348
      %4370 = vmatpush.bf16.msra.mxu0 %v4347
      %4371 = vmatmul.bf16.gmra.mxu0 %v4283
      %v4372 = vpop.f32.mrf.mxu0
      %v4373 = vadd.f32 0.0, %v4372
      %v4374 = vpop.f32.mrf.mxu0
      %v4375 = vadd.f32 0.0, %v4374
      %4376 = vmatmul.bf16.gmra.mxu0 %v4284
      %v4377 = vpop.f32.mrf.mxu0
      %v4378 = vadd.f32 0.0, %v4377
      %v4379 = vpop.f32.mrf.mxu0
      %v4380 = vadd.f32 0.0, %v4379
      %4381 = vmatmul.bf16.gmra.mxu0 %v4285
      %v4382 = vpop.f32.mrf.mxu0
      %v4383 = vadd.f32 0.0, %v4382
      %v4384 = vpop.f32.mrf.mxu0
      %v4385 = vadd.f32 0.0, %v4384
      %4386 = vmatmul.bf16.gmra.mxu0 %v4286
      %v4387 = vpop.f32.mrf.mxu0
      %v4388 = vadd.f32 0.0, %v4387
      %v4389 = vpop.f32.mrf.mxu0
      %v4390 = vadd.f32 0.0, %v4389
      %4391 = vmatmul.bf16.gmra.mxu0 %v4287
      %v4392 = vpop.f32.mrf.mxu0
      %v4393 = vadd.f32 0.0, %v4392
      %v4394 = vpop.f32.mrf.mxu0
      %v4395 = vadd.f32 0.0, %v4394
      %4396 = vmatmul.bf16.gmra.mxu0 %v4288
      %v4397 = vpop.f32.mrf.mxu0
      %v4398 = vadd.f32 0.0, %v4397
      %v4399 = vpop.f32.mrf.mxu0
      %v4400 = vadd.f32 0.0, %v4399
      %4401 = vmatmul.bf16.gmra.mxu0 %v4289
      %v4402 = vpop.f32.mrf.mxu0
      %v4403 = vadd.f32 0.0, %v4402
      %v4404 = vpop.f32.mrf.mxu0
      %v4405 = vadd.f32 0.0, %v4404
      %4406 = vmatmul.bf16.gmra.mxu0 %v4290
      %v4407 = vpop.f32.mrf.mxu0
      %v4408 = vadd.f32 0.0, %v4407
      %v4409 = vpop.f32.mrf.mxu0
      %v4410 = vadd.f32 0.0, %v4409
      %4411 = vmatmul.bf16.gmra.mxu0 %v4291
      %v4412 = vpop.f32.mrf.mxu0
      %v4413 = vadd.f32 0.0, %v4412
      %v4414 = vpop.f32.mrf.mxu0
      %v4415 = vadd.f32 0.0, %v4414
      %4416 = vmatmul.bf16.gmra.mxu0 %v4292
      %v4417 = vpop.f32.mrf.mxu0
      %v4418 = vadd.f32 0.0, %v4417
      %v4419 = vpop.f32.mrf.mxu0
      %v4420 = vadd.f32 0.0, %v4419
      %4421 = vmatmul.bf16.gmra.mxu0 %v4293
      %v4422 = vpop.f32.mrf.mxu0
      %v4423 = vadd.f32 0.0, %v4422
      %v4424 = vpop.f32.mrf.mxu0
      %v4425 = vadd.f32 0.0, %v4424
      %4426 = vmatmul.bf16.gmra.mxu0 %v4294
      %v4427 = vpop.f32.mrf.mxu0
      %v4428 = vadd.f32 0.0, %v4427
      %v4429 = vpop.f32.mrf.mxu0
      %v4430 = vadd.f32 0.0, %v4429
      %4431 = vmatmul.bf16.gmra.mxu0 %v4295
      %v4432 = vpop.f32.mrf.mxu0
      %v4433 = vadd.f32 0.0, %v4432
      %v4434 = vpop.f32.mrf.mxu0
      %v4435 = vadd.f32 0.0, %v4434
      %4436 = vmatmul.bf16.gmra.mxu0 %v4296
      %v4437 = vpop.f32.mrf.mxu0
      %v4438 = vadd.f32 0.0, %v4437
      %v4439 = vpop.f32.mrf.mxu0
      %v4440 = vadd.f32 0.0, %v4439
      %4441 = vmatmul.bf16.gmra.mxu0 %v4297
      %v4442 = vpop.f32.mrf.mxu0
      %v4443 = vadd.f32 0.0, %v4442
      %v4444 = vpop.f32.mrf.mxu0
      %v4445 = vadd.f32 0.0, %v4444
      %4446 = vmatmul.bf16.gmra.mxu0 %v4298
      %v4447 = vpop.f32.mrf.mxu0
      %v4448 = vadd.f32 0.0, %v4447
      %v4449 = vpop.f32.mrf.mxu0
      %v4450 = vadd.f32 0.0, %v4449
      %4451 = vdwg.mxu0
      %v4452 = vadd.f32 %v4026, %v4373
      %v4453 = vadd.f32 %v4027, %v4375
      %v4454 = vadd.f32 %v4028, %v4378
      %v4455 = vadd.f32 %v4029, %v4380
      %v4456 = vadd.f32 %v4030, %v4383
      %v4457 = vadd.f32 %v4031, %v4385
      %v4458 = vadd.f32 %v4032, %v4388
      %v4459 = vadd.f32 %v4033, %v4390
      %v4460 = vadd.f32 %v4034, %v4393
      %v4461 = vadd.f32 %v4035, %v4395
      %v4462 = vadd.f32 %v4036, %v4398
      %v4463 = vadd.f32 %v4037, %v4400
      %v4464 = vadd.f32 %v4038, %v4403
      %v4465 = vadd.f32 %v4039, %v4405
      %v4466 = vadd.f32 %v4040, %v4408
      %v4467 = vadd.f32 %v4041, %v4410
      %v4468 = vadd.f32 %v4042, %v4413
      %v4469 = vadd.f32 %v4043, %v4415
      %v4470 = vadd.f32 %v4044, %v4418
      %v4471 = vadd.f32 %v4045, %v4420
      %v4472 = vadd.f32 %v4046, %v4423
      %v4473 = vadd.f32 %v4047, %v4425
      %v4474 = vadd.f32 %v4048, %v4428
      %v4475 = vadd.f32 %v4049, %v4430
      %v4476 = vadd.f32 %v4050, %v4433
      %v4477 = vadd.f32 %v4051, %v4435
      %v4478 = vadd.f32 %v4052, %v4438
      %v4479 = vadd.f32 %v4053, %v4440
      %v4480 = vadd.f32 %v4054, %v4443
      %v4481 = vadd.f32 %v4055, %v4445
      %v4482 = vadd.f32 %v4056, %v4448
      %v4483 = vadd.f32 %v4057, %v4450
      %4484 = vst [vmem:[%s265] sm:$0xff] %v4452
      %4485 = vst [vmem:[%s265 + $0x8] sm:$0xff] %v4453
      %4486 = vst [vmem:[%s265 + $0x10] sm:$0xff] %v4454
      %4487 = vst [vmem:[%s265 + $0x18] sm:$0xff] %v4455
      %4488 = vst [vmem:[%s265 + $0x20] sm:$0xff] %v4456
      %4489 = vst [vmem:[%s265 + $0x28] sm:$0xff] %v4457
      %4490 = vst [vmem:[%s265 + $0x30] sm:$0xff] %v4458
      %4491 = vst [vmem:[%s265 + $0x38] sm:$0xff] %v4459
      %4492 = vst [vmem:[%s265 + $0x40] sm:$0xff] %v4460
      %4493 = vst [vmem:[%s265 + $0x48] sm:$0xff] %v4461
      %4494 = vst [vmem:[%s265 + $0x50] sm:$0xff] %v4462
      %4495 = vst [vmem:[%s265 + $0x58] sm:$0xff] %v4463
      %4496 = vst [vmem:[%s265 + $0x60] sm:$0xff] %v4464
      %4497 = vst [vmem:[%s265 + $0x68] sm:$0xff] %v4465
      %4498 = vst [vmem:[%s265 + $0x70] sm:$0xff] %v4466
      %4499 = vst [vmem:[%s265 + $0x78] sm:$0xff] %v4467
      %4500 = vst [vmem:[%s265 + $0x80] sm:$0xff] %v4468
      %4501 = vst [vmem:[%s265 + $0x88] sm:$0xff] %v4469
      %4502 = vst [vmem:[%s265 + $0x90] sm:$0xff] %v4470
      %4503 = vst [vmem:[%s265 + $0x98] sm:$0xff] %v4471
      %4504 = vst [vmem:[%s265 + $0xa0] sm:$0xff] %v4472
      %4505 = vst [vmem:[%s265 + $0xa8] sm:$0xff] %v4473
      %4506 = vst [vmem:[%s265 + $0xb0] sm:$0xff] %v4474
      %4507 = vst [vmem:[%s265 + $0xb8] sm:$0xff] %v4475
      %4508 = vst [vmem:[%s265 + $0xc0] sm:$0xff] %v4476
      %4509 = vst [vmem:[%s265 + $0xc8] sm:$0xff] %v4477
      %4510 = vst [vmem:[%s265 + $0xd0] sm:$0xff] %v4478
      %4511 = vst [vmem:[%s265 + $0xd8] sm:$0xff] %v4479
      %4512 = vst [vmem:[%s265 + $0xe0] sm:$0xff] %v4480
      %4513 = vst [vmem:[%s265 + $0xe8] sm:$0xff] %v4481
      %4514 = vst [vmem:[%s265 + $0xf0] sm:$0xff] %v4482
      %4515 = vst [vmem:[%s265 + $0xf8] sm:$0xff] %v4483
      %v4516 = vadd.f32 %v4452, %v4453
      %v4517 = vadd.f32 %v4516, %v4454
      %v4518 = vadd.f32 %v4517, %v4455
      %v4519 = vadd.f32 %v4518, %v4456
      %v4520 = vadd.f32 %v4519, %v4457
      %v4521 = vadd.f32 %v4520, %v4458
      %v4522 = vadd.f32 %v4521, %v4459
      %v4523 = vadd.f32 %v4522, %v4460
      %v4524 = vadd.f32 %v4523, %v4461
      %v4525 = vadd.f32 %v4524, %v4462
      %v4526 = vadd.f32 %v4525, %v4463
      %v4527 = vadd.f32 %v4526, %v4464
      %v4528 = vadd.f32 %v4527, %v4465
      %v4529 = vadd.f32 %v4528, %v4466
      %v4530 = vadd.f32 %v4529, %v4467
      %v4531 = vadd.f32 %v4530, %v4468
      %v4532 = vadd.f32 %v4531, %v4469
      %v4533 = vadd.f32 %v4532, %v4470
      %v4534 = vadd.f32 %v4533, %v4471
      %v4535 = vadd.f32 %v4534, %v4472
      %v4536 = vadd.f32 %v4535, %v4473
      %v4537 = vadd.f32 %v4536, %v4474
      %v4538 = vadd.f32 %v4537, %v4475
      %v4539 = vadd.f32 %v4538, %v4476
      %v4540 = vadd.f32 %v4539, %v4477
      %v4541 = vadd.f32 %v4540, %v4478
      %v4542 = vadd.f32 %v4541, %v4479
      %v4543 = vadd.f32 %v4542, %v4480
      %v4544 = vadd.f32 %v4543, %v4481
      %v4545 = vadd.f32 %v4544, %v4482
      %v4546 = vadd.f32 %v4545, %v4483
      %v4547 = vrot.slane %v4546, 4
      %v4548 = vadd.f32 %v4546, %v4547
      %v4549 = vrot.slane %v4548, 2
      %v4550 = vadd.f32 %v4548, %v4549
      %v4551 = vrot.slane %v4550, 1
      %v4552 = vadd.f32 %v4550, %v4551
      %4553 = vst [vmem:[%s274] sm:$0x1] %v4552
      %v4554 = vmul.f32 %v4452, %v4452
      %v4555 = vmul.f32 %v4453, %v4453
      %v4556 = vmul.f32 %v4454, %v4454
      %v4557 = vmul.f32 %v4455, %v4455
      %v4558 = vmul.f32 %v4456, %v4456
      %v4559 = vmul.f32 %v4457, %v4457
      %v4560 = vmul.f32 %v4458, %v4458
      %v4561 = vmul.f32 %v4459, %v4459
      %v4562 = vmul.f32 %v4460, %v4460
      %v4563 = vmul.f32 %v4461, %v4461
      %v4564 = vmul.f32 %v4462, %v4462
      %v4565 = vmul.f32 %v4463, %v4463
      %v4566 = vmul.f32 %v4464, %v4464
      %v4567 = vmul.f32 %v4465, %v4465
      %v4568 = vmul.f32 %v4466, %v4466
      %v4569 = vmul.f32 %v4467, %v4467
      %v4570 = vmul.f32 %v4468, %v4468
      %v4571 = vmul.f32 %v4469, %v4469
      %v4572 = vmul.f32 %v4470, %v4470
      %v4573 = vmul.f32 %v4471, %v4471
      %v4574 = vmul.f32 %v4472, %v4472
      %v4575 = vmul.f32 %v4473, %v4473
      %v4576 = vmul.f32 %v4474, %v4474
      %v4577 = vmul.f32 %v4475, %v4475
      %v4578 = vmul.f32 %v4476, %v4476
      %v4579 = vmul.f32 %v4477, %v4477
      %v4580 = vmul.f32 %v4478, %v4478
      %v4581 = vmul.f32 %v4479, %v4479
      %v4582 = vmul.f32 %v4480, %v4480
      %v4583 = vmul.f32 %v4481, %v4481
      %v4584 = vmul.f32 %v4482, %v4482
      %v4585 = vmul.f32 %v4483, %v4483
      %v4586 = vadd.f32 %v4554, %v4555
      %v4587 = vadd.f32 %v4586, %v4556
      %v4588 = vadd.f32 %v4587, %v4557
      %v4589 = vadd.f32 %v4588, %v4558
      %v4590 = vadd.f32 %v4589, %v4559
      %v4591 = vadd.f32 %v4590, %v4560
      %v4592 = vadd.f32 %v4591, %v4561
      %v4593 = vadd.f32 %v4592, %v4562
      %v4594 = vadd.f32 %v4593, %v4563
      %v4595 = vadd.f32 %v4594, %v4564
      %v4596 = vadd.f32 %v4595, %v4565
      %v4597 = vadd.f32 %v4596, %v4566
      %v4598 = vadd.f32 %v4597, %v4567
      %v4599 = vadd.f32 %v4598, %v4568
      %v4600 = vadd.f32 %v4599, %v4569
      %v4601 = vadd.f32 %v4600, %v4570
      %v4602 = vadd.f32 %v4601, %v4571
      %v4603 = vadd.f32 %v4602, %v4572
      %v4604 = vadd.f32 %v4603, %v4573
      %v4605 = vadd.f32 %v4604, %v4574
      %v4606 = vadd.f32 %v4605, %v4575
      %v4607 = vadd.f32 %v4606, %v4576
      %v4608 = vadd.f32 %v4607, %v4577
      %v4609 = vadd.f32 %v4608, %v4578
      %v4610 = vadd.f32 %v4609, %v4579
      %v4611 = vadd.f32 %v4610, %v4580
      %v4612 = vadd.f32 %v4611, %v4581
      %v4613 = vadd.f32 %v4612, %v4582
      %v4614 = vadd.f32 %v4613, %v4583
      %v4615 = vadd.f32 %v4614, %v4584
      %v4616 = vadd.f32 %v4615, %v4585
      %v4617 = vrot.slane %v4616, 4
      %v4618 = vadd.f32 %v4616, %v4617
      %v4619 = vrot.slane %v4618, 2
      %v4620 = vadd.f32 %v4618, %v4619
      %v4621 = vrot.slane %v4620, 1
      %v4622 = vadd.f32 %v4620, %v4621
      %4623 = vst [vmem:[%s274 + $0x1] sm:$0x1] %v4622
      %v4624 = vld [vmem:[%s2] sm:$0xf]
      %v4625 = vld [vmem:[%s2 + $0x4] sm:$0xf]
      %v4626 = vld [vmem:[%s2 + $0x8] sm:$0xf]
      %v4627 = vld [vmem:[%s2 + $0xc] sm:$0xf]
      %v4628 = vld [vmem:[%s2 + $0x10] sm:$0xf]
      %v4629 = vld [vmem:[%s2 + $0x14] sm:$0xf]
      %v4630 = vld [vmem:[%s2 + $0x18] sm:$0xf]
      %v4631 = vld [vmem:[%s2 + $0x1c] sm:$0xf]
      %v4632 = vld [vmem:[%s2 + $0x20] sm:$0xf]
      %v4633 = vld [vmem:[%s2 + $0x24] sm:$0xf]
      %v4634 = vld [vmem:[%s2 + $0x28] sm:$0xf]
      %v4635 = vld [vmem:[%s2 + $0x2c] sm:$0xf]
      %v4636 = vld [vmem:[%s2 + $0x30] sm:$0xf]
      %v4637 = vld [vmem:[%s2 + $0x34] sm:$0xf]
      %v4638 = vld [vmem:[%s2 + $0x38] sm:$0xf]
      %v4639 = vld [vmem:[%s2 + $0x3c] sm:$0xf]
      %v4640 = vld [vmem:[%s3] sm:$0x1]
      %v4642 = vperm.slane %v4640, 0
      %v4660 = vunpack.c.l.b16 %v4624
      %v4661 = vunpack.c.l.b16 %v4625
      %v4662 = vunpack.c.l.b16 %v4626
      %v4663 = vunpack.c.l.b16 %v4627
      %v4664 = vunpack.c.l.b16 %v4628
      %v4665 = vunpack.c.l.b16 %v4629
      %v4666 = vunpack.c.l.b16 %v4630
      %v4667 = vunpack.c.l.b16 %v4631
      %v4668 = vunpack.c.l.b16 %v4632
      %v4669 = vunpack.c.l.b16 %v4633
      %v4670 = vunpack.c.l.b16 %v4634
      %v4671 = vunpack.c.l.b16 %v4635
      %v4672 = vunpack.c.l.b16 %v4636
      %v4673 = vunpack.c.l.b16 %v4637
      %v4674 = vunpack.c.l.b16 %v4638
      %v4675 = vunpack.c.l.b16 %v4639
      %v4676 = vpack.c.b16 %v4661, %v4660
      %v4677 = vpack.c.b16 %v4663, %v4662
      %v4678 = vpack.c.b16 %v4665, %v4664
      %v4679 = vpack.c.b16 %v4667, %v4666
      %v4680 = vpack.c.b16 %v4669, %v4668
      %v4681 = vpack.c.b16 %v4671, %v4670
      %v4682 = vpack.c.b16 %v4673, %v4672
      %v4683 = vpack.c.b16 %v4675, %v4674
      %4692 = vmatpush.bf16.msra.mxu0 %v4683
      %4693 = vmatpush.bf16.msra.mxu0 %v4682
      %4694 = vmatpush.bf16.msra.mxu0 %v4681
      %4695 = vmatpush.bf16.msra.mxu0 %v4680
      %4696 = vmatpush.bf16.msra.mxu0 %v4679
      %4697 = vmatpush.bf16.msra.mxu0 %v4678
      %4698 = vmatpush.bf16.msra.mxu0 %v4677
      %4699 = vmatpush.bf16.msra.mxu0 %v4676
      %4700 = vmatmul.bf16.gmra.mxu0 %v1041
      %v4701 = vpop.f32.mrf.mxu0
      %v4702 = vadd.f32 %v4642, %v4701
      %v4703 = vpop.f32.mrf.mxu0
      %v4704 = vadd.f32 %v4642, %v4703
      %4705 = vmatmul.bf16.gmra.mxu0 %v1042
      %v4706 = vpop.f32.mrf.mxu0
      %v4707 = vadd.f32 %v4642, %v4706
      %v4708 = vpop.f32.mrf.mxu0
      %v4709 = vadd.f32 %v4642, %v4708
      %4710 = vmatmul.bf16.gmra.mxu0 %v1043
      %v4711 = vpop.f32.mrf.mxu0
      %v4712 = vadd.f32 %v4642, %v4711
      %v4713 = vpop.f32.mrf.mxu0
      %v4714 = vadd.f32 %v4642, %v4713
      %4715 = vmatmul.bf16.gmra.mxu0 %v1044
      %v4716 = vpop.f32.mrf.mxu0
      %v4717 = vadd.f32 %v4642, %v4716
      %v4718 = vpop.f32.mrf.mxu0
      %v4719 = vadd.f32 %v4642, %v4718
      %4720 = vmatmul.bf16.gmra.mxu0 %v1045
      %v4721 = vpop.f32.mrf.mxu0
      %v4722 = vadd.f32 %v4642, %v4721
      %v4723 = vpop.f32.mrf.mxu0
      %v4724 = vadd.f32 %v4642, %v4723
      %4725 = vmatmul.bf16.gmra.mxu0 %v1046
      %v4726 = vpop.f32.mrf.mxu0
      %v4727 = vadd.f32 %v4642, %v4726
      %v4728 = vpop.f32.mrf.mxu0
      %v4729 = vadd.f32 %v4642, %v4728
      %4730 = vmatmul.bf16.gmra.mxu0 %v1047
      %v4731 = vpop.f32.mrf.mxu0
      %v4732 = vadd.f32 %v4642, %v4731
      %v4733 = vpop.f32.mrf.mxu0
      %v4734 = vadd.f32 %v4642, %v4733
      %4735 = vmatmul.bf16.gmra.mxu0 %v1048
      %v4736 = vpop.f32.mrf.mxu0
      %v4737 = vadd.f32 %v4642, %v4736
      %v4738 = vpop.f32.mrf.mxu0
      %v4739 = vadd.f32 %v4642, %v4738
      %4740 = vmatmul.bf16.gmra.mxu0 %v1049
      %v4741 = vpop.f32.mrf.mxu0
      %v4742 = vadd.f32 %v4642, %v4741
      %v4743 = vpop.f32.mrf.mxu0
      %v4744 = vadd.f32 %v4642, %v4743
      %4745 = vmatmul.bf16.gmra.mxu0 %v1050
      %v4746 = vpop.f32.mrf.mxu0
      %v4747 = vadd.f32 %v4642, %v4746
      %v4748 = vpop.f32.mrf.mxu0
      %v4749 = vadd.f32 %v4642, %v4748
      %4750 = vmatmul.bf16.gmra.mxu0 %v1051
      %v4751 = vpop.f32.mrf.mxu0
      %v4752 = vadd.f32 %v4642, %v4751
      %v4753 = vpop.f32.mrf.mxu0
      %v4754 = vadd.f32 %v4642, %v4753
      %4755 = vmatmul.bf16.gmra.mxu0 %v1052
      %v4756 = vpop.f32.mrf.mxu0
      %v4757 = vadd.f32 %v4642, %v4756
      %v4758 = vpop.f32.mrf.mxu0
      %v4759 = vadd.f32 %v4642, %v4758
      %4760 = vmatmul.bf16.gmra.mxu0 %v1053
      %v4761 = vpop.f32.mrf.mxu0
      %v4762 = vadd.f32 %v4642, %v4761
      %v4763 = vpop.f32.mrf.mxu0
      %v4764 = vadd.f32 %v4642, %v4763
      %4765 = vmatmul.bf16.gmra.mxu0 %v1054
      %v4766 = vpop.f32.mrf.mxu0
      %v4767 = vadd.f32 %v4642, %v4766
      %v4768 = vpop.f32.mrf.mxu0
      %v4769 = vadd.f32 %v4642, %v4768
      %4770 = vmatmul.bf16.gmra.mxu0 %v1055
      %v4771 = vpop.f32.mrf.mxu0
      %v4772 = vadd.f32 %v4642, %v4771
      %v4773 = vpop.f32.mrf.mxu0
      %v4774 = vadd.f32 %v4642, %v4773
      %4775 = vmatmul.bf16.gmra.mxu0 %v1056
      %v4776 = vpop.f32.mrf.mxu0
      %v4777 = vadd.f32 %v4642, %v4776
      %v4778 = vpop.f32.mrf.mxu0
      %v4779 = vadd.f32 %v4642, %v4778
      %4780 = vdwg.mxu0
      %4781 = vst [vmem:[%s270] sm:$0xff] %v4702
      %4782 = vst [vmem:[%s270 + $0x8] sm:$0xff] %v4704
      %4783 = vst [vmem:[%s270 + $0x10] sm:$0xff] %v4707
      %4784 = vst [vmem:[%s270 + $0x18] sm:$0xff] %v4709
      %4785 = vst [vmem:[%s270 + $0x20] sm:$0xff] %v4712
      %4786 = vst [vmem:[%s270 + $0x28] sm:$0xff] %v4714
      %4787 = vst [vmem:[%s270 + $0x30] sm:$0xff] %v4717
      %4788 = vst [vmem:[%s270 + $0x38] sm:$0xff] %v4719
      %4789 = vst [vmem:[%s270 + $0x40] sm:$0xff] %v4722
      %4790 = vst [vmem:[%s270 + $0x48] sm:$0xff] %v4724
      %4791 = vst [vmem:[%s270 + $0x50] sm:$0xff] %v4727
      %4792 = vst [vmem:[%s270 + $0x58] sm:$0xff] %v4729
      %4793 = vst [vmem:[%s270 + $0x60] sm:$0xff] %v4732
      %4794 = vst [vmem:[%s270 + $0x68] sm:$0xff] %v4734
      %4795 = vst [vmem:[%s270 + $0x70] sm:$0xff] %v4737
      %4796 = vst [vmem:[%s270 + $0x78] sm:$0xff] %v4739
      %4797 = vst [vmem:[%s270 + $0x80] sm:$0xff] %v4742
      %4798 = vst [vmem:[%s270 + $0x88] sm:$0xff] %v4744
      %4799 = vst [vmem:[%s270 + $0x90] sm:$0xff] %v4747
      %4800 = vst [vmem:[%s270 + $0x98] sm:$0xff] %v4749
      %4801 = vst [vmem:[%s270 + $0xa0] sm:$0xff] %v4752
      %4802 = vst [vmem:[%s270 + $0xa8] sm:$0xff] %v4754
      %4803 = vst [vmem:[%s270 + $0xb0] sm:$0xff] %v4757
      %4804 = vst [vmem:[%s270 + $0xb8] sm:$0xff] %v4759
      %4805 = vst [vmem:[%s270 + $0xc0] sm:$0xff] %v4762
      %4806 = vst [vmem:[%s270 + $0xc8] sm:$0xff] %v4764
      %4807 = vst [vmem:[%s270 + $0xd0] sm:$0xff] %v4767
      %4808 = vst [vmem:[%s270 + $0xd8] sm:$0xff] %v4769
      %4809 = vst [vmem:[%s270 + $0xe0] sm:$0xff] %v4772
      %4810 = vst [vmem:[%s270 + $0xe8] sm:$0xff] %v4774
      %4811 = vst [vmem:[%s270 + $0xf0] sm:$0xff] %v4777
      %4812 = vst [vmem:[%s270 + $0xf8] sm:$0xff] %v4779
      %p4813 = scmp.lt.s32.totalorder %s18, 1
      %s4814 = scalar_select %p4813, %s18, 1
      %s4815 = smul.addr %s4814, 32
      %s4816 = smul.addr %s4815, 8
      %s4817 = scalar_lea.vmem %s4, %s4816
      %p4818 = scmp.lt.s32.totalorder %s18, 1
      %s4819 = scalar_select %p4818, %s18, 1
      %s4820 = smul.addr %s4819, 32
      %s4821 = smul.addr %s4820, 8
      %s4822 = scalar_lea.vmem %s5, %s4821
      %p4823 = scmp.lt.s32.totalorder %s18, 1
      %s4824 = scalar_select %p4823, %s18, 1
      %s4825 = smul.addr %s4824, 2
      %s4826 = scalar_lea.vmem %s6, %s4825
      // Predicated region
      $region37: #{basic_res_block.3} parent=35 // pred_check
        %p4827 = pneg %p125
      $region38: #{basic_res_block.3} parent=35 // pred_check_branch
        %4829 = sbr.rel (%p4827) target = $region40
      $region39: #{basic_res_block.3} parent=35 // pred_region
        _
      $region40: #{basic_res_block.3} parent=35 // pred_fallthru
        _
      // Predicated region
      $region41: #{basic_res_block.3} parent=35 // pred_check
        %p4830 = pneg %p151
      $region42: #{basic_res_block.3} parent=35 // pred_check_branch
        %4832 = sbr.rel (%p4830) target = $region44
      $region43: #{basic_res_block.3} parent=35 // pred_region
        _
      $region44: #{basic_res_block.3} parent=35 // pred_fallthru
        _
      // Predicated region
      $region45: #{basic_res_block.3} parent=35 // pred_check
        %p4833 = pneg %p177
      $region46: #{basic_res_block.3} parent=35 // pred_check_branch
        %4835 = sbr.rel (%p4833) target = $region48
      $region47: #{basic_res_block.3} parent=35 // pred_region
        _
      $region48: #{basic_res_block.3} parent=35 // pred_fallthru
        _
    $region36: #{basic_res_block.3} parent=5 // pred_fallthru
      _
    %p4836 = scmp.le.s32.totalorder 2, %s13
    // Predicated region
    $region49: #{basic_res_block.3} parent=5 // pred_check
      %p4837 = pneg %p4836
    $region50: #{basic_res_block.3} parent=5 // pred_check_branch
      %4839 = sbr.rel (%p4837) target = $region52
    $region51: #{basic_res_block.3} parent=5 // pred_region
      %s4840 = ssub.s32 %s13, 2
      // Predicated region
      $region53: #{basic_res_block.3} parent=51 // pred_check
        %p4841 = pneg %p131
      $region54: #{basic_res_block.3} parent=51 // pred_check_branch
        %4843 = sbr.rel (%p4841) target = $region56
      $region55: #{basic_res_block.3} parent=51 // pred_region
        %p4844 = scmp.lt.s32.totalorder %s19, 1
        %s4845 = scalar_select %p4844, %s19, 1
        %s4846 = smul.addr %s4845, 32
        %s4847 = smul.addr %s4846, 8
        %s4848 = scalar_lea.vmem %s4, %s4847
      $region56: #{basic_res_block.3} parent=51 // pred_fallthru
        _
      // Predicated region
      $region57: #{basic_res_block.3} parent=51 // pred_check
        %p4849 = pneg %p157
      $region58: #{basic_res_block.3} parent=51 // pred_check_branch
        %4851 = sbr.rel (%p4849) target = $region60
      $region59: #{basic_res_block.3} parent=51 // pred_region
        %p4852 = scmp.lt.s32.totalorder %s19, 1
        %s4853 = scalar_select %p4852, %s19, 1
        %s4854 = smul.addr %s4853, 32
        %s4855 = smul.addr %s4854, 8
        %s4856 = scalar_lea.vmem %s5, %s4855
      $region60: #{basic_res_block.3} parent=51 // pred_fallthru
        _
      // Predicated region
      $region61: #{basic_res_block.3} parent=51 // pred_check
        %p4857 = pneg %p183
      $region62: #{basic_res_block.3} parent=51 // pred_check_branch
        %4859 = sbr.rel (%p4857) target = $region64
      $region63: #{basic_res_block.3} parent=51 // pred_region
        %p4860 = scmp.lt.s32.totalorder %s19, 1
        %s4861 = scalar_select %p4860, %s19, 1
        %s4862 = smul.addr %s4861, 2
        %s4863 = scalar_lea.vmem %s6, %s4862
      $region64: #{basic_res_block.3} parent=51 // pred_fallthru
        _
    $region52: #{basic_res_block.3} parent=5 // pred_fallthru
      _
  $region6: #{basic_res_block.3} parent=0 // loop_footer
    %s17 = sadd.s32 1, %s13
  $region7: #{basic_res_block.3} parent=0 // loop_footer_branch
    %12 = sbr.rel target = $region3
  $region8: #{basic_res_block.3} parent=0 // loop_exit
    _

</llo_original>
